<compile_context>
chip_gen: v7x
topology: tpu7x:2x2x1
jax: 0.10.0
libtpu: 0.0.40
codegen_flags: <defaults>
</compile_context>

<pallas_src>
import math

import jax
import jax.numpy as jnp
from jax import lax
from jax.experimental import pallas as pl
from jax.experimental.pallas import tpu as pltpu

LN_EPS = 1e-5  # PyTorch nn.LayerNorm default

#             (in,  out, layernorm, relu)
LAYER_CFG = [(512, 700, True,  True),
             (700, 700, True,  True),
             (700, 700, True,  True),
             (700, 512, True,  True),
             (512, 128, False, True),
             (128, 64,  False, True),
             (64,  1,   False, False)]


def _pad128(d):
    return ((d + 127) // 128) * 128


# (in_pad, out_pad, logical_out, use_ln, use_relu)
PADDED_CFG = [(_pad128(i), _pad128(o), o, ln, relu) for (i, o, ln, relu) in LAYER_CFG]
IN_DIM = LAYER_CFG[0][0]          # 512, already lane-aligned
N_LAYERS = len(PADDED_CFG)


def _mlp_kernel(*refs):
    """Entire 7-layer MLP for one batch tile: matmul + bias [+ LN] [+ ReLU] x7."""
    x_ref, o_ref = refs[0], refs[-1]
    params = refs[1:-1]

    h = x_ref[...].astype(jnp.bfloat16)                      # (TM, 512) bf16 loop carry
    p = 0
    last = N_LAYERS - 1
    for li, (in_pad, out_pad, logical_out, use_ln, use_relu) in enumerate(PADDED_CFG):
        w = params[p][...]                                   # bf16 weights
        b = params[p + 1][...]                               # f32 bias
        p += 2

        if li == last:
            # Linear(64,1), stored transposed: w is (out_pad, in_pad), b is (out_pad, 1).
            # Contract both lane dims on the MXU -> transposed result (out_pad, TM);
            # row 0 holds the logits, rows 1..7 are exactly zero (zero-padded weights).
            yt = lax.dot_general(w, h, (((1,), (1,)), ((), ())),
                                 preferred_element_type=jnp.float32) + b
            o_ref[...] = yt[:8, :].astype(o_ref.dtype)       # lane-dense (8, TM) store
        else:
            y = jnp.dot(h, w, preferred_element_type=jnp.float32) + b   # f32 MXU accum
            if use_ln:
                gamma = params[p][...]                       # (1, out_pad), 0 on padded lanes
                beta = params[p + 1][...]
                p += 2
                # Padded lanes of y are exactly zero (zero weight cols / zero bias), so
                # unmasked sums over out_pad equal sums over the logical width.
                inv_n = jnp.float32(1.0 / logical_out)
                s = jnp.sum(y, axis=-1, keepdims=True)       # XLU reduce #1
                ss = jnp.sum(y * y, axis=-1, keepdims=True)  # XLU reduce #2
                mean = s * inv_n
                var = jnp.maximum(ss * inv_n - mean * mean, 0.0)  # clamp: 1-pass var can go < 0
                y = (y - mean) * lax.rsqrt(var + LN_EPS)     # EUP rsqrt
                y = y * gamma + beta                         # padded lanes -> 0 (gamma=beta=0)
            # TODO(synk): nn.Dropout(p=0.3) is identity at inference time; training-mode
            # stochastic dropout is intentionally not reproduced here.
            if use_relu:
                y = jnp.maximum(y, 0.0)
            h = y.astype(jnp.bfloat16)                       # bf16 loop carry


def init_params(key):
    """bf16 weights / f32 bias+LN params, zero-padded to lane-aligned shapes.

    Mimics PyTorch Linear default init U(-1/sqrt(fan_in), 1/sqrt(fan_in)); LayerNorm
    gamma=1, beta=0. Returns a flat list in kernel order: [w, b, (gamma, beta)] per
    layer. The LAST layer's weight is stored transposed ((out_pad, in_pad)) and its
    bias as a column ((out_pad, 1)) so the kernel can emit a transposed logit slab.
    """
    flat = []
    for li, ((fan_in, fan_out, use_ln, _), (in_pad, out_pad, _, _, _)) in enumerate(
            zip(LAYER_CFG, PADDED_CFG)):
        key, kw, kb = jax.random.split(key, 3)
        bound = 1.0 / math.sqrt(fan_in)
        w = jax.random.uniform(kw, (fan_in, fan_out), jnp.float32, -bound, bound)
        b = jax.random.uniform(kb, (fan_out,), jnp.float32, -bound, bound)
        w = jnp.pad(w, ((0, in_pad - fan_in), (0, out_pad - fan_out)))
        b = jnp.pad(b, (0, out_pad - fan_out))
        if li == N_LAYERS - 1:
            flat += [w.T.astype(jnp.bfloat16), b[:, None]]           # (out_pad,in_pad), (out_pad,1)
        else:
            flat += [w.astype(jnp.bfloat16), b[None, :]]             # (in_pad,out_pad), (1,out_pad)
        if use_ln:
            gamma = jnp.pad(jnp.ones((1, fan_out), jnp.float32),
                            ((0, 0), (0, out_pad - fan_out)))        # padded lanes -> 0
            beta = jnp.zeros((1, out_pad), jnp.float32)
            flat += [gamma, beta]
    return flat


def _param_block_spec(shape):
    """Whole-array spec pinned to block (0, 0); single-buffered (fetched exactly once)."""
    try:
        return pl.BlockSpec(shape, lambda i: (0, 0), pipeline_mode=pl.Buffered(1))
    except TypeError:  # very old jax without pipeline_mode: fall back to default buffering
        return pl.BlockSpec(shape, lambda i: (0, 0))


def _pick_tile(batch):
    """Batch tile size: big tiles for big batches; >= 2 tiles whenever batch >= 128
    so v7x can shard the 'parallel' axis over both TensorCores."""
    if batch >= 1024:
        return 512
    if batch >= 512:
        return 256
    if batch >= 256:
        return 128
    if batch >= 128:
        return 64
    return max(8, ((batch + 7) // 8) * 8)        # single sublane-aligned tile


def neural_network_forward(x, flat_params):
    """x: (batch, 512) f32 -> (batch, 1) f32 logits."""
    batch = x.shape[0]
    tm = _pick_tile(batch)
    b_pad = ((batch + tm - 1) // tm) * tm
    if b_pad != batch:
        x = jnp.pad(x, ((0, b_pad - batch), (0, 0)))

    grid = (b_pad // tm,)
    # Weights/bias/LN params: whole array, constant index_map -> DMA'd once and
    # VMEM-resident across batch tiles; single-buffered to halve their VMEM cost.
    param_specs = [_param_block_spec(p.shape) for p in flat_params]
    in_specs = [pl.BlockSpec((tm, IN_DIM), lambda i: (i, 0))] + param_specs
    # Lane-dense transposed logit slab: row 0 of the (8, b_pad) output holds the logits.
    out_specs = pl.BlockSpec((8, tm), lambda i: (0, i))

    flops = 2 * b_pad * sum(ip * op for (ip, op, _, _, _) in PADDED_CFG)
    bytes_accessed = (x.size * x.dtype.itemsize
                      + sum(int(p.size) * p.dtype.itemsize for p in flat_params)
                      + 8 * b_pad * 4)
    cost = pl.CostEstimate(flops=flops,
                           transcendentals=4 * b_pad,        # one rsqrt per row per LN layer
                           bytes_accessed=bytes_accessed)

    # TODO(synk): for single-tile (batch < 128) latency the one-time ~4 MB weight
    # HBM->VMEM DMA dominates; a cross-call weight prefetch (P10) would hide it but
    # is not implemented here.
    out = pl.pallas_call(
        _mlp_kernel,
        out_shape=jax.ShapeDtypeStruct((8, b_pad), jnp.float32),
        grid=grid,
        in_specs=in_specs,
        out_specs=out_specs,
        compiler_params=pltpu.CompilerParams(
            dimension_semantics=("parallel",),               # v7x: shard batch tiles over 2 TCs
            vmem_limit_bytes=48 * 1024 * 1024),
        cost_estimate=cost,
    )(x, *flat_params)
    return out[0, :batch][:, None]                           # logits row -> (batch, 1)


def _reference_forward(x, flat_params):
    """Pure-JAX f32 reference mirroring the kernel math (loose parity check)."""
    h = x
    p = 0
    for li, (in_pad, out_pad, logical_out, use_ln, use_relu) in enumerate(PADDED_CFG):
        w = flat_params[p].astype(jnp.float32)
        b = flat_params[p + 1]
        p += 2
        if li == N_LAYERS - 1:
            y = h @ w.T + b[:, 0][None, :]                   # w stored transposed
            return y[:, :1]
        y = h @ w + b
        if use_ln:
            gamma, beta = flat_params[p], flat_params[p + 1]
            p += 2
            mean = jnp.sum(y, -1, keepdims=True) / logical_out
            var = jnp.maximum(jnp.sum(y * y, -1, keepdims=True) / logical_out - mean * mean, 0.0)
            y = (y - mean) * lax.rsqrt(var + LN_EPS) * gamma + beta
        if use_relu:
            y = jnp.maximum(y, 0.0)
        h = y


if __name__ == "__main__":
    key = jax.random.PRNGKey(0)
    key, kx, kx2 = jax.random.split(key, 3)
    params = init_params(key)

    # Small, single-tile case.
    batch = 8
    x = jax.random.normal(kx, (batch, 512), dtype=jnp.float32)
    logits = jax.block_until_ready(neural_network_forward(x, params))
    assert logits.shape == (batch, 1), logits.shape
    assert logits.dtype == jnp.float32
    assert bool(jnp.all(jnp.isfinite(logits)))
    ref = _reference_forward(x, params)
    assert bool(jnp.max(jnp.abs(logits - ref)) < 5e-2), "kernel/reference mismatch"

    # Multi-tile case (exercises the parallel batch grid axis).
    batch2 = 256
    x2 = jax.random.normal(kx2, (batch2, 512), dtype=jnp.float32)
    logits2 = jax.block_until_ready(neural_network_forward(x2, params))
    assert logits2.shape == (batch2, 1)
    assert bool(jnp.all(jnp.isfinite(logits2)))

    print("KERNEL_OK")
</pallas_src>

<mosaic_0001>
module attributes {stable_mosaic.version = 11 : i64} {
  func.func @_mlp_kernel(%arg0: i32, %arg1: memref<8x512xf32, #tpu.memory_space<vmem>>, %arg2: memref<512x768xbf16, #tpu.memory_space<vmem>>, %arg3: memref<1x768xf32, #tpu.memory_space<vmem>>, %arg4: memref<1x768xf32, #tpu.memory_space<vmem>>, %arg5: memref<1x768xf32, #tpu.memory_space<vmem>>, %arg6: memref<768x768xbf16, #tpu.memory_space<vmem>>, %arg7: memref<1x768xf32, #tpu.memory_space<vmem>>, %arg8: memref<1x768xf32, #tpu.memory_space<vmem>>, %arg9: memref<1x768xf32, #tpu.memory_space<vmem>>, %arg10: memref<768x768xbf16, #tpu.memory_space<vmem>>, %arg11: memref<1x768xf32, #tpu.memory_space<vmem>>, %arg12: memref<1x768xf32, #tpu.memory_space<vmem>>, %arg13: memref<1x768xf32, #tpu.memory_space<vmem>>, %arg14: memref<768x512xbf16, #tpu.memory_space<vmem>>, %arg15: memref<1x512xf32, #tpu.memory_space<vmem>>, %arg16: memref<1x512xf32, #tpu.memory_space<vmem>>, %arg17: memref<1x512xf32, #tpu.memory_space<vmem>>, %arg18: memref<512x128xbf16, #tpu.memory_space<vmem>>, %arg19: memref<1x128xf32, #tpu.memory_space<vmem>>, %arg20: memref<128x128xbf16, #tpu.memory_space<vmem>>, %arg21: memref<1x128xf32, #tpu.memory_space<vmem>>, %arg22: memref<128x128xbf16, #tpu.memory_space<vmem>>, %arg23: memref<128x1xf32, #tpu.memory_space<vmem>>, %arg24: memref<8x8xf32, #tpu.memory_space<vmem>>) attributes {dimension_semantics = [#tpu.dimension_semantics<parallel>], iteration_bounds = array<i64: 1>, scalar_prefetch = 0 : i64, scratch_operands = 0 : i64, tpu.core_type = #tpu.core_type<tc>, window_params = [{transform_indices = @transform_0, window_bounds = array<i64: 8, 512>}, {pipeline_mode = #tpu.pipeline_mode<synchronous>, transform_indices = @transform_1, window_bounds = array<i64: 512, 768>}, {pipeline_mode = #tpu.pipeline_mode<synchronous>, transform_indices = @transform_2, window_bounds = array<i64: 1, 768>}, {pipeline_mode = #tpu.pipeline_mode<synchronous>, transform_indices = @transform_3, window_bounds = array<i64: 1, 768>}, {pipeline_mode = #tpu.pipeline_mode<synchronous>, transform_indices = @transform_4, window_bounds = array<i64: 1, 768>}, {pipeline_mode = #tpu.pipeline_mode<synchronous>, transform_indices = @transform_5, window_bounds = array<i64: 768, 768>}, {pipeline_mode = #tpu.pipeline_mode<synchronous>, transform_indices = @transform_6, window_bounds = array<i64: 1, 768>}, {pipeline_mode = #tpu.pipeline_mode<synchronous>, transform_indices = @transform_7, window_bounds = array<i64: 1, 768>}, {pipeline_mode = #tpu.pipeline_mode<synchronous>, transform_indices = @transform_8, window_bounds = array<i64: 1, 768>}, {pipeline_mode = #tpu.pipeline_mode<synchronous>, transform_indices = @transform_9, window_bounds = array<i64: 768, 768>}, {pipeline_mode = #tpu.pipeline_mode<synchronous>, transform_indices = @transform_10, window_bounds = array<i64: 1, 768>}, {pipeline_mode = #tpu.pipeline_mode<synchronous>, transform_indices = @transform_11, window_bounds = array<i64: 1, 768>}, {pipeline_mode = #tpu.pipeline_mode<synchronous>, transform_indices = @transform_12, window_bounds = array<i64: 1, 768>}, {pipeline_mode = #tpu.pipeline_mode<synchronous>, transform_indices = @transform_13, window_bounds = array<i64: 768, 512>}, {pipeline_mode = #tpu.pipeline_mode<synchronous>, transform_indices = @transform_14, window_bounds = array<i64: 1, 512>}, {pipeline_mode = #tpu.pipeline_mode<synchronous>, transform_indices = @transform_15, window_bounds = array<i64: 1, 512>}, {pipeline_mode = #tpu.pipeline_mode<synchronous>, transform_indices = @transform_16, window_bounds = array<i64: 1, 512>}, {pipeline_mode = #tpu.pipeline_mode<synchronous>, transform_indices = @transform_17, window_bounds = array<i64: 512, 128>}, {pipeline_mode = #tpu.pipeline_mode<synchronous>, transform_indices = @transform_18, window_bounds = array<i64: 1, 128>}, {pipeline_mode = #tpu.pipeline_mode<synchronous>, transform_indices = @transform_19, window_bounds = array<i64: 128, 128>}, {pipeline_mode = #tpu.pipeline_mode<synchronous>, transform_indices = @transform_20, window_bounds = array<i64: 1, 128>}, {pipeline_mode = #tpu.pipeline_mode<synchronous>, transform_indices = @transform_21, window_bounds = array<i64: 128, 128>}, {pipeline_mode = #tpu.pipeline_mode<synchronous>, transform_indices = @transform_22, window_bounds = array<i64: 128, 1>}, {transform_indices = @transform_23, window_bounds = array<i64: 8, 8>}]} {
    %c0 = arith.constant 0 : index
    %c0_0 = arith.constant 0 : index
    %0 = vector.load %arg1[%c0, %c0_0] : memref<8x512xf32, #tpu.memory_space<vmem>>, vector<8x512xf32>
    %1 = arith.truncf %0 : vector<8x512xf32> to vector<8x512xbf16>
    %c0_1 = arith.constant 0 : index
    %c0_2 = arith.constant 0 : index
    %2 = vector.load %arg2[%c0_1, %c0_2] : memref<512x768xbf16, #tpu.memory_space<vmem>>, vector<512x768xbf16>
    %c0_3 = arith.constant 0 : index
    %c0_4 = arith.constant 0 : index
    %3 = vector.load %arg3[%c0_3, %c0_4] : memref<1x768xf32, #tpu.memory_space<vmem>>, vector<1x768xf32>
    %cst = arith.constant dense<0.000000e+00> : vector<8x768xf32>
    %4 = tpu.matmul %1, %2, %cst {dimension_numbers = #tpu.dot_dimension_numbers<[1], [0], [0], [1], [0, 0, 1, 1], [], []>} : vector<8x512xbf16>, vector<512x768xbf16>, vector<8x768xf32> -> vector<8x768xf32>
    %5 = vector.broadcast %3 : vector<1x768xf32> to vector<8x768xf32>
    %6 = arith.addf %4, %5 : vector<8x768xf32>
    %c0_5 = arith.constant 0 : index
    %c0_6 = arith.constant 0 : index
    %7 = vector.load %arg4[%c0_5, %c0_6] : memref<1x768xf32, #tpu.memory_space<vmem>>, vector<1x768xf32>
    %c0_7 = arith.constant 0 : index
    %c0_8 = arith.constant 0 : index
    %8 = vector.load %arg5[%c0_7, %c0_8] : memref<1x768xf32, #tpu.memory_space<vmem>>, vector<1x768xf32>
    %cst_9 = arith.constant dense<0.000000e+00> : vector<8xf32>
    %9 = vector.multi_reduction <add>, %6, %cst_9 [1] : vector<8x768xf32> to vector<8xf32>
    %10 = vector.shape_cast %9 : vector<8xf32> to vector<8x1xf32>
    %11 = arith.mulf %6, %6 : vector<8x768xf32>
    %cst_10 = arith.constant dense<0.000000e+00> : vector<8xf32>
    %12 = vector.multi_reduction <add>, %11, %cst_10 [1] : vector<8x768xf32> to vector<8xf32>
    %13 = vector.shape_cast %12 : vector<8xf32> to vector<8x1xf32>
    %cst_11 = arith.constant 0.00142857141 : f32
    %14 = vector.broadcast %cst_11 : f32 to vector<8x1xf32>
    %15 = arith.mulf %10, %14 : vector<8x1xf32>
    %cst_12 = arith.constant 0.00142857141 : f32
    %16 = vector.broadcast %cst_12 : f32 to vector<8x1xf32>
    %17 = arith.mulf %13, %16 : vector<8x1xf32>
    %18 = arith.mulf %15, %15 : vector<8x1xf32>
    %19 = arith.subf %17, %18 : vector<8x1xf32>
    %cst_13 = arith.constant 0.000000e+00 : f32
    %20 = vector.broadcast %cst_13 : f32 to vector<8x1xf32>
    %21 = arith.maximumf %19, %20 : vector<8x1xf32>
    %22 = vector.broadcast %15 : vector<8x1xf32> to vector<8x768xf32>
    %23 = arith.subf %6, %22 : vector<8x768xf32>
    %cst_14 = arith.constant 9.99999974E-6 : f32
    %24 = vector.broadcast %cst_14 : f32 to vector<8x1xf32>
    %25 = arith.addf %21, %24 : vector<8x1xf32>
    %26 = math.rsqrt %25 : vector<8x1xf32>
    %27 = vector.broadcast %26 : vector<8x1xf32> to vector<8x768xf32>
    %28 = arith.mulf %23, %27 : vector<8x768xf32>
    %29 = vector.broadcast %7 : vector<1x768xf32> to vector<8x768xf32>
    %30 = arith.mulf %28, %29 : vector<8x768xf32>
    %31 = vector.broadcast %8 : vector<1x768xf32> to vector<8x768xf32>
    %32 = arith.addf %30, %31 : vector<8x768xf32>
    %cst_15 = arith.constant 0.000000e+00 : f32
    %33 = vector.broadcast %cst_15 : f32 to vector<8x768xf32>
    %34 = arith.maximumf %32, %33 : vector<8x768xf32>
    %35 = arith.truncf %34 : vector<8x768xf32> to vector<8x768xbf16>
    %c0_16 = arith.constant 0 : index
    %c0_17 = arith.constant 0 : index
    %36 = vector.load %arg6[%c0_16, %c0_17] : memref<768x768xbf16, #tpu.memory_space<vmem>>, vector<768x768xbf16>
    %c0_18 = arith.constant 0 : index
    %c0_19 = arith.constant 0 : index
    %37 = vector.load %arg7[%c0_18, %c0_19] : memref<1x768xf32, #tpu.memory_space<vmem>>, vector<1x768xf32>
    %cst_20 = arith.constant dense<0.000000e+00> : vector<8x768xf32>
    %38 = tpu.matmul %35, %36, %cst_20 {dimension_numbers = #tpu.dot_dimension_numbers<[1], [0], [0], [1], [0, 0, 1, 1], [], []>} : vector<8x768xbf16>, vector<768x768xbf16>, vector<8x768xf32> -> vector<8x768xf32>
    %39 = vector.broadcast %37 : vector<1x768xf32> to vector<8x768xf32>
    %40 = arith.addf %38, %39 : vector<8x768xf32>
    %c0_21 = arith.constant 0 : index
    %c0_22 = arith.constant 0 : index
    %41 = vector.load %arg8[%c0_21, %c0_22] : memref<1x768xf32, #tpu.memory_space<vmem>>, vector<1x768xf32>
    %c0_23 = arith.constant 0 : index
    %c0_24 = arith.constant 0 : index
    %42 = vector.load %arg9[%c0_23, %c0_24] : memref<1x768xf32, #tpu.memory_space<vmem>>, vector<1x768xf32>
    %cst_25 = arith.constant dense<0.000000e+00> : vector<8xf32>
    %43 = vector.multi_reduction <add>, %40, %cst_25 [1] : vector<8x768xf32> to vector<8xf32>
    %44 = vector.shape_cast %43 : vector<8xf32> to vector<8x1xf32>
    %45 = arith.mulf %40, %40 : vector<8x768xf32>
    %cst_26 = arith.constant dense<0.000000e+00> : vector<8xf32>
    %46 = vector.multi_reduction <add>, %45, %cst_26 [1] : vector<8x768xf32> to vector<8xf32>
    %47 = vector.shape_cast %46 : vector<8xf32> to vector<8x1xf32>
    %cst_27 = arith.constant 0.00142857141 : f32
    %48 = vector.broadcast %cst_27 : f32 to vector<8x1xf32>
    %49 = arith.mulf %44, %48 : vector<8x1xf32>
    %cst_28 = arith.constant 0.00142857141 : f32
    %50 = vector.broadcast %cst_28 : f32 to vector<8x1xf32>
    %51 = arith.mulf %47, %50 : vector<8x1xf32>
    %52 = arith.mulf %49, %49 : vector<8x1xf32>
    %53 = arith.subf %51, %52 : vector<8x1xf32>
    %cst_29 = arith.constant 0.000000e+00 : f32
    %54 = vector.broadcast %cst_29 : f32 to vector<8x1xf32>
    %55 = arith.maximumf %53, %54 : vector<8x1xf32>
    %56 = vector.broadcast %49 : vector<8x1xf32> to vector<8x768xf32>
    %57 = arith.subf %40, %56 : vector<8x768xf32>
    %cst_30 = arith.constant 9.99999974E-6 : f32
    %58 = vector.broadcast %cst_30 : f32 to vector<8x1xf32>
    %59 = arith.addf %55, %58 : vector<8x1xf32>
    %60 = math.rsqrt %59 : vector<8x1xf32>
    %61 = vector.broadcast %60 : vector<8x1xf32> to vector<8x768xf32>
    %62 = arith.mulf %57, %61 : vector<8x768xf32>
    %63 = vector.broadcast %41 : vector<1x768xf32> to vector<8x768xf32>
    %64 = arith.mulf %62, %63 : vector<8x768xf32>
    %65 = vector.broadcast %42 : vector<1x768xf32> to vector<8x768xf32>
    %66 = arith.addf %64, %65 : vector<8x768xf32>
    %cst_31 = arith.constant 0.000000e+00 : f32
    %67 = vector.broadcast %cst_31 : f32 to vector<8x768xf32>
    %68 = arith.maximumf %66, %67 : vector<8x768xf32>
    %69 = arith.truncf %68 : vector<8x768xf32> to vector<8x768xbf16>
    %c0_32 = arith.constant 0 : index
    %c0_33 = arith.constant 0 : index
    %70 = vector.load %arg10[%c0_32, %c0_33] : memref<768x768xbf16, #tpu.memory_space<vmem>>, vector<768x768xbf16>
    %c0_34 = arith.constant 0 : index
    %c0_35 = arith.constant 0 : index
    %71 = vector.load %arg11[%c0_34, %c0_35] : memref<1x768xf32, #tpu.memory_space<vmem>>, vector<1x768xf32>
    %cst_36 = arith.constant dense<0.000000e+00> : vector<8x768xf32>
    %72 = tpu.matmul %69, %70, %cst_36 {dimension_numbers = #tpu.dot_dimension_numbers<[1], [0], [0], [1], [0, 0, 1, 1], [], []>} : vector<8x768xbf16>, vector<768x768xbf16>, vector<8x768xf32> -> vector<8x768xf32>
    %73 = vector.broadcast %71 : vector<1x768xf32> to vector<8x768xf32>
    %74 = arith.addf %72, %73 : vector<8x768xf32>
    %c0_37 = arith.constant 0 : index
    %c0_38 = arith.constant 0 : index
    %75 = vector.load %arg12[%c0_37, %c0_38] : memref<1x768xf32, #tpu.memory_space<vmem>>, vector<1x768xf32>
    %c0_39 = arith.constant 0 : index
    %c0_40 = arith.constant 0 : index
    %76 = vector.load %arg13[%c0_39, %c0_40] : memref<1x768xf32, #tpu.memory_space<vmem>>, vector<1x768xf32>
    %cst_41 = arith.constant dense<0.000000e+00> : vector<8xf32>
    %77 = vector.multi_reduction <add>, %74, %cst_41 [1] : vector<8x768xf32> to vector<8xf32>
    %78 = vector.shape_cast %77 : vector<8xf32> to vector<8x1xf32>
    %79 = arith.mulf %74, %74 : vector<8x768xf32>
    %cst_42 = arith.constant dense<0.000000e+00> : vector<8xf32>
    %80 = vector.multi_reduction <add>, %79, %cst_42 [1] : vector<8x768xf32> to vector<8xf32>
    %81 = vector.shape_cast %80 : vector<8xf32> to vector<8x1xf32>
    %cst_43 = arith.constant 0.00142857141 : f32
    %82 = vector.broadcast %cst_43 : f32 to vector<8x1xf32>
    %83 = arith.mulf %78, %82 : vector<8x1xf32>
    %cst_44 = arith.constant 0.00142857141 : f32
    %84 = vector.broadcast %cst_44 : f32 to vector<8x1xf32>
    %85 = arith.mulf %81, %84 : vector<8x1xf32>
    %86 = arith.mulf %83, %83 : vector<8x1xf32>
    %87 = arith.subf %85, %86 : vector<8x1xf32>
    %cst_45 = arith.constant 0.000000e+00 : f32
    %88 = vector.broadcast %cst_45 : f32 to vector<8x1xf32>
    %89 = arith.maximumf %87, %88 : vector<8x1xf32>
    %90 = vector.broadcast %83 : vector<8x1xf32> to vector<8x768xf32>
    %91 = arith.subf %74, %90 : vector<8x768xf32>
    %cst_46 = arith.constant 9.99999974E-6 : f32
    %92 = vector.broadcast %cst_46 : f32 to vector<8x1xf32>
    %93 = arith.addf %89, %92 : vector<8x1xf32>
    %94 = math.rsqrt %93 : vector<8x1xf32>
    %95 = vector.broadcast %94 : vector<8x1xf32> to vector<8x768xf32>
    %96 = arith.mulf %91, %95 : vector<8x768xf32>
    %97 = vector.broadcast %75 : vector<1x768xf32> to vector<8x768xf32>
    %98 = arith.mulf %96, %97 : vector<8x768xf32>
    %99 = vector.broadcast %76 : vector<1x768xf32> to vector<8x768xf32>
    %100 = arith.addf %98, %99 : vector<8x768xf32>
    %cst_47 = arith.constant 0.000000e+00 : f32
    %101 = vector.broadcast %cst_47 : f32 to vector<8x768xf32>
    %102 = arith.maximumf %100, %101 : vector<8x768xf32>
    %103 = arith.truncf %102 : vector<8x768xf32> to vector<8x768xbf16>
    %c0_48 = arith.constant 0 : index
    %c0_49 = arith.constant 0 : index
    %104 = vector.load %arg14[%c0_48, %c0_49] : memref<768x512xbf16, #tpu.memory_space<vmem>>, vector<768x512xbf16>
    %c0_50 = arith.constant 0 : index
    %c0_51 = arith.constant 0 : index
    %105 = vector.load %arg15[%c0_50, %c0_51] : memref<1x512xf32, #tpu.memory_space<vmem>>, vector<1x512xf32>
    %cst_52 = arith.constant dense<0.000000e+00> : vector<8x512xf32>
    %106 = tpu.matmul %103, %104, %cst_52 {dimension_numbers = #tpu.dot_dimension_numbers<[1], [0], [0], [1], [0, 0, 1, 1], [], []>} : vector<8x768xbf16>, vector<768x512xbf16>, vector<8x512xf32> -> vector<8x512xf32>
    %107 = vector.broadcast %105 : vector<1x512xf32> to vector<8x512xf32>
    %108 = arith.addf %106, %107 : vector<8x512xf32>
    %c0_53 = arith.constant 0 : index
    %c0_54 = arith.constant 0 : index
    %109 = vector.load %arg16[%c0_53, %c0_54] : memref<1x512xf32, #tpu.memory_space<vmem>>, vector<1x512xf32>
    %c0_55 = arith.constant 0 : index
    %c0_56 = arith.constant 0 : index
    %110 = vector.load %arg17[%c0_55, %c0_56] : memref<1x512xf32, #tpu.memory_space<vmem>>, vector<1x512xf32>
    %cst_57 = arith.constant dense<0.000000e+00> : vector<8xf32>
    %111 = vector.multi_reduction <add>, %108, %cst_57 [1] : vector<8x512xf32> to vector<8xf32>
    %112 = vector.shape_cast %111 : vector<8xf32> to vector<8x1xf32>
    %113 = arith.mulf %108, %108 : vector<8x512xf32>
    %cst_58 = arith.constant dense<0.000000e+00> : vector<8xf32>
    %114 = vector.multi_reduction <add>, %113, %cst_58 [1] : vector<8x512xf32> to vector<8xf32>
    %115 = vector.shape_cast %114 : vector<8xf32> to vector<8x1xf32>
    %cst_59 = arith.constant 0.001953125 : f32
    %116 = vector.broadcast %cst_59 : f32 to vector<8x1xf32>
    %117 = arith.mulf %112, %116 : vector<8x1xf32>
    %cst_60 = arith.constant 0.001953125 : f32
    %118 = vector.broadcast %cst_60 : f32 to vector<8x1xf32>
    %119 = arith.mulf %115, %118 : vector<8x1xf32>
    %120 = arith.mulf %117, %117 : vector<8x1xf32>
    %121 = arith.subf %119, %120 : vector<8x1xf32>
    %cst_61 = arith.constant 0.000000e+00 : f32
    %122 = vector.broadcast %cst_61 : f32 to vector<8x1xf32>
    %123 = arith.maximumf %121, %122 : vector<8x1xf32>
    %124 = vector.broadcast %117 : vector<8x1xf32> to vector<8x512xf32>
    %125 = arith.subf %108, %124 : vector<8x512xf32>
    %cst_62 = arith.constant 9.99999974E-6 : f32
    %126 = vector.broadcast %cst_62 : f32 to vector<8x1xf32>
    %127 = arith.addf %123, %126 : vector<8x1xf32>
    %128 = math.rsqrt %127 : vector<8x1xf32>
    %129 = vector.broadcast %128 : vector<8x1xf32> to vector<8x512xf32>
    %130 = arith.mulf %125, %129 : vector<8x512xf32>
    %131 = vector.broadcast %109 : vector<1x512xf32> to vector<8x512xf32>
    %132 = arith.mulf %130, %131 : vector<8x512xf32>
    %133 = vector.broadcast %110 : vector<1x512xf32> to vector<8x512xf32>
    %134 = arith.addf %132, %133 : vector<8x512xf32>
    %cst_63 = arith.constant 0.000000e+00 : f32
    %135 = vector.broadcast %cst_63 : f32 to vector<8x512xf32>
    %136 = arith.maximumf %134, %135 : vector<8x512xf32>
    %137 = arith.truncf %136 : vector<8x512xf32> to vector<8x512xbf16>
    %c0_64 = arith.constant 0 : index
    %c0_65 = arith.constant 0 : index
    %138 = vector.load %arg18[%c0_64, %c0_65] : memref<512x128xbf16, #tpu.memory_space<vmem>>, vector<512x128xbf16>
    %c0_66 = arith.constant 0 : index
    %c0_67 = arith.constant 0 : index
    %139 = vector.load %arg19[%c0_66, %c0_67] : memref<1x128xf32, #tpu.memory_space<vmem>>, vector<1x128xf32>
    %cst_68 = arith.constant dense<0.000000e+00> : vector<8x128xf32>
    %140 = tpu.matmul %137, %138, %cst_68 {dimension_numbers = #tpu.dot_dimension_numbers<[1], [0], [0], [1], [0, 0, 1, 1], [], []>} : vector<8x512xbf16>, vector<512x128xbf16>, vector<8x128xf32> -> vector<8x128xf32>
    %141 = vector.broadcast %139 : vector<1x128xf32> to vector<8x128xf32>
    %142 = arith.addf %140, %141 : vector<8x128xf32>
    %cst_69 = arith.constant 0.000000e+00 : f32
    %143 = vector.broadcast %cst_69 : f32 to vector<8x128xf32>
    %144 = arith.maximumf %142, %143 : vector<8x128xf32>
    %145 = arith.truncf %144 : vector<8x128xf32> to vector<8x128xbf16>
    %c0_70 = arith.constant 0 : index
    %c0_71 = arith.constant 0 : index
    %146 = vector.load %arg20[%c0_70, %c0_71] : memref<128x128xbf16, #tpu.memory_space<vmem>>, vector<128x128xbf16>
    %c0_72 = arith.constant 0 : index
    %c0_73 = arith.constant 0 : index
    %147 = vector.load %arg21[%c0_72, %c0_73] : memref<1x128xf32, #tpu.memory_space<vmem>>, vector<1x128xf32>
    %cst_74 = arith.constant dense<0.000000e+00> : vector<8x128xf32>
    %148 = tpu.matmul %145, %146, %cst_74 {dimension_numbers = #tpu.dot_dimension_numbers<[1], [0], [0], [1], [0, 0, 1, 1], [], []>} : vector<8x128xbf16>, vector<128x128xbf16>, vector<8x128xf32> -> vector<8x128xf32>
    %149 = vector.broadcast %147 : vector<1x128xf32> to vector<8x128xf32>
    %150 = arith.addf %148, %149 : vector<8x128xf32>
    %cst_75 = arith.constant 0.000000e+00 : f32
    %151 = vector.broadcast %cst_75 : f32 to vector<8x128xf32>
    %152 = arith.maximumf %150, %151 : vector<8x128xf32>
    %153 = arith.truncf %152 : vector<8x128xf32> to vector<8x128xbf16>
    %c0_76 = arith.constant 0 : index
    %c0_77 = arith.constant 0 : index
    %154 = vector.load %arg22[%c0_76, %c0_77] : memref<128x128xbf16, #tpu.memory_space<vmem>>, vector<128x128xbf16>
    %c0_78 = arith.constant 0 : index
    %c0_79 = arith.constant 0 : index
    %155 = vector.load %arg23[%c0_78, %c0_79] : memref<128x1xf32, #tpu.memory_space<vmem>>, vector<128x1xf32>
    %cst_80 = arith.constant dense<0.000000e+00> : vector<128x8xf32>
    %156 = tpu.matmul %154, %153, %cst_80 {dimension_numbers = #tpu.dot_dimension_numbers<[1], [1], [0], [0], [0, 0, 1, 0], [], []>} : vector<128x128xbf16>, vector<8x128xbf16>, vector<128x8xf32> -> vector<128x8xf32>
    %157 = vector.broadcast %155 : vector<128x1xf32> to vector<128x8xf32>
    %158 = arith.addf %156, %157 : vector<128x8xf32>
    %159 = vector.extract_strided_slice %158 {offsets = [0, 0], sizes = [8, 8], strides = [1, 1]} : vector<128x8xf32> to vector<8x8xf32>
    %c0_81 = arith.constant 0 : index
    %c0_82 = arith.constant 0 : index
    %160 = vector.load %arg24[%c0_81, %c0_82] : memref<8x8xf32, #tpu.memory_space<vmem>>, vector<8x8xf32>
    tpu.vector_store %arg24[%c0_81, %c0_82], %159 {strides = array<i32>} : memref<8x8xf32, #tpu.memory_space<vmem>>, vector<8x8xf32>,
    return
  }
  func.func @transform_0(%arg0: i32) -> (i32, i32) {
    %c0_i32 = arith.constant 0 : i32
    %c0_i32_0 = arith.constant 0 : i32
    return %arg0, %c0_i32 : i32, i32
  }
  func.func @transform_1(%arg0: i32) -> (i32, i32) {
    %c0_i32 = arith.constant 0 : i32
    %c0_i32_0 = arith.constant 0 : i32
    %c0_i32_1 = arith.constant 0 : i32
    return %c0_i32, %c0_i32_0 : i32, i32
  }
  func.func @transform_2(%arg0: i32) -> (i32, i32) {
    %c0_i32 = arith.constant 0 : i32
    %c0_i32_0 = arith.constant 0 : i32
    %c0_i32_1 = arith.constant 0 : i32
    return %c0_i32, %c0_i32_0 : i32, i32
  }
  func.func @transform_3(%arg0: i32) -> (i32, i32) {
    %c0_i32 = arith.constant 0 : i32
    %c0_i32_0 = arith.constant 0 : i32
    %c0_i32_1 = arith.constant 0 : i32
    return %c0_i32, %c0_i32_0 : i32, i32
  }
  func.func @transform_4(%arg0: i32) -> (i32, i32) {
    %c0_i32 = arith.constant 0 : i32
    %c0_i32_0 = arith.constant 0 : i32
    %c0_i32_1 = arith.constant 0 : i32
    return %c0_i32, %c0_i32_0 : i32, i32
  }
  func.func @transform_5(%arg0: i32) -> (i32, i32) {
    %c0_i32 = arith.constant 0 : i32
    %c0_i32_0 = arith.constant 0 : i32
    %c0_i32_1 = arith.constant 0 : i32
    return %c0_i32, %c0_i32_0 : i32, i32
  }
  func.func @transform_6(%arg0: i32) -> (i32, i32) {
    %c0_i32 = arith.constant 0 : i32
    %c0_i32_0 = arith.constant 0 : i32
    %c0_i32_1 = arith.constant 0 : i32
    return %c0_i32, %c0_i32_0 : i32, i32
  }
  func.func @transform_7(%arg0: i32) -> (i32, i32) {
    %c0_i32 = arith.constant 0 : i32
    %c0_i32_0 = arith.constant 0 : i32
    %c0_i32_1 = arith.constant 0 : i32
    return %c0_i32, %c0_i32_0 : i32, i32
  }
  func.func @transform_8(%arg0: i32) -> (i32, i32) {
    %c0_i32 = arith.constant 0 : i32
    %c0_i32_0 = arith.constant 0 : i32
    %c0_i32_1 = arith.constant 0 : i32
    return %c0_i32, %c0_i32_0 : i32, i32
  }
  func.func @transform_9(%arg0: i32) -> (i32, i32) {
    %c0_i32 = arith.constant 0 : i32
    %c0_i32_0 = arith.constant 0 : i32
    %c0_i32_1 = arith.constant 0 : i32
    return %c0_i32, %c0_i32_0 : i32, i32
  }
  func.func @transform_10(%arg0: i32) -> (i32, i32) {
    %c0_i32 = arith.constant 0 : i32
    %c0_i32_0 = arith.constant 0 : i32
    %c0_i32_1 = arith.constant 0 : i32
    return %c0_i32, %c0_i32_0 : i32, i32
  }
  func.func @transform_11(%arg0: i32) -> (i32, i32) {
    %c0_i32 = arith.constant 0 : i32
    %c0_i32_0 = arith.constant 0 : i32
    %c0_i32_1 = arith.constant 0 : i32
    return %c0_i32, %c0_i32_0 : i32, i32
  }
  func.func @transform_12(%arg0: i32) -> (i32, i32) {
    %c0_i32 = arith.constant 0 : i32
    %c0_i32_0 = arith.constant 0 : i32
    %c0_i32_1 = arith.constant 0 : i32
    return %c0_i32, %c0_i32_0 : i32, i32
  }
  func.func @transform_13(%arg0: i32) -> (i32, i32) {
    %c0_i32 = arith.constant 0 : i32
    %c0_i32_0 = arith.constant 0 : i32
    %c0_i32_1 = arith.constant 0 : i32
    return %c0_i32, %c0_i32_0 : i32, i32
  }
  func.func @transform_14(%arg0: i32) -> (i32, i32) {
    %c0_i32 = arith.constant 0 : i32
    %c0_i32_0 = arith.constant 0 : i32
    %c0_i32_1 = arith.constant 0 : i32
    return %c0_i32, %c0_i32_0 : i32, i32
  }
  func.func @transform_15(%arg0: i32) -> (i32, i32) {
    %c0_i32 = arith.constant 0 : i32
    %c0_i32_0 = arith.constant 0 : i32
    %c0_i32_1 = arith.constant 0 : i32
    return %c0_i32, %c0_i32_0 : i32, i32
  }
  func.func @transform_16(%arg0: i32) -> (i32, i32) {
    %c0_i32 = arith.constant 0 : i32
    %c0_i32_0 = arith.constant 0 : i32
    %c0_i32_1 = arith.constant 0 : i32
    return %c0_i32, %c0_i32_0 : i32, i32
  }
  func.func @transform_17(%arg0: i32) -> (i32, i32) {
    %c0_i32 = arith.constant 0 : i32
    %c0_i32_0 = arith.constant 0 : i32
    %c0_i32_1 = arith.constant 0 : i32
    return %c0_i32, %c0_i32_0 : i32, i32
  }
  func.func @transform_18(%arg0: i32) -> (i32, i32) {
    %c0_i32 = arith.constant 0 : i32
    %c0_i32_0 = arith.constant 0 : i32
    %c0_i32_1 = arith.constant 0 : i32
    return %c0_i32, %c0_i32_0 : i32, i32
  }
  func.func @transform_19(%arg0: i32) -> (i32, i32) {
    %c0_i32 = arith.constant 0 : i32
    %c0_i32_0 = arith.constant 0 : i32
    %c0_i32_1 = arith.constant 0 : i32
    return %c0_i32, %c0_i32_0 : i32, i32
  }
  func.func @transform_20(%arg0: i32) -> (i32, i32) {
    %c0_i32 = arith.constant 0 : i32
    %c0_i32_0 = arith.constant 0 : i32
    %c0_i32_1 = arith.constant 0 : i32
    return %c0_i32, %c0_i32_0 : i32, i32
  }
  func.func @transform_21(%arg0: i32) -> (i32, i32) {
    %c0_i32 = arith.constant 0 : i32
    %c0_i32_0 = arith.constant 0 : i32
    %c0_i32_1 = arith.constant 0 : i32
    return %c0_i32, %c0_i32_0 : i32, i32
  }
  func.func @transform_22(%arg0: i32) -> (i32, i32) {
    %c0_i32 = arith.constant 0 : i32
    %c0_i32_0 = arith.constant 0 : i32
    %c0_i32_1 = arith.constant 0 : i32
    return %c0_i32, %c0_i32_0 : i32, i32
  }
  func.func @transform_23(%arg0: i32) -> (i32, i32) {
    %c0_i32 = arith.constant 0 : i32
    %c0_i32_0 = arith.constant 0 : i32
    return %c0_i32, %arg0 : i32, i32
  }
}

</mosaic_0001>

<llo_original>
// kernel: tpu_custom_call.1
$region0: #{tpu_custom_call.1}
  #allocation0 [shape = 'u32[]', space=smem, size = 0x4, offset = 0x4, fixed_abs, tag = 'smem constant byte address 0x4 - core index']
  #allocation1 [shape = 'u32[144,128]{1,0:T(1,128)}', space=vmem, size = 0x12000, scoped, tag = 'internal scratch']
  %s0 = inlined_call_operand.hbm [shape: f32[8,512], index: 0, kind: input, shape index: {}]
  %s1 = inlined_call_operand.hbm [shape: bf16[512,768], index: 1, kind: input, shape index: {}]
  %s2 = inlined_call_operand.hbm [shape: f32[1,768], index: 2, kind: input, shape index: {}]
  %s3 = inlined_call_operand.hbm [shape: f32[1,768], index: 3, kind: input, shape index: {}]
  %s4 = inlined_call_operand.hbm [shape: f32[1,768], index: 4, kind: input, shape index: {}]
  %s5 = inlined_call_operand.hbm [shape: bf16[768,768], index: 5, kind: input, shape index: {}]
  %s6 = inlined_call_operand.hbm [shape: f32[1,768], index: 6, kind: input, shape index: {}]
  %s7 = inlined_call_operand.hbm [shape: f32[1,768], index: 7, kind: input, shape index: {}]
  %s8 = inlined_call_operand.hbm [shape: f32[1,768], index: 8, kind: input, shape index: {}]
  %s9 = inlined_call_operand.hbm [shape: bf16[768,768], index: 9, kind: input, shape index: {}]
  %s10 = inlined_call_operand.hbm [shape: f32[1,768], index: 10, kind: input, shape index: {}]
  %s11 = inlined_call_operand.hbm [shape: f32[1,768], index: 11, kind: input, shape index: {}]
  %s12 = inlined_call_operand.hbm [shape: f32[1,768], index: 12, kind: input, shape index: {}]
  %s13 = inlined_call_operand.hbm [shape: bf16[768,512], index: 13, kind: input, shape index: {}]
  %s14 = inlined_call_operand.hbm [shape: f32[1,512], index: 14, kind: input, shape index: {}]
  %s15 = inlined_call_operand.hbm [shape: f32[1,512], index: 15, kind: input, shape index: {}]
  %s16 = inlined_call_operand.hbm [shape: f32[1,512], index: 16, kind: input, shape index: {}]
  %s17 = inlined_call_operand.hbm [shape: bf16[512,128], index: 17, kind: input, shape index: {}]
  %s18 = inlined_call_operand.hbm [shape: f32[1,128], index: 18, kind: input, shape index: {}]
  %s19 = inlined_call_operand.hbm [shape: bf16[128,128], index: 19, kind: input, shape index: {}]
  %s20 = inlined_call_operand.hbm [shape: f32[1,128], index: 20, kind: input, shape index: {}]
  %s21 = inlined_call_operand.hbm [shape: bf16[128,128], index: 21, kind: input, shape index: {}]
  %s22 = inlined_call_operand.vmem [shape: f32[128,1], index: 22, kind: input, shape index: {}]
  %s23 = inlined_call_operand.hbm [shape: f32[8,8], index: 23, kind: output, shape index: {}]
  %s24 = sld [smem:[#allocation0]]
  $region190: #{tpu_custom_call.1} parent=0
    _
  %s26 = ssub.s32 1, %s24
  %s27 = scalar_select 0, %s26, %s24
  $region1: #{tpu_custom_call.1} parent=0
    #allocation2 [shape = 'u8[16384]{0}', space=vmem, size = 0x4000, scoped, tag = 'input window, operand 0, single buffered']
    #allocation3 [shape = 's32[1]{0}', space=sflag, size = 0x4, scoped, tag = 'scoped memory for tpu_custom_call.1']
    #allocation4 [shape = 's32[1]{0}', space=sflag, size = 0x4, scoped, tag = 'scoped memory for tpu_custom_call.1']
    #allocation5 [shape = 'u8[786432]{0}', space=vmem, size = 0xc0000, scoped, tag = 'input window, operand 1, single buffered']
    #allocation6 [shape = 's32[1]{0}', space=sflag, size = 0x4, scoped, tag = 'scoped memory for tpu_custom_call.1']
    #allocation7 [shape = 'u8[3072]{0}', space=vmem, size = 0xc00, scoped, tag = 'input window, operand 2, single buffered']
    #allocation8 [shape = 'u8[3072]{0}', space=vmem, size = 0xc00, scoped, tag = 'input window, operand 3, single buffered']
    #allocation9 [shape = 's32[1]{0}', space=sflag, size = 0x4, scoped, tag = 'scoped memory for tpu_custom_call.1']
    #allocation10 [shape = 'u8[3072]{0}', space=vmem, size = 0xc00, scoped, tag = 'input window, operand 4, single buffered']
    #allocation11 [shape = 'u8[1179648]{0}', space=vmem, size = 0x120000, scoped, tag = 'input window, operand 5, single buffered']
    #allocation12 [shape = 's32[1]{0}', space=sflag, size = 0x4, scoped, tag = 'scoped memory for tpu_custom_call.1']
    #allocation13 [shape = 'u8[3072]{0}', space=vmem, size = 0xc00, scoped, tag = 'input window, operand 6, single buffered']
    #allocation14 [shape = 'u8[3072]{0}', space=vmem, size = 0xc00, scoped, tag = 'input window, operand 7, single buffered']
    #allocation15 [shape = 's32[1]{0}', space=sflag, size = 0x4, scoped, tag = 'scoped memory for tpu_custom_call.1']
    #allocation16 [shape = 'u8[3072]{0}', space=vmem, size = 0xc00, scoped, tag = 'input window, operand 8, single buffered']
    #allocation17 [shape = 'u8[1179648]{0}', space=vmem, size = 0x120000, scoped, tag = 'input window, operand 9, single buffered']
    #allocation18 [shape = 's32[1]{0}', space=sflag, size = 0x4, scoped, tag = 'scoped memory for tpu_custom_call.1']
    #allocation19 [shape = 'u8[3072]{0}', space=vmem, size = 0xc00, scoped, tag = 'input window, operand 10, single buffered']
    #allocation20 [shape = 'u8[3072]{0}', space=vmem, size = 0xc00, scoped, tag = 'input window, operand 11, single buffered']
    #allocation21 [shape = 's32[1]{0}', space=sflag, size = 0x4, scoped, tag = 'scoped memory for tpu_custom_call.1']
    #allocation22 [shape = 'u8[3072]{0}', space=vmem, size = 0xc00, scoped, tag = 'input window, operand 12, single buffered']
    #allocation23 [shape = 'u8[786432]{0}', space=vmem, size = 0xc0000, scoped, tag = 'input window, operand 13, single buffered']
    #allocation24 [shape = 's32[1]{0}', space=sflag, size = 0x4, scoped, tag = 'scoped memory for tpu_custom_call.1']
    #allocation25 [shape = 'u8[2048]{0}', space=vmem, size = 0x800, scoped, tag = 'input window, operand 14, single buffered']
    #allocation26 [shape = 'u8[2048]{0}', space=vmem, size = 0x800, scoped, tag = 'input window, operand 15, single buffered']
    #allocation27 [shape = 's32[1]{0}', space=sflag, size = 0x4, scoped, tag = 'scoped memory for tpu_custom_call.1']
    #allocation28 [shape = 'u8[2048]{0}', space=vmem, size = 0x800, scoped, tag = 'input window, operand 16, single buffered']
    #allocation29 [shape = 'u8[131072]{0}', space=vmem, size = 0x20000, scoped, tag = 'input window, operand 17, single buffered']
    #allocation30 [shape = 's32[1]{0}', space=sflag, size = 0x4, scoped, tag = 'scoped memory for tpu_custom_call.1']
    #allocation31 [shape = 'u8[512]{0}', space=vmem, size = 0x400, scoped, tag = 'input window, operand 18, single buffered']
    #allocation32 [shape = 'u8[32768]{0}', space=vmem, size = 0x8000, scoped, tag = 'input window, operand 19, single buffered']
    #allocation33 [shape = 's32[1]{0}', space=sflag, size = 0x4, scoped, tag = 'scoped memory for tpu_custom_call.1']
    #allocation34 [shape = 'u8[512]{0}', space=vmem, size = 0x400, scoped, tag = 'input window, operand 20, single buffered']
    #allocation35 [shape = 'u8[32768]{0}', space=vmem, size = 0x8000, scoped, tag = 'input window, operand 21, single buffered']
    #allocation36 [shape = 's32[1]{0}', space=sflag, size = 0x4, scoped, tag = 'scoped memory for tpu_custom_call.1']
    #allocation37 [shape = 'u8[4096]{0}', space=vmem, size = 0x1000, scoped, tag = 'output window, operand 0, single buffered']
    %28 = vsyncpa [#allocation3], 0
    %29 = vsyncpa [#allocation6], 0
    %30 = vsyncpa [#allocation9], 0
    %31 = vsyncpa [#allocation12], 0
    %32 = vsyncpa [#allocation15], 0
    %33 = vsyncpa [#allocation18], 0
    %34 = vsyncpa [#allocation21], 0
    %35 = vsyncpa [#allocation24], 0
    %36 = vsyncpa [#allocation27], 0
    %37 = vsyncpa [#allocation30], 0
    %38 = vsyncpa [#allocation33], 0
    %39 = vsyncpa [#allocation36], 0
    %40 = vsyncpa [#allocation4], 0
    // Predicated region
    $region2: #{tpu_custom_call.1} parent=1 // pred_check
      _
    $region3: #{tpu_custom_call.1} parent=1 // pred_check_branch
      %42 = sbr.rel (0) target = $region5
    $region4: #{tpu_custom_call.1} parent=1 // pred_region
      %s44 = ssub.s32 512, 512
      %45 = vsyncadd [#allocation3], %s44
      %s47 = sshll.u32 [#allocation2], 4
      %s48 = int_to_ptr.vmem [resolvable:$true] %s47
      %50 = dma.hbm_to_vmem [thread:$0]  %s0, 512, %s48, [#allocation3]
    $region5: #{tpu_custom_call.1} parent=1 // pred_fallthru
      _
    // Predicated region
    $region6: #{tpu_custom_call.1} parent=1 // pred_check
      _
    $region7: #{tpu_custom_call.1} parent=1 // pred_check_branch
      %52 = sbr.rel (0) target = $region9
    $region8: #{tpu_custom_call.1} parent=1 // pred_region
      %s54 = ssub.s32 24576, 24576
      %55 = vsyncadd [#allocation6], %s54
      %s56 = sshll.u32 [#allocation5], 4
      %s57 = int_to_ptr.vmem [resolvable:$true] %s56
      %62 = dma.hbm_to_vmem [thread:$0]  %s1, 24576, %s57, [#allocation6], 384, 384, 24
    $region9: #{tpu_custom_call.1} parent=1 // pred_fallthru
      _
    // Predicated region
    $region10: #{tpu_custom_call.1} parent=1 // pred_check
      _
    $region11: #{tpu_custom_call.1} parent=1 // pred_check_branch
      %64 = sbr.rel (0) target = $region13
    $region12: #{tpu_custom_call.1} parent=1 // pred_region
      %s66 = ssub.s32 96, 96
      %67 = vsyncadd [#allocation6], %s66
      %s69 = sshll.u32 [#allocation7], 4
      %s70 = int_to_ptr.vmem [resolvable:$true] %s69
      %72 = dma.hbm_to_vmem [thread:$0]  %s2, 96, %s70, [#allocation6]
    $region13: #{tpu_custom_call.1} parent=1 // pred_fallthru
      _
    // Predicated region
    $region14: #{tpu_custom_call.1} parent=1 // pred_check
      _
    $region15: #{tpu_custom_call.1} parent=1 // pred_check_branch
      %74 = sbr.rel (0) target = $region17
    $region16: #{tpu_custom_call.1} parent=1 // pred_region
      %s76 = ssub.s32 96, 96
      %77 = vsyncadd [#allocation9], %s76
      %s79 = sshll.u32 [#allocation8], 4
      %s80 = int_to_ptr.vmem [resolvable:$true] %s79
      %82 = dma.hbm_to_vmem [thread:$0]  %s3, 96, %s80, [#allocation9]
    $region17: #{tpu_custom_call.1} parent=1 // pred_fallthru
      _
    // Predicated region
    $region18: #{tpu_custom_call.1} parent=1 // pred_check
      _
    $region19: #{tpu_custom_call.1} parent=1 // pred_check_branch
      %84 = sbr.rel (0) target = $region21
    $region20: #{tpu_custom_call.1} parent=1 // pred_region
      %s86 = ssub.s32 96, 96
      %87 = vsyncadd [#allocation9], %s86
      %s89 = sshll.u32 [#allocation10], 4
      %s90 = int_to_ptr.vmem [resolvable:$true] %s89
      %92 = dma.hbm_to_vmem [thread:$0]  %s4, 96, %s90, [#allocation9]
    $region21: #{tpu_custom_call.1} parent=1 // pred_fallthru
      _
    // Predicated region
    $region22: #{tpu_custom_call.1} parent=1 // pred_check
      _
    $region23: #{tpu_custom_call.1} parent=1 // pred_check_branch
      %94 = sbr.rel (0) target = $region25
    $region24: #{tpu_custom_call.1} parent=1 // pred_region
      %s96 = ssub.s32 36864, 36864
      %97 = vsyncadd [#allocation12], %s96
      %s98 = sshll.u32 [#allocation11], 4
      %s99 = int_to_ptr.vmem [resolvable:$true] %s98
      %104 = dma.hbm_to_vmem [thread:$0]  %s5, 36864, %s99, [#allocation12], 384, 384, 24
    $region25: #{tpu_custom_call.1} parent=1 // pred_fallthru
      _
    // Predicated region
    $region26: #{tpu_custom_call.1} parent=1 // pred_check
      _
    $region27: #{tpu_custom_call.1} parent=1 // pred_check_branch
      %106 = sbr.rel (0) target = $region29
    $region28: #{tpu_custom_call.1} parent=1 // pred_region
      %s108 = ssub.s32 96, 96
      %109 = vsyncadd [#allocation12], %s108
      %s111 = sshll.u32 [#allocation13], 4
      %s112 = int_to_ptr.vmem [resolvable:$true] %s111
      %114 = dma.hbm_to_vmem [thread:$0]  %s6, 96, %s112, [#allocation12]
    $region29: #{tpu_custom_call.1} parent=1 // pred_fallthru
      _
    // Predicated region
    $region30: #{tpu_custom_call.1} parent=1 // pred_check
      _
    $region31: #{tpu_custom_call.1} parent=1 // pred_check_branch
      %116 = sbr.rel (0) target = $region33
    $region32: #{tpu_custom_call.1} parent=1 // pred_region
      %s118 = ssub.s32 96, 96
      %119 = vsyncadd [#allocation15], %s118
      %s121 = sshll.u32 [#allocation14], 4
      %s122 = int_to_ptr.vmem [resolvable:$true] %s121
      %124 = dma.hbm_to_vmem [thread:$0]  %s7, 96, %s122, [#allocation15]
    $region33: #{tpu_custom_call.1} parent=1 // pred_fallthru
      _
    // Predicated region
    $region34: #{tpu_custom_call.1} parent=1 // pred_check
      _
    $region35: #{tpu_custom_call.1} parent=1 // pred_check_branch
      %126 = sbr.rel (0) target = $region37
    $region36: #{tpu_custom_call.1} parent=1 // pred_region
      %s128 = ssub.s32 96, 96
      %129 = vsyncadd [#allocation15], %s128
      %s131 = sshll.u32 [#allocation16], 4
      %s132 = int_to_ptr.vmem [resolvable:$true] %s131
      %134 = dma.hbm_to_vmem [thread:$0]  %s8, 96, %s132, [#allocation15]
    $region37: #{tpu_custom_call.1} parent=1 // pred_fallthru
      _
    // Predicated region
    $region38: #{tpu_custom_call.1} parent=1 // pred_check
      _
    $region39: #{tpu_custom_call.1} parent=1 // pred_check_branch
      %136 = sbr.rel (0) target = $region41
    $region40: #{tpu_custom_call.1} parent=1 // pred_region
      %s138 = ssub.s32 36864, 36864
      %139 = vsyncadd [#allocation18], %s138
      %s140 = sshll.u32 [#allocation17], 4
      %s141 = int_to_ptr.vmem [resolvable:$true] %s140
      %146 = dma.hbm_to_vmem [thread:$0]  %s9, 36864, %s141, [#allocation18], 384, 384, 24
    $region41: #{tpu_custom_call.1} parent=1 // pred_fallthru
      _
    // Predicated region
    $region42: #{tpu_custom_call.1} parent=1 // pred_check
      _
    $region43: #{tpu_custom_call.1} parent=1 // pred_check_branch
      %148 = sbr.rel (0) target = $region45
    $region44: #{tpu_custom_call.1} parent=1 // pred_region
      %s150 = ssub.s32 96, 96
      %151 = vsyncadd [#allocation18], %s150
      %s153 = sshll.u32 [#allocation19], 4
      %s154 = int_to_ptr.vmem [resolvable:$true] %s153
      %156 = dma.hbm_to_vmem [thread:$0]  %s10, 96, %s154, [#allocation18]
    $region45: #{tpu_custom_call.1} parent=1 // pred_fallthru
      _
    // Predicated region
    $region46: #{tpu_custom_call.1} parent=1 // pred_check
      _
    $region47: #{tpu_custom_call.1} parent=1 // pred_check_branch
      %158 = sbr.rel (0) target = $region49
    $region48: #{tpu_custom_call.1} parent=1 // pred_region
      %s160 = ssub.s32 96, 96
      %161 = vsyncadd [#allocation21], %s160
      %s163 = sshll.u32 [#allocation20], 4
      %s164 = int_to_ptr.vmem [resolvable:$true] %s163
      %166 = dma.hbm_to_vmem [thread:$0]  %s11, 96, %s164, [#allocation21]
    $region49: #{tpu_custom_call.1} parent=1 // pred_fallthru
      _
    // Predicated region
    $region50: #{tpu_custom_call.1} parent=1 // pred_check
      _
    $region51: #{tpu_custom_call.1} parent=1 // pred_check_branch
      %168 = sbr.rel (0) target = $region53
    $region52: #{tpu_custom_call.1} parent=1 // pred_region
      %s170 = ssub.s32 96, 96
      %171 = vsyncadd [#allocation21], %s170
      %s173 = sshll.u32 [#allocation22], 4
      %s174 = int_to_ptr.vmem [resolvable:$true] %s173
      %176 = dma.hbm_to_vmem [thread:$0]  %s12, 96, %s174, [#allocation21]
    $region53: #{tpu_custom_call.1} parent=1 // pred_fallthru
      _
    // Predicated region
    $region54: #{tpu_custom_call.1} parent=1 // pred_check
      _
    $region55: #{tpu_custom_call.1} parent=1 // pred_check_branch
      %178 = sbr.rel (0) target = $region57
    $region56: #{tpu_custom_call.1} parent=1 // pred_region
      %s180 = ssub.s32 24576, 24576
      %181 = vsyncadd [#allocation24], %s180
      %s182 = sshll.u32 [#allocation23], 4
      %s183 = int_to_ptr.vmem [resolvable:$true] %s182
      %188 = dma.hbm_to_vmem [thread:$0]  %s13, 24576, %s183, [#allocation24], 256, 256, 16
    $region57: #{tpu_custom_call.1} parent=1 // pred_fallthru
      _
    // Predicated region
    $region58: #{tpu_custom_call.1} parent=1 // pred_check
      _
    $region59: #{tpu_custom_call.1} parent=1 // pred_check_branch
      %190 = sbr.rel (0) target = $region61
    $region60: #{tpu_custom_call.1} parent=1 // pred_region
      %s192 = ssub.s32 64, 64
      %193 = vsyncadd [#allocation24], %s192
      %s195 = sshll.u32 [#allocation25], 4
      %s196 = int_to_ptr.vmem [resolvable:$true] %s195
      %198 = dma.hbm_to_vmem [thread:$0]  %s14, 64, %s196, [#allocation24]
    $region61: #{tpu_custom_call.1} parent=1 // pred_fallthru
      _
    // Predicated region
    $region62: #{tpu_custom_call.1} parent=1 // pred_check
      _
    $region63: #{tpu_custom_call.1} parent=1 // pred_check_branch
      %200 = sbr.rel (0) target = $region65
    $region64: #{tpu_custom_call.1} parent=1 // pred_region
      %s202 = ssub.s32 64, 64
      %203 = vsyncadd [#allocation27], %s202
      %s205 = sshll.u32 [#allocation26], 4
      %s206 = int_to_ptr.vmem [resolvable:$true] %s205
      %208 = dma.hbm_to_vmem [thread:$0]  %s15, 64, %s206, [#allocation27]
    $region65: #{tpu_custom_call.1} parent=1 // pred_fallthru
      _
    // Predicated region
    $region66: #{tpu_custom_call.1} parent=1 // pred_check
      _
    $region67: #{tpu_custom_call.1} parent=1 // pred_check_branch
      %210 = sbr.rel (0) target = $region69
    $region68: #{tpu_custom_call.1} parent=1 // pred_region
      %s212 = ssub.s32 64, 64
      %213 = vsyncadd [#allocation27], %s212
      %s215 = sshll.u32 [#allocation28], 4
      %s216 = int_to_ptr.vmem [resolvable:$true] %s215
      %218 = dma.hbm_to_vmem [thread:$0]  %s16, 64, %s216, [#allocation27]
    $region69: #{tpu_custom_call.1} parent=1 // pred_fallthru
      _
    // Predicated region
    $region70: #{tpu_custom_call.1} parent=1 // pred_check
      _
    $region71: #{tpu_custom_call.1} parent=1 // pred_check_branch
      %220 = sbr.rel (0) target = $region73
    $region72: #{tpu_custom_call.1} parent=1 // pred_region
      %s222 = ssub.s32 4096, 4096
      %223 = vsyncadd [#allocation30], %s222
      %s224 = sshll.u32 [#allocation29], 4
      %s225 = int_to_ptr.vmem [resolvable:$true] %s224
      %230 = dma.hbm_to_vmem [thread:$0]  %s17, 4096, %s225, [#allocation30], 64, 64, 4
    $region73: #{tpu_custom_call.1} parent=1 // pred_fallthru
      _
    // Predicated region
    $region74: #{tpu_custom_call.1} parent=1 // pred_check
      _
    $region75: #{tpu_custom_call.1} parent=1 // pred_check_branch
      %232 = sbr.rel (0) target = $region77
    $region76: #{tpu_custom_call.1} parent=1 // pred_region
      %s234 = ssub.s32 16, 16
      %235 = vsyncadd [#allocation30], %s234
      %s237 = sshll.u32 [#allocation31], 4
      %s238 = int_to_ptr.vmem [resolvable:$true] %s237
      %240 = dma.hbm_to_vmem [thread:$0]  %s18, 16, %s238, [#allocation30]
    $region77: #{tpu_custom_call.1} parent=1 // pred_fallthru
      _
    // Predicated region
    $region78: #{tpu_custom_call.1} parent=1 // pred_check
      _
    $region79: #{tpu_custom_call.1} parent=1 // pred_check_branch
      %242 = sbr.rel (0) target = $region81
    $region80: #{tpu_custom_call.1} parent=1 // pred_region
      %s244 = ssub.s32 1024, 1024
      %245 = vsyncadd [#allocation33], %s244
      %s246 = sshll.u32 [#allocation32], 4
      %s247 = int_to_ptr.vmem [resolvable:$true] %s246
      %252 = dma.hbm_to_vmem [thread:$0]  %s19, 1024, %s247, [#allocation33], 64, 64, 4
    $region81: #{tpu_custom_call.1} parent=1 // pred_fallthru
      _
    // Predicated region
    $region82: #{tpu_custom_call.1} parent=1 // pred_check
      _
    $region83: #{tpu_custom_call.1} parent=1 // pred_check_branch
      %254 = sbr.rel (0) target = $region85
    $region84: #{tpu_custom_call.1} parent=1 // pred_region
      %s256 = ssub.s32 16, 16
      %257 = vsyncadd [#allocation33], %s256
      %s259 = sshll.u32 [#allocation34], 4
      %s260 = int_to_ptr.vmem [resolvable:$true] %s259
      %262 = dma.hbm_to_vmem [thread:$0]  %s20, 16, %s260, [#allocation33]
    $region85: #{tpu_custom_call.1} parent=1 // pred_fallthru
      _
    // Predicated region
    $region86: #{tpu_custom_call.1} parent=1 // pred_check
      _
    $region87: #{tpu_custom_call.1} parent=1 // pred_check_branch
      %264 = sbr.rel (0) target = $region89
    $region88: #{tpu_custom_call.1} parent=1 // pred_region
      %s266 = ssub.s32 1024, 1024
      %267 = vsyncadd [#allocation36], %s266
      %s268 = sshll.u32 [#allocation35], 4
      %s269 = int_to_ptr.vmem [resolvable:$true] %s268
      %274 = dma.hbm_to_vmem [thread:$0]  %s21, 1024, %s269, [#allocation36], 64, 64, 4
    $region89: #{tpu_custom_call.1} parent=1 // pred_fallthru
      _
    // Predicated region
    $region90: #{tpu_custom_call.1} parent=1 // pred_check
      _
    $region91: #{tpu_custom_call.1} parent=1 // pred_check_branch
      %276 = sbr.rel (0) target = $region93
    $region92: #{tpu_custom_call.1} parent=1 // pred_region
      _
    $region93: #{tpu_custom_call.1} parent=1 // pred_fallthru
      _
    // Predicated region
    $region94: #{tpu_custom_call.1} parent=1 // pred_check
      _
    $region95: #{tpu_custom_call.1} parent=1 // pred_check_branch
      %278 = sbr.rel (0) target = $region97
    $region96: #{tpu_custom_call.1} parent=1 // pred_region
      %279 = dma.done [#allocation3], 512
    $region97: #{tpu_custom_call.1} parent=1 // pred_fallthru
      _
    // Predicated region
    $region98: #{tpu_custom_call.1} parent=1 // pred_check
      _
    $region99: #{tpu_custom_call.1} parent=1 // pred_check_branch
      %281 = sbr.rel (0) target = $region101
    $region100: #{tpu_custom_call.1} parent=1 // pred_region
      %282 = dma.done [#allocation6], 24576
    $region101: #{tpu_custom_call.1} parent=1 // pred_fallthru
      _
    // Predicated region
    $region102: #{tpu_custom_call.1} parent=1 // pred_check
      _
    $region103: #{tpu_custom_call.1} parent=1 // pred_check_branch
      %284 = sbr.rel (0) target = $region105
    $region104: #{tpu_custom_call.1} parent=1 // pred_region
      %285 = dma.done [#allocation6], 96
    $region105: #{tpu_custom_call.1} parent=1 // pred_fallthru
      _
    // Predicated region
    $region106: #{tpu_custom_call.1} parent=1 // pred_check
      _
    $region107: #{tpu_custom_call.1} parent=1 // pred_check_branch
      %287 = sbr.rel (0) target = $region109
    $region108: #{tpu_custom_call.1} parent=1 // pred_region
      %288 = dma.done [#allocation9], 96
    $region109: #{tpu_custom_call.1} parent=1 // pred_fallthru
      _
    // Predicated region
    $region110: #{tpu_custom_call.1} parent=1 // pred_check
      _
    $region111: #{tpu_custom_call.1} parent=1 // pred_check_branch
      %290 = sbr.rel (0) target = $region113
    $region112: #{tpu_custom_call.1} parent=1 // pred_region
      %291 = dma.done [#allocation9], 96
    $region113: #{tpu_custom_call.1} parent=1 // pred_fallthru
      _
    // Predicated region
    $region114: #{tpu_custom_call.1} parent=1 // pred_check
      _
    $region115: #{tpu_custom_call.1} parent=1 // pred_check_branch
      %293 = sbr.rel (0) target = $region117
    $region116: #{tpu_custom_call.1} parent=1 // pred_region
      %294 = dma.done [#allocation12], 36864
    $region117: #{tpu_custom_call.1} parent=1 // pred_fallthru
      _
    // Predicated region
    $region118: #{tpu_custom_call.1} parent=1 // pred_check
      _
    $region119: #{tpu_custom_call.1} parent=1 // pred_check_branch
      %296 = sbr.rel (0) target = $region121
    $region120: #{tpu_custom_call.1} parent=1 // pred_region
      %297 = dma.done [#allocation12], 96
    $region121: #{tpu_custom_call.1} parent=1 // pred_fallthru
      _
    // Predicated region
    $region122: #{tpu_custom_call.1} parent=1 // pred_check
      _
    $region123: #{tpu_custom_call.1} parent=1 // pred_check_branch
      %299 = sbr.rel (0) target = $region125
    $region124: #{tpu_custom_call.1} parent=1 // pred_region
      %300 = dma.done [#allocation15], 96
    $region125: #{tpu_custom_call.1} parent=1 // pred_fallthru
      _
    // Predicated region
    $region126: #{tpu_custom_call.1} parent=1 // pred_check
      _
    $region127: #{tpu_custom_call.1} parent=1 // pred_check_branch
      %302 = sbr.rel (0) target = $region129
    $region128: #{tpu_custom_call.1} parent=1 // pred_region
      %303 = dma.done [#allocation15], 96
    $region129: #{tpu_custom_call.1} parent=1 // pred_fallthru
      _
    // Predicated region
    $region130: #{tpu_custom_call.1} parent=1 // pred_check
      _
    $region131: #{tpu_custom_call.1} parent=1 // pred_check_branch
      %305 = sbr.rel (0) target = $region133
    $region132: #{tpu_custom_call.1} parent=1 // pred_region
      %306 = dma.done [#allocation18], 36864
    $region133: #{tpu_custom_call.1} parent=1 // pred_fallthru
      _
    // Predicated region
    $region134: #{tpu_custom_call.1} parent=1 // pred_check
      _
    $region135: #{tpu_custom_call.1} parent=1 // pred_check_branch
      %308 = sbr.rel (0) target = $region137
    $region136: #{tpu_custom_call.1} parent=1 // pred_region
      %309 = dma.done [#allocation18], 96
    $region137: #{tpu_custom_call.1} parent=1 // pred_fallthru
      _
    // Predicated region
    $region138: #{tpu_custom_call.1} parent=1 // pred_check
      _
    $region139: #{tpu_custom_call.1} parent=1 // pred_check_branch
      %311 = sbr.rel (0) target = $region141
    $region140: #{tpu_custom_call.1} parent=1 // pred_region
      %312 = dma.done [#allocation21], 96
    $region141: #{tpu_custom_call.1} parent=1 // pred_fallthru
      _
    // Predicated region
    $region142: #{tpu_custom_call.1} parent=1 // pred_check
      _
    $region143: #{tpu_custom_call.1} parent=1 // pred_check_branch
      %314 = sbr.rel (0) target = $region145
    $region144: #{tpu_custom_call.1} parent=1 // pred_region
      %315 = dma.done [#allocation21], 96
    $region145: #{tpu_custom_call.1} parent=1 // pred_fallthru
      _
    // Predicated region
    $region146: #{tpu_custom_call.1} parent=1 // pred_check
      _
    $region147: #{tpu_custom_call.1} parent=1 // pred_check_branch
      %317 = sbr.rel (0) target = $region149
    $region148: #{tpu_custom_call.1} parent=1 // pred_region
      %318 = dma.done [#allocation24], 24576
    $region149: #{tpu_custom_call.1} parent=1 // pred_fallthru
      _
    // Predicated region
    $region150: #{tpu_custom_call.1} parent=1 // pred_check
      _
    $region151: #{tpu_custom_call.1} parent=1 // pred_check_branch
      %320 = sbr.rel (0) target = $region153
    $region152: #{tpu_custom_call.1} parent=1 // pred_region
      %321 = dma.done [#allocation24], 64
    $region153: #{tpu_custom_call.1} parent=1 // pred_fallthru
      _
    // Predicated region
    $region154: #{tpu_custom_call.1} parent=1 // pred_check
      _
    $region155: #{tpu_custom_call.1} parent=1 // pred_check_branch
      %323 = sbr.rel (0) target = $region157
    $region156: #{tpu_custom_call.1} parent=1 // pred_region
      %324 = dma.done [#allocation27], 64
    $region157: #{tpu_custom_call.1} parent=1 // pred_fallthru
      _
    // Predicated region
    $region158: #{tpu_custom_call.1} parent=1 // pred_check
      _
    $region159: #{tpu_custom_call.1} parent=1 // pred_check_branch
      %326 = sbr.rel (0) target = $region161
    $region160: #{tpu_custom_call.1} parent=1 // pred_region
      %327 = dma.done [#allocation27], 64
    $region161: #{tpu_custom_call.1} parent=1 // pred_fallthru
      _
    // Predicated region
    $region162: #{tpu_custom_call.1} parent=1 // pred_check
      _
    $region163: #{tpu_custom_call.1} parent=1 // pred_check_branch
      %329 = sbr.rel (0) target = $region165
    $region164: #{tpu_custom_call.1} parent=1 // pred_region
      %330 = dma.done [#allocation30], 4096
    $region165: #{tpu_custom_call.1} parent=1 // pred_fallthru
      _
    // Predicated region
    $region166: #{tpu_custom_call.1} parent=1 // pred_check
      _
    $region167: #{tpu_custom_call.1} parent=1 // pred_check_branch
      %332 = sbr.rel (0) target = $region169
    $region168: #{tpu_custom_call.1} parent=1 // pred_region
      %333 = dma.done [#allocation30], 16
    $region169: #{tpu_custom_call.1} parent=1 // pred_fallthru
      _
    // Predicated region
    $region170: #{tpu_custom_call.1} parent=1 // pred_check
      _
    $region171: #{tpu_custom_call.1} parent=1 // pred_check_branch
      %335 = sbr.rel (0) target = $region173
    $region172: #{tpu_custom_call.1} parent=1 // pred_region
      %336 = dma.done [#allocation33], 1024
    $region173: #{tpu_custom_call.1} parent=1 // pred_fallthru
      _
    // Predicated region
    $region174: #{tpu_custom_call.1} parent=1 // pred_check
      _
    $region175: #{tpu_custom_call.1} parent=1 // pred_check_branch
      %338 = sbr.rel (0) target = $region177
    $region176: #{tpu_custom_call.1} parent=1 // pred_region
      %339 = dma.done [#allocation33], 16
    $region177: #{tpu_custom_call.1} parent=1 // pred_fallthru
      _
    // Predicated region
    $region178: #{tpu_custom_call.1} parent=1 // pred_check
      _
    $region179: #{tpu_custom_call.1} parent=1 // pred_check_branch
      %341 = sbr.rel (0) target = $region181
    $region180: #{tpu_custom_call.1} parent=1 // pred_region
      %342 = dma.done [#allocation36], 1024
    $region181: #{tpu_custom_call.1} parent=1 // pred_fallthru
      _
    %v344 = vld [vmem:[#allocation2] sm:$0xff]
    %v345 = vld [vmem:[#allocation2 + $0x8] sm:$0xff]
    %v346 = vld [vmem:[#allocation2 + $0x10] sm:$0xff]
    %v347 = vld [vmem:[#allocation2 + $0x18] sm:$0xff]
    %v348 = vpack.c.bf16 %v344, %v344
    %v349 = vpack.c.bf16 %v345, %v345
    %v350 = vpack.c.bf16 %v346, %v346
    %v351 = vpack.c.bf16 %v347, %v347
    %v352 = vld [vmem:[#allocation5] sm:$0xff]
    %v353 = vld [vmem:[#allocation5 + $0x8] sm:$0xff]
    %v354 = vld [vmem:[#allocation5 + $0x10] sm:$0xff]
    %v355 = vld [vmem:[#allocation5 + $0x18] sm:$0xff]
    %v356 = vld [vmem:[#allocation5 + $0x20] sm:$0xff]
    %v357 = vld [vmem:[#allocation5 + $0x28] sm:$0xff]
    %v358 = vld [vmem:[#allocation5 + $0x30] sm:$0xff]
    %v359 = vld [vmem:[#allocation5 + $0x38] sm:$0xff]
    %v360 = vld [vmem:[#allocation5 + $0x40] sm:$0xff]
    %v361 = vld [vmem:[#allocation5 + $0x48] sm:$0xff]
    %v362 = vld [vmem:[#allocation5 + $0x50] sm:$0xff]
    %v363 = vld [vmem:[#allocation5 + $0x58] sm:$0xff]
    %v364 = vld [vmem:[#allocation5 + $0x60] sm:$0xff]
    %v365 = vld [vmem:[#allocation5 + $0x68] sm:$0xff]
    %v366 = vld [vmem:[#allocation5 + $0x70] sm:$0xff]
    %v367 = vld [vmem:[#allocation5 + $0x78] sm:$0xff]
    %v368 = vld [vmem:[#allocation5 + $0x80] sm:$0xff]
    %v369 = vld [vmem:[#allocation5 + $0x88] sm:$0xff]
    %v370 = vld [vmem:[#allocation5 + $0x90] sm:$0xff]
    %v371 = vld [vmem:[#allocation5 + $0x98] sm:$0xff]
    %v372 = vld [vmem:[#allocation5 + $0xa0] sm:$0xff]
    %v373 = vld [vmem:[#allocation5 + $0xa8] sm:$0xff]
    %v374 = vld [vmem:[#allocation5 + $0xb0] sm:$0xff]
    %v375 = vld [vmem:[#allocation5 + $0xb8] sm:$0xff]
    %v376 = vld [vmem:[#allocation5 + $0xc0] sm:$0xff]
    %v377 = vld [vmem:[#allocation5 + $0xc8] sm:$0xff]
    %v378 = vld [vmem:[#allocation5 + $0xd0] sm:$0xff]
    %v379 = vld [vmem:[#allocation5 + $0xd8] sm:$0xff]
    %v380 = vld [vmem:[#allocation5 + $0xe0] sm:$0xff]
    %v381 = vld [vmem:[#allocation5 + $0xe8] sm:$0xff]
    %v382 = vld [vmem:[#allocation5 + $0xf0] sm:$0xff]
    %v383 = vld [vmem:[#allocation5 + $0xf8] sm:$0xff]
    %v384 = vld [vmem:[#allocation5 + $0x100] sm:$0xff]
    %v385 = vld [vmem:[#allocation5 + $0x108] sm:$0xff]
    %v386 = vld [vmem:[#allocation5 + $0x110] sm:$0xff]
    %v387 = vld [vmem:[#allocation5 + $0x118] sm:$0xff]
    %v388 = vld [vmem:[#allocation5 + $0x120] sm:$0xff]
    %v389 = vld [vmem:[#allocation5 + $0x128] sm:$0xff]
    %v390 = vld [vmem:[#allocation5 + $0x130] sm:$0xff]
    %v391 = vld [vmem:[#allocation5 + $0x138] sm:$0xff]
    %v392 = vld [vmem:[#allocation5 + $0x140] sm:$0xff]
    %v393 = vld [vmem:[#allocation5 + $0x148] sm:$0xff]
    %v394 = vld [vmem:[#allocation5 + $0x150] sm:$0xff]
    %v395 = vld [vmem:[#allocation5 + $0x158] sm:$0xff]
    %v396 = vld [vmem:[#allocation5 + $0x160] sm:$0xff]
    %v397 = vld [vmem:[#allocation5 + $0x168] sm:$0xff]
    %v398 = vld [vmem:[#allocation5 + $0x170] sm:$0xff]
    %v399 = vld [vmem:[#allocation5 + $0x178] sm:$0xff]
    %v400 = vld [vmem:[#allocation5 + $0x180] sm:$0xff]
    %v401 = vld [vmem:[#allocation5 + $0x188] sm:$0xff]
    %v402 = vld [vmem:[#allocation5 + $0x190] sm:$0xff]
    %v403 = vld [vmem:[#allocation5 + $0x198] sm:$0xff]
    %v404 = vld [vmem:[#allocation5 + $0x1a0] sm:$0xff]
    %v405 = vld [vmem:[#allocation5 + $0x1a8] sm:$0xff]
    %v406 = vld [vmem:[#allocation5 + $0x1b0] sm:$0xff]
    %v407 = vld [vmem:[#allocation5 + $0x1b8] sm:$0xff]
    %v408 = vld [vmem:[#allocation5 + $0x1c0] sm:$0xff]
    %v409 = vld [vmem:[#allocation5 + $0x1c8] sm:$0xff]
    %v410 = vld [vmem:[#allocation5 + $0x1d0] sm:$0xff]
    %v411 = vld [vmem:[#allocation5 + $0x1d8] sm:$0xff]
    %v412 = vld [vmem:[#allocation5 + $0x1e0] sm:$0xff]
    %v413 = vld [vmem:[#allocation5 + $0x1e8] sm:$0xff]
    %v414 = vld [vmem:[#allocation5 + $0x1f0] sm:$0xff]
    %v415 = vld [vmem:[#allocation5 + $0x1f8] sm:$0xff]
    %v416 = vld [vmem:[#allocation5 + $0x200] sm:$0xff]
    %v417 = vld [vmem:[#allocation5 + $0x208] sm:$0xff]
    %v418 = vld [vmem:[#allocation5 + $0x210] sm:$0xff]
    %v419 = vld [vmem:[#allocation5 + $0x218] sm:$0xff]
    %v420 = vld [vmem:[#allocation5 + $0x220] sm:$0xff]
    %v421 = vld [vmem:[#allocation5 + $0x228] sm:$0xff]
    %v422 = vld [vmem:[#allocation5 + $0x230] sm:$0xff]
    %v423 = vld [vmem:[#allocation5 + $0x238] sm:$0xff]
    %v424 = vld [vmem:[#allocation5 + $0x240] sm:$0xff]
    %v425 = vld [vmem:[#allocation5 + $0x248] sm:$0xff]
    %v426 = vld [vmem:[#allocation5 + $0x250] sm:$0xff]
    %v427 = vld [vmem:[#allocation5 + $0x258] sm:$0xff]
    %v428 = vld [vmem:[#allocation5 + $0x260] sm:$0xff]
    %v429 = vld [vmem:[#allocation5 + $0x268] sm:$0xff]
    %v430 = vld [vmem:[#allocation5 + $0x270] sm:$0xff]
    %v431 = vld [vmem:[#allocation5 + $0x278] sm:$0xff]
    %v432 = vld [vmem:[#allocation5 + $0x280] sm:$0xff]
    %v433 = vld [vmem:[#allocation5 + $0x288] sm:$0xff]
    %v434 = vld [vmem:[#allocation5 + $0x290] sm:$0xff]
    %v435 = vld [vmem:[#allocation5 + $0x298] sm:$0xff]
    %v436 = vld [vmem:[#allocation5 + $0x2a0] sm:$0xff]
    %v437 = vld [vmem:[#allocation5 + $0x2a8] sm:$0xff]
    %v438 = vld [vmem:[#allocation5 + $0x2b0] sm:$0xff]
    %v439 = vld [vmem:[#allocation5 + $0x2b8] sm:$0xff]
    %v440 = vld [vmem:[#allocation5 + $0x2c0] sm:$0xff]
    %v441 = vld [vmem:[#allocation5 + $0x2c8] sm:$0xff]
    %v442 = vld [vmem:[#allocation5 + $0x2d0] sm:$0xff]
    %v443 = vld [vmem:[#allocation5 + $0x2d8] sm:$0xff]
    %v444 = vld [vmem:[#allocation5 + $0x2e0] sm:$0xff]
    %v445 = vld [vmem:[#allocation5 + $0x2e8] sm:$0xff]
    %v446 = vld [vmem:[#allocation5 + $0x2f0] sm:$0xff]
    %v447 = vld [vmem:[#allocation5 + $0x2f8] sm:$0xff]
    %v448 = vld [vmem:[#allocation5 + $0x300] sm:$0xff]
    %v449 = vld [vmem:[#allocation5 + $0x308] sm:$0xff]
    %v450 = vld [vmem:[#allocation5 + $0x310] sm:$0xff]
    %v451 = vld [vmem:[#allocation5 + $0x318] sm:$0xff]
    %v452 = vld [vmem:[#allocation5 + $0x320] sm:$0xff]
    %v453 = vld [vmem:[#allocation5 + $0x328] sm:$0xff]
    %v454 = vld [vmem:[#allocation5 + $0x330] sm:$0xff]
    %v455 = vld [vmem:[#allocation5 + $0x338] sm:$0xff]
    %v456 = vld [vmem:[#allocation5 + $0x340] sm:$0xff]
    %v457 = vld [vmem:[#allocation5 + $0x348] sm:$0xff]
    %v458 = vld [vmem:[#allocation5 + $0x350] sm:$0xff]
    %v459 = vld [vmem:[#allocation5 + $0x358] sm:$0xff]
    %v460 = vld [vmem:[#allocation5 + $0x360] sm:$0xff]
    %v461 = vld [vmem:[#allocation5 + $0x368] sm:$0xff]
    %v462 = vld [vmem:[#allocation5 + $0x370] sm:$0xff]
    %v463 = vld [vmem:[#allocation5 + $0x378] sm:$0xff]
    %v464 = vld [vmem:[#allocation5 + $0x380] sm:$0xff]
    %v465 = vld [vmem:[#allocation5 + $0x388] sm:$0xff]
    %v466 = vld [vmem:[#allocation5 + $0x390] sm:$0xff]
    %v467 = vld [vmem:[#allocation5 + $0x398] sm:$0xff]
    %v468 = vld [vmem:[#allocation5 + $0x3a0] sm:$0xff]
    %v469 = vld [vmem:[#allocation5 + $0x3a8] sm:$0xff]
    %v470 = vld [vmem:[#allocation5 + $0x3b0] sm:$0xff]
    %v471 = vld [vmem:[#allocation5 + $0x3b8] sm:$0xff]
    %v472 = vld [vmem:[#allocation5 + $0x3c0] sm:$0xff]
    %v473 = vld [vmem:[#allocation5 + $0x3c8] sm:$0xff]
    %v474 = vld [vmem:[#allocation5 + $0x3d0] sm:$0xff]
    %v475 = vld [vmem:[#allocation5 + $0x3d8] sm:$0xff]
    %v476 = vld [vmem:[#allocation5 + $0x3e0] sm:$0xff]
    %v477 = vld [vmem:[#allocation5 + $0x3e8] sm:$0xff]
    %v478 = vld [vmem:[#allocation5 + $0x3f0] sm:$0xff]
    %v479 = vld [vmem:[#allocation5 + $0x3f8] sm:$0xff]
    %v480 = vld [vmem:[#allocation5 + $0x400] sm:$0xff]
    %v481 = vld [vmem:[#allocation5 + $0x408] sm:$0xff]
    %v482 = vld [vmem:[#allocation5 + $0x410] sm:$0xff]
    %v483 = vld [vmem:[#allocation5 + $0x418] sm:$0xff]
    %v484 = vld [vmem:[#allocation5 + $0x420] sm:$0xff]
    %v485 = vld [vmem:[#allocation5 + $0x428] sm:$0xff]
    %v486 = vld [vmem:[#allocation5 + $0x430] sm:$0xff]
    %v487 = vld [vmem:[#allocation5 + $0x438] sm:$0xff]
    %v488 = vld [vmem:[#allocation5 + $0x440] sm:$0xff]
    %v489 = vld [vmem:[#allocation5 + $0x448] sm:$0xff]
    %v490 = vld [vmem:[#allocation5 + $0x450] sm:$0xff]
    %v491 = vld [vmem:[#allocation5 + $0x458] sm:$0xff]
    %v492 = vld [vmem:[#allocation5 + $0x460] sm:$0xff]
    %v493 = vld [vmem:[#allocation5 + $0x468] sm:$0xff]
    %v494 = vld [vmem:[#allocation5 + $0x470] sm:$0xff]
    %v495 = vld [vmem:[#allocation5 + $0x478] sm:$0xff]
    %v496 = vld [vmem:[#allocation5 + $0x480] sm:$0xff]
    %v497 = vld [vmem:[#allocation5 + $0x488] sm:$0xff]
    %v498 = vld [vmem:[#allocation5 + $0x490] sm:$0xff]
    %v499 = vld [vmem:[#allocation5 + $0x498] sm:$0xff]
    %v500 = vld [vmem:[#allocation5 + $0x4a0] sm:$0xff]
    %v501 = vld [vmem:[#allocation5 + $0x4a8] sm:$0xff]
    %v502 = vld [vmem:[#allocation5 + $0x4b0] sm:$0xff]
    %v503 = vld [vmem:[#allocation5 + $0x4b8] sm:$0xff]
    %v504 = vld [vmem:[#allocation5 + $0x4c0] sm:$0xff]
    %v505 = vld [vmem:[#allocation5 + $0x4c8] sm:$0xff]
    %v506 = vld [vmem:[#allocation5 + $0x4d0] sm:$0xff]
    %v507 = vld [vmem:[#allocation5 + $0x4d8] sm:$0xff]
    %v508 = vld [vmem:[#allocation5 + $0x4e0] sm:$0xff]
    %v509 = vld [vmem:[#allocation5 + $0x4e8] sm:$0xff]
    %v510 = vld [vmem:[#allocation5 + $0x4f0] sm:$0xff]
    %v511 = vld [vmem:[#allocation5 + $0x4f8] sm:$0xff]
    %v512 = vld [vmem:[#allocation5 + $0x500] sm:$0xff]
    %v513 = vld [vmem:[#allocation5 + $0x508] sm:$0xff]
    %v514 = vld [vmem:[#allocation5 + $0x510] sm:$0xff]
    %v515 = vld [vmem:[#allocation5 + $0x518] sm:$0xff]
    %v516 = vld [vmem:[#allocation5 + $0x520] sm:$0xff]
    %v517 = vld [vmem:[#allocation5 + $0x528] sm:$0xff]
    %v518 = vld [vmem:[#allocation5 + $0x530] sm:$0xff]
    %v519 = vld [vmem:[#allocation5 + $0x538] sm:$0xff]
    %v520 = vld [vmem:[#allocation5 + $0x540] sm:$0xff]
    %v521 = vld [vmem:[#allocation5 + $0x548] sm:$0xff]
    %v522 = vld [vmem:[#allocation5 + $0x550] sm:$0xff]
    %v523 = vld [vmem:[#allocation5 + $0x558] sm:$0xff]
    %v524 = vld [vmem:[#allocation5 + $0x560] sm:$0xff]
    %v525 = vld [vmem:[#allocation5 + $0x568] sm:$0xff]
    %v526 = vld [vmem:[#allocation5 + $0x570] sm:$0xff]
    %v527 = vld [vmem:[#allocation5 + $0x578] sm:$0xff]
    %v528 = vld [vmem:[#allocation5 + $0x580] sm:$0xff]
    %v529 = vld [vmem:[#allocation5 + $0x588] sm:$0xff]
    %v530 = vld [vmem:[#allocation5 + $0x590] sm:$0xff]
    %v531 = vld [vmem:[#allocation5 + $0x598] sm:$0xff]
    %v532 = vld [vmem:[#allocation5 + $0x5a0] sm:$0xff]
    %v533 = vld [vmem:[#allocation5 + $0x5a8] sm:$0xff]
    %v534 = vld [vmem:[#allocation5 + $0x5b0] sm:$0xff]
    %v535 = vld [vmem:[#allocation5 + $0x5b8] sm:$0xff]
    %v536 = vld [vmem:[#allocation5 + $0x5c0] sm:$0xff]
    %v537 = vld [vmem:[#allocation5 + $0x5c8] sm:$0xff]
    %v538 = vld [vmem:[#allocation5 + $0x5d0] sm:$0xff]
    %v539 = vld [vmem:[#allocation5 + $0x5d8] sm:$0xff]
    %v540 = vld [vmem:[#allocation5 + $0x5e0] sm:$0xff]
    %v541 = vld [vmem:[#allocation5 + $0x5e8] sm:$0xff]
    %v542 = vld [vmem:[#allocation5 + $0x5f0] sm:$0xff]
    %v543 = vld [vmem:[#allocation5 + $0x5f8] sm:$0xff]
    %v544 = vld [vmem:[#allocation7] sm:$0x3f]
    %v546 = vlaneseq
    %v547 = vshrl.u32 %v546, 7
    %v548 = vsub.s32 0, %v547
    %v549 = vrot.slane %v544, %v548
    %v550 = vlaneseq
    %v551 = vshrl.u32 %v550, 7
    %v552 = vsub.s32 1, %v551
    %v553 = vrot.slane %v544, %v552
    %v554 = vlaneseq
    %v555 = vshrl.u32 %v554, 7
    %v556 = vsub.s32 2, %v555
    %v557 = vrot.slane %v544, %v556
    %v558 = vlaneseq
    %v559 = vshrl.u32 %v558, 7
    %v560 = vsub.s32 3, %v559
    %v561 = vrot.slane %v544, %v560
    %v562 = vlaneseq
    %v563 = vshrl.u32 %v562, 7
    %v564 = vsub.s32 4, %v563
    %v565 = vrot.slane %v544, %v564
    %v566 = vlaneseq
    %v567 = vshrl.u32 %v566, 7
    %v568 = vsub.s32 5, %v567
    %v569 = vrot.slane %v544, %v568
    %v768 = vunpack.c.l.b16 %v352
    %v769 = vunpack.c.h.b16 %v352
    %v770 = vunpack.c.l.b16 %v353
    %v771 = vunpack.c.h.b16 %v353
    %v772 = vunpack.c.l.b16 %v354
    %v773 = vunpack.c.h.b16 %v354
    %v774 = vunpack.c.l.b16 %v355
    %v775 = vunpack.c.h.b16 %v355
    %v776 = vunpack.c.l.b16 %v356
    %v777 = vunpack.c.h.b16 %v356
    %v778 = vunpack.c.l.b16 %v357
    %v779 = vunpack.c.h.b16 %v357
    %v780 = vunpack.c.l.b16 %v358
    %v781 = vunpack.c.h.b16 %v358
    %v782 = vunpack.c.l.b16 %v359
    %v783 = vunpack.c.h.b16 %v359
    %v784 = vunpack.c.l.b16 %v360
    %v785 = vunpack.c.h.b16 %v360
    %v786 = vunpack.c.l.b16 %v361
    %v787 = vunpack.c.h.b16 %v361
    %v788 = vunpack.c.l.b16 %v362
    %v789 = vunpack.c.h.b16 %v362
    %v790 = vunpack.c.l.b16 %v363
    %v791 = vunpack.c.h.b16 %v363
    %v792 = vunpack.c.l.b16 %v364
    %v793 = vunpack.c.h.b16 %v364
    %v794 = vunpack.c.l.b16 %v365
    %v795 = vunpack.c.h.b16 %v365
    %v796 = vunpack.c.l.b16 %v366
    %v797 = vunpack.c.h.b16 %v366
    %v798 = vunpack.c.l.b16 %v367
    %v799 = vunpack.c.h.b16 %v367
    %v800 = vunpack.c.l.b16 %v368
    %v801 = vunpack.c.h.b16 %v368
    %v802 = vunpack.c.l.b16 %v369
    %v803 = vunpack.c.h.b16 %v369
    %v804 = vunpack.c.l.b16 %v370
    %v805 = vunpack.c.h.b16 %v370
    %v806 = vunpack.c.l.b16 %v371
    %v807 = vunpack.c.h.b16 %v371
    %v808 = vunpack.c.l.b16 %v372
    %v809 = vunpack.c.h.b16 %v372
    %v810 = vunpack.c.l.b16 %v373
    %v811 = vunpack.c.h.b16 %v373
    %v812 = vunpack.c.l.b16 %v374
    %v813 = vunpack.c.h.b16 %v374
    %v814 = vunpack.c.l.b16 %v375
    %v815 = vunpack.c.h.b16 %v375
    %v816 = vunpack.c.l.b16 %v376
    %v817 = vunpack.c.h.b16 %v376
    %v818 = vunpack.c.l.b16 %v377
    %v819 = vunpack.c.h.b16 %v377
    %v820 = vunpack.c.l.b16 %v378
    %v821 = vunpack.c.h.b16 %v378
    %v822 = vunpack.c.l.b16 %v379
    %v823 = vunpack.c.h.b16 %v379
    %v824 = vunpack.c.l.b16 %v380
    %v825 = vunpack.c.h.b16 %v380
    %v826 = vunpack.c.l.b16 %v381
    %v827 = vunpack.c.h.b16 %v381
    %v828 = vunpack.c.l.b16 %v382
    %v829 = vunpack.c.h.b16 %v382
    %v830 = vunpack.c.l.b16 %v383
    %v831 = vunpack.c.h.b16 %v383
    %v832 = vunpack.c.l.b16 %v384
    %v833 = vunpack.c.h.b16 %v384
    %v834 = vunpack.c.l.b16 %v385
    %v835 = vunpack.c.h.b16 %v385
    %v836 = vunpack.c.l.b16 %v386
    %v837 = vunpack.c.h.b16 %v386
    %v838 = vunpack.c.l.b16 %v387
    %v839 = vunpack.c.h.b16 %v387
    %v840 = vunpack.c.l.b16 %v388
    %v841 = vunpack.c.h.b16 %v388
    %v842 = vunpack.c.l.b16 %v389
    %v843 = vunpack.c.h.b16 %v389
    %v844 = vunpack.c.l.b16 %v390
    %v845 = vunpack.c.h.b16 %v390
    %v846 = vunpack.c.l.b16 %v391
    %v847 = vunpack.c.h.b16 %v391
    %v848 = vunpack.c.l.b16 %v392
    %v849 = vunpack.c.h.b16 %v392
    %v850 = vunpack.c.l.b16 %v393
    %v851 = vunpack.c.h.b16 %v393
    %v852 = vunpack.c.l.b16 %v394
    %v853 = vunpack.c.h.b16 %v394
    %v854 = vunpack.c.l.b16 %v395
    %v855 = vunpack.c.h.b16 %v395
    %v856 = vunpack.c.l.b16 %v396
    %v857 = vunpack.c.h.b16 %v396
    %v858 = vunpack.c.l.b16 %v397
    %v859 = vunpack.c.h.b16 %v397
    %v860 = vunpack.c.l.b16 %v398
    %v861 = vunpack.c.h.b16 %v398
    %v862 = vunpack.c.l.b16 %v399
    %v863 = vunpack.c.h.b16 %v399
    %v864 = vunpack.c.l.b16 %v400
    %v865 = vunpack.c.h.b16 %v400
    %v866 = vunpack.c.l.b16 %v401
    %v867 = vunpack.c.h.b16 %v401
    %v868 = vunpack.c.l.b16 %v402
    %v869 = vunpack.c.h.b16 %v402
    %v870 = vunpack.c.l.b16 %v403
    %v871 = vunpack.c.h.b16 %v403
    %v872 = vunpack.c.l.b16 %v404
    %v873 = vunpack.c.h.b16 %v404
    %v874 = vunpack.c.l.b16 %v405
    %v875 = vunpack.c.h.b16 %v405
    %v876 = vunpack.c.l.b16 %v406
    %v877 = vunpack.c.h.b16 %v406
    %v878 = vunpack.c.l.b16 %v407
    %v879 = vunpack.c.h.b16 %v407
    %v880 = vunpack.c.l.b16 %v408
    %v881 = vunpack.c.h.b16 %v408
    %v882 = vunpack.c.l.b16 %v409
    %v883 = vunpack.c.h.b16 %v409
    %v884 = vunpack.c.l.b16 %v410
    %v885 = vunpack.c.h.b16 %v410
    %v886 = vunpack.c.l.b16 %v411
    %v887 = vunpack.c.h.b16 %v411
    %v888 = vunpack.c.l.b16 %v412
    %v889 = vunpack.c.h.b16 %v412
    %v890 = vunpack.c.l.b16 %v413
    %v891 = vunpack.c.h.b16 %v413
    %v892 = vunpack.c.l.b16 %v414
    %v893 = vunpack.c.h.b16 %v414
    %v894 = vunpack.c.l.b16 %v415
    %v895 = vunpack.c.h.b16 %v415
    %v896 = vunpack.c.l.b16 %v416
    %v897 = vunpack.c.h.b16 %v416
    %v898 = vunpack.c.l.b16 %v417
    %v899 = vunpack.c.h.b16 %v417
    %v900 = vunpack.c.l.b16 %v418
    %v901 = vunpack.c.h.b16 %v418
    %v902 = vunpack.c.l.b16 %v419
    %v903 = vunpack.c.h.b16 %v419
    %v904 = vunpack.c.l.b16 %v420
    %v905 = vunpack.c.h.b16 %v420
    %v906 = vunpack.c.l.b16 %v421
    %v907 = vunpack.c.h.b16 %v421
    %v908 = vunpack.c.l.b16 %v422
    %v909 = vunpack.c.h.b16 %v422
    %v910 = vunpack.c.l.b16 %v423
    %v911 = vunpack.c.h.b16 %v423
    %v912 = vunpack.c.l.b16 %v424
    %v913 = vunpack.c.h.b16 %v424
    %v914 = vunpack.c.l.b16 %v425
    %v915 = vunpack.c.h.b16 %v425
    %v916 = vunpack.c.l.b16 %v426
    %v917 = vunpack.c.h.b16 %v426
    %v918 = vunpack.c.l.b16 %v427
    %v919 = vunpack.c.h.b16 %v427
    %v920 = vunpack.c.l.b16 %v428
    %v921 = vunpack.c.h.b16 %v428
    %v922 = vunpack.c.l.b16 %v429
    %v923 = vunpack.c.h.b16 %v429
    %v924 = vunpack.c.l.b16 %v430
    %v925 = vunpack.c.h.b16 %v430
    %v926 = vunpack.c.l.b16 %v431
    %v927 = vunpack.c.h.b16 %v431
    %v928 = vunpack.c.l.b16 %v432
    %v929 = vunpack.c.h.b16 %v432
    %v930 = vunpack.c.l.b16 %v433
    %v931 = vunpack.c.h.b16 %v433
    %v932 = vunpack.c.l.b16 %v434
    %v933 = vunpack.c.h.b16 %v434
    %v934 = vunpack.c.l.b16 %v435
    %v935 = vunpack.c.h.b16 %v435
    %v936 = vunpack.c.l.b16 %v436
    %v937 = vunpack.c.h.b16 %v436
    %v938 = vunpack.c.l.b16 %v437
    %v939 = vunpack.c.h.b16 %v437
    %v940 = vunpack.c.l.b16 %v438
    %v941 = vunpack.c.h.b16 %v438
    %v942 = vunpack.c.l.b16 %v439
    %v943 = vunpack.c.h.b16 %v439
    %v944 = vunpack.c.l.b16 %v440
    %v945 = vunpack.c.h.b16 %v440
    %v946 = vunpack.c.l.b16 %v441
    %v947 = vunpack.c.h.b16 %v441
    %v948 = vunpack.c.l.b16 %v442
    %v949 = vunpack.c.h.b16 %v442
    %v950 = vunpack.c.l.b16 %v443
    %v951 = vunpack.c.h.b16 %v443
    %v952 = vunpack.c.l.b16 %v444
    %v953 = vunpack.c.h.b16 %v444
    %v954 = vunpack.c.l.b16 %v445
    %v955 = vunpack.c.h.b16 %v445
    %v956 = vunpack.c.l.b16 %v446
    %v957 = vunpack.c.h.b16 %v446
    %v958 = vunpack.c.l.b16 %v447
    %v959 = vunpack.c.h.b16 %v447
    %v960 = vunpack.c.l.b16 %v448
    %v961 = vunpack.c.h.b16 %v448
    %v962 = vunpack.c.l.b16 %v449
    %v963 = vunpack.c.h.b16 %v449
    %v964 = vunpack.c.l.b16 %v450
    %v965 = vunpack.c.h.b16 %v450
    %v966 = vunpack.c.l.b16 %v451
    %v967 = vunpack.c.h.b16 %v451
    %v968 = vunpack.c.l.b16 %v452
    %v969 = vunpack.c.h.b16 %v452
    %v970 = vunpack.c.l.b16 %v453
    %v971 = vunpack.c.h.b16 %v453
    %v972 = vunpack.c.l.b16 %v454
    %v973 = vunpack.c.h.b16 %v454
    %v974 = vunpack.c.l.b16 %v455
    %v975 = vunpack.c.h.b16 %v455
    %v976 = vunpack.c.l.b16 %v456
    %v977 = vunpack.c.h.b16 %v456
    %v978 = vunpack.c.l.b16 %v457
    %v979 = vunpack.c.h.b16 %v457
    %v980 = vunpack.c.l.b16 %v458
    %v981 = vunpack.c.h.b16 %v458
    %v982 = vunpack.c.l.b16 %v459
    %v983 = vunpack.c.h.b16 %v459
    %v984 = vunpack.c.l.b16 %v460
    %v985 = vunpack.c.h.b16 %v460
    %v986 = vunpack.c.l.b16 %v461
    %v987 = vunpack.c.h.b16 %v461
    %v988 = vunpack.c.l.b16 %v462
    %v989 = vunpack.c.h.b16 %v462
    %v990 = vunpack.c.l.b16 %v463
    %v991 = vunpack.c.h.b16 %v463
    %v992 = vunpack.c.l.b16 %v464
    %v993 = vunpack.c.h.b16 %v464
    %v994 = vunpack.c.l.b16 %v465
    %v995 = vunpack.c.h.b16 %v465
    %v996 = vunpack.c.l.b16 %v466
    %v997 = vunpack.c.h.b16 %v466
    %v998 = vunpack.c.l.b16 %v467
    %v999 = vunpack.c.h.b16 %v467
    %v1000 = vunpack.c.l.b16 %v468
    %v1001 = vunpack.c.h.b16 %v468
    %v1002 = vunpack.c.l.b16 %v469
    %v1003 = vunpack.c.h.b16 %v469
    %v1004 = vunpack.c.l.b16 %v470
    %v1005 = vunpack.c.h.b16 %v470
    %v1006 = vunpack.c.l.b16 %v471
    %v1007 = vunpack.c.h.b16 %v471
    %v1008 = vunpack.c.l.b16 %v472
    %v1009 = vunpack.c.h.b16 %v472
    %v1010 = vunpack.c.l.b16 %v473
    %v1011 = vunpack.c.h.b16 %v473
    %v1012 = vunpack.c.l.b16 %v474
    %v1013 = vunpack.c.h.b16 %v474
    %v1014 = vunpack.c.l.b16 %v475
    %v1015 = vunpack.c.h.b16 %v475
    %v1016 = vunpack.c.l.b16 %v476
    %v1017 = vunpack.c.h.b16 %v476
    %v1018 = vunpack.c.l.b16 %v477
    %v1019 = vunpack.c.h.b16 %v477
    %v1020 = vunpack.c.l.b16 %v478
    %v1021 = vunpack.c.h.b16 %v478
    %v1022 = vunpack.c.l.b16 %v479
    %v1023 = vunpack.c.h.b16 %v479
    %v1024 = vunpack.c.l.b16 %v480
    %v1025 = vunpack.c.h.b16 %v480
    %v1026 = vunpack.c.l.b16 %v481
    %v1027 = vunpack.c.h.b16 %v481
    %v1028 = vunpack.c.l.b16 %v482
    %v1029 = vunpack.c.h.b16 %v482
    %v1030 = vunpack.c.l.b16 %v483
    %v1031 = vunpack.c.h.b16 %v483
    %v1032 = vunpack.c.l.b16 %v484
    %v1033 = vunpack.c.h.b16 %v484
    %v1034 = vunpack.c.l.b16 %v485
    %v1035 = vunpack.c.h.b16 %v485
    %v1036 = vunpack.c.l.b16 %v486
    %v1037 = vunpack.c.h.b16 %v486
    %v1038 = vunpack.c.l.b16 %v487
    %v1039 = vunpack.c.h.b16 %v487
    %v1040 = vunpack.c.l.b16 %v488
    %v1041 = vunpack.c.h.b16 %v488
    %v1042 = vunpack.c.l.b16 %v489
    %v1043 = vunpack.c.h.b16 %v489
    %v1044 = vunpack.c.l.b16 %v490
    %v1045 = vunpack.c.h.b16 %v490
    %v1046 = vunpack.c.l.b16 %v491
    %v1047 = vunpack.c.h.b16 %v491
    %v1048 = vunpack.c.l.b16 %v492
    %v1049 = vunpack.c.h.b16 %v492
    %v1050 = vunpack.c.l.b16 %v493
    %v1051 = vunpack.c.h.b16 %v493
    %v1052 = vunpack.c.l.b16 %v494
    %v1053 = vunpack.c.h.b16 %v494
    %v1054 = vunpack.c.l.b16 %v495
    %v1055 = vunpack.c.h.b16 %v495
    %v1056 = vunpack.c.l.b16 %v496
    %v1057 = vunpack.c.h.b16 %v496
    %v1058 = vunpack.c.l.b16 %v497
    %v1059 = vunpack.c.h.b16 %v497
    %v1060 = vunpack.c.l.b16 %v498
    %v1061 = vunpack.c.h.b16 %v498
    %v1062 = vunpack.c.l.b16 %v499
    %v1063 = vunpack.c.h.b16 %v499
    %v1064 = vunpack.c.l.b16 %v500
    %v1065 = vunpack.c.h.b16 %v500
    %v1066 = vunpack.c.l.b16 %v501
    %v1067 = vunpack.c.h.b16 %v501
    %v1068 = vunpack.c.l.b16 %v502
    %v1069 = vunpack.c.h.b16 %v502
    %v1070 = vunpack.c.l.b16 %v503
    %v1071 = vunpack.c.h.b16 %v503
    %v1072 = vunpack.c.l.b16 %v504
    %v1073 = vunpack.c.h.b16 %v504
    %v1074 = vunpack.c.l.b16 %v505
    %v1075 = vunpack.c.h.b16 %v505
    %v1076 = vunpack.c.l.b16 %v506
    %v1077 = vunpack.c.h.b16 %v506
    %v1078 = vunpack.c.l.b16 %v507
    %v1079 = vunpack.c.h.b16 %v507
    %v1080 = vunpack.c.l.b16 %v508
    %v1081 = vunpack.c.h.b16 %v508
    %v1082 = vunpack.c.l.b16 %v509
    %v1083 = vunpack.c.h.b16 %v509
    %v1084 = vunpack.c.l.b16 %v510
    %v1085 = vunpack.c.h.b16 %v510
    %v1086 = vunpack.c.l.b16 %v511
    %v1087 = vunpack.c.h.b16 %v511
    %v1088 = vunpack.c.l.b16 %v512
    %v1089 = vunpack.c.h.b16 %v512
    %v1090 = vunpack.c.l.b16 %v513
    %v1091 = vunpack.c.h.b16 %v513
    %v1092 = vunpack.c.l.b16 %v514
    %v1093 = vunpack.c.h.b16 %v514
    %v1094 = vunpack.c.l.b16 %v515
    %v1095 = vunpack.c.h.b16 %v515
    %v1096 = vunpack.c.l.b16 %v516
    %v1097 = vunpack.c.h.b16 %v516
    %v1098 = vunpack.c.l.b16 %v517
    %v1099 = vunpack.c.h.b16 %v517
    %v1100 = vunpack.c.l.b16 %v518
    %v1101 = vunpack.c.h.b16 %v518
    %v1102 = vunpack.c.l.b16 %v519
    %v1103 = vunpack.c.h.b16 %v519
    %v1104 = vunpack.c.l.b16 %v520
    %v1105 = vunpack.c.h.b16 %v520
    %v1106 = vunpack.c.l.b16 %v521
    %v1107 = vunpack.c.h.b16 %v521
    %v1108 = vunpack.c.l.b16 %v522
    %v1109 = vunpack.c.h.b16 %v522
    %v1110 = vunpack.c.l.b16 %v523
    %v1111 = vunpack.c.h.b16 %v523
    %v1112 = vunpack.c.l.b16 %v524
    %v1113 = vunpack.c.h.b16 %v524
    %v1114 = vunpack.c.l.b16 %v525
    %v1115 = vunpack.c.h.b16 %v525
    %v1116 = vunpack.c.l.b16 %v526
    %v1117 = vunpack.c.h.b16 %v526
    %v1118 = vunpack.c.l.b16 %v527
    %v1119 = vunpack.c.h.b16 %v527
    %v1120 = vunpack.c.l.b16 %v528
    %v1121 = vunpack.c.h.b16 %v528
    %v1122 = vunpack.c.l.b16 %v529
    %v1123 = vunpack.c.h.b16 %v529
    %v1124 = vunpack.c.l.b16 %v530
    %v1125 = vunpack.c.h.b16 %v530
    %v1126 = vunpack.c.l.b16 %v531
    %v1127 = vunpack.c.h.b16 %v531
    %v1128 = vunpack.c.l.b16 %v532
    %v1129 = vunpack.c.h.b16 %v532
    %v1130 = vunpack.c.l.b16 %v533
    %v1131 = vunpack.c.h.b16 %v533
    %v1132 = vunpack.c.l.b16 %v534
    %v1133 = vunpack.c.h.b16 %v534
    %v1134 = vunpack.c.l.b16 %v535
    %v1135 = vunpack.c.h.b16 %v535
    %v1136 = vunpack.c.l.b16 %v536
    %v1137 = vunpack.c.h.b16 %v536
    %v1138 = vunpack.c.l.b16 %v537
    %v1139 = vunpack.c.h.b16 %v537
    %v1140 = vunpack.c.l.b16 %v538
    %v1141 = vunpack.c.h.b16 %v538
    %v1142 = vunpack.c.l.b16 %v539
    %v1143 = vunpack.c.h.b16 %v539
    %v1144 = vunpack.c.l.b16 %v540
    %v1145 = vunpack.c.h.b16 %v540
    %v1146 = vunpack.c.l.b16 %v541
    %v1147 = vunpack.c.h.b16 %v541
    %v1148 = vunpack.c.l.b16 %v542
    %v1149 = vunpack.c.h.b16 %v542
    %v1150 = vunpack.c.l.b16 %v543
    %v1151 = vunpack.c.h.b16 %v543
    %v1152 = vpack.c.b16 %v774, %v768
    %v1153 = vpack.c.b16 %v775, %v769
    %v1154 = vpack.c.b16 %v776, %v770
    %v1155 = vpack.c.b16 %v777, %v771
    %v1156 = vpack.c.b16 %v778, %v772
    %v1157 = vpack.c.b16 %v779, %v773
    %v1158 = vpack.c.b16 %v786, %v780
    %v1159 = vpack.c.b16 %v787, %v781
    %v1160 = vpack.c.b16 %v788, %v782
    %v1161 = vpack.c.b16 %v789, %v783
    %v1162 = vpack.c.b16 %v790, %v784
    %v1163 = vpack.c.b16 %v791, %v785
    %v1164 = vpack.c.b16 %v798, %v792
    %v1165 = vpack.c.b16 %v799, %v793
    %v1166 = vpack.c.b16 %v800, %v794
    %v1167 = vpack.c.b16 %v801, %v795
    %v1168 = vpack.c.b16 %v802, %v796
    %v1169 = vpack.c.b16 %v803, %v797
    %v1170 = vpack.c.b16 %v810, %v804
    %v1171 = vpack.c.b16 %v811, %v805
    %v1172 = vpack.c.b16 %v812, %v806
    %v1173 = vpack.c.b16 %v813, %v807
    %v1174 = vpack.c.b16 %v814, %v808
    %v1175 = vpack.c.b16 %v815, %v809
    %v1176 = vpack.c.b16 %v822, %v816
    %v1177 = vpack.c.b16 %v823, %v817
    %v1178 = vpack.c.b16 %v824, %v818
    %v1179 = vpack.c.b16 %v825, %v819
    %v1180 = vpack.c.b16 %v826, %v820
    %v1181 = vpack.c.b16 %v827, %v821
    %v1182 = vpack.c.b16 %v834, %v828
    %v1183 = vpack.c.b16 %v835, %v829
    %v1184 = vpack.c.b16 %v836, %v830
    %v1185 = vpack.c.b16 %v837, %v831
    %v1186 = vpack.c.b16 %v838, %v832
    %v1187 = vpack.c.b16 %v839, %v833
    %v1188 = vpack.c.b16 %v846, %v840
    %v1189 = vpack.c.b16 %v847, %v841
    %v1190 = vpack.c.b16 %v848, %v842
    %v1191 = vpack.c.b16 %v849, %v843
    %v1192 = vpack.c.b16 %v850, %v844
    %v1193 = vpack.c.b16 %v851, %v845
    %v1194 = vpack.c.b16 %v858, %v852
    %v1195 = vpack.c.b16 %v859, %v853
    %v1196 = vpack.c.b16 %v860, %v854
    %v1197 = vpack.c.b16 %v861, %v855
    %v1198 = vpack.c.b16 %v862, %v856
    %v1199 = vpack.c.b16 %v863, %v857
    %v1200 = vpack.c.b16 %v870, %v864
    %v1201 = vpack.c.b16 %v871, %v865
    %v1202 = vpack.c.b16 %v872, %v866
    %v1203 = vpack.c.b16 %v873, %v867
    %v1204 = vpack.c.b16 %v874, %v868
    %v1205 = vpack.c.b16 %v875, %v869
    %v1206 = vpack.c.b16 %v882, %v876
    %v1207 = vpack.c.b16 %v883, %v877
    %v1208 = vpack.c.b16 %v884, %v878
    %v1209 = vpack.c.b16 %v885, %v879
    %v1210 = vpack.c.b16 %v886, %v880
    %v1211 = vpack.c.b16 %v887, %v881
    %v1212 = vpack.c.b16 %v894, %v888
    %v1213 = vpack.c.b16 %v895, %v889
    %v1214 = vpack.c.b16 %v896, %v890
    %v1215 = vpack.c.b16 %v897, %v891
    %v1216 = vpack.c.b16 %v898, %v892
    %v1217 = vpack.c.b16 %v899, %v893
    %v1218 = vpack.c.b16 %v906, %v900
    %v1219 = vpack.c.b16 %v907, %v901
    %v1220 = vpack.c.b16 %v908, %v902
    %v1221 = vpack.c.b16 %v909, %v903
    %v1222 = vpack.c.b16 %v910, %v904
    %v1223 = vpack.c.b16 %v911, %v905
    %v1224 = vpack.c.b16 %v918, %v912
    %v1225 = vpack.c.b16 %v919, %v913
    %v1226 = vpack.c.b16 %v920, %v914
    %v1227 = vpack.c.b16 %v921, %v915
    %v1228 = vpack.c.b16 %v922, %v916
    %v1229 = vpack.c.b16 %v923, %v917
    %v1230 = vpack.c.b16 %v930, %v924
    %v1231 = vpack.c.b16 %v931, %v925
    %v1232 = vpack.c.b16 %v932, %v926
    %v1233 = vpack.c.b16 %v933, %v927
    %v1234 = vpack.c.b16 %v934, %v928
    %v1235 = vpack.c.b16 %v935, %v929
    %v1236 = vpack.c.b16 %v942, %v936
    %v1237 = vpack.c.b16 %v943, %v937
    %v1238 = vpack.c.b16 %v944, %v938
    %v1239 = vpack.c.b16 %v945, %v939
    %v1240 = vpack.c.b16 %v946, %v940
    %v1241 = vpack.c.b16 %v947, %v941
    %v1242 = vpack.c.b16 %v954, %v948
    %v1243 = vpack.c.b16 %v955, %v949
    %v1244 = vpack.c.b16 %v956, %v950
    %v1245 = vpack.c.b16 %v957, %v951
    %v1246 = vpack.c.b16 %v958, %v952
    %v1247 = vpack.c.b16 %v959, %v953
    %v1248 = vpack.c.b16 %v966, %v960
    %v1249 = vpack.c.b16 %v967, %v961
    %v1250 = vpack.c.b16 %v968, %v962
    %v1251 = vpack.c.b16 %v969, %v963
    %v1252 = vpack.c.b16 %v970, %v964
    %v1253 = vpack.c.b16 %v971, %v965
    %v1254 = vpack.c.b16 %v978, %v972
    %v1255 = vpack.c.b16 %v979, %v973
    %v1256 = vpack.c.b16 %v980, %v974
    %v1257 = vpack.c.b16 %v981, %v975
    %v1258 = vpack.c.b16 %v982, %v976
    %v1259 = vpack.c.b16 %v983, %v977
    %v1260 = vpack.c.b16 %v990, %v984
    %v1261 = vpack.c.b16 %v991, %v985
    %v1262 = vpack.c.b16 %v992, %v986
    %v1263 = vpack.c.b16 %v993, %v987
    %v1264 = vpack.c.b16 %v994, %v988
    %v1265 = vpack.c.b16 %v995, %v989
    %v1266 = vpack.c.b16 %v1002, %v996
    %v1267 = vpack.c.b16 %v1003, %v997
    %v1268 = vpack.c.b16 %v1004, %v998
    %v1269 = vpack.c.b16 %v1005, %v999
    %v1270 = vpack.c.b16 %v1006, %v1000
    %v1271 = vpack.c.b16 %v1007, %v1001
    %v1272 = vpack.c.b16 %v1014, %v1008
    %v1273 = vpack.c.b16 %v1015, %v1009
    %v1274 = vpack.c.b16 %v1016, %v1010
    %v1275 = vpack.c.b16 %v1017, %v1011
    %v1276 = vpack.c.b16 %v1018, %v1012
    %v1277 = vpack.c.b16 %v1019, %v1013
    %v1278 = vpack.c.b16 %v1026, %v1020
    %v1279 = vpack.c.b16 %v1027, %v1021
    %v1280 = vpack.c.b16 %v1028, %v1022
    %v1281 = vpack.c.b16 %v1029, %v1023
    %v1282 = vpack.c.b16 %v1030, %v1024
    %v1283 = vpack.c.b16 %v1031, %v1025
    %v1284 = vpack.c.b16 %v1038, %v1032
    %v1285 = vpack.c.b16 %v1039, %v1033
    %v1286 = vpack.c.b16 %v1040, %v1034
    %v1287 = vpack.c.b16 %v1041, %v1035
    %v1288 = vpack.c.b16 %v1042, %v1036
    %v1289 = vpack.c.b16 %v1043, %v1037
    %v1290 = vpack.c.b16 %v1050, %v1044
    %v1291 = vpack.c.b16 %v1051, %v1045
    %v1292 = vpack.c.b16 %v1052, %v1046
    %v1293 = vpack.c.b16 %v1053, %v1047
    %v1294 = vpack.c.b16 %v1054, %v1048
    %v1295 = vpack.c.b16 %v1055, %v1049
    %v1296 = vpack.c.b16 %v1062, %v1056
    %v1297 = vpack.c.b16 %v1063, %v1057
    %v1298 = vpack.c.b16 %v1064, %v1058
    %v1299 = vpack.c.b16 %v1065, %v1059
    %v1300 = vpack.c.b16 %v1066, %v1060
    %v1301 = vpack.c.b16 %v1067, %v1061
    %v1302 = vpack.c.b16 %v1074, %v1068
    %v1303 = vpack.c.b16 %v1075, %v1069
    %v1304 = vpack.c.b16 %v1076, %v1070
    %v1305 = vpack.c.b16 %v1077, %v1071
    %v1306 = vpack.c.b16 %v1078, %v1072
    %v1307 = vpack.c.b16 %v1079, %v1073
    %v1308 = vpack.c.b16 %v1086, %v1080
    %v1309 = vpack.c.b16 %v1087, %v1081
    %v1310 = vpack.c.b16 %v1088, %v1082
    %v1311 = vpack.c.b16 %v1089, %v1083
    %v1312 = vpack.c.b16 %v1090, %v1084
    %v1313 = vpack.c.b16 %v1091, %v1085
    %v1314 = vpack.c.b16 %v1098, %v1092
    %v1315 = vpack.c.b16 %v1099, %v1093
    %v1316 = vpack.c.b16 %v1100, %v1094
    %v1317 = vpack.c.b16 %v1101, %v1095
    %v1318 = vpack.c.b16 %v1102, %v1096
    %v1319 = vpack.c.b16 %v1103, %v1097
    %v1320 = vpack.c.b16 %v1110, %v1104
    %v1321 = vpack.c.b16 %v1111, %v1105
    %v1322 = vpack.c.b16 %v1112, %v1106
    %v1323 = vpack.c.b16 %v1113, %v1107
    %v1324 = vpack.c.b16 %v1114, %v1108
    %v1325 = vpack.c.b16 %v1115, %v1109
    %v1326 = vpack.c.b16 %v1122, %v1116
    %v1327 = vpack.c.b16 %v1123, %v1117
    %v1328 = vpack.c.b16 %v1124, %v1118
    %v1329 = vpack.c.b16 %v1125, %v1119
    %v1330 = vpack.c.b16 %v1126, %v1120
    %v1331 = vpack.c.b16 %v1127, %v1121
    %v1332 = vpack.c.b16 %v1134, %v1128
    %v1333 = vpack.c.b16 %v1135, %v1129
    %v1334 = vpack.c.b16 %v1136, %v1130
    %v1335 = vpack.c.b16 %v1137, %v1131
    %v1336 = vpack.c.b16 %v1138, %v1132
    %v1337 = vpack.c.b16 %v1139, %v1133
    %v1338 = vpack.c.b16 %v1146, %v1140
    %v1339 = vpack.c.b16 %v1147, %v1141
    %v1340 = vpack.c.b16 %v1148, %v1142
    %v1341 = vpack.c.b16 %v1149, %v1143
    %v1342 = vpack.c.b16 %v1150, %v1144
    %v1343 = vpack.c.b16 %v1151, %v1145
    %1536 = vmatprep.subr.bf16.mxu0 %v1153
    %1537 = vmatpush1.bf16.msra.mxu0 %v1152
    %1538 = vmatprep.subr.bf16.mxu0 %v1159
    %1539 = vmatpush1.bf16.msra.mxu0 %v1158
    %1540 = vmatprep.subr.bf16.mxu0 %v1165
    %1541 = vmatpush1.bf16.msra.mxu0 %v1164
    %1542 = vmatprep.subr.bf16.mxu0 %v1171
    %1543 = vmatpush1.bf16.msra.mxu0 %v1170
    %1544 = vmatprep.subr.bf16.mxu0 %v1177
    %1545 = vmatpush1.bf16.msra.mxu0 %v1176
    %1546 = vmatprep.subr.bf16.mxu0 %v1183
    %1547 = vmatpush1.bf16.msra.mxu0 %v1182
    %1548 = vmatprep.subr.bf16.mxu0 %v1189
    %1549 = vmatpush1.bf16.msra.mxu0 %v1188
    %1550 = vmatprep.subr.bf16.mxu0 %v1195
    %1551 = vmatpush1.bf16.msra.mxu0 %v1194
    %1552 = vmatprep.subr.bf16.mxu0 %v1201
    %1553 = vmatpush1.bf16.msra.mxu0 %v1200
    %1554 = vmatprep.subr.bf16.mxu0 %v1207
    %1555 = vmatpush1.bf16.msra.mxu0 %v1206
    %1556 = vmatprep.subr.bf16.mxu0 %v1213
    %1557 = vmatpush1.bf16.msra.mxu0 %v1212
    %1558 = vmatprep.subr.bf16.mxu0 %v1219
    %1559 = vmatpush1.bf16.msra.mxu0 %v1218
    %1560 = vmatprep.subr.bf16.mxu0 %v1225
    %1561 = vmatpush1.bf16.msra.mxu0 %v1224
    %1562 = vmatprep.subr.bf16.mxu0 %v1231
    %1563 = vmatpush1.bf16.msra.mxu0 %v1230
    %1564 = vmatprep.subr.bf16.mxu0 %v1237
    %1565 = vmatpush1.bf16.msra.mxu0 %v1236
    %1566 = vmatprep.subr.bf16.mxu0 %v1243
    %1567 = vmatpush1.bf16.msra.mxu0 %v1242
    %1568 = vmatprep.mubr.bf16.mxu0 %v349
    %1569 = vmatmul.mubr.bf16.gmra.mrb[0].mxu0 %v348
    %v1570 = vpop.f32.mrb[0].mxu0
    %v1571 = vadd.f32 %v549, %v1570
    %v1572 = vpop.f32.mrb[0].mxu0
    %v1573 = vadd.f32 %v553, %v1572
    %v1574 = vpop.f32.mrb[0].mxu0
    %v1575 = vpop.f32.mrb[0].mxu0
    %1576 = vdwg.mxu0
    %1577 = vmatprep.subr.bf16.mxu0 %v1249
    %1578 = vmatpush1.bf16.msra.mxu0 %v1248
    %1579 = vmatprep.subr.bf16.mxu0 %v1255
    %1580 = vmatpush1.bf16.msra.mxu0 %v1254
    %1581 = vmatprep.subr.bf16.mxu0 %v1261
    %1582 = vmatpush1.bf16.msra.mxu0 %v1260
    %1583 = vmatprep.subr.bf16.mxu0 %v1267
    %1584 = vmatpush1.bf16.msra.mxu0 %v1266
    %1585 = vmatprep.subr.bf16.mxu0 %v1273
    %1586 = vmatpush1.bf16.msra.mxu0 %v1272
    %1587 = vmatprep.subr.bf16.mxu0 %v1279
    %1588 = vmatpush1.bf16.msra.mxu0 %v1278
    %1589 = vmatprep.subr.bf16.mxu0 %v1285
    %1590 = vmatpush1.bf16.msra.mxu0 %v1284
    %1591 = vmatprep.subr.bf16.mxu0 %v1291
    %1592 = vmatpush1.bf16.msra.mxu0 %v1290
    %1593 = vmatprep.subr.bf16.mxu0 %v1297
    %1594 = vmatpush1.bf16.msra.mxu0 %v1296
    %1595 = vmatprep.subr.bf16.mxu0 %v1303
    %1596 = vmatpush1.bf16.msra.mxu0 %v1302
    %1597 = vmatprep.subr.bf16.mxu0 %v1309
    %1598 = vmatpush1.bf16.msra.mxu0 %v1308
    %1599 = vmatprep.subr.bf16.mxu0 %v1315
    %1600 = vmatpush1.bf16.msra.mxu0 %v1314
    %1601 = vmatprep.subr.bf16.mxu0 %v1321
    %1602 = vmatpush1.bf16.msra.mxu0 %v1320
    %1603 = vmatprep.subr.bf16.mxu0 %v1327
    %1604 = vmatpush1.bf16.msra.mxu0 %v1326
    %1605 = vmatprep.subr.bf16.mxu0 %v1333
    %1606 = vmatpush1.bf16.msra.mxu0 %v1332
    %1607 = vmatprep.subr.bf16.mxu0 %v1339
    %1608 = vmatpush1.bf16.msra.mxu0 %v1338
    %1609 = vmatprep.mubr.bf16.mxu0 %v351
    %1610 = vmatmul.mubr.bf16.gmra.mrb[0].mxu0 %v350
    %v1611 = vpop.f32.mrb[0].mxu0
    %v1612 = vadd.f32 %v1571, %v1611
    %v1613 = vpop.f32.mrb[0].mxu0
    %v1614 = vadd.f32 %v1573, %v1613
    %v1615 = vpop.f32.mrb[0].mxu0
    %v1616 = vpop.f32.mrb[0].mxu0
    %1617 = vdwg.mxu0
    %1618 = vmatprep.subr.bf16.mxu0 %v1155
    %1619 = vmatpush1.bf16.msra.mxu0 %v1154
    %1620 = vmatprep.subr.bf16.mxu0 %v1161
    %1621 = vmatpush1.bf16.msra.mxu0 %v1160
    %1622 = vmatprep.subr.bf16.mxu0 %v1167
    %1623 = vmatpush1.bf16.msra.mxu0 %v1166
    %1624 = vmatprep.subr.bf16.mxu0 %v1173
    %1625 = vmatpush1.bf16.msra.mxu0 %v1172
    %1626 = vmatprep.subr.bf16.mxu0 %v1179
    %1627 = vmatpush1.bf16.msra.mxu0 %v1178
    %1628 = vmatprep.subr.bf16.mxu0 %v1185
    %1629 = vmatpush1.bf16.msra.mxu0 %v1184
    %1630 = vmatprep.subr.bf16.mxu0 %v1191
    %1631 = vmatpush1.bf16.msra.mxu0 %v1190
    %1632 = vmatprep.subr.bf16.mxu0 %v1197
    %1633 = vmatpush1.bf16.msra.mxu0 %v1196
    %1634 = vmatprep.subr.bf16.mxu0 %v1203
    %1635 = vmatpush1.bf16.msra.mxu0 %v1202
    %1636 = vmatprep.subr.bf16.mxu0 %v1209
    %1637 = vmatpush1.bf16.msra.mxu0 %v1208
    %1638 = vmatprep.subr.bf16.mxu0 %v1215
    %1639 = vmatpush1.bf16.msra.mxu0 %v1214
    %1640 = vmatprep.subr.bf16.mxu0 %v1221
    %1641 = vmatpush1.bf16.msra.mxu0 %v1220
    %1642 = vmatprep.subr.bf16.mxu0 %v1227
    %1643 = vmatpush1.bf16.msra.mxu0 %v1226
    %1644 = vmatprep.subr.bf16.mxu0 %v1233
    %1645 = vmatpush1.bf16.msra.mxu0 %v1232
    %1646 = vmatprep.subr.bf16.mxu0 %v1239
    %1647 = vmatpush1.bf16.msra.mxu0 %v1238
    %1648 = vmatprep.subr.bf16.mxu0 %v1245
    %1649 = vmatpush1.bf16.msra.mxu0 %v1244
    %1650 = vmatprep.mubr.bf16.mxu0 %v349
    %1651 = vmatmul.mubr.bf16.gmra.mrb[0].mxu0 %v348
    %v1652 = vpop.f32.mrb[0].mxu0
    %v1653 = vadd.f32 %v557, %v1652
    %v1654 = vpop.f32.mrb[0].mxu0
    %v1655 = vadd.f32 %v561, %v1654
    %v1656 = vpop.f32.mrb[0].mxu0
    %v1657 = vpop.f32.mrb[0].mxu0
    %1658 = vdwg.mxu0
    %1659 = vmatprep.subr.bf16.mxu0 %v1251
    %1660 = vmatpush1.bf16.msra.mxu0 %v1250
    %1661 = vmatprep.subr.bf16.mxu0 %v1257
    %1662 = vmatpush1.bf16.msra.mxu0 %v1256
    %1663 = vmatprep.subr.bf16.mxu0 %v1263
    %1664 = vmatpush1.bf16.msra.mxu0 %v1262
    %1665 = vmatprep.subr.bf16.mxu0 %v1269
    %1666 = vmatpush1.bf16.msra.mxu0 %v1268
    %1667 = vmatprep.subr.bf16.mxu0 %v1275
    %1668 = vmatpush1.bf16.msra.mxu0 %v1274
    %1669 = vmatprep.subr.bf16.mxu0 %v1281
    %1670 = vmatpush1.bf16.msra.mxu0 %v1280
    %1671 = vmatprep.subr.bf16.mxu0 %v1287
    %1672 = vmatpush1.bf16.msra.mxu0 %v1286
    %1673 = vmatprep.subr.bf16.mxu0 %v1293
    %1674 = vmatpush1.bf16.msra.mxu0 %v1292
    %1675 = vmatprep.subr.bf16.mxu0 %v1299
    %1676 = vmatpush1.bf16.msra.mxu0 %v1298
    %1677 = vmatprep.subr.bf16.mxu0 %v1305
    %1678 = vmatpush1.bf16.msra.mxu0 %v1304
    %1679 = vmatprep.subr.bf16.mxu0 %v1311
    %1680 = vmatpush1.bf16.msra.mxu0 %v1310
    %1681 = vmatprep.subr.bf16.mxu0 %v1317
    %1682 = vmatpush1.bf16.msra.mxu0 %v1316
    %1683 = vmatprep.subr.bf16.mxu0 %v1323
    %1684 = vmatpush1.bf16.msra.mxu0 %v1322
    %1685 = vmatprep.subr.bf16.mxu0 %v1329
    %1686 = vmatpush1.bf16.msra.mxu0 %v1328
    %1687 = vmatprep.subr.bf16.mxu0 %v1335
    %1688 = vmatpush1.bf16.msra.mxu0 %v1334
    %1689 = vmatprep.subr.bf16.mxu0 %v1341
    %1690 = vmatpush1.bf16.msra.mxu0 %v1340
    %1691 = vmatprep.mubr.bf16.mxu0 %v351
    %1692 = vmatmul.mubr.bf16.gmra.mrb[0].mxu0 %v350
    %v1693 = vpop.f32.mrb[0].mxu0
    %v1694 = vadd.f32 %v1653, %v1693
    %v1695 = vpop.f32.mrb[0].mxu0
    %v1696 = vadd.f32 %v1655, %v1695
    %v1697 = vpop.f32.mrb[0].mxu0
    %v1698 = vpop.f32.mrb[0].mxu0
    %1699 = vdwg.mxu0
    %1700 = vmatprep.subr.bf16.mxu0 %v1157
    %1701 = vmatpush1.bf16.msra.mxu0 %v1156
    %1702 = vmatprep.subr.bf16.mxu0 %v1163
    %1703 = vmatpush1.bf16.msra.mxu0 %v1162
    %1704 = vmatprep.subr.bf16.mxu0 %v1169
    %1705 = vmatpush1.bf16.msra.mxu0 %v1168
    %1706 = vmatprep.subr.bf16.mxu0 %v1175
    %1707 = vmatpush1.bf16.msra.mxu0 %v1174
    %1708 = vmatprep.subr.bf16.mxu0 %v1181
    %1709 = vmatpush1.bf16.msra.mxu0 %v1180
    %1710 = vmatprep.subr.bf16.mxu0 %v1187
    %1711 = vmatpush1.bf16.msra.mxu0 %v1186
    %1712 = vmatprep.subr.bf16.mxu0 %v1193
    %1713 = vmatpush1.bf16.msra.mxu0 %v1192
    %1714 = vmatprep.subr.bf16.mxu0 %v1199
    %1715 = vmatpush1.bf16.msra.mxu0 %v1198
    %1716 = vmatprep.subr.bf16.mxu0 %v1205
    %1717 = vmatpush1.bf16.msra.mxu0 %v1204
    %1718 = vmatprep.subr.bf16.mxu0 %v1211
    %1719 = vmatpush1.bf16.msra.mxu0 %v1210
    %1720 = vmatprep.subr.bf16.mxu0 %v1217
    %1721 = vmatpush1.bf16.msra.mxu0 %v1216
    %1722 = vmatprep.subr.bf16.mxu0 %v1223
    %1723 = vmatpush1.bf16.msra.mxu0 %v1222
    %1724 = vmatprep.subr.bf16.mxu0 %v1229
    %1725 = vmatpush1.bf16.msra.mxu0 %v1228
    %1726 = vmatprep.subr.bf16.mxu0 %v1235
    %1727 = vmatpush1.bf16.msra.mxu0 %v1234
    %1728 = vmatprep.subr.bf16.mxu0 %v1241
    %1729 = vmatpush1.bf16.msra.mxu0 %v1240
    %1730 = vmatprep.subr.bf16.mxu0 %v1247
    %1731 = vmatpush1.bf16.msra.mxu0 %v1246
    %1732 = vmatprep.mubr.bf16.mxu0 %v349
    %1733 = vmatmul.mubr.bf16.gmra.mrb[0].mxu0 %v348
    %v1734 = vpop.f32.mrb[0].mxu0
    %v1735 = vadd.f32 %v565, %v1734
    %v1736 = vpop.f32.mrb[0].mxu0
    %v1737 = vadd.f32 %v569, %v1736
    %v1738 = vpop.f32.mrb[0].mxu0
    %v1739 = vpop.f32.mrb[0].mxu0
    %1740 = vdwg.mxu0
    %1741 = vmatprep.subr.bf16.mxu0 %v1253
    %1742 = vmatpush1.bf16.msra.mxu0 %v1252
    %1743 = vmatprep.subr.bf16.mxu0 %v1259
    %1744 = vmatpush1.bf16.msra.mxu0 %v1258
    %1745 = vmatprep.subr.bf16.mxu0 %v1265
    %1746 = vmatpush1.bf16.msra.mxu0 %v1264
    %1747 = vmatprep.subr.bf16.mxu0 %v1271
    %1748 = vmatpush1.bf16.msra.mxu0 %v1270
    %1749 = vmatprep.subr.bf16.mxu0 %v1277
    %1750 = vmatpush1.bf16.msra.mxu0 %v1276
    %1751 = vmatprep.subr.bf16.mxu0 %v1283
    %1752 = vmatpush1.bf16.msra.mxu0 %v1282
    %1753 = vmatprep.subr.bf16.mxu0 %v1289
    %1754 = vmatpush1.bf16.msra.mxu0 %v1288
    %1755 = vmatprep.subr.bf16.mxu0 %v1295
    %1756 = vmatpush1.bf16.msra.mxu0 %v1294
    %1757 = vmatprep.subr.bf16.mxu0 %v1301
    %1758 = vmatpush1.bf16.msra.mxu0 %v1300
    %1759 = vmatprep.subr.bf16.mxu0 %v1307
    %1760 = vmatpush1.bf16.msra.mxu0 %v1306
    %1761 = vmatprep.subr.bf16.mxu0 %v1313
    %1762 = vmatpush1.bf16.msra.mxu0 %v1312
    %1763 = vmatprep.subr.bf16.mxu0 %v1319
    %1764 = vmatpush1.bf16.msra.mxu0 %v1318
    %1765 = vmatprep.subr.bf16.mxu0 %v1325
    %1766 = vmatpush1.bf16.msra.mxu0 %v1324
    %1767 = vmatprep.subr.bf16.mxu0 %v1331
    %1768 = vmatpush1.bf16.msra.mxu0 %v1330
    %1769 = vmatprep.subr.bf16.mxu0 %v1337
    %1770 = vmatpush1.bf16.msra.mxu0 %v1336
    %1771 = vmatprep.subr.bf16.mxu0 %v1343
    %1772 = vmatpush1.bf16.msra.mxu0 %v1342
    %1773 = vmatprep.mubr.bf16.mxu0 %v351
    %1774 = vmatmul.mubr.bf16.gmra.mrb[0].mxu0 %v350
    %v1775 = vpop.f32.mrb[0].mxu0
    %v1776 = vadd.f32 %v1735, %v1775
    %v1777 = vpop.f32.mrb[0].mxu0
    %v1778 = vadd.f32 %v1737, %v1777
    %v1779 = vpop.f32.mrb[0].mxu0
    %v1780 = vpop.f32.mrb[0].mxu0
    %1781 = vdwg.mxu0
    %v1782 = vld [vmem:[#allocation8] sm:$0x3f]
    %v1783 = vld [vmem:[#allocation10] sm:$0x3f]
    %v1784 = vadd.f32 %v1612, %v1614
    %v1785 = vadd.f32 %v1784, %v1694
    %v1786 = vadd.f32 %v1785, %v1696
    %v1787 = vadd.f32 %v1786, %v1776
    %v1788 = vadd.f32 %v1787, %v1778
    %1789 = vadd.xlane.f32.xlu0 %v1788
    %v1790 = vpop.xlane.xlu0 %1789
    %v1791 = vmul.f32 %v1612, %v1612
    %v1792 = vmul.f32 %v1614, %v1614
    %v1793 = vmul.f32 %v1694, %v1694
    %v1794 = vmul.f32 %v1696, %v1696
    %v1795 = vmul.f32 %v1776, %v1776
    %v1796 = vmul.f32 %v1778, %v1778
    %v1797 = vadd.f32 %v1791, %v1792
    %v1798 = vadd.f32 %v1797, %v1793
    %v1799 = vadd.f32 %v1798, %v1794
    %v1800 = vadd.f32 %v1799, %v1795
    %v1801 = vadd.f32 %v1800, %v1796
    %1802 = vadd.xlane.f32.xlu0 %v1801
    %v1803 = vpop.xlane.xlu0 %1802
    %v1804 = vmul.f32 %v1790, 0.0014285714
    %v1805 = vmul.f32 %v1803, 0.0014285714
    %v1806 = vmul.f32 %v1804, %v1804
    %v1807 = vsub.f32 %v1805, %v1806
    %v1808 = vmax.f32 %v1807, 0.0
    %v1809 = vsub.f32 %v1612, %v1804
    %v1810 = vsub.f32 %v1614, %v1804
    %v1811 = vsub.f32 %v1694, %v1804
    %v1812 = vsub.f32 %v1696, %v1804
    %v1813 = vsub.f32 %v1776, %v1804
    %v1814 = vsub.f32 %v1778, %v1804
    %v1815 = vadd.f32 %v1808, 1e-05
    %v1816 = vrsqrt.pop %v1815
    %v1817 = vmul.f32 %v1809, %v1816
    %v1818 = vmul.f32 %v1810, %v1816
    %v1819 = vmul.f32 %v1811, %v1816
    %v1820 = vmul.f32 %v1812, %v1816
    %v1821 = vmul.f32 %v1813, %v1816
    %v1822 = vmul.f32 %v1814, %v1816
    %v1824 = vlaneseq
    %v1825 = vshrl.u32 %v1824, 7
    %v1826 = vsub.s32 0, %v1825
    %v1827 = vrot.slane %v1782, %v1826
    %v1828 = vlaneseq
    %v1829 = vshrl.u32 %v1828, 7
    %v1830 = vsub.s32 1, %v1829
    %v1831 = vrot.slane %v1782, %v1830
    %v1832 = vlaneseq
    %v1833 = vshrl.u32 %v1832, 7
    %v1834 = vsub.s32 2, %v1833
    %v1835 = vrot.slane %v1782, %v1834
    %v1836 = vlaneseq
    %v1837 = vshrl.u32 %v1836, 7
    %v1838 = vsub.s32 3, %v1837
    %v1839 = vrot.slane %v1782, %v1838
    %v1840 = vlaneseq
    %v1841 = vshrl.u32 %v1840, 7
    %v1842 = vsub.s32 4, %v1841
    %v1843 = vrot.slane %v1782, %v1842
    %v1844 = vlaneseq
    %v1845 = vshrl.u32 %v1844, 7
    %v1846 = vsub.s32 5, %v1845
    %v1847 = vrot.slane %v1782, %v1846
    %v1854 = vmul.f32 %v1817, %v1827
    %v1855 = vmul.f32 %v1818, %v1831
    %v1856 = vmul.f32 %v1819, %v1835
    %v1857 = vmul.f32 %v1820, %v1839
    %v1858 = vmul.f32 %v1821, %v1843
    %v1859 = vmul.f32 %v1822, %v1847
    %v1861 = vlaneseq
    %v1862 = vshrl.u32 %v1861, 7
    %v1863 = vsub.s32 0, %v1862
    %v1864 = vrot.slane %v1783, %v1863
    %v1865 = vlaneseq
    %v1866 = vshrl.u32 %v1865, 7
    %v1867 = vsub.s32 1, %v1866
    %v1868 = vrot.slane %v1783, %v1867
    %v1869 = vlaneseq
    %v1870 = vshrl.u32 %v1869, 7
    %v1871 = vsub.s32 2, %v1870
    %v1872 = vrot.slane %v1783, %v1871
    %v1873 = vlaneseq
    %v1874 = vshrl.u32 %v1873, 7
    %v1875 = vsub.s32 3, %v1874
    %v1876 = vrot.slane %v1783, %v1875
    %v1877 = vlaneseq
    %v1878 = vshrl.u32 %v1877, 7
    %v1879 = vsub.s32 4, %v1878
    %v1880 = vrot.slane %v1783, %v1879
    %v1881 = vlaneseq
    %v1882 = vshrl.u32 %v1881, 7
    %v1883 = vsub.s32 5, %v1882
    %v1884 = vrot.slane %v1783, %v1883
    %v1891 = vadd.f32 %v1854, %v1864
    %v1892 = vadd.f32 %v1855, %v1868
    %v1893 = vadd.f32 %v1856, %v1872
    %v1894 = vadd.f32 %v1857, %v1876
    %v1895 = vadd.f32 %v1858, %v1880
    %v1896 = vadd.f32 %v1859, %v1884
    %v1897 = vmax.f32 %v1891, 0.0
    %v1898 = vmax.f32 %v1892, 0.0
    %v1899 = vmax.f32 %v1893, 0.0
    %v1900 = vmax.f32 %v1894, 0.0
    %v1901 = vmax.f32 %v1895, 0.0
    %v1902 = vmax.f32 %v1896, 0.0
    %v1903 = vpack.c.bf16 %v1897, %v1897
    %v1904 = vpack.c.bf16 %v1898, %v1898
    %v1905 = vpack.c.bf16 %v1899, %v1899
    %v1906 = vpack.c.bf16 %v1900, %v1900
    %v1907 = vpack.c.bf16 %v1901, %v1901
    %v1908 = vpack.c.bf16 %v1902, %v1902
    %v1909 = vld [vmem:[#allocation11] sm:$0xff]
    %v1910 = vld [vmem:[#allocation11 + $0x8] sm:$0xff]
    %v1911 = vld [vmem:[#allocation11 + $0x10] sm:$0xff]
    %v1912 = vld [vmem:[#allocation11 + $0x18] sm:$0xff]
    %v1913 = vld [vmem:[#allocation11 + $0x20] sm:$0xff]
    %v1914 = vld [vmem:[#allocation11 + $0x28] sm:$0xff]
    %v1915 = vld [vmem:[#allocation11 + $0x30] sm:$0xff]
    %v1916 = vld [vmem:[#allocation11 + $0x38] sm:$0xff]
    %v1917 = vld [vmem:[#allocation11 + $0x40] sm:$0xff]
    %v1918 = vld [vmem:[#allocation11 + $0x48] sm:$0xff]
    %v1919 = vld [vmem:[#allocation11 + $0x50] sm:$0xff]
    %v1920 = vld [vmem:[#allocation11 + $0x58] sm:$0xff]
    %v1921 = vld [vmem:[#allocation11 + $0x60] sm:$0xff]
    %v1922 = vld [vmem:[#allocation11 + $0x68] sm:$0xff]
    %v1923 = vld [vmem:[#allocation11 + $0x70] sm:$0xff]
    %v1924 = vld [vmem:[#allocation11 + $0x78] sm:$0xff]
    %v1925 = vld [vmem:[#allocation11 + $0x80] sm:$0xff]
    %v1926 = vld [vmem:[#allocation11 + $0x88] sm:$0xff]
    %v1927 = vld [vmem:[#allocation11 + $0x90] sm:$0xff]
    %v1928 = vld [vmem:[#allocation11 + $0x98] sm:$0xff]
    %v1929 = vld [vmem:[#allocation11 + $0xa0] sm:$0xff]
    %v1930 = vld [vmem:[#allocation11 + $0xa8] sm:$0xff]
    %v1931 = vld [vmem:[#allocation11 + $0xb0] sm:$0xff]
    %v1932 = vld [vmem:[#allocation11 + $0xb8] sm:$0xff]
    %v1933 = vld [vmem:[#allocation11 + $0xc0] sm:$0xff]
    %v1934 = vld [vmem:[#allocation11 + $0xc8] sm:$0xff]
    %v1935 = vld [vmem:[#allocation11 + $0xd0] sm:$0xff]
    %v1936 = vld [vmem:[#allocation11 + $0xd8] sm:$0xff]
    %v1937 = vld [vmem:[#allocation11 + $0xe0] sm:$0xff]
    %v1938 = vld [vmem:[#allocation11 + $0xe8] sm:$0xff]
    %v1939 = vld [vmem:[#allocation11 + $0xf0] sm:$0xff]
    %v1940 = vld [vmem:[#allocation11 + $0xf8] sm:$0xff]
    %v1941 = vld [vmem:[#allocation11 + $0x100] sm:$0xff]
    %v1942 = vld [vmem:[#allocation11 + $0x108] sm:$0xff]
    %v1943 = vld [vmem:[#allocation11 + $0x110] sm:$0xff]
    %v1944 = vld [vmem:[#allocation11 + $0x118] sm:$0xff]
    %v1945 = vld [vmem:[#allocation11 + $0x120] sm:$0xff]
    %v1946 = vld [vmem:[#allocation11 + $0x128] sm:$0xff]
    %v1947 = vld [vmem:[#allocation11 + $0x130] sm:$0xff]
    %v1948 = vld [vmem:[#allocation11 + $0x138] sm:$0xff]
    %v1949 = vld [vmem:[#allocation11 + $0x140] sm:$0xff]
    %v1950 = vld [vmem:[#allocation11 + $0x148] sm:$0xff]
    %v1951 = vld [vmem:[#allocation11 + $0x150] sm:$0xff]
    %v1952 = vld [vmem:[#allocation11 + $0x158] sm:$0xff]
    %v1953 = vld [vmem:[#allocation11 + $0x160] sm:$0xff]
    %v1954 = vld [vmem:[#allocation11 + $0x168] sm:$0xff]
    %v1955 = vld [vmem:[#allocation11 + $0x170] sm:$0xff]
    %v1956 = vld [vmem:[#allocation11 + $0x178] sm:$0xff]
    %v1957 = vld [vmem:[#allocation11 + $0x180] sm:$0xff]
    %v1958 = vld [vmem:[#allocation11 + $0x188] sm:$0xff]
    %v1959 = vld [vmem:[#allocation11 + $0x190] sm:$0xff]
    %v1960 = vld [vmem:[#allocation11 + $0x198] sm:$0xff]
    %v1961 = vld [vmem:[#allocation11 + $0x1a0] sm:$0xff]
    %v1962 = vld [vmem:[#allocation11 + $0x1a8] sm:$0xff]
    %v1963 = vld [vmem:[#allocation11 + $0x1b0] sm:$0xff]
    %v1964 = vld [vmem:[#allocation11 + $0x1b8] sm:$0xff]
    %v1965 = vld [vmem:[#allocation11 + $0x1c0] sm:$0xff]
    %v1966 = vld [vmem:[#allocation11 + $0x1c8] sm:$0xff]
    %v1967 = vld [vmem:[#allocation11 + $0x1d0] sm:$0xff]
    %v1968 = vld [vmem:[#allocation11 + $0x1d8] sm:$0xff]
    %v1969 = vld [vmem:[#allocation11 + $0x1e0] sm:$0xff]
    %v1970 = vld [vmem:[#allocation11 + $0x1e8] sm:$0xff]
    %v1971 = vld [vmem:[#allocation11 + $0x1f0] sm:$0xff]
    %v1972 = vld [vmem:[#allocation11 + $0x1f8] sm:$0xff]
    %v1973 = vld [vmem:[#allocation11 + $0x200] sm:$0xff]
    %v1974 = vld [vmem:[#allocation11 + $0x208] sm:$0xff]
    %v1975 = vld [vmem:[#allocation11 + $0x210] sm:$0xff]
    %v1976 = vld [vmem:[#allocation11 + $0x218] sm:$0xff]
    %v1977 = vld [vmem:[#allocation11 + $0x220] sm:$0xff]
    %v1978 = vld [vmem:[#allocation11 + $0x228] sm:$0xff]
    %v1979 = vld [vmem:[#allocation11 + $0x230] sm:$0xff]
    %v1980 = vld [vmem:[#allocation11 + $0x238] sm:$0xff]
    %v1981 = vld [vmem:[#allocation11 + $0x240] sm:$0xff]
    %v1982 = vld [vmem:[#allocation11 + $0x248] sm:$0xff]
    %v1983 = vld [vmem:[#allocation11 + $0x250] sm:$0xff]
    %v1984 = vld [vmem:[#allocation11 + $0x258] sm:$0xff]
    %v1985 = vld [vmem:[#allocation11 + $0x260] sm:$0xff]
    %v1986 = vld [vmem:[#allocation11 + $0x268] sm:$0xff]
    %v1987 = vld [vmem:[#allocation11 + $0x270] sm:$0xff]
    %v1988 = vld [vmem:[#allocation11 + $0x278] sm:$0xff]
    %v1989 = vld [vmem:[#allocation11 + $0x280] sm:$0xff]
    %v1990 = vld [vmem:[#allocation11 + $0x288] sm:$0xff]
    %v1991 = vld [vmem:[#allocation11 + $0x290] sm:$0xff]
    %v1992 = vld [vmem:[#allocation11 + $0x298] sm:$0xff]
    %v1993 = vld [vmem:[#allocation11 + $0x2a0] sm:$0xff]
    %v1994 = vld [vmem:[#allocation11 + $0x2a8] sm:$0xff]
    %v1995 = vld [vmem:[#allocation11 + $0x2b0] sm:$0xff]
    %v1996 = vld [vmem:[#allocation11 + $0x2b8] sm:$0xff]
    %v1997 = vld [vmem:[#allocation11 + $0x2c0] sm:$0xff]
    %v1998 = vld [vmem:[#allocation11 + $0x2c8] sm:$0xff]
    %v1999 = vld [vmem:[#allocation11 + $0x2d0] sm:$0xff]
    %v2000 = vld [vmem:[#allocation11 + $0x2d8] sm:$0xff]
    %v2001 = vld [vmem:[#allocation11 + $0x2e0] sm:$0xff]
    %v2002 = vld [vmem:[#allocation11 + $0x2e8] sm:$0xff]
    %v2003 = vld [vmem:[#allocation11 + $0x2f0] sm:$0xff]
    %v2004 = vld [vmem:[#allocation11 + $0x2f8] sm:$0xff]
    %v2005 = vld [vmem:[#allocation11 + $0x300] sm:$0xff]
    %v2006 = vld [vmem:[#allocation11 + $0x308] sm:$0xff]
    %v2007 = vld [vmem:[#allocation11 + $0x310] sm:$0xff]
    %v2008 = vld [vmem:[#allocation11 + $0x318] sm:$0xff]
    %v2009 = vld [vmem:[#allocation11 + $0x320] sm:$0xff]
    %v2010 = vld [vmem:[#allocation11 + $0x328] sm:$0xff]
    %v2011 = vld [vmem:[#allocation11 + $0x330] sm:$0xff]
    %v2012 = vld [vmem:[#allocation11 + $0x338] sm:$0xff]
    %v2013 = vld [vmem:[#allocation11 + $0x340] sm:$0xff]
    %v2014 = vld [vmem:[#allocation11 + $0x348] sm:$0xff]
    %v2015 = vld [vmem:[#allocation11 + $0x350] sm:$0xff]
    %v2016 = vld [vmem:[#allocation11 + $0x358] sm:$0xff]
    %v2017 = vld [vmem:[#allocation11 + $0x360] sm:$0xff]
    %v2018 = vld [vmem:[#allocation11 + $0x368] sm:$0xff]
    %v2019 = vld [vmem:[#allocation11 + $0x370] sm:$0xff]
    %v2020 = vld [vmem:[#allocation11 + $0x378] sm:$0xff]
    %v2021 = vld [vmem:[#allocation11 + $0x380] sm:$0xff]
    %v2022 = vld [vmem:[#allocation11 + $0x388] sm:$0xff]
    %v2023 = vld [vmem:[#allocation11 + $0x390] sm:$0xff]
    %v2024 = vld [vmem:[#allocation11 + $0x398] sm:$0xff]
    %v2025 = vld [vmem:[#allocation11 + $0x3a0] sm:$0xff]
    %v2026 = vld [vmem:[#allocation11 + $0x3a8] sm:$0xff]
    %v2027 = vld [vmem:[#allocation11 + $0x3b0] sm:$0xff]
    %v2028 = vld [vmem:[#allocation11 + $0x3b8] sm:$0xff]
    %v2029 = vld [vmem:[#allocation11 + $0x3c0] sm:$0xff]
    %v2030 = vld [vmem:[#allocation11 + $0x3c8] sm:$0xff]
    %v2031 = vld [vmem:[#allocation11 + $0x3d0] sm:$0xff]
    %v2032 = vld [vmem:[#allocation11 + $0x3d8] sm:$0xff]
    %v2033 = vld [vmem:[#allocation11 + $0x3e0] sm:$0xff]
    %v2034 = vld [vmem:[#allocation11 + $0x3e8] sm:$0xff]
    %v2035 = vld [vmem:[#allocation11 + $0x3f0] sm:$0xff]
    %v2036 = vld [vmem:[#allocation11 + $0x3f8] sm:$0xff]
    %v2037 = vld [vmem:[#allocation11 + $0x400] sm:$0xff]
    %v2038 = vld [vmem:[#allocation11 + $0x408] sm:$0xff]
    %v2039 = vld [vmem:[#allocation11 + $0x410] sm:$0xff]
    %v2040 = vld [vmem:[#allocation11 + $0x418] sm:$0xff]
    %v2041 = vld [vmem:[#allocation11 + $0x420] sm:$0xff]
    %v2042 = vld [vmem:[#allocation11 + $0x428] sm:$0xff]
    %v2043 = vld [vmem:[#allocation11 + $0x430] sm:$0xff]
    %v2044 = vld [vmem:[#allocation11 + $0x438] sm:$0xff]
    %v2045 = vld [vmem:[#allocation11 + $0x440] sm:$0xff]
    %v2046 = vld [vmem:[#allocation11 + $0x448] sm:$0xff]
    %v2047 = vld [vmem:[#allocation11 + $0x450] sm:$0xff]
    %v2048 = vld [vmem:[#allocation11 + $0x458] sm:$0xff]
    %v2049 = vld [vmem:[#allocation11 + $0x460] sm:$0xff]
    %v2050 = vld [vmem:[#allocation11 + $0x468] sm:$0xff]
    %v2051 = vld [vmem:[#allocation11 + $0x470] sm:$0xff]
    %v2052 = vld [vmem:[#allocation11 + $0x478] sm:$0xff]
    %v2053 = vld [vmem:[#allocation11 + $0x480] sm:$0xff]
    %v2054 = vld [vmem:[#allocation11 + $0x488] sm:$0xff]
    %v2055 = vld [vmem:[#allocation11 + $0x490] sm:$0xff]
    %v2056 = vld [vmem:[#allocation11 + $0x498] sm:$0xff]
    %v2057 = vld [vmem:[#allocation11 + $0x4a0] sm:$0xff]
    %v2058 = vld [vmem:[#allocation11 + $0x4a8] sm:$0xff]
    %v2059 = vld [vmem:[#allocation11 + $0x4b0] sm:$0xff]
    %v2060 = vld [vmem:[#allocation11 + $0x4b8] sm:$0xff]
    %v2061 = vld [vmem:[#allocation11 + $0x4c0] sm:$0xff]
    %v2062 = vld [vmem:[#allocation11 + $0x4c8] sm:$0xff]
    %v2063 = vld [vmem:[#allocation11 + $0x4d0] sm:$0xff]
    %v2064 = vld [vmem:[#allocation11 + $0x4d8] sm:$0xff]
    %v2065 = vld [vmem:[#allocation11 + $0x4e0] sm:$0xff]
    %v2066 = vld [vmem:[#allocation11 + $0x4e8] sm:$0xff]
    %v2067 = vld [vmem:[#allocation11 + $0x4f0] sm:$0xff]
    %v2068 = vld [vmem:[#allocation11 + $0x4f8] sm:$0xff]
    %v2069 = vld [vmem:[#allocation11 + $0x500] sm:$0xff]
    %v2070 = vld [vmem:[#allocation11 + $0x508] sm:$0xff]
    %v2071 = vld [vmem:[#allocation11 + $0x510] sm:$0xff]
    %v2072 = vld [vmem:[#allocation11 + $0x518] sm:$0xff]
    %v2073 = vld [vmem:[#allocation11 + $0x520] sm:$0xff]
    %v2074 = vld [vmem:[#allocation11 + $0x528] sm:$0xff]
    %v2075 = vld [vmem:[#allocation11 + $0x530] sm:$0xff]
    %v2076 = vld [vmem:[#allocation11 + $0x538] sm:$0xff]
    %v2077 = vld [vmem:[#allocation11 + $0x540] sm:$0xff]
    %v2078 = vld [vmem:[#allocation11 + $0x548] sm:$0xff]
    %v2079 = vld [vmem:[#allocation11 + $0x550] sm:$0xff]
    %v2080 = vld [vmem:[#allocation11 + $0x558] sm:$0xff]
    %v2081 = vld [vmem:[#allocation11 + $0x560] sm:$0xff]
    %v2082 = vld [vmem:[#allocation11 + $0x568] sm:$0xff]
    %v2083 = vld [vmem:[#allocation11 + $0x570] sm:$0xff]
    %v2084 = vld [vmem:[#allocation11 + $0x578] sm:$0xff]
    %v2085 = vld [vmem:[#allocation11 + $0x580] sm:$0xff]
    %v2086 = vld [vmem:[#allocation11 + $0x588] sm:$0xff]
    %v2087 = vld [vmem:[#allocation11 + $0x590] sm:$0xff]
    %v2088 = vld [vmem:[#allocation11 + $0x598] sm:$0xff]
    %v2089 = vld [vmem:[#allocation11 + $0x5a0] sm:$0xff]
    %v2090 = vld [vmem:[#allocation11 + $0x5a8] sm:$0xff]
    %v2091 = vld [vmem:[#allocation11 + $0x5b0] sm:$0xff]
    %v2092 = vld [vmem:[#allocation11 + $0x5b8] sm:$0xff]
    %v2093 = vld [vmem:[#allocation11 + $0x5c0] sm:$0xff]
    %v2094 = vld [vmem:[#allocation11 + $0x5c8] sm:$0xff]
    %v2095 = vld [vmem:[#allocation11 + $0x5d0] sm:$0xff]
    %v2096 = vld [vmem:[#allocation11 + $0x5d8] sm:$0xff]
    %v2097 = vld [vmem:[#allocation11 + $0x5e0] sm:$0xff]
    %v2098 = vld [vmem:[#allocation11 + $0x5e8] sm:$0xff]
    %v2099 = vld [vmem:[#allocation11 + $0x5f0] sm:$0xff]
    %v2100 = vld [vmem:[#allocation11 + $0x5f8] sm:$0xff]
    %v2101 = vld [vmem:[#allocation11 + $0x600] sm:$0xff]
    %v2102 = vld [vmem:[#allocation11 + $0x608] sm:$0xff]
    %v2103 = vld [vmem:[#allocation11 + $0x610] sm:$0xff]
    %v2104 = vld [vmem:[#allocation11 + $0x618] sm:$0xff]
    %v2105 = vld [vmem:[#allocation11 + $0x620] sm:$0xff]
    %v2106 = vld [vmem:[#allocation11 + $0x628] sm:$0xff]
    %v2107 = vld [vmem:[#allocation11 + $0x630] sm:$0xff]
    %v2108 = vld [vmem:[#allocation11 + $0x638] sm:$0xff]
    %v2109 = vld [vmem:[#allocation11 + $0x640] sm:$0xff]
    %v2110 = vld [vmem:[#allocation11 + $0x648] sm:$0xff]
    %v2111 = vld [vmem:[#allocation11 + $0x650] sm:$0xff]
    %v2112 = vld [vmem:[#allocation11 + $0x658] sm:$0xff]
    %v2113 = vld [vmem:[#allocation11 + $0x660] sm:$0xff]
    %v2114 = vld [vmem:[#allocation11 + $0x668] sm:$0xff]
    %v2115 = vld [vmem:[#allocation11 + $0x670] sm:$0xff]
    %v2116 = vld [vmem:[#allocation11 + $0x678] sm:$0xff]
    %v2117 = vld [vmem:[#allocation11 + $0x680] sm:$0xff]
    %v2118 = vld [vmem:[#allocation11 + $0x688] sm:$0xff]
    %v2119 = vld [vmem:[#allocation11 + $0x690] sm:$0xff]
    %v2120 = vld [vmem:[#allocation11 + $0x698] sm:$0xff]
    %v2121 = vld [vmem:[#allocation11 + $0x6a0] sm:$0xff]
    %v2122 = vld [vmem:[#allocation11 + $0x6a8] sm:$0xff]
    %v2123 = vld [vmem:[#allocation11 + $0x6b0] sm:$0xff]
    %v2124 = vld [vmem:[#allocation11 + $0x6b8] sm:$0xff]
    %v2125 = vld [vmem:[#allocation11 + $0x6c0] sm:$0xff]
    %v2126 = vld [vmem:[#allocation11 + $0x6c8] sm:$0xff]
    %v2127 = vld [vmem:[#allocation11 + $0x6d0] sm:$0xff]
    %v2128 = vld [vmem:[#allocation11 + $0x6d8] sm:$0xff]
    %v2129 = vld [vmem:[#allocation11 + $0x6e0] sm:$0xff]
    %v2130 = vld [vmem:[#allocation11 + $0x6e8] sm:$0xff]
    %v2131 = vld [vmem:[#allocation11 + $0x6f0] sm:$0xff]
    %v2132 = vld [vmem:[#allocation11 + $0x6f8] sm:$0xff]
    %v2133 = vld [vmem:[#allocation11 + $0x700] sm:$0xff]
    %v2134 = vld [vmem:[#allocation11 + $0x708] sm:$0xff]
    %v2135 = vld [vmem:[#allocation11 + $0x710] sm:$0xff]
    %v2136 = vld [vmem:[#allocation11 + $0x718] sm:$0xff]
    %v2137 = vld [vmem:[#allocation11 + $0x720] sm:$0xff]
    %v2138 = vld [vmem:[#allocation11 + $0x728] sm:$0xff]
    %v2139 = vld [vmem:[#allocation11 + $0x730] sm:$0xff]
    %v2140 = vld [vmem:[#allocation11 + $0x738] sm:$0xff]
    %v2141 = vld [vmem:[#allocation11 + $0x740] sm:$0xff]
    %v2142 = vld [vmem:[#allocation11 + $0x748] sm:$0xff]
    %v2143 = vld [vmem:[#allocation11 + $0x750] sm:$0xff]
    %v2144 = vld [vmem:[#allocation11 + $0x758] sm:$0xff]
    %v2145 = vld [vmem:[#allocation11 + $0x760] sm:$0xff]
    %v2146 = vld [vmem:[#allocation11 + $0x768] sm:$0xff]
    %v2147 = vld [vmem:[#allocation11 + $0x770] sm:$0xff]
    %v2148 = vld [vmem:[#allocation11 + $0x778] sm:$0xff]
    %v2149 = vld [vmem:[#allocation11 + $0x780] sm:$0xff]
    %v2150 = vld [vmem:[#allocation11 + $0x788] sm:$0xff]
    %v2151 = vld [vmem:[#allocation11 + $0x790] sm:$0xff]
    %v2152 = vld [vmem:[#allocation11 + $0x798] sm:$0xff]
    %v2153 = vld [vmem:[#allocation11 + $0x7a0] sm:$0xff]
    %v2154 = vld [vmem:[#allocation11 + $0x7a8] sm:$0xff]
    %v2155 = vld [vmem:[#allocation11 + $0x7b0] sm:$0xff]
    %v2156 = vld [vmem:[#allocation11 + $0x7b8] sm:$0xff]
    %v2157 = vld [vmem:[#allocation11 + $0x7c0] sm:$0xff]
    %v2158 = vld [vmem:[#allocation11 + $0x7c8] sm:$0xff]
    %v2159 = vld [vmem:[#allocation11 + $0x7d0] sm:$0xff]
    %v2160 = vld [vmem:[#allocation11 + $0x7d8] sm:$0xff]
    %v2161 = vld [vmem:[#allocation11 + $0x7e0] sm:$0xff]
    %v2162 = vld [vmem:[#allocation11 + $0x7e8] sm:$0xff]
    %v2163 = vld [vmem:[#allocation11 + $0x7f0] sm:$0xff]
    %v2164 = vld [vmem:[#allocation11 + $0x7f8] sm:$0xff]
    %v2165 = vld [vmem:[#allocation11 + $0x800] sm:$0xff]
    %v2166 = vld [vmem:[#allocation11 + $0x808] sm:$0xff]
    %v2167 = vld [vmem:[#allocation11 + $0x810] sm:$0xff]
    %v2168 = vld [vmem:[#allocation11 + $0x818] sm:$0xff]
    %v2169 = vld [vmem:[#allocation11 + $0x820] sm:$0xff]
    %v2170 = vld [vmem:[#allocation11 + $0x828] sm:$0xff]
    %v2171 = vld [vmem:[#allocation11 + $0x830] sm:$0xff]
    %v2172 = vld [vmem:[#allocation11 + $0x838] sm:$0xff]
    %v2173 = vld [vmem:[#allocation11 + $0x840] sm:$0xff]
    %v2174 = vld [vmem:[#allocation11 + $0x848] sm:$0xff]
    %v2175 = vld [vmem:[#allocation11 + $0x850] sm:$0xff]
    %v2176 = vld [vmem:[#allocation11 + $0x858] sm:$0xff]
    %v2177 = vld [vmem:[#allocation11 + $0x860] sm:$0xff]
    %v2178 = vld [vmem:[#allocation11 + $0x868] sm:$0xff]
    %v2179 = vld [vmem:[#allocation11 + $0x870] sm:$0xff]
    %v2180 = vld [vmem:[#allocation11 + $0x878] sm:$0xff]
    %v2181 = vld [vmem:[#allocation11 + $0x880] sm:$0xff]
    %v2182 = vld [vmem:[#allocation11 + $0x888] sm:$0xff]
    %v2183 = vld [vmem:[#allocation11 + $0x890] sm:$0xff]
    %v2184 = vld [vmem:[#allocation11 + $0x898] sm:$0xff]
    %v2185 = vld [vmem:[#allocation11 + $0x8a0] sm:$0xff]
    %v2186 = vld [vmem:[#allocation11 + $0x8a8] sm:$0xff]
    %v2187 = vld [vmem:[#allocation11 + $0x8b0] sm:$0xff]
    %v2188 = vld [vmem:[#allocation11 + $0x8b8] sm:$0xff]
    %v2189 = vld [vmem:[#allocation11 + $0x8c0] sm:$0xff]
    %v2190 = vld [vmem:[#allocation11 + $0x8c8] sm:$0xff]
    %v2191 = vld [vmem:[#allocation11 + $0x8d0] sm:$0xff]
    %v2192 = vld [vmem:[#allocation11 + $0x8d8] sm:$0xff]
    %v2193 = vld [vmem:[#allocation11 + $0x8e0] sm:$0xff]
    %v2194 = vld [vmem:[#allocation11 + $0x8e8] sm:$0xff]
    %v2195 = vld [vmem:[#allocation11 + $0x8f0] sm:$0xff]
    %v2196 = vld [vmem:[#allocation11 + $0x8f8] sm:$0xff]
    %v2197 = vld [vmem:[#allocation13] sm:$0x3f]
    %v2199 = vlaneseq
    %v2200 = vshrl.u32 %v2199, 7
    %v2201 = vsub.s32 0, %v2200
    %v2202 = vrot.slane %v2197, %v2201
    %v2203 = vlaneseq
    %v2204 = vshrl.u32 %v2203, 7
    %v2205 = vsub.s32 1, %v2204
    %v2206 = vrot.slane %v2197, %v2205
    %v2207 = vlaneseq
    %v2208 = vshrl.u32 %v2207, 7
    %v2209 = vsub.s32 2, %v2208
    %v2210 = vrot.slane %v2197, %v2209
    %v2211 = vlaneseq
    %v2212 = vshrl.u32 %v2211, 7
    %v2213 = vsub.s32 3, %v2212
    %v2214 = vrot.slane %v2197, %v2213
    %v2215 = vlaneseq
    %v2216 = vshrl.u32 %v2215, 7
    %v2217 = vsub.s32 4, %v2216
    %v2218 = vrot.slane %v2197, %v2217
    %v2219 = vlaneseq
    %v2220 = vshrl.u32 %v2219, 7
    %v2221 = vsub.s32 5, %v2220
    %v2222 = vrot.slane %v2197, %v2221
    %v2517 = vunpack.c.l.b16 %v1909
    %v2518 = vunpack.c.h.b16 %v1909
    %v2519 = vunpack.c.l.b16 %v1910
    %v2520 = vunpack.c.h.b16 %v1910
    %v2521 = vunpack.c.l.b16 %v1911
    %v2522 = vunpack.c.h.b16 %v1911
    %v2523 = vunpack.c.l.b16 %v1912
    %v2524 = vunpack.c.h.b16 %v1912
    %v2525 = vunpack.c.l.b16 %v1913
    %v2526 = vunpack.c.h.b16 %v1913
    %v2527 = vunpack.c.l.b16 %v1914
    %v2528 = vunpack.c.h.b16 %v1914
    %v2529 = vunpack.c.l.b16 %v1915
    %v2530 = vunpack.c.h.b16 %v1915
    %v2531 = vunpack.c.l.b16 %v1916
    %v2532 = vunpack.c.h.b16 %v1916
    %v2533 = vunpack.c.l.b16 %v1917
    %v2534 = vunpack.c.h.b16 %v1917
    %v2535 = vunpack.c.l.b16 %v1918
    %v2536 = vunpack.c.h.b16 %v1918
    %v2537 = vunpack.c.l.b16 %v1919
    %v2538 = vunpack.c.h.b16 %v1919
    %v2539 = vunpack.c.l.b16 %v1920
    %v2540 = vunpack.c.h.b16 %v1920
    %v2541 = vunpack.c.l.b16 %v1921
    %v2542 = vunpack.c.h.b16 %v1921
    %v2543 = vunpack.c.l.b16 %v1922
    %v2544 = vunpack.c.h.b16 %v1922
    %v2545 = vunpack.c.l.b16 %v1923
    %v2546 = vunpack.c.h.b16 %v1923
    %v2547 = vunpack.c.l.b16 %v1924
    %v2548 = vunpack.c.h.b16 %v1924
    %v2549 = vunpack.c.l.b16 %v1925
    %v2550 = vunpack.c.h.b16 %v1925
    %v2551 = vunpack.c.l.b16 %v1926
    %v2552 = vunpack.c.h.b16 %v1926
    %v2553 = vunpack.c.l.b16 %v1927
    %v2554 = vunpack.c.h.b16 %v1927
    %v2555 = vunpack.c.l.b16 %v1928
    %v2556 = vunpack.c.h.b16 %v1928
    %v2557 = vunpack.c.l.b16 %v1929
    %v2558 = vunpack.c.h.b16 %v1929
    %v2559 = vunpack.c.l.b16 %v1930
    %v2560 = vunpack.c.h.b16 %v1930
    %v2561 = vunpack.c.l.b16 %v1931
    %v2562 = vunpack.c.h.b16 %v1931
    %v2563 = vunpack.c.l.b16 %v1932
    %v2564 = vunpack.c.h.b16 %v1932
    %v2565 = vunpack.c.l.b16 %v1933
    %v2566 = vunpack.c.h.b16 %v1933
    %v2567 = vunpack.c.l.b16 %v1934
    %v2568 = vunpack.c.h.b16 %v1934
    %v2569 = vunpack.c.l.b16 %v1935
    %v2570 = vunpack.c.h.b16 %v1935
    %v2571 = vunpack.c.l.b16 %v1936
    %v2572 = vunpack.c.h.b16 %v1936
    %v2573 = vunpack.c.l.b16 %v1937
    %v2574 = vunpack.c.h.b16 %v1937
    %v2575 = vunpack.c.l.b16 %v1938
    %v2576 = vunpack.c.h.b16 %v1938
    %v2577 = vunpack.c.l.b16 %v1939
    %v2578 = vunpack.c.h.b16 %v1939
    %v2579 = vunpack.c.l.b16 %v1940
    %v2580 = vunpack.c.h.b16 %v1940
    %v2581 = vunpack.c.l.b16 %v1941
    %v2582 = vunpack.c.h.b16 %v1941
    %v2583 = vunpack.c.l.b16 %v1942
    %v2584 = vunpack.c.h.b16 %v1942
    %v2585 = vunpack.c.l.b16 %v1943
    %v2586 = vunpack.c.h.b16 %v1943
    %v2587 = vunpack.c.l.b16 %v1944
    %v2588 = vunpack.c.h.b16 %v1944
    %v2589 = vunpack.c.l.b16 %v1945
    %v2590 = vunpack.c.h.b16 %v1945
    %v2591 = vunpack.c.l.b16 %v1946
    %v2592 = vunpack.c.h.b16 %v1946
    %v2593 = vunpack.c.l.b16 %v1947
    %v2594 = vunpack.c.h.b16 %v1947
    %v2595 = vunpack.c.l.b16 %v1948
    %v2596 = vunpack.c.h.b16 %v1948
    %v2597 = vunpack.c.l.b16 %v1949
    %v2598 = vunpack.c.h.b16 %v1949
    %v2599 = vunpack.c.l.b16 %v1950
    %v2600 = vunpack.c.h.b16 %v1950
    %v2601 = vunpack.c.l.b16 %v1951
    %v2602 = vunpack.c.h.b16 %v1951
    %v2603 = vunpack.c.l.b16 %v1952
    %v2604 = vunpack.c.h.b16 %v1952
    %v2605 = vunpack.c.l.b16 %v1953
    %v2606 = vunpack.c.h.b16 %v1953
    %v2607 = vunpack.c.l.b16 %v1954
    %v2608 = vunpack.c.h.b16 %v1954
    %v2609 = vunpack.c.l.b16 %v1955
    %v2610 = vunpack.c.h.b16 %v1955
    %v2611 = vunpack.c.l.b16 %v1956
    %v2612 = vunpack.c.h.b16 %v1956
    %v2613 = vunpack.c.l.b16 %v1957
    %v2614 = vunpack.c.h.b16 %v1957
    %v2615 = vunpack.c.l.b16 %v1958
    %v2616 = vunpack.c.h.b16 %v1958
    %v2617 = vunpack.c.l.b16 %v1959
    %v2618 = vunpack.c.h.b16 %v1959
    %v2619 = vunpack.c.l.b16 %v1960
    %v2620 = vunpack.c.h.b16 %v1960
    %v2621 = vunpack.c.l.b16 %v1961
    %v2622 = vunpack.c.h.b16 %v1961
    %v2623 = vunpack.c.l.b16 %v1962
    %v2624 = vunpack.c.h.b16 %v1962
    %v2625 = vunpack.c.l.b16 %v1963
    %v2626 = vunpack.c.h.b16 %v1963
    %v2627 = vunpack.c.l.b16 %v1964
    %v2628 = vunpack.c.h.b16 %v1964
    %v2629 = vunpack.c.l.b16 %v1965
    %v2630 = vunpack.c.h.b16 %v1965
    %v2631 = vunpack.c.l.b16 %v1966
    %v2632 = vunpack.c.h.b16 %v1966
    %v2633 = vunpack.c.l.b16 %v1967
    %v2634 = vunpack.c.h.b16 %v1967
    %v2635 = vunpack.c.l.b16 %v1968
    %v2636 = vunpack.c.h.b16 %v1968
    %v2637 = vunpack.c.l.b16 %v1969
    %v2638 = vunpack.c.h.b16 %v1969
    %v2639 = vunpack.c.l.b16 %v1970
    %v2640 = vunpack.c.h.b16 %v1970
    %v2641 = vunpack.c.l.b16 %v1971
    %v2642 = vunpack.c.h.b16 %v1971
    %v2643 = vunpack.c.l.b16 %v1972
    %v2644 = vunpack.c.h.b16 %v1972
    %v2645 = vunpack.c.l.b16 %v1973
    %v2646 = vunpack.c.h.b16 %v1973
    %v2647 = vunpack.c.l.b16 %v1974
    %v2648 = vunpack.c.h.b16 %v1974
    %v2649 = vunpack.c.l.b16 %v1975
    %v2650 = vunpack.c.h.b16 %v1975
    %v2651 = vunpack.c.l.b16 %v1976
    %v2652 = vunpack.c.h.b16 %v1976
    %v2653 = vunpack.c.l.b16 %v1977
    %v2654 = vunpack.c.h.b16 %v1977
    %v2655 = vunpack.c.l.b16 %v1978
    %v2656 = vunpack.c.h.b16 %v1978
    %v2657 = vunpack.c.l.b16 %v1979
    %v2658 = vunpack.c.h.b16 %v1979
    %v2659 = vunpack.c.l.b16 %v1980
    %v2660 = vunpack.c.h.b16 %v1980
    %v2661 = vunpack.c.l.b16 %v1981
    %v2662 = vunpack.c.h.b16 %v1981
    %v2663 = vunpack.c.l.b16 %v1982
    %v2664 = vunpack.c.h.b16 %v1982
    %v2665 = vunpack.c.l.b16 %v1983
    %v2666 = vunpack.c.h.b16 %v1983
    %v2667 = vunpack.c.l.b16 %v1984
    %v2668 = vunpack.c.h.b16 %v1984
    %v2669 = vunpack.c.l.b16 %v1985
    %v2670 = vunpack.c.h.b16 %v1985
    %v2671 = vunpack.c.l.b16 %v1986
    %v2672 = vunpack.c.h.b16 %v1986
    %v2673 = vunpack.c.l.b16 %v1987
    %v2674 = vunpack.c.h.b16 %v1987
    %v2675 = vunpack.c.l.b16 %v1988
    %v2676 = vunpack.c.h.b16 %v1988
    %v2677 = vunpack.c.l.b16 %v1989
    %v2678 = vunpack.c.h.b16 %v1989
    %v2679 = vunpack.c.l.b16 %v1990
    %v2680 = vunpack.c.h.b16 %v1990
    %v2681 = vunpack.c.l.b16 %v1991
    %v2682 = vunpack.c.h.b16 %v1991
    %v2683 = vunpack.c.l.b16 %v1992
    %v2684 = vunpack.c.h.b16 %v1992
    %v2685 = vunpack.c.l.b16 %v1993
    %v2686 = vunpack.c.h.b16 %v1993
    %v2687 = vunpack.c.l.b16 %v1994
    %v2688 = vunpack.c.h.b16 %v1994
    %v2689 = vunpack.c.l.b16 %v1995
    %v2690 = vunpack.c.h.b16 %v1995
    %v2691 = vunpack.c.l.b16 %v1996
    %v2692 = vunpack.c.h.b16 %v1996
    %v2693 = vunpack.c.l.b16 %v1997
    %v2694 = vunpack.c.h.b16 %v1997
    %v2695 = vunpack.c.l.b16 %v1998
    %v2696 = vunpack.c.h.b16 %v1998
    %v2697 = vunpack.c.l.b16 %v1999
    %v2698 = vunpack.c.h.b16 %v1999
    %v2699 = vunpack.c.l.b16 %v2000
    %v2700 = vunpack.c.h.b16 %v2000
    %v2701 = vunpack.c.l.b16 %v2001
    %v2702 = vunpack.c.h.b16 %v2001
    %v2703 = vunpack.c.l.b16 %v2002
    %v2704 = vunpack.c.h.b16 %v2002
    %v2705 = vunpack.c.l.b16 %v2003
    %v2706 = vunpack.c.h.b16 %v2003
    %v2707 = vunpack.c.l.b16 %v2004
    %v2708 = vunpack.c.h.b16 %v2004
    %v2709 = vunpack.c.l.b16 %v2005
    %v2710 = vunpack.c.h.b16 %v2005
    %v2711 = vunpack.c.l.b16 %v2006
    %v2712 = vunpack.c.h.b16 %v2006
    %v2713 = vunpack.c.l.b16 %v2007
    %v2714 = vunpack.c.h.b16 %v2007
    %v2715 = vunpack.c.l.b16 %v2008
    %v2716 = vunpack.c.h.b16 %v2008
    %v2717 = vunpack.c.l.b16 %v2009
    %v2718 = vunpack.c.h.b16 %v2009
    %v2719 = vunpack.c.l.b16 %v2010
    %v2720 = vunpack.c.h.b16 %v2010
    %v2721 = vunpack.c.l.b16 %v2011
    %v2722 = vunpack.c.h.b16 %v2011
    %v2723 = vunpack.c.l.b16 %v2012
    %v2724 = vunpack.c.h.b16 %v2012
    %v2725 = vunpack.c.l.b16 %v2013
    %v2726 = vunpack.c.h.b16 %v2013
    %v2727 = vunpack.c.l.b16 %v2014
    %v2728 = vunpack.c.h.b16 %v2014
    %v2729 = vunpack.c.l.b16 %v2015
    %v2730 = vunpack.c.h.b16 %v2015
    %v2731 = vunpack.c.l.b16 %v2016
    %v2732 = vunpack.c.h.b16 %v2016
    %v2733 = vunpack.c.l.b16 %v2017
    %v2734 = vunpack.c.h.b16 %v2017
    %v2735 = vunpack.c.l.b16 %v2018
    %v2736 = vunpack.c.h.b16 %v2018
    %v2737 = vunpack.c.l.b16 %v2019
    %v2738 = vunpack.c.h.b16 %v2019
    %v2739 = vunpack.c.l.b16 %v2020
    %v2740 = vunpack.c.h.b16 %v2020
    %v2741 = vunpack.c.l.b16 %v2021
    %v2742 = vunpack.c.h.b16 %v2021
    %v2743 = vunpack.c.l.b16 %v2022
    %v2744 = vunpack.c.h.b16 %v2022
    %v2745 = vunpack.c.l.b16 %v2023
    %v2746 = vunpack.c.h.b16 %v2023
    %v2747 = vunpack.c.l.b16 %v2024
    %v2748 = vunpack.c.h.b16 %v2024
    %v2749 = vunpack.c.l.b16 %v2025
    %v2750 = vunpack.c.h.b16 %v2025
    %v2751 = vunpack.c.l.b16 %v2026
    %v2752 = vunpack.c.h.b16 %v2026
    %v2753 = vunpack.c.l.b16 %v2027
    %v2754 = vunpack.c.h.b16 %v2027
    %v2755 = vunpack.c.l.b16 %v2028
    %v2756 = vunpack.c.h.b16 %v2028
    %v2757 = vunpack.c.l.b16 %v2029
    %v2758 = vunpack.c.h.b16 %v2029
    %v2759 = vunpack.c.l.b16 %v2030
    %v2760 = vunpack.c.h.b16 %v2030
    %v2761 = vunpack.c.l.b16 %v2031
    %v2762 = vunpack.c.h.b16 %v2031
    %v2763 = vunpack.c.l.b16 %v2032
    %v2764 = vunpack.c.h.b16 %v2032
    %v2765 = vunpack.c.l.b16 %v2033
    %v2766 = vunpack.c.h.b16 %v2033
    %v2767 = vunpack.c.l.b16 %v2034
    %v2768 = vunpack.c.h.b16 %v2034
    %v2769 = vunpack.c.l.b16 %v2035
    %v2770 = vunpack.c.h.b16 %v2035
    %v2771 = vunpack.c.l.b16 %v2036
    %v2772 = vunpack.c.h.b16 %v2036
    %v2773 = vunpack.c.l.b16 %v2037
    %v2774 = vunpack.c.h.b16 %v2037
    %v2775 = vunpack.c.l.b16 %v2038
    %v2776 = vunpack.c.h.b16 %v2038
    %v2777 = vunpack.c.l.b16 %v2039
    %v2778 = vunpack.c.h.b16 %v2039
    %v2779 = vunpack.c.l.b16 %v2040
    %v2780 = vunpack.c.h.b16 %v2040
    %v2781 = vunpack.c.l.b16 %v2041
    %v2782 = vunpack.c.h.b16 %v2041
    %v2783 = vunpack.c.l.b16 %v2042
    %v2784 = vunpack.c.h.b16 %v2042
    %v2785 = vunpack.c.l.b16 %v2043
    %v2786 = vunpack.c.h.b16 %v2043
    %v2787 = vunpack.c.l.b16 %v2044
    %v2788 = vunpack.c.h.b16 %v2044
    %v2789 = vunpack.c.l.b16 %v2045
    %v2790 = vunpack.c.h.b16 %v2045
    %v2791 = vunpack.c.l.b16 %v2046
    %v2792 = vunpack.c.h.b16 %v2046
    %v2793 = vunpack.c.l.b16 %v2047
    %v2794 = vunpack.c.h.b16 %v2047
    %v2795 = vunpack.c.l.b16 %v2048
    %v2796 = vunpack.c.h.b16 %v2048
    %v2797 = vunpack.c.l.b16 %v2049
    %v2798 = vunpack.c.h.b16 %v2049
    %v2799 = vunpack.c.l.b16 %v2050
    %v2800 = vunpack.c.h.b16 %v2050
    %v2801 = vunpack.c.l.b16 %v2051
    %v2802 = vunpack.c.h.b16 %v2051
    %v2803 = vunpack.c.l.b16 %v2052
    %v2804 = vunpack.c.h.b16 %v2052
    %v2805 = vunpack.c.l.b16 %v2053
    %v2806 = vunpack.c.h.b16 %v2053
    %v2807 = vunpack.c.l.b16 %v2054
    %v2808 = vunpack.c.h.b16 %v2054
    %v2809 = vunpack.c.l.b16 %v2055
    %v2810 = vunpack.c.h.b16 %v2055
    %v2811 = vunpack.c.l.b16 %v2056
    %v2812 = vunpack.c.h.b16 %v2056
    %v2813 = vunpack.c.l.b16 %v2057
    %v2814 = vunpack.c.h.b16 %v2057
    %v2815 = vunpack.c.l.b16 %v2058
    %v2816 = vunpack.c.h.b16 %v2058
    %v2817 = vunpack.c.l.b16 %v2059
    %v2818 = vunpack.c.h.b16 %v2059
    %v2819 = vunpack.c.l.b16 %v2060
    %v2820 = vunpack.c.h.b16 %v2060
    %v2821 = vunpack.c.l.b16 %v2061
    %v2822 = vunpack.c.h.b16 %v2061
    %v2823 = vunpack.c.l.b16 %v2062
    %v2824 = vunpack.c.h.b16 %v2062
    %v2825 = vunpack.c.l.b16 %v2063
    %v2826 = vunpack.c.h.b16 %v2063
    %v2827 = vunpack.c.l.b16 %v2064
    %v2828 = vunpack.c.h.b16 %v2064
    %v2829 = vunpack.c.l.b16 %v2065
    %v2830 = vunpack.c.h.b16 %v2065
    %v2831 = vunpack.c.l.b16 %v2066
    %v2832 = vunpack.c.h.b16 %v2066
    %v2833 = vunpack.c.l.b16 %v2067
    %v2834 = vunpack.c.h.b16 %v2067
    %v2835 = vunpack.c.l.b16 %v2068
    %v2836 = vunpack.c.h.b16 %v2068
    %v2837 = vunpack.c.l.b16 %v2069
    %v2838 = vunpack.c.h.b16 %v2069
    %v2839 = vunpack.c.l.b16 %v2070
    %v2840 = vunpack.c.h.b16 %v2070
    %v2841 = vunpack.c.l.b16 %v2071
    %v2842 = vunpack.c.h.b16 %v2071
    %v2843 = vunpack.c.l.b16 %v2072
    %v2844 = vunpack.c.h.b16 %v2072
    %v2845 = vunpack.c.l.b16 %v2073
    %v2846 = vunpack.c.h.b16 %v2073
    %v2847 = vunpack.c.l.b16 %v2074
    %v2848 = vunpack.c.h.b16 %v2074
    %v2849 = vunpack.c.l.b16 %v2075
    %v2850 = vunpack.c.h.b16 %v2075
    %v2851 = vunpack.c.l.b16 %v2076
    %v2852 = vunpack.c.h.b16 %v2076
    %v2853 = vunpack.c.l.b16 %v2077
    %v2854 = vunpack.c.h.b16 %v2077
    %v2855 = vunpack.c.l.b16 %v2078
    %v2856 = vunpack.c.h.b16 %v2078
    %v2857 = vunpack.c.l.b16 %v2079
    %v2858 = vunpack.c.h.b16 %v2079
    %v2859 = vunpack.c.l.b16 %v2080
    %v2860 = vunpack.c.h.b16 %v2080
    %v2861 = vunpack.c.l.b16 %v2081
    %v2862 = vunpack.c.h.b16 %v2081
    %v2863 = vunpack.c.l.b16 %v2082
    %v2864 = vunpack.c.h.b16 %v2082
    %v2865 = vunpack.c.l.b16 %v2083
    %v2866 = vunpack.c.h.b16 %v2083
    %v2867 = vunpack.c.l.b16 %v2084
    %v2868 = vunpack.c.h.b16 %v2084
    %v2869 = vunpack.c.l.b16 %v2085
    %v2870 = vunpack.c.h.b16 %v2085
    %v2871 = vunpack.c.l.b16 %v2086
    %v2872 = vunpack.c.h.b16 %v2086
    %v2873 = vunpack.c.l.b16 %v2087
    %v2874 = vunpack.c.h.b16 %v2087
    %v2875 = vunpack.c.l.b16 %v2088
    %v2876 = vunpack.c.h.b16 %v2088
    %v2877 = vunpack.c.l.b16 %v2089
    %v2878 = vunpack.c.h.b16 %v2089
    %v2879 = vunpack.c.l.b16 %v2090
    %v2880 = vunpack.c.h.b16 %v2090
    %v2881 = vunpack.c.l.b16 %v2091
    %v2882 = vunpack.c.h.b16 %v2091
    %v2883 = vunpack.c.l.b16 %v2092
    %v2884 = vunpack.c.h.b16 %v2092
    %v2885 = vunpack.c.l.b16 %v2093
    %v2886 = vunpack.c.h.b16 %v2093
    %v2887 = vunpack.c.l.b16 %v2094
    %v2888 = vunpack.c.h.b16 %v2094
    %v2889 = vunpack.c.l.b16 %v2095
    %v2890 = vunpack.c.h.b16 %v2095
    %v2891 = vunpack.c.l.b16 %v2096
    %v2892 = vunpack.c.h.b16 %v2096
    %v2893 = vunpack.c.l.b16 %v2097
    %v2894 = vunpack.c.h.b16 %v2097
    %v2895 = vunpack.c.l.b16 %v2098
    %v2896 = vunpack.c.h.b16 %v2098
    %v2897 = vunpack.c.l.b16 %v2099
    %v2898 = vunpack.c.h.b16 %v2099
    %v2899 = vunpack.c.l.b16 %v2100
    %v2900 = vunpack.c.h.b16 %v2100
    %v2901 = vunpack.c.l.b16 %v2101
    %v2902 = vunpack.c.h.b16 %v2101
    %v2903 = vunpack.c.l.b16 %v2102
    %v2904 = vunpack.c.h.b16 %v2102
    %v2905 = vunpack.c.l.b16 %v2103
    %v2906 = vunpack.c.h.b16 %v2103
    %v2907 = vunpack.c.l.b16 %v2104
    %v2908 = vunpack.c.h.b16 %v2104
    %v2909 = vunpack.c.l.b16 %v2105
    %v2910 = vunpack.c.h.b16 %v2105
    %v2911 = vunpack.c.l.b16 %v2106
    %v2912 = vunpack.c.h.b16 %v2106
    %v2913 = vunpack.c.l.b16 %v2107
    %v2914 = vunpack.c.h.b16 %v2107
    %v2915 = vunpack.c.l.b16 %v2108
    %v2916 = vunpack.c.h.b16 %v2108
    %v2917 = vunpack.c.l.b16 %v2109
    %v2918 = vunpack.c.h.b16 %v2109
    %v2919 = vunpack.c.l.b16 %v2110
    %v2920 = vunpack.c.h.b16 %v2110
    %v2921 = vunpack.c.l.b16 %v2111
    %v2922 = vunpack.c.h.b16 %v2111
    %v2923 = vunpack.c.l.b16 %v2112
    %v2924 = vunpack.c.h.b16 %v2112
    %v2925 = vunpack.c.l.b16 %v2113
    %v2926 = vunpack.c.h.b16 %v2113
    %v2927 = vunpack.c.l.b16 %v2114
    %v2928 = vunpack.c.h.b16 %v2114
    %v2929 = vunpack.c.l.b16 %v2115
    %v2930 = vunpack.c.h.b16 %v2115
    %v2931 = vunpack.c.l.b16 %v2116
    %v2932 = vunpack.c.h.b16 %v2116
    %v2933 = vunpack.c.l.b16 %v2117
    %v2934 = vunpack.c.h.b16 %v2117
    %v2935 = vunpack.c.l.b16 %v2118
    %v2936 = vunpack.c.h.b16 %v2118
    %v2937 = vunpack.c.l.b16 %v2119
    %v2938 = vunpack.c.h.b16 %v2119
    %v2939 = vunpack.c.l.b16 %v2120
    %v2940 = vunpack.c.h.b16 %v2120
    %v2941 = vunpack.c.l.b16 %v2121
    %v2942 = vunpack.c.h.b16 %v2121
    %v2943 = vunpack.c.l.b16 %v2122
    %v2944 = vunpack.c.h.b16 %v2122
    %v2945 = vunpack.c.l.b16 %v2123
    %v2946 = vunpack.c.h.b16 %v2123
    %v2947 = vunpack.c.l.b16 %v2124
    %v2948 = vunpack.c.h.b16 %v2124
    %v2949 = vunpack.c.l.b16 %v2125
    %v2950 = vunpack.c.h.b16 %v2125
    %v2951 = vunpack.c.l.b16 %v2126
    %v2952 = vunpack.c.h.b16 %v2126
    %v2953 = vunpack.c.l.b16 %v2127
    %v2954 = vunpack.c.h.b16 %v2127
    %v2955 = vunpack.c.l.b16 %v2128
    %v2956 = vunpack.c.h.b16 %v2128
    %v2957 = vunpack.c.l.b16 %v2129
    %v2958 = vunpack.c.h.b16 %v2129
    %v2959 = vunpack.c.l.b16 %v2130
    %v2960 = vunpack.c.h.b16 %v2130
    %v2961 = vunpack.c.l.b16 %v2131
    %v2962 = vunpack.c.h.b16 %v2131
    %v2963 = vunpack.c.l.b16 %v2132
    %v2964 = vunpack.c.h.b16 %v2132
    %v2965 = vunpack.c.l.b16 %v2133
    %v2966 = vunpack.c.h.b16 %v2133
    %v2967 = vunpack.c.l.b16 %v2134
    %v2968 = vunpack.c.h.b16 %v2134
    %v2969 = vunpack.c.l.b16 %v2135
    %v2970 = vunpack.c.h.b16 %v2135
    %v2971 = vunpack.c.l.b16 %v2136
    %v2972 = vunpack.c.h.b16 %v2136
    %v2973 = vunpack.c.l.b16 %v2137
    %v2974 = vunpack.c.h.b16 %v2137
    %v2975 = vunpack.c.l.b16 %v2138
    %v2976 = vunpack.c.h.b16 %v2138
    %v2977 = vunpack.c.l.b16 %v2139
    %v2978 = vunpack.c.h.b16 %v2139
    %v2979 = vunpack.c.l.b16 %v2140
    %v2980 = vunpack.c.h.b16 %v2140
    %v2981 = vunpack.c.l.b16 %v2141
    %v2982 = vunpack.c.h.b16 %v2141
    %v2983 = vunpack.c.l.b16 %v2142
    %v2984 = vunpack.c.h.b16 %v2142
    %v2985 = vunpack.c.l.b16 %v2143
    %v2986 = vunpack.c.h.b16 %v2143
    %v2987 = vunpack.c.l.b16 %v2144
    %v2988 = vunpack.c.h.b16 %v2144
    %v2989 = vunpack.c.l.b16 %v2145
    %v2990 = vunpack.c.h.b16 %v2145
    %v2991 = vunpack.c.l.b16 %v2146
    %v2992 = vunpack.c.h.b16 %v2146
    %v2993 = vunpack.c.l.b16 %v2147
    %v2994 = vunpack.c.h.b16 %v2147
    %v2995 = vunpack.c.l.b16 %v2148
    %v2996 = vunpack.c.h.b16 %v2148
    %v2997 = vunpack.c.l.b16 %v2149
    %v2998 = vunpack.c.h.b16 %v2149
    %v2999 = vunpack.c.l.b16 %v2150
    %v3000 = vunpack.c.h.b16 %v2150
    %v3001 = vunpack.c.l.b16 %v2151
    %v3002 = vunpack.c.h.b16 %v2151
    %v3003 = vunpack.c.l.b16 %v2152
    %v3004 = vunpack.c.h.b16 %v2152
    %v3005 = vunpack.c.l.b16 %v2153
    %v3006 = vunpack.c.h.b16 %v2153
    %v3007 = vunpack.c.l.b16 %v2154
    %v3008 = vunpack.c.h.b16 %v2154
    %v3009 = vunpack.c.l.b16 %v2155
    %v3010 = vunpack.c.h.b16 %v2155
    %v3011 = vunpack.c.l.b16 %v2156
    %v3012 = vunpack.c.h.b16 %v2156
    %v3013 = vunpack.c.l.b16 %v2157
    %v3014 = vunpack.c.h.b16 %v2157
    %v3015 = vunpack.c.l.b16 %v2158
    %v3016 = vunpack.c.h.b16 %v2158
    %v3017 = vunpack.c.l.b16 %v2159
    %v3018 = vunpack.c.h.b16 %v2159
    %v3019 = vunpack.c.l.b16 %v2160
    %v3020 = vunpack.c.h.b16 %v2160
    %v3021 = vunpack.c.l.b16 %v2161
    %v3022 = vunpack.c.h.b16 %v2161
    %v3023 = vunpack.c.l.b16 %v2162
    %v3024 = vunpack.c.h.b16 %v2162
    %v3025 = vunpack.c.l.b16 %v2163
    %v3026 = vunpack.c.h.b16 %v2163
    %v3027 = vunpack.c.l.b16 %v2164
    %v3028 = vunpack.c.h.b16 %v2164
    %v3029 = vunpack.c.l.b16 %v2165
    %v3030 = vunpack.c.h.b16 %v2165
    %v3031 = vunpack.c.l.b16 %v2166
    %v3032 = vunpack.c.h.b16 %v2166
    %v3033 = vunpack.c.l.b16 %v2167
    %v3034 = vunpack.c.h.b16 %v2167
    %v3035 = vunpack.c.l.b16 %v2168
    %v3036 = vunpack.c.h.b16 %v2168
    %v3037 = vunpack.c.l.b16 %v2169
    %v3038 = vunpack.c.h.b16 %v2169
    %v3039 = vunpack.c.l.b16 %v2170
    %v3040 = vunpack.c.h.b16 %v2170
    %v3041 = vunpack.c.l.b16 %v2171
    %v3042 = vunpack.c.h.b16 %v2171
    %v3043 = vunpack.c.l.b16 %v2172
    %v3044 = vunpack.c.h.b16 %v2172
    %v3045 = vunpack.c.l.b16 %v2173
    %v3046 = vunpack.c.h.b16 %v2173
    %v3047 = vunpack.c.l.b16 %v2174
    %v3048 = vunpack.c.h.b16 %v2174
    %v3049 = vunpack.c.l.b16 %v2175
    %v3050 = vunpack.c.h.b16 %v2175
    %v3051 = vunpack.c.l.b16 %v2176
    %v3052 = vunpack.c.h.b16 %v2176
    %v3053 = vunpack.c.l.b16 %v2177
    %v3054 = vunpack.c.h.b16 %v2177
    %v3055 = vunpack.c.l.b16 %v2178
    %v3056 = vunpack.c.h.b16 %v2178
    %v3057 = vunpack.c.l.b16 %v2179
    %v3058 = vunpack.c.h.b16 %v2179
    %v3059 = vunpack.c.l.b16 %v2180
    %v3060 = vunpack.c.h.b16 %v2180
    %v3061 = vunpack.c.l.b16 %v2181
    %v3062 = vunpack.c.h.b16 %v2181
    %v3063 = vunpack.c.l.b16 %v2182
    %v3064 = vunpack.c.h.b16 %v2182
    %v3065 = vunpack.c.l.b16 %v2183
    %v3066 = vunpack.c.h.b16 %v2183
    %v3067 = vunpack.c.l.b16 %v2184
    %v3068 = vunpack.c.h.b16 %v2184
    %v3069 = vunpack.c.l.b16 %v2185
    %v3070 = vunpack.c.h.b16 %v2185
    %v3071 = vunpack.c.l.b16 %v2186
    %v3072 = vunpack.c.h.b16 %v2186
    %v3073 = vunpack.c.l.b16 %v2187
    %v3074 = vunpack.c.h.b16 %v2187
    %v3075 = vunpack.c.l.b16 %v2188
    %v3076 = vunpack.c.h.b16 %v2188
    %v3077 = vunpack.c.l.b16 %v2189
    %v3078 = vunpack.c.h.b16 %v2189
    %v3079 = vunpack.c.l.b16 %v2190
    %v3080 = vunpack.c.h.b16 %v2190
    %v3081 = vunpack.c.l.b16 %v2191
    %v3082 = vunpack.c.h.b16 %v2191
    %v3083 = vunpack.c.l.b16 %v2192
    %v3084 = vunpack.c.h.b16 %v2192
    %v3085 = vunpack.c.l.b16 %v2193
    %v3086 = vunpack.c.h.b16 %v2193
    %v3087 = vunpack.c.l.b16 %v2194
    %v3088 = vunpack.c.h.b16 %v2194
    %v3089 = vunpack.c.l.b16 %v2195
    %v3090 = vunpack.c.h.b16 %v2195
    %v3091 = vunpack.c.l.b16 %v2196
    %v3092 = vunpack.c.h.b16 %v2196
    %v3093 = vpack.c.b16 %v2523, %v2517
    %v3094 = vpack.c.b16 %v2524, %v2518
    %v3095 = vpack.c.b16 %v2525, %v2519
    %v3096 = vpack.c.b16 %v2526, %v2520
    %v3097 = vpack.c.b16 %v2527, %v2521
    %v3098 = vpack.c.b16 %v2528, %v2522
    %v3099 = vpack.c.b16 %v2535, %v2529
    %v3100 = vpack.c.b16 %v2536, %v2530
    %v3101 = vpack.c.b16 %v2537, %v2531
    %v3102 = vpack.c.b16 %v2538, %v2532
    %v3103 = vpack.c.b16 %v2539, %v2533
    %v3104 = vpack.c.b16 %v2540, %v2534
    %v3105 = vpack.c.b16 %v2547, %v2541
    %v3106 = vpack.c.b16 %v2548, %v2542
    %v3107 = vpack.c.b16 %v2549, %v2543
    %v3108 = vpack.c.b16 %v2550, %v2544
    %v3109 = vpack.c.b16 %v2551, %v2545
    %v3110 = vpack.c.b16 %v2552, %v2546
    %v3111 = vpack.c.b16 %v2559, %v2553
    %v3112 = vpack.c.b16 %v2560, %v2554
    %v3113 = vpack.c.b16 %v2561, %v2555
    %v3114 = vpack.c.b16 %v2562, %v2556
    %v3115 = vpack.c.b16 %v2563, %v2557
    %v3116 = vpack.c.b16 %v2564, %v2558
    %v3117 = vpack.c.b16 %v2571, %v2565
    %v3118 = vpack.c.b16 %v2572, %v2566
    %v3119 = vpack.c.b16 %v2573, %v2567
    %v3120 = vpack.c.b16 %v2574, %v2568
    %v3121 = vpack.c.b16 %v2575, %v2569
    %v3122 = vpack.c.b16 %v2576, %v2570
    %v3123 = vpack.c.b16 %v2583, %v2577
    %v3124 = vpack.c.b16 %v2584, %v2578
    %v3125 = vpack.c.b16 %v2585, %v2579
    %v3126 = vpack.c.b16 %v2586, %v2580
    %v3127 = vpack.c.b16 %v2587, %v2581
    %v3128 = vpack.c.b16 %v2588, %v2582
    %v3129 = vpack.c.b16 %v2595, %v2589
    %v3130 = vpack.c.b16 %v2596, %v2590
    %v3131 = vpack.c.b16 %v2597, %v2591
    %v3132 = vpack.c.b16 %v2598, %v2592
    %v3133 = vpack.c.b16 %v2599, %v2593
    %v3134 = vpack.c.b16 %v2600, %v2594
    %v3135 = vpack.c.b16 %v2607, %v2601
    %v3136 = vpack.c.b16 %v2608, %v2602
    %v3137 = vpack.c.b16 %v2609, %v2603
    %v3138 = vpack.c.b16 %v2610, %v2604
    %v3139 = vpack.c.b16 %v2611, %v2605
    %v3140 = vpack.c.b16 %v2612, %v2606
    %v3141 = vpack.c.b16 %v2619, %v2613
    %v3142 = vpack.c.b16 %v2620, %v2614
    %v3143 = vpack.c.b16 %v2621, %v2615
    %v3144 = vpack.c.b16 %v2622, %v2616
    %v3145 = vpack.c.b16 %v2623, %v2617
    %v3146 = vpack.c.b16 %v2624, %v2618
    %v3147 = vpack.c.b16 %v2631, %v2625
    %v3148 = vpack.c.b16 %v2632, %v2626
    %v3149 = vpack.c.b16 %v2633, %v2627
    %v3150 = vpack.c.b16 %v2634, %v2628
    %v3151 = vpack.c.b16 %v2635, %v2629
    %v3152 = vpack.c.b16 %v2636, %v2630
    %v3153 = vpack.c.b16 %v2643, %v2637
    %v3154 = vpack.c.b16 %v2644, %v2638
    %v3155 = vpack.c.b16 %v2645, %v2639
    %v3156 = vpack.c.b16 %v2646, %v2640
    %v3157 = vpack.c.b16 %v2647, %v2641
    %v3158 = vpack.c.b16 %v2648, %v2642
    %v3159 = vpack.c.b16 %v2655, %v2649
    %v3160 = vpack.c.b16 %v2656, %v2650
    %v3161 = vpack.c.b16 %v2657, %v2651
    %v3162 = vpack.c.b16 %v2658, %v2652
    %v3163 = vpack.c.b16 %v2659, %v2653
    %v3164 = vpack.c.b16 %v2660, %v2654
    %v3165 = vpack.c.b16 %v2667, %v2661
    %v3166 = vpack.c.b16 %v2668, %v2662
    %v3167 = vpack.c.b16 %v2669, %v2663
    %v3168 = vpack.c.b16 %v2670, %v2664
    %v3169 = vpack.c.b16 %v2671, %v2665
    %v3170 = vpack.c.b16 %v2672, %v2666
    %v3171 = vpack.c.b16 %v2679, %v2673
    %v3172 = vpack.c.b16 %v2680, %v2674
    %v3173 = vpack.c.b16 %v2681, %v2675
    %v3174 = vpack.c.b16 %v2682, %v2676
    %v3175 = vpack.c.b16 %v2683, %v2677
    %v3176 = vpack.c.b16 %v2684, %v2678
    %v3177 = vpack.c.b16 %v2691, %v2685
    %v3178 = vpack.c.b16 %v2692, %v2686
    %v3179 = vpack.c.b16 %v2693, %v2687
    %v3180 = vpack.c.b16 %v2694, %v2688
    %v3181 = vpack.c.b16 %v2695, %v2689
    %v3182 = vpack.c.b16 %v2696, %v2690
    %v3183 = vpack.c.b16 %v2703, %v2697
    %v3184 = vpack.c.b16 %v2704, %v2698
    %v3185 = vpack.c.b16 %v2705, %v2699
    %v3186 = vpack.c.b16 %v2706, %v2700
    %v3187 = vpack.c.b16 %v2707, %v2701
    %v3188 = vpack.c.b16 %v2708, %v2702
    %v3189 = vpack.c.b16 %v2715, %v2709
    %v3190 = vpack.c.b16 %v2716, %v2710
    %v3191 = vpack.c.b16 %v2717, %v2711
    %v3192 = vpack.c.b16 %v2718, %v2712
    %v3193 = vpack.c.b16 %v2719, %v2713
    %v3194 = vpack.c.b16 %v2720, %v2714
    %v3195 = vpack.c.b16 %v2727, %v2721
    %v3196 = vpack.c.b16 %v2728, %v2722
    %v3197 = vpack.c.b16 %v2729, %v2723
    %v3198 = vpack.c.b16 %v2730, %v2724
    %v3199 = vpack.c.b16 %v2731, %v2725
    %v3200 = vpack.c.b16 %v2732, %v2726
    %v3201 = vpack.c.b16 %v2739, %v2733
    %v3202 = vpack.c.b16 %v2740, %v2734
    %v3203 = vpack.c.b16 %v2741, %v2735
    %v3204 = vpack.c.b16 %v2742, %v2736
    %v3205 = vpack.c.b16 %v2743, %v2737
    %v3206 = vpack.c.b16 %v2744, %v2738
    %v3207 = vpack.c.b16 %v2751, %v2745
    %v3208 = vpack.c.b16 %v2752, %v2746
    %v3209 = vpack.c.b16 %v2753, %v2747
    %v3210 = vpack.c.b16 %v2754, %v2748
    %v3211 = vpack.c.b16 %v2755, %v2749
    %v3212 = vpack.c.b16 %v2756, %v2750
    %v3213 = vpack.c.b16 %v2763, %v2757
    %v3214 = vpack.c.b16 %v2764, %v2758
    %v3215 = vpack.c.b16 %v2765, %v2759
    %v3216 = vpack.c.b16 %v2766, %v2760
    %v3217 = vpack.c.b16 %v2767, %v2761
    %v3218 = vpack.c.b16 %v2768, %v2762
    %v3219 = vpack.c.b16 %v2775, %v2769
    %v3220 = vpack.c.b16 %v2776, %v2770
    %v3221 = vpack.c.b16 %v2777, %v2771
    %v3222 = vpack.c.b16 %v2778, %v2772
    %v3223 = vpack.c.b16 %v2779, %v2773
    %v3224 = vpack.c.b16 %v2780, %v2774
    %v3225 = vpack.c.b16 %v2787, %v2781
    %v3226 = vpack.c.b16 %v2788, %v2782
    %v3227 = vpack.c.b16 %v2789, %v2783
    %v3228 = vpack.c.b16 %v2790, %v2784
    %v3229 = vpack.c.b16 %v2791, %v2785
    %v3230 = vpack.c.b16 %v2792, %v2786
    %v3231 = vpack.c.b16 %v2799, %v2793
    %v3232 = vpack.c.b16 %v2800, %v2794
    %v3233 = vpack.c.b16 %v2801, %v2795
    %v3234 = vpack.c.b16 %v2802, %v2796
    %v3235 = vpack.c.b16 %v2803, %v2797
    %v3236 = vpack.c.b16 %v2804, %v2798
    %v3237 = vpack.c.b16 %v2811, %v2805
    %v3238 = vpack.c.b16 %v2812, %v2806
    %v3239 = vpack.c.b16 %v2813, %v2807
    %v3240 = vpack.c.b16 %v2814, %v2808
    %v3241 = vpack.c.b16 %v2815, %v2809
    %v3242 = vpack.c.b16 %v2816, %v2810
    %v3243 = vpack.c.b16 %v2823, %v2817
    %v3244 = vpack.c.b16 %v2824, %v2818
    %v3245 = vpack.c.b16 %v2825, %v2819
    %v3246 = vpack.c.b16 %v2826, %v2820
    %v3247 = vpack.c.b16 %v2827, %v2821
    %v3248 = vpack.c.b16 %v2828, %v2822
    %v3249 = vpack.c.b16 %v2835, %v2829
    %v3250 = vpack.c.b16 %v2836, %v2830
    %v3251 = vpack.c.b16 %v2837, %v2831
    %v3252 = vpack.c.b16 %v2838, %v2832
    %v3253 = vpack.c.b16 %v2839, %v2833
    %v3254 = vpack.c.b16 %v2840, %v2834
    %v3255 = vpack.c.b16 %v2847, %v2841
    %v3256 = vpack.c.b16 %v2848, %v2842
    %v3257 = vpack.c.b16 %v2849, %v2843
    %v3258 = vpack.c.b16 %v2850, %v2844
    %v3259 = vpack.c.b16 %v2851, %v2845
    %v3260 = vpack.c.b16 %v2852, %v2846
    %v3261 = vpack.c.b16 %v2859, %v2853
    %v3262 = vpack.c.b16 %v2860, %v2854
    %v3263 = vpack.c.b16 %v2861, %v2855
    %v3264 = vpack.c.b16 %v2862, %v2856
    %v3265 = vpack.c.b16 %v2863, %v2857
    %v3266 = vpack.c.b16 %v2864, %v2858
    %v3267 = vpack.c.b16 %v2871, %v2865
    %v3268 = vpack.c.b16 %v2872, %v2866
    %v3269 = vpack.c.b16 %v2873, %v2867
    %v3270 = vpack.c.b16 %v2874, %v2868
    %v3271 = vpack.c.b16 %v2875, %v2869
    %v3272 = vpack.c.b16 %v2876, %v2870
    %v3273 = vpack.c.b16 %v2883, %v2877
    %v3274 = vpack.c.b16 %v2884, %v2878
    %v3275 = vpack.c.b16 %v2885, %v2879
    %v3276 = vpack.c.b16 %v2886, %v2880
    %v3277 = vpack.c.b16 %v2887, %v2881
    %v3278 = vpack.c.b16 %v2888, %v2882
    %v3279 = vpack.c.b16 %v2895, %v2889
    %v3280 = vpack.c.b16 %v2896, %v2890
    %v3281 = vpack.c.b16 %v2897, %v2891
    %v3282 = vpack.c.b16 %v2898, %v2892
    %v3283 = vpack.c.b16 %v2899, %v2893
    %v3284 = vpack.c.b16 %v2900, %v2894
    %v3285 = vpack.c.b16 %v2907, %v2901
    %v3286 = vpack.c.b16 %v2908, %v2902
    %v3287 = vpack.c.b16 %v2909, %v2903
    %v3288 = vpack.c.b16 %v2910, %v2904
    %v3289 = vpack.c.b16 %v2911, %v2905
    %v3290 = vpack.c.b16 %v2912, %v2906
    %v3291 = vpack.c.b16 %v2919, %v2913
    %v3292 = vpack.c.b16 %v2920, %v2914
    %v3293 = vpack.c.b16 %v2921, %v2915
    %v3294 = vpack.c.b16 %v2922, %v2916
    %v3295 = vpack.c.b16 %v2923, %v2917
    %v3296 = vpack.c.b16 %v2924, %v2918
    %v3297 = vpack.c.b16 %v2931, %v2925
    %v3298 = vpack.c.b16 %v2932, %v2926
    %v3299 = vpack.c.b16 %v2933, %v2927
    %v3300 = vpack.c.b16 %v2934, %v2928
    %v3301 = vpack.c.b16 %v2935, %v2929
    %v3302 = vpack.c.b16 %v2936, %v2930
    %v3303 = vpack.c.b16 %v2943, %v2937
    %v3304 = vpack.c.b16 %v2944, %v2938
    %v3305 = vpack.c.b16 %v2945, %v2939
    %v3306 = vpack.c.b16 %v2946, %v2940
    %v3307 = vpack.c.b16 %v2947, %v2941
    %v3308 = vpack.c.b16 %v2948, %v2942
    %v3309 = vpack.c.b16 %v2955, %v2949
    %v3310 = vpack.c.b16 %v2956, %v2950
    %v3311 = vpack.c.b16 %v2957, %v2951
    %v3312 = vpack.c.b16 %v2958, %v2952
    %v3313 = vpack.c.b16 %v2959, %v2953
    %v3314 = vpack.c.b16 %v2960, %v2954
    %v3315 = vpack.c.b16 %v2967, %v2961
    %v3316 = vpack.c.b16 %v2968, %v2962
    %v3317 = vpack.c.b16 %v2969, %v2963
    %v3318 = vpack.c.b16 %v2970, %v2964
    %v3319 = vpack.c.b16 %v2971, %v2965
    %v3320 = vpack.c.b16 %v2972, %v2966
    %v3321 = vpack.c.b16 %v2979, %v2973
    %v3322 = vpack.c.b16 %v2980, %v2974
    %v3323 = vpack.c.b16 %v2981, %v2975
    %v3324 = vpack.c.b16 %v2982, %v2976
    %v3325 = vpack.c.b16 %v2983, %v2977
    %v3326 = vpack.c.b16 %v2984, %v2978
    %v3327 = vpack.c.b16 %v2991, %v2985
    %v3328 = vpack.c.b16 %v2992, %v2986
    %v3329 = vpack.c.b16 %v2993, %v2987
    %v3330 = vpack.c.b16 %v2994, %v2988
    %v3331 = vpack.c.b16 %v2995, %v2989
    %v3332 = vpack.c.b16 %v2996, %v2990
    %v3333 = vpack.c.b16 %v3003, %v2997
    %v3334 = vpack.c.b16 %v3004, %v2998
    %v3335 = vpack.c.b16 %v3005, %v2999
    %v3336 = vpack.c.b16 %v3006, %v3000
    %v3337 = vpack.c.b16 %v3007, %v3001
    %v3338 = vpack.c.b16 %v3008, %v3002
    %v3339 = vpack.c.b16 %v3015, %v3009
    %v3340 = vpack.c.b16 %v3016, %v3010
    %v3341 = vpack.c.b16 %v3017, %v3011
    %v3342 = vpack.c.b16 %v3018, %v3012
    %v3343 = vpack.c.b16 %v3019, %v3013
    %v3344 = vpack.c.b16 %v3020, %v3014
    %v3345 = vpack.c.b16 %v3027, %v3021
    %v3346 = vpack.c.b16 %v3028, %v3022
    %v3347 = vpack.c.b16 %v3029, %v3023
    %v3348 = vpack.c.b16 %v3030, %v3024
    %v3349 = vpack.c.b16 %v3031, %v3025
    %v3350 = vpack.c.b16 %v3032, %v3026
    %v3351 = vpack.c.b16 %v3039, %v3033
    %v3352 = vpack.c.b16 %v3040, %v3034
    %v3353 = vpack.c.b16 %v3041, %v3035
    %v3354 = vpack.c.b16 %v3042, %v3036
    %v3355 = vpack.c.b16 %v3043, %v3037
    %v3356 = vpack.c.b16 %v3044, %v3038
    %v3357 = vpack.c.b16 %v3051, %v3045
    %v3358 = vpack.c.b16 %v3052, %v3046
    %v3359 = vpack.c.b16 %v3053, %v3047
    %v3360 = vpack.c.b16 %v3054, %v3048
    %v3361 = vpack.c.b16 %v3055, %v3049
    %v3362 = vpack.c.b16 %v3056, %v3050
    %v3363 = vpack.c.b16 %v3063, %v3057
    %v3364 = vpack.c.b16 %v3064, %v3058
    %v3365 = vpack.c.b16 %v3065, %v3059
    %v3366 = vpack.c.b16 %v3066, %v3060
    %v3367 = vpack.c.b16 %v3067, %v3061
    %v3368 = vpack.c.b16 %v3068, %v3062
    %v3369 = vpack.c.b16 %v3075, %v3069
    %v3370 = vpack.c.b16 %v3076, %v3070
    %v3371 = vpack.c.b16 %v3077, %v3071
    %v3372 = vpack.c.b16 %v3078, %v3072
    %v3373 = vpack.c.b16 %v3079, %v3073
    %v3374 = vpack.c.b16 %v3080, %v3074
    %v3375 = vpack.c.b16 %v3087, %v3081
    %v3376 = vpack.c.b16 %v3088, %v3082
    %v3377 = vpack.c.b16 %v3089, %v3083
    %v3378 = vpack.c.b16 %v3090, %v3084
    %v3379 = vpack.c.b16 %v3091, %v3085
    %v3380 = vpack.c.b16 %v3092, %v3086
    %3669 = vmatprep.subr.bf16.mxu0 %v3094
    %3670 = vmatpush1.bf16.msra.mxu0 %v3093
    %3671 = vmatprep.subr.bf16.mxu0 %v3100
    %3672 = vmatpush1.bf16.msra.mxu0 %v3099
    %3673 = vmatprep.subr.bf16.mxu0 %v3106
    %3674 = vmatpush1.bf16.msra.mxu0 %v3105
    %3675 = vmatprep.subr.bf16.mxu0 %v3112
    %3676 = vmatpush1.bf16.msra.mxu0 %v3111
    %3677 = vmatprep.subr.bf16.mxu0 %v3118
    %3678 = vmatpush1.bf16.msra.mxu0 %v3117
    %3679 = vmatprep.subr.bf16.mxu0 %v3124
    %3680 = vmatpush1.bf16.msra.mxu0 %v3123
    %3681 = vmatprep.subr.bf16.mxu0 %v3130
    %3682 = vmatpush1.bf16.msra.mxu0 %v3129
    %3683 = vmatprep.subr.bf16.mxu0 %v3136
    %3684 = vmatpush1.bf16.msra.mxu0 %v3135
    %3685 = vmatprep.subr.bf16.mxu0 %v3142
    %3686 = vmatpush1.bf16.msra.mxu0 %v3141
    %3687 = vmatprep.subr.bf16.mxu0 %v3148
    %3688 = vmatpush1.bf16.msra.mxu0 %v3147
    %3689 = vmatprep.subr.bf16.mxu0 %v3154
    %3690 = vmatpush1.bf16.msra.mxu0 %v3153
    %3691 = vmatprep.subr.bf16.mxu0 %v3160
    %3692 = vmatpush1.bf16.msra.mxu0 %v3159
    %3693 = vmatprep.subr.bf16.mxu0 %v3166
    %3694 = vmatpush1.bf16.msra.mxu0 %v3165
    %3695 = vmatprep.subr.bf16.mxu0 %v3172
    %3696 = vmatpush1.bf16.msra.mxu0 %v3171
    %3697 = vmatprep.subr.bf16.mxu0 %v3178
    %3698 = vmatpush1.bf16.msra.mxu0 %v3177
    %3699 = vmatprep.subr.bf16.mxu0 %v3184
    %3700 = vmatpush1.bf16.msra.mxu0 %v3183
    %3701 = vmatprep.mubr.bf16.mxu0 %v1904
    %3702 = vmatmul.mubr.bf16.gmra.mrb[0].mxu0 %v1903
    %v3703 = vpop.f32.mrb[0].mxu0
    %v3704 = vadd.f32 %v2202, %v3703
    %v3705 = vpop.f32.mrb[0].mxu0
    %v3706 = vadd.f32 %v2206, %v3705
    %v3707 = vpop.f32.mrb[0].mxu0
    %v3708 = vpop.f32.mrb[0].mxu0
    %3709 = vdwg.mxu0
    %3710 = vmatprep.subr.bf16.mxu0 %v3190
    %3711 = vmatpush1.bf16.msra.mxu0 %v3189
    %3712 = vmatprep.subr.bf16.mxu0 %v3196
    %3713 = vmatpush1.bf16.msra.mxu0 %v3195
    %3714 = vmatprep.subr.bf16.mxu0 %v3202
    %3715 = vmatpush1.bf16.msra.mxu0 %v3201
    %3716 = vmatprep.subr.bf16.mxu0 %v3208
    %3717 = vmatpush1.bf16.msra.mxu0 %v3207
    %3718 = vmatprep.subr.bf16.mxu0 %v3214
    %3719 = vmatpush1.bf16.msra.mxu0 %v3213
    %3720 = vmatprep.subr.bf16.mxu0 %v3220
    %3721 = vmatpush1.bf16.msra.mxu0 %v3219
    %3722 = vmatprep.subr.bf16.mxu0 %v3226
    %3723 = vmatpush1.bf16.msra.mxu0 %v3225
    %3724 = vmatprep.subr.bf16.mxu0 %v3232
    %3725 = vmatpush1.bf16.msra.mxu0 %v3231
    %3726 = vmatprep.subr.bf16.mxu0 %v3238
    %3727 = vmatpush1.bf16.msra.mxu0 %v3237
    %3728 = vmatprep.subr.bf16.mxu0 %v3244
    %3729 = vmatpush1.bf16.msra.mxu0 %v3243
    %3730 = vmatprep.subr.bf16.mxu0 %v3250
    %3731 = vmatpush1.bf16.msra.mxu0 %v3249
    %3732 = vmatprep.subr.bf16.mxu0 %v3256
    %3733 = vmatpush1.bf16.msra.mxu0 %v3255
    %3734 = vmatprep.subr.bf16.mxu0 %v3262
    %3735 = vmatpush1.bf16.msra.mxu0 %v3261
    %3736 = vmatprep.subr.bf16.mxu0 %v3268
    %3737 = vmatpush1.bf16.msra.mxu0 %v3267
    %3738 = vmatprep.subr.bf16.mxu0 %v3274
    %3739 = vmatpush1.bf16.msra.mxu0 %v3273
    %3740 = vmatprep.subr.bf16.mxu0 %v3280
    %3741 = vmatpush1.bf16.msra.mxu0 %v3279
    %3742 = vmatprep.mubr.bf16.mxu0 %v1906
    %3743 = vmatmul.mubr.bf16.gmra.mrb[0].mxu0 %v1905
    %v3744 = vpop.f32.mrb[0].mxu0
    %v3745 = vadd.f32 %v3704, %v3744
    %v3746 = vpop.f32.mrb[0].mxu0
    %v3747 = vadd.f32 %v3706, %v3746
    %v3748 = vpop.f32.mrb[0].mxu0
    %v3749 = vpop.f32.mrb[0].mxu0
    %3750 = vdwg.mxu0
    %3751 = vmatprep.subr.bf16.mxu0 %v3286
    %3752 = vmatpush1.bf16.msra.mxu0 %v3285
    %3753 = vmatprep.subr.bf16.mxu0 %v3292
    %3754 = vmatpush1.bf16.msra.mxu0 %v3291
    %3755 = vmatprep.subr.bf16.mxu0 %v3298
    %3756 = vmatpush1.bf16.msra.mxu0 %v3297
    %3757 = vmatprep.subr.bf16.mxu0 %v3304
    %3758 = vmatpush1.bf16.msra.mxu0 %v3303
    %3759 = vmatprep.subr.bf16.mxu0 %v3310
    %3760 = vmatpush1.bf16.msra.mxu0 %v3309
    %3761 = vmatprep.subr.bf16.mxu0 %v3316
    %3762 = vmatpush1.bf16.msra.mxu0 %v3315
    %3763 = vmatprep.subr.bf16.mxu0 %v3322
    %3764 = vmatpush1.bf16.msra.mxu0 %v3321
    %3765 = vmatprep.subr.bf16.mxu0 %v3328
    %3766 = vmatpush1.bf16.msra.mxu0 %v3327
    %3767 = vmatprep.subr.bf16.mxu0 %v3334
    %3768 = vmatpush1.bf16.msra.mxu0 %v3333
    %3769 = vmatprep.subr.bf16.mxu0 %v3340
    %3770 = vmatpush1.bf16.msra.mxu0 %v3339
    %3771 = vmatprep.subr.bf16.mxu0 %v3346
    %3772 = vmatpush1.bf16.msra.mxu0 %v3345
    %3773 = vmatprep.subr.bf16.mxu0 %v3352
    %3774 = vmatpush1.bf16.msra.mxu0 %v3351
    %3775 = vmatprep.subr.bf16.mxu0 %v3358
    %3776 = vmatpush1.bf16.msra.mxu0 %v3357
    %3777 = vmatprep.subr.bf16.mxu0 %v3364
    %3778 = vmatpush1.bf16.msra.mxu0 %v3363
    %3779 = vmatprep.subr.bf16.mxu0 %v3370
    %3780 = vmatpush1.bf16.msra.mxu0 %v3369
    %3781 = vmatprep.subr.bf16.mxu0 %v3376
    %3782 = vmatpush1.bf16.msra.mxu0 %v3375
    %3783 = vmatprep.mubr.bf16.mxu0 %v1908
    %3784 = vmatmul.mubr.bf16.gmra.mrb[0].mxu0 %v1907
    %v3785 = vpop.f32.mrb[0].mxu0
    %v3786 = vadd.f32 %v3745, %v3785
    %v3787 = vpop.f32.mrb[0].mxu0
    %v3788 = vadd.f32 %v3747, %v3787
    %v3789 = vpop.f32.mrb[0].mxu0
    %v3790 = vpop.f32.mrb[0].mxu0
    %3791 = vdwg.mxu0
    %3792 = vmatprep.subr.bf16.mxu0 %v3096
    %3793 = vmatpush1.bf16.msra.mxu0 %v3095
    %3794 = vmatprep.subr.bf16.mxu0 %v3102
    %3795 = vmatpush1.bf16.msra.mxu0 %v3101
    %3796 = vmatprep.subr.bf16.mxu0 %v3108
    %3797 = vmatpush1.bf16.msra.mxu0 %v3107
    %3798 = vmatprep.subr.bf16.mxu0 %v3114
    %3799 = vmatpush1.bf16.msra.mxu0 %v3113
    %3800 = vmatprep.subr.bf16.mxu0 %v3120
    %3801 = vmatpush1.bf16.msra.mxu0 %v3119
    %3802 = vmatprep.subr.bf16.mxu0 %v3126
    %3803 = vmatpush1.bf16.msra.mxu0 %v3125
    %3804 = vmatprep.subr.bf16.mxu0 %v3132
    %3805 = vmatpush1.bf16.msra.mxu0 %v3131
    %3806 = vmatprep.subr.bf16.mxu0 %v3138
    %3807 = vmatpush1.bf16.msra.mxu0 %v3137
    %3808 = vmatprep.subr.bf16.mxu0 %v3144
    %3809 = vmatpush1.bf16.msra.mxu0 %v3143
    %3810 = vmatprep.subr.bf16.mxu0 %v3150
    %3811 = vmatpush1.bf16.msra.mxu0 %v3149
    %3812 = vmatprep.subr.bf16.mxu0 %v3156
    %3813 = vmatpush1.bf16.msra.mxu0 %v3155
    %3814 = vmatprep.subr.bf16.mxu0 %v3162
    %3815 = vmatpush1.bf16.msra.mxu0 %v3161
    %3816 = vmatprep.subr.bf16.mxu0 %v3168
    %3817 = vmatpush1.bf16.msra.mxu0 %v3167
    %3818 = vmatprep.subr.bf16.mxu0 %v3174
    %3819 = vmatpush1.bf16.msra.mxu0 %v3173
    %3820 = vmatprep.subr.bf16.mxu0 %v3180
    %3821 = vmatpush1.bf16.msra.mxu0 %v3179
    %3822 = vmatprep.subr.bf16.mxu0 %v3186
    %3823 = vmatpush1.bf16.msra.mxu0 %v3185
    %3824 = vmatprep.mubr.bf16.mxu0 %v1904
    %3825 = vmatmul.mubr.bf16.gmra.mrb[0].mxu0 %v1903
    %v3826 = vpop.f32.mrb[0].mxu0
    %v3827 = vadd.f32 %v2210, %v3826
    %v3828 = vpop.f32.mrb[0].mxu0
    %v3829 = vadd.f32 %v2214, %v3828
    %v3830 = vpop.f32.mrb[0].mxu0
    %v3831 = vpop.f32.mrb[0].mxu0
    %3832 = vdwg.mxu0
    %3833 = vmatprep.subr.bf16.mxu0 %v3192
    %3834 = vmatpush1.bf16.msra.mxu0 %v3191
    %3835 = vmatprep.subr.bf16.mxu0 %v3198
    %3836 = vmatpush1.bf16.msra.mxu0 %v3197
    %3837 = vmatprep.subr.bf16.mxu0 %v3204
    %3838 = vmatpush1.bf16.msra.mxu0 %v3203
    %3839 = vmatprep.subr.bf16.mxu0 %v3210
    %3840 = vmatpush1.bf16.msra.mxu0 %v3209
    %3841 = vmatprep.subr.bf16.mxu0 %v3216
    %3842 = vmatpush1.bf16.msra.mxu0 %v3215
    %3843 = vmatprep.subr.bf16.mxu0 %v3222
    %3844 = vmatpush1.bf16.msra.mxu0 %v3221
    %3845 = vmatprep.subr.bf16.mxu0 %v3228
    %3846 = vmatpush1.bf16.msra.mxu0 %v3227
    %3847 = vmatprep.subr.bf16.mxu0 %v3234
    %3848 = vmatpush1.bf16.msra.mxu0 %v3233
    %3849 = vmatprep.subr.bf16.mxu0 %v3240
    %3850 = vmatpush1.bf16.msra.mxu0 %v3239
    %3851 = vmatprep.subr.bf16.mxu0 %v3246
    %3852 = vmatpush1.bf16.msra.mxu0 %v3245
    %3853 = vmatprep.subr.bf16.mxu0 %v3252
    %3854 = vmatpush1.bf16.msra.mxu0 %v3251
    %3855 = vmatprep.subr.bf16.mxu0 %v3258
    %3856 = vmatpush1.bf16.msra.mxu0 %v3257
    %3857 = vmatprep.subr.bf16.mxu0 %v3264
    %3858 = vmatpush1.bf16.msra.mxu0 %v3263
    %3859 = vmatprep.subr.bf16.mxu0 %v3270
    %3860 = vmatpush1.bf16.msra.mxu0 %v3269
    %3861 = vmatprep.subr.bf16.mxu0 %v3276
    %3862 = vmatpush1.bf16.msra.mxu0 %v3275
    %3863 = vmatprep.subr.bf16.mxu0 %v3282
    %3864 = vmatpush1.bf16.msra.mxu0 %v3281
    %3865 = vmatprep.mubr.bf16.mxu0 %v1906
    %3866 = vmatmul.mubr.bf16.gmra.mrb[0].mxu0 %v1905
    %v3867 = vpop.f32.mrb[0].mxu0
    %v3868 = vadd.f32 %v3827, %v3867
    %v3869 = vpop.f32.mrb[0].mxu0
    %v3870 = vadd.f32 %v3829, %v3869
    %v3871 = vpop.f32.mrb[0].mxu0
    %v3872 = vpop.f32.mrb[0].mxu0
    %3873 = vdwg.mxu0
    %3874 = vmatprep.subr.bf16.mxu0 %v3288
    %3875 = vmatpush1.bf16.msra.mxu0 %v3287
    %3876 = vmatprep.subr.bf16.mxu0 %v3294
    %3877 = vmatpush1.bf16.msra.mxu0 %v3293
    %3878 = vmatprep.subr.bf16.mxu0 %v3300
    %3879 = vmatpush1.bf16.msra.mxu0 %v3299
    %3880 = vmatprep.subr.bf16.mxu0 %v3306
    %3881 = vmatpush1.bf16.msra.mxu0 %v3305
    %3882 = vmatprep.subr.bf16.mxu0 %v3312
    %3883 = vmatpush1.bf16.msra.mxu0 %v3311
    %3884 = vmatprep.subr.bf16.mxu0 %v3318
    %3885 = vmatpush1.bf16.msra.mxu0 %v3317
    %3886 = vmatprep.subr.bf16.mxu0 %v3324
    %3887 = vmatpush1.bf16.msra.mxu0 %v3323
    %3888 = vmatprep.subr.bf16.mxu0 %v3330
    %3889 = vmatpush1.bf16.msra.mxu0 %v3329
    %3890 = vmatprep.subr.bf16.mxu0 %v3336
    %3891 = vmatpush1.bf16.msra.mxu0 %v3335
    %3892 = vmatprep.subr.bf16.mxu0 %v3342
    %3893 = vmatpush1.bf16.msra.mxu0 %v3341
    %3894 = vmatprep.subr.bf16.mxu0 %v3348
    %3895 = vmatpush1.bf16.msra.mxu0 %v3347
    %3896 = vmatprep.subr.bf16.mxu0 %v3354
    %3897 = vmatpush1.bf16.msra.mxu0 %v3353
    %3898 = vmatprep.subr.bf16.mxu0 %v3360
    %3899 = vmatpush1.bf16.msra.mxu0 %v3359
    %3900 = vmatprep.subr.bf16.mxu0 %v3366
    %3901 = vmatpush1.bf16.msra.mxu0 %v3365
    %3902 = vmatprep.subr.bf16.mxu0 %v3372
    %3903 = vmatpush1.bf16.msra.mxu0 %v3371
    %3904 = vmatprep.subr.bf16.mxu0 %v3378
    %3905 = vmatpush1.bf16.msra.mxu0 %v3377
    %3906 = vmatprep.mubr.bf16.mxu0 %v1908
    %3907 = vmatmul.mubr.bf16.gmra.mrb[0].mxu0 %v1907
    %v3908 = vpop.f32.mrb[0].mxu0
    %v3909 = vadd.f32 %v3868, %v3908
    %v3910 = vpop.f32.mrb[0].mxu0
    %v3911 = vadd.f32 %v3870, %v3910
    %v3912 = vpop.f32.mrb[0].mxu0
    %v3913 = vpop.f32.mrb[0].mxu0
    %3914 = vdwg.mxu0
    %3915 = vmatprep.subr.bf16.mxu0 %v3098
    %3916 = vmatpush1.bf16.msra.mxu0 %v3097
    %3917 = vmatprep.subr.bf16.mxu0 %v3104
    %3918 = vmatpush1.bf16.msra.mxu0 %v3103
    %3919 = vmatprep.subr.bf16.mxu0 %v3110
    %3920 = vmatpush1.bf16.msra.mxu0 %v3109
    %3921 = vmatprep.subr.bf16.mxu0 %v3116
    %3922 = vmatpush1.bf16.msra.mxu0 %v3115
    %3923 = vmatprep.subr.bf16.mxu0 %v3122
    %3924 = vmatpush1.bf16.msra.mxu0 %v3121
    %3925 = vmatprep.subr.bf16.mxu0 %v3128
    %3926 = vmatpush1.bf16.msra.mxu0 %v3127
    %3927 = vmatprep.subr.bf16.mxu0 %v3134
    %3928 = vmatpush1.bf16.msra.mxu0 %v3133
    %3929 = vmatprep.subr.bf16.mxu0 %v3140
    %3930 = vmatpush1.bf16.msra.mxu0 %v3139
    %3931 = vmatprep.subr.bf16.mxu0 %v3146
    %3932 = vmatpush1.bf16.msra.mxu0 %v3145
    %3933 = vmatprep.subr.bf16.mxu0 %v3152
    %3934 = vmatpush1.bf16.msra.mxu0 %v3151
    %3935 = vmatprep.subr.bf16.mxu0 %v3158
    %3936 = vmatpush1.bf16.msra.mxu0 %v3157
    %3937 = vmatprep.subr.bf16.mxu0 %v3164
    %3938 = vmatpush1.bf16.msra.mxu0 %v3163
    %3939 = vmatprep.subr.bf16.mxu0 %v3170
    %3940 = vmatpush1.bf16.msra.mxu0 %v3169
    %3941 = vmatprep.subr.bf16.mxu0 %v3176
    %3942 = vmatpush1.bf16.msra.mxu0 %v3175
    %3943 = vmatprep.subr.bf16.mxu0 %v3182
    %3944 = vmatpush1.bf16.msra.mxu0 %v3181
    %3945 = vmatprep.subr.bf16.mxu0 %v3188
    %3946 = vmatpush1.bf16.msra.mxu0 %v3187
    %3947 = vmatprep.mubr.bf16.mxu0 %v1904
    %3948 = vmatmul.mubr.bf16.gmra.mrb[0].mxu0 %v1903
    %v3949 = vpop.f32.mrb[0].mxu0
    %v3950 = vadd.f32 %v2218, %v3949
    %v3951 = vpop.f32.mrb[0].mxu0
    %v3952 = vadd.f32 %v2222, %v3951
    %v3953 = vpop.f32.mrb[0].mxu0
    %v3954 = vpop.f32.mrb[0].mxu0
    %3955 = vdwg.mxu0
    %3956 = vmatprep.subr.bf16.mxu0 %v3194
    %3957 = vmatpush1.bf16.msra.mxu0 %v3193
    %3958 = vmatprep.subr.bf16.mxu0 %v3200
    %3959 = vmatpush1.bf16.msra.mxu0 %v3199
    %3960 = vmatprep.subr.bf16.mxu0 %v3206
    %3961 = vmatpush1.bf16.msra.mxu0 %v3205
    %3962 = vmatprep.subr.bf16.mxu0 %v3212
    %3963 = vmatpush1.bf16.msra.mxu0 %v3211
    %3964 = vmatprep.subr.bf16.mxu0 %v3218
    %3965 = vmatpush1.bf16.msra.mxu0 %v3217
    %3966 = vmatprep.subr.bf16.mxu0 %v3224
    %3967 = vmatpush1.bf16.msra.mxu0 %v3223
    %3968 = vmatprep.subr.bf16.mxu0 %v3230
    %3969 = vmatpush1.bf16.msra.mxu0 %v3229
    %3970 = vmatprep.subr.bf16.mxu0 %v3236
    %3971 = vmatpush1.bf16.msra.mxu0 %v3235
    %3972 = vmatprep.subr.bf16.mxu0 %v3242
    %3973 = vmatpush1.bf16.msra.mxu0 %v3241
    %3974 = vmatprep.subr.bf16.mxu0 %v3248
    %3975 = vmatpush1.bf16.msra.mxu0 %v3247
    %3976 = vmatprep.subr.bf16.mxu0 %v3254
    %3977 = vmatpush1.bf16.msra.mxu0 %v3253
    %3978 = vmatprep.subr.bf16.mxu0 %v3260
    %3979 = vmatpush1.bf16.msra.mxu0 %v3259
    %3980 = vmatprep.subr.bf16.mxu0 %v3266
    %3981 = vmatpush1.bf16.msra.mxu0 %v3265
    %3982 = vmatprep.subr.bf16.mxu0 %v3272
    %3983 = vmatpush1.bf16.msra.mxu0 %v3271
    %3984 = vmatprep.subr.bf16.mxu0 %v3278
    %3985 = vmatpush1.bf16.msra.mxu0 %v3277
    %3986 = vmatprep.subr.bf16.mxu0 %v3284
    %3987 = vmatpush1.bf16.msra.mxu0 %v3283
    %3988 = vmatprep.mubr.bf16.mxu0 %v1906
    %3989 = vmatmul.mubr.bf16.gmra.mrb[0].mxu0 %v1905
    %v3990 = vpop.f32.mrb[0].mxu0
    %v3991 = vadd.f32 %v3950, %v3990
    %v3992 = vpop.f32.mrb[0].mxu0
    %v3993 = vadd.f32 %v3952, %v3992
    %v3994 = vpop.f32.mrb[0].mxu0
    %v3995 = vpop.f32.mrb[0].mxu0
    %3996 = vdwg.mxu0
    %3997 = vmatprep.subr.bf16.mxu0 %v3290
    %3998 = vmatpush1.bf16.msra.mxu0 %v3289
    %3999 = vmatprep.subr.bf16.mxu0 %v3296
    %4000 = vmatpush1.bf16.msra.mxu0 %v3295
    %4001 = vmatprep.subr.bf16.mxu0 %v3302
    %4002 = vmatpush1.bf16.msra.mxu0 %v3301
    %4003 = vmatprep.subr.bf16.mxu0 %v3308
    %4004 = vmatpush1.bf16.msra.mxu0 %v3307
    %4005 = vmatprep.subr.bf16.mxu0 %v3314
    %4006 = vmatpush1.bf16.msra.mxu0 %v3313
    %4007 = vmatprep.subr.bf16.mxu0 %v3320
    %4008 = vmatpush1.bf16.msra.mxu0 %v3319
    %4009 = vmatprep.subr.bf16.mxu0 %v3326
    %4010 = vmatpush1.bf16.msra.mxu0 %v3325
    %4011 = vmatprep.subr.bf16.mxu0 %v3332
    %4012 = vmatpush1.bf16.msra.mxu0 %v3331
    %4013 = vmatprep.subr.bf16.mxu0 %v3338
    %4014 = vmatpush1.bf16.msra.mxu0 %v3337
    %4015 = vmatprep.subr.bf16.mxu0 %v3344
    %4016 = vmatpush1.bf16.msra.mxu0 %v3343
    %4017 = vmatprep.subr.bf16.mxu0 %v3350
    %4018 = vmatpush1.bf16.msra.mxu0 %v3349
    %4019 = vmatprep.subr.bf16.mxu0 %v3356
    %4020 = vmatpush1.bf16.msra.mxu0 %v3355
    %4021 = vmatprep.subr.bf16.mxu0 %v3362
    %4022 = vmatpush1.bf16.msra.mxu0 %v3361
    %4023 = vmatprep.subr.bf16.mxu0 %v3368
    %4024 = vmatpush1.bf16.msra.mxu0 %v3367
    %4025 = vmatprep.subr.bf16.mxu0 %v3374
    %4026 = vmatpush1.bf16.msra.mxu0 %v3373
    %4027 = vmatprep.subr.bf16.mxu0 %v3380
    %4028 = vmatpush1.bf16.msra.mxu0 %v3379
    %4029 = vmatprep.mubr.bf16.mxu0 %v1908
    %4030 = vmatmul.mubr.bf16.gmra.mrb[0].mxu0 %v1907
    %v4031 = vpop.f32.mrb[0].mxu0
    %v4032 = vadd.f32 %v3991, %v4031
    %v4033 = vpop.f32.mrb[0].mxu0
    %v4034 = vadd.f32 %v3993, %v4033
    %v4035 = vpop.f32.mrb[0].mxu0
    %v4036 = vpop.f32.mrb[0].mxu0
    %4037 = vdwg.mxu0
    %v4038 = vld [vmem:[#allocation14] sm:$0x3f]
    %v4039 = vld [vmem:[#allocation16] sm:$0x3f]
    %v4040 = vadd.f32 %v3786, %v3788
    %v4041 = vadd.f32 %v4040, %v3909
    %v4042 = vadd.f32 %v4041, %v3911
    %v4043 = vadd.f32 %v4042, %v4032
    %v4044 = vadd.f32 %v4043, %v4034
    %4045 = vadd.xlane.f32.xlu0 %v4044
    %v4046 = vpop.xlane.xlu0 %4045
    %v4047 = vmul.f32 %v3786, %v3786
    %v4048 = vmul.f32 %v3788, %v3788
    %v4049 = vmul.f32 %v3909, %v3909
    %v4050 = vmul.f32 %v3911, %v3911
    %v4051 = vmul.f32 %v4032, %v4032
    %v4052 = vmul.f32 %v4034, %v4034
    %v4053 = vadd.f32 %v4047, %v4048
    %v4054 = vadd.f32 %v4053, %v4049
    %v4055 = vadd.f32 %v4054, %v4050
    %v4056 = vadd.f32 %v4055, %v4051
    %v4057 = vadd.f32 %v4056, %v4052
    %4058 = vadd.xlane.f32.xlu0 %v4057
    %v4059 = vpop.xlane.xlu0 %4058
    %v4060 = vmul.f32 %v4046, 0.0014285714
    %v4061 = vmul.f32 %v4059, 0.0014285714
    %v4062 = vmul.f32 %v4060, %v4060
    %v4063 = vsub.f32 %v4061, %v4062
    %v4064 = vmax.f32 %v4063, 0.0
    %v4065 = vsub.f32 %v3786, %v4060
    %v4066 = vsub.f32 %v3788, %v4060
    %v4067 = vsub.f32 %v3909, %v4060
    %v4068 = vsub.f32 %v3911, %v4060
    %v4069 = vsub.f32 %v4032, %v4060
    %v4070 = vsub.f32 %v4034, %v4060
    %v4071 = vadd.f32 %v4064, 1e-05
    %v4072 = vrsqrt.pop %v4071
    %v4073 = vmul.f32 %v4065, %v4072
    %v4074 = vmul.f32 %v4066, %v4072
    %v4075 = vmul.f32 %v4067, %v4072
    %v4076 = vmul.f32 %v4068, %v4072
    %v4077 = vmul.f32 %v4069, %v4072
    %v4078 = vmul.f32 %v4070, %v4072
    %v4080 = vlaneseq
    %v4081 = vshrl.u32 %v4080, 7
    %v4082 = vsub.s32 0, %v4081
    %v4083 = vrot.slane %v4038, %v4082
    %v4084 = vlaneseq
    %v4085 = vshrl.u32 %v4084, 7
    %v4086 = vsub.s32 1, %v4085
    %v4087 = vrot.slane %v4038, %v4086
    %v4088 = vlaneseq
    %v4089 = vshrl.u32 %v4088, 7
    %v4090 = vsub.s32 2, %v4089
    %v4091 = vrot.slane %v4038, %v4090
    %v4092 = vlaneseq
    %v4093 = vshrl.u32 %v4092, 7
    %v4094 = vsub.s32 3, %v4093
    %v4095 = vrot.slane %v4038, %v4094
    %v4096 = vlaneseq
    %v4097 = vshrl.u32 %v4096, 7
    %v4098 = vsub.s32 4, %v4097
    %v4099 = vrot.slane %v4038, %v4098
    %v4100 = vlaneseq
    %v4101 = vshrl.u32 %v4100, 7
    %v4102 = vsub.s32 5, %v4101
    %v4103 = vrot.slane %v4038, %v4102
    %v4110 = vmul.f32 %v4073, %v4083
    %v4111 = vmul.f32 %v4074, %v4087
    %v4112 = vmul.f32 %v4075, %v4091
    %v4113 = vmul.f32 %v4076, %v4095
    %v4114 = vmul.f32 %v4077, %v4099
    %v4115 = vmul.f32 %v4078, %v4103
    %v4117 = vlaneseq
    %v4118 = vshrl.u32 %v4117, 7
    %v4119 = vsub.s32 0, %v4118
    %v4120 = vrot.slane %v4039, %v4119
    %v4121 = vlaneseq
    %v4122 = vshrl.u32 %v4121, 7
    %v4123 = vsub.s32 1, %v4122
    %v4124 = vrot.slane %v4039, %v4123
    %v4125 = vlaneseq
    %v4126 = vshrl.u32 %v4125, 7
    %v4127 = vsub.s32 2, %v4126
    %v4128 = vrot.slane %v4039, %v4127
    %v4129 = vlaneseq
    %v4130 = vshrl.u32 %v4129, 7
    %v4131 = vsub.s32 3, %v4130
    %v4132 = vrot.slane %v4039, %v4131
    %v4133 = vlaneseq
    %v4134 = vshrl.u32 %v4133, 7
    %v4135 = vsub.s32 4, %v4134
    %v4136 = vrot.slane %v4039, %v4135
    %v4137 = vlaneseq
    %v4138 = vshrl.u32 %v4137, 7
    %v4139 = vsub.s32 5, %v4138
    %v4140 = vrot.slane %v4039, %v4139
    %v4147 = vadd.f32 %v4110, %v4120
    %v4148 = vadd.f32 %v4111, %v4124
    %v4149 = vadd.f32 %v4112, %v4128
    %v4150 = vadd.f32 %v4113, %v4132
    %v4151 = vadd.f32 %v4114, %v4136
    %v4152 = vadd.f32 %v4115, %v4140
    %v4153 = vmax.f32 %v4147, 0.0
    %v4154 = vmax.f32 %v4148, 0.0
    %v4155 = vmax.f32 %v4149, 0.0
    %v4156 = vmax.f32 %v4150, 0.0
    %v4157 = vmax.f32 %v4151, 0.0
    %v4158 = vmax.f32 %v4152, 0.0
    %v4159 = vpack.c.bf16 %v4153, %v4153
    %v4160 = vpack.c.bf16 %v4154, %v4154
    %v4161 = vpack.c.bf16 %v4155, %v4155
    %v4162 = vpack.c.bf16 %v4156, %v4156
    %v4163 = vpack.c.bf16 %v4157, %v4157
    %v4164 = vpack.c.bf16 %v4158, %v4158
    %v4165 = vld [vmem:[#allocation17] sm:$0xff]
    %v4166 = vld [vmem:[#allocation17 + $0x8] sm:$0xff]
    %v4167 = vld [vmem:[#allocation17 + $0x10] sm:$0xff]
    %v4168 = vld [vmem:[#allocation17 + $0x18] sm:$0xff]
    %v4169 = vld [vmem:[#allocation17 + $0x20] sm:$0xff]
    %v4170 = vld [vmem:[#allocation17 + $0x28] sm:$0xff]
    %v4171 = vld [vmem:[#allocation17 + $0x30] sm:$0xff]
    %v4172 = vld [vmem:[#allocation17 + $0x38] sm:$0xff]
    %v4173 = vld [vmem:[#allocation17 + $0x40] sm:$0xff]
    %v4174 = vld [vmem:[#allocation17 + $0x48] sm:$0xff]
    %v4175 = vld [vmem:[#allocation17 + $0x50] sm:$0xff]
    %v4176 = vld [vmem:[#allocation17 + $0x58] sm:$0xff]
    %v4177 = vld [vmem:[#allocation17 + $0x60] sm:$0xff]
    %v4178 = vld [vmem:[#allocation17 + $0x68] sm:$0xff]
    %v4179 = vld [vmem:[#allocation17 + $0x70] sm:$0xff]
    %v4180 = vld [vmem:[#allocation17 + $0x78] sm:$0xff]
    %v4181 = vld [vmem:[#allocation17 + $0x80] sm:$0xff]
    %v4182 = vld [vmem:[#allocation17 + $0x88] sm:$0xff]
    %v4183 = vld [vmem:[#allocation17 + $0x90] sm:$0xff]
    %v4184 = vld [vmem:[#allocation17 + $0x98] sm:$0xff]
    %v4185 = vld [vmem:[#allocation17 + $0xa0] sm:$0xff]
    %v4186 = vld [vmem:[#allocation17 + $0xa8] sm:$0xff]
    %v4187 = vld [vmem:[#allocation17 + $0xb0] sm:$0xff]
    %v4188 = vld [vmem:[#allocation17 + $0xb8] sm:$0xff]
    %v4189 = vld [vmem:[#allocation17 + $0xc0] sm:$0xff]
    %v4190 = vld [vmem:[#allocation17 + $0xc8] sm:$0xff]
    %v4191 = vld [vmem:[#allocation17 + $0xd0] sm:$0xff]
    %v4192 = vld [vmem:[#allocation17 + $0xd8] sm:$0xff]
    %v4193 = vld [vmem:[#allocation17 + $0xe0] sm:$0xff]
    %v4194 = vld [vmem:[#allocation17 + $0xe8] sm:$0xff]
    %v4195 = vld [vmem:[#allocation17 + $0xf0] sm:$0xff]
    %v4196 = vld [vmem:[#allocation17 + $0xf8] sm:$0xff]
    %v4197 = vld [vmem:[#allocation17 + $0x100] sm:$0xff]
    %v4198 = vld [vmem:[#allocation17 + $0x108] sm:$0xff]
    %v4199 = vld [vmem:[#allocation17 + $0x110] sm:$0xff]
    %v4200 = vld [vmem:[#allocation17 + $0x118] sm:$0xff]
    %v4201 = vld [vmem:[#allocation17 + $0x120] sm:$0xff]
    %v4202 = vld [vmem:[#allocation17 + $0x128] sm:$0xff]
    %v4203 = vld [vmem:[#allocation17 + $0x130] sm:$0xff]
    %v4204 = vld [vmem:[#allocation17 + $0x138] sm:$0xff]
    %v4205 = vld [vmem:[#allocation17 + $0x140] sm:$0xff]
    %v4206 = vld [vmem:[#allocation17 + $0x148] sm:$0xff]
    %v4207 = vld [vmem:[#allocation17 + $0x150] sm:$0xff]
    %v4208 = vld [vmem:[#allocation17 + $0x158] sm:$0xff]
    %v4209 = vld [vmem:[#allocation17 + $0x160] sm:$0xff]
    %v4210 = vld [vmem:[#allocation17 + $0x168] sm:$0xff]
    %v4211 = vld [vmem:[#allocation17 + $0x170] sm:$0xff]
    %v4212 = vld [vmem:[#allocation17 + $0x178] sm:$0xff]
    %v4213 = vld [vmem:[#allocation17 + $0x180] sm:$0xff]
    %v4214 = vld [vmem:[#allocation17 + $0x188] sm:$0xff]
    %v4215 = vld [vmem:[#allocation17 + $0x190] sm:$0xff]
    %v4216 = vld [vmem:[#allocation17 + $0x198] sm:$0xff]
    %v4217 = vld [vmem:[#allocation17 + $0x1a0] sm:$0xff]
    %v4218 = vld [vmem:[#allocation17 + $0x1a8] sm:$0xff]
    %v4219 = vld [vmem:[#allocation17 + $0x1b0] sm:$0xff]
    %v4220 = vld [vmem:[#allocation17 + $0x1b8] sm:$0xff]
    %v4221 = vld [vmem:[#allocation17 + $0x1c0] sm:$0xff]
    %v4222 = vld [vmem:[#allocation17 + $0x1c8] sm:$0xff]
    %v4223 = vld [vmem:[#allocation17 + $0x1d0] sm:$0xff]
    %v4224 = vld [vmem:[#allocation17 + $0x1d8] sm:$0xff]
    %v4225 = vld [vmem:[#allocation17 + $0x1e0] sm:$0xff]
    %v4226 = vld [vmem:[#allocation17 + $0x1e8] sm:$0xff]
    %v4227 = vld [vmem:[#allocation17 + $0x1f0] sm:$0xff]
    %v4228 = vld [vmem:[#allocation17 + $0x1f8] sm:$0xff]
    %v4229 = vld [vmem:[#allocation17 + $0x200] sm:$0xff]
    %v4230 = vld [vmem:[#allocation17 + $0x208] sm:$0xff]
    %v4231 = vld [vmem:[#allocation17 + $0x210] sm:$0xff]
    %v4232 = vld [vmem:[#allocation17 + $0x218] sm:$0xff]
    %v4233 = vld [vmem:[#allocation17 + $0x220] sm:$0xff]
    %v4234 = vld [vmem:[#allocation17 + $0x228] sm:$0xff]
    %v4235 = vld [vmem:[#allocation17 + $0x230] sm:$0xff]
    %v4236 = vld [vmem:[#allocation17 + $0x238] sm:$0xff]
    %v4237 = vld [vmem:[#allocation17 + $0x240] sm:$0xff]
    %v4238 = vld [vmem:[#allocation17 + $0x248] sm:$0xff]
    %v4239 = vld [vmem:[#allocation17 + $0x250] sm:$0xff]
    %v4240 = vld [vmem:[#allocation17 + $0x258] sm:$0xff]
    %v4241 = vld [vmem:[#allocation17 + $0x260] sm:$0xff]
    %v4242 = vld [vmem:[#allocation17 + $0x268] sm:$0xff]
    %v4243 = vld [vmem:[#allocation17 + $0x270] sm:$0xff]
    %v4244 = vld [vmem:[#allocation17 + $0x278] sm:$0xff]
    %v4245 = vld [vmem:[#allocation17 + $0x280] sm:$0xff]
    %v4246 = vld [vmem:[#allocation17 + $0x288] sm:$0xff]
    %v4247 = vld [vmem:[#allocation17 + $0x290] sm:$0xff]
    %v4248 = vld [vmem:[#allocation17 + $0x298] sm:$0xff]
    %v4249 = vld [vmem:[#allocation17 + $0x2a0] sm:$0xff]
    %v4250 = vld [vmem:[#allocation17 + $0x2a8] sm:$0xff]
    %v4251 = vld [vmem:[#allocation17 + $0x2b0] sm:$0xff]
    %v4252 = vld [vmem:[#allocation17 + $0x2b8] sm:$0xff]
    %v4253 = vld [vmem:[#allocation17 + $0x2c0] sm:$0xff]
    %v4254 = vld [vmem:[#allocation17 + $0x2c8] sm:$0xff]
    %v4255 = vld [vmem:[#allocation17 + $0x2d0] sm:$0xff]
    %v4256 = vld [vmem:[#allocation17 + $0x2d8] sm:$0xff]
    %v4257 = vld [vmem:[#allocation17 + $0x2e0] sm:$0xff]
    %v4258 = vld [vmem:[#allocation17 + $0x2e8] sm:$0xff]
    %v4259 = vld [vmem:[#allocation17 + $0x2f0] sm:$0xff]
    %v4260 = vld [vmem:[#allocation17 + $0x2f8] sm:$0xff]
    %v4261 = vld [vmem:[#allocation17 + $0x300] sm:$0xff]
    %v4262 = vld [vmem:[#allocation17 + $0x308] sm:$0xff]
    %v4263 = vld [vmem:[#allocation17 + $0x310] sm:$0xff]
    %v4264 = vld [vmem:[#allocation17 + $0x318] sm:$0xff]
    %v4265 = vld [vmem:[#allocation17 + $0x320] sm:$0xff]
    %v4266 = vld [vmem:[#allocation17 + $0x328] sm:$0xff]
    %v4267 = vld [vmem:[#allocation17 + $0x330] sm:$0xff]
    %v4268 = vld [vmem:[#allocation17 + $0x338] sm:$0xff]
    %v4269 = vld [vmem:[#allocation17 + $0x340] sm:$0xff]
    %v4270 = vld [vmem:[#allocation17 + $0x348] sm:$0xff]
    %v4271 = vld [vmem:[#allocation17 + $0x350] sm:$0xff]
    %v4272 = vld [vmem:[#allocation17 + $0x358] sm:$0xff]
    %v4273 = vld [vmem:[#allocation17 + $0x360] sm:$0xff]
    %v4274 = vld [vmem:[#allocation17 + $0x368] sm:$0xff]
    %v4275 = vld [vmem:[#allocation17 + $0x370] sm:$0xff]
    %v4276 = vld [vmem:[#allocation17 + $0x378] sm:$0xff]
    %v4277 = vld [vmem:[#allocation17 + $0x380] sm:$0xff]
    %v4278 = vld [vmem:[#allocation17 + $0x388] sm:$0xff]
    %v4279 = vld [vmem:[#allocation17 + $0x390] sm:$0xff]
    %v4280 = vld [vmem:[#allocation17 + $0x398] sm:$0xff]
    %v4281 = vld [vmem:[#allocation17 + $0x3a0] sm:$0xff]
    %v4282 = vld [vmem:[#allocation17 + $0x3a8] sm:$0xff]
    %v4283 = vld [vmem:[#allocation17 + $0x3b0] sm:$0xff]
    %v4284 = vld [vmem:[#allocation17 + $0x3b8] sm:$0xff]
    %v4285 = vld [vmem:[#allocation17 + $0x3c0] sm:$0xff]
    %v4286 = vld [vmem:[#allocation17 + $0x3c8] sm:$0xff]
    %v4287 = vld [vmem:[#allocation17 + $0x3d0] sm:$0xff]
    %v4288 = vld [vmem:[#allocation17 + $0x3d8] sm:$0xff]
    %v4289 = vld [vmem:[#allocation17 + $0x3e0] sm:$0xff]
    %v4290 = vld [vmem:[#allocation17 + $0x3e8] sm:$0xff]
    %v4291 = vld [vmem:[#allocation17 + $0x3f0] sm:$0xff]
    %v4292 = vld [vmem:[#allocation17 + $0x3f8] sm:$0xff]
    %v4293 = vld [vmem:[#allocation17 + $0x400] sm:$0xff]
    %v4294 = vld [vmem:[#allocation17 + $0x408] sm:$0xff]
    %v4295 = vld [vmem:[#allocation17 + $0x410] sm:$0xff]
    %v4296 = vld [vmem:[#allocation17 + $0x418] sm:$0xff]
    %v4297 = vld [vmem:[#allocation17 + $0x420] sm:$0xff]
    %v4298 = vld [vmem:[#allocation17 + $0x428] sm:$0xff]
    %v4299 = vld [vmem:[#allocation17 + $0x430] sm:$0xff]
    %v4300 = vld [vmem:[#allocation17 + $0x438] sm:$0xff]
    %v4301 = vld [vmem:[#allocation17 + $0x440] sm:$0xff]
    %v4302 = vld [vmem:[#allocation17 + $0x448] sm:$0xff]
    %v4303 = vld [vmem:[#allocation17 + $0x450] sm:$0xff]
    %v4304 = vld [vmem:[#allocation17 + $0x458] sm:$0xff]
    %v4305 = vld [vmem:[#allocation17 + $0x460] sm:$0xff]
    %v4306 = vld [vmem:[#allocation17 + $0x468] sm:$0xff]
    %v4307 = vld [vmem:[#allocation17 + $0x470] sm:$0xff]
    %v4308 = vld [vmem:[#allocation17 + $0x478] sm:$0xff]
    %v4309 = vld [vmem:[#allocation17 + $0x480] sm:$0xff]
    %v4310 = vld [vmem:[#allocation17 + $0x488] sm:$0xff]
    %v4311 = vld [vmem:[#allocation17 + $0x490] sm:$0xff]
    %v4312 = vld [vmem:[#allocation17 + $0x498] sm:$0xff]
    %v4313 = vld [vmem:[#allocation17 + $0x4a0] sm:$0xff]
    %v4314 = vld [vmem:[#allocation17 + $0x4a8] sm:$0xff]
    %v4315 = vld [vmem:[#allocation17 + $0x4b0] sm:$0xff]
    %v4316 = vld [vmem:[#allocation17 + $0x4b8] sm:$0xff]
    %v4317 = vld [vmem:[#allocation17 + $0x4c0] sm:$0xff]
    %v4318 = vld [vmem:[#allocation17 + $0x4c8] sm:$0xff]
    %v4319 = vld [vmem:[#allocation17 + $0x4d0] sm:$0xff]
    %v4320 = vld [vmem:[#allocation17 + $0x4d8] sm:$0xff]
    %v4321 = vld [vmem:[#allocation17 + $0x4e0] sm:$0xff]
    %v4322 = vld [vmem:[#allocation17 + $0x4e8] sm:$0xff]
    %v4323 = vld [vmem:[#allocation17 + $0x4f0] sm:$0xff]
    %v4324 = vld [vmem:[#allocation17 + $0x4f8] sm:$0xff]
    %v4325 = vld [vmem:[#allocation17 + $0x500] sm:$0xff]
    %v4326 = vld [vmem:[#allocation17 + $0x508] sm:$0xff]
    %v4327 = vld [vmem:[#allocation17 + $0x510] sm:$0xff]
    %v4328 = vld [vmem:[#allocation17 + $0x518] sm:$0xff]
    %v4329 = vld [vmem:[#allocation17 + $0x520] sm:$0xff]
    %v4330 = vld [vmem:[#allocation17 + $0x528] sm:$0xff]
    %v4331 = vld [vmem:[#allocation17 + $0x530] sm:$0xff]
    %v4332 = vld [vmem:[#allocation17 + $0x538] sm:$0xff]
    %v4333 = vld [vmem:[#allocation17 + $0x540] sm:$0xff]
    %v4334 = vld [vmem:[#allocation17 + $0x548] sm:$0xff]
    %v4335 = vld [vmem:[#allocation17 + $0x550] sm:$0xff]
    %v4336 = vld [vmem:[#allocation17 + $0x558] sm:$0xff]
    %v4337 = vld [vmem:[#allocation17 + $0x560] sm:$0xff]
    %v4338 = vld [vmem:[#allocation17 + $0x568] sm:$0xff]
    %v4339 = vld [vmem:[#allocation17 + $0x570] sm:$0xff]
    %v4340 = vld [vmem:[#allocation17 + $0x578] sm:$0xff]
    %v4341 = vld [vmem:[#allocation17 + $0x580] sm:$0xff]
    %v4342 = vld [vmem:[#allocation17 + $0x588] sm:$0xff]
    %v4343 = vld [vmem:[#allocation17 + $0x590] sm:$0xff]
    %v4344 = vld [vmem:[#allocation17 + $0x598] sm:$0xff]
    %v4345 = vld [vmem:[#allocation17 + $0x5a0] sm:$0xff]
    %v4346 = vld [vmem:[#allocation17 + $0x5a8] sm:$0xff]
    %v4347 = vld [vmem:[#allocation17 + $0x5b0] sm:$0xff]
    %v4348 = vld [vmem:[#allocation17 + $0x5b8] sm:$0xff]
    %v4349 = vld [vmem:[#allocation17 + $0x5c0] sm:$0xff]
    %v4350 = vld [vmem:[#allocation17 + $0x5c8] sm:$0xff]
    %v4351 = vld [vmem:[#allocation17 + $0x5d0] sm:$0xff]
    %v4352 = vld [vmem:[#allocation17 + $0x5d8] sm:$0xff]
    %v4353 = vld [vmem:[#allocation17 + $0x5e0] sm:$0xff]
    %v4354 = vld [vmem:[#allocation17 + $0x5e8] sm:$0xff]
    %v4355 = vld [vmem:[#allocation17 + $0x5f0] sm:$0xff]
    %v4356 = vld [vmem:[#allocation17 + $0x5f8] sm:$0xff]
    %v4357 = vld [vmem:[#allocation17 + $0x600] sm:$0xff]
    %v4358 = vld [vmem:[#allocation17 + $0x608] sm:$0xff]
    %v4359 = vld [vmem:[#allocation17 + $0x610] sm:$0xff]
    %v4360 = vld [vmem:[#allocation17 + $0x618] sm:$0xff]
    %v4361 = vld [vmem:[#allocation17 + $0x620] sm:$0xff]
    %v4362 = vld [vmem:[#allocation17 + $0x628] sm:$0xff]
    %v4363 = vld [vmem:[#allocation17 + $0x630] sm:$0xff]
    %v4364 = vld [vmem:[#allocation17 + $0x638] sm:$0xff]
    %v4365 = vld [vmem:[#allocation17 + $0x640] sm:$0xff]
    %v4366 = vld [vmem:[#allocation17 + $0x648] sm:$0xff]
    %v4367 = vld [vmem:[#allocation17 + $0x650] sm:$0xff]
    %v4368 = vld [vmem:[#allocation17 + $0x658] sm:$0xff]
    %v4369 = vld [vmem:[#allocation17 + $0x660] sm:$0xff]
    %v4370 = vld [vmem:[#allocation17 + $0x668] sm:$0xff]
    %v4371 = vld [vmem:[#allocation17 + $0x670] sm:$0xff]
    %v4372 = vld [vmem:[#allocation17 + $0x678] sm:$0xff]
    %v4373 = vld [vmem:[#allocation17 + $0x680] sm:$0xff]
    %v4374 = vld [vmem:[#allocation17 + $0x688] sm:$0xff]
    %v4375 = vld [vmem:[#allocation17 + $0x690] sm:$0xff]
    %v4376 = vld [vmem:[#allocation17 + $0x698] sm:$0xff]
    %v4377 = vld [vmem:[#allocation17 + $0x6a0] sm:$0xff]
    %v4378 = vld [vmem:[#allocation17 + $0x6a8] sm:$0xff]
    %v4379 = vld [vmem:[#allocation17 + $0x6b0] sm:$0xff]
    %v4380 = vld [vmem:[#allocation17 + $0x6b8] sm:$0xff]
    %v4381 = vld [vmem:[#allocation17 + $0x6c0] sm:$0xff]
    %v4382 = vld [vmem:[#allocation17 + $0x6c8] sm:$0xff]
    %v4383 = vld [vmem:[#allocation17 + $0x6d0] sm:$0xff]
    %v4384 = vld [vmem:[#allocation17 + $0x6d8] sm:$0xff]
    %v4385 = vld [vmem:[#allocation17 + $0x6e0] sm:$0xff]
    %v4386 = vld [vmem:[#allocation17 + $0x6e8] sm:$0xff]
    %v4387 = vld [vmem:[#allocation17 + $0x6f0] sm:$0xff]
    %v4388 = vld [vmem:[#allocation17 + $0x6f8] sm:$0xff]
    %v4389 = vld [vmem:[#allocation17 + $0x700] sm:$0xff]
    %v4390 = vld [vmem:[#allocation17 + $0x708] sm:$0xff]
    %v4391 = vld [vmem:[#allocation17 + $0x710] sm:$0xff]
    %v4392 = vld [vmem:[#allocation17 + $0x718] sm:$0xff]
    %v4393 = vld [vmem:[#allocation17 + $0x720] sm:$0xff]
    %v4394 = vld [vmem:[#allocation17 + $0x728] sm:$0xff]
    %v4395 = vld [vmem:[#allocation17 + $0x730] sm:$0xff]
    %v4396 = vld [vmem:[#allocation17 + $0x738] sm:$0xff]
    %v4397 = vld [vmem:[#allocation17 + $0x740] sm:$0xff]
    %v4398 = vld [vmem:[#allocation17 + $0x748] sm:$0xff]
    %v4399 = vld [vmem:[#allocation17 + $0x750] sm:$0xff]
    %v4400 = vld [vmem:[#allocation17 + $0x758] sm:$0xff]
    %v4401 = vld [vmem:[#allocation17 + $0x760] sm:$0xff]
    %v4402 = vld [vmem:[#allocation17 + $0x768] sm:$0xff]
    %v4403 = vld [vmem:[#allocation17 + $0x770] sm:$0xff]
    %v4404 = vld [vmem:[#allocation17 + $0x778] sm:$0xff]
    %v4405 = vld [vmem:[#allocation17 + $0x780] sm:$0xff]
    %v4406 = vld [vmem:[#allocation17 + $0x788] sm:$0xff]
    %v4407 = vld [vmem:[#allocation17 + $0x790] sm:$0xff]
    %v4408 = vld [vmem:[#allocation17 + $0x798] sm:$0xff]
    %v4409 = vld [vmem:[#allocation17 + $0x7a0] sm:$0xff]
    %v4410 = vld [vmem:[#allocation17 + $0x7a8] sm:$0xff]
    %v4411 = vld [vmem:[#allocation17 + $0x7b0] sm:$0xff]
    %v4412 = vld [vmem:[#allocation17 + $0x7b8] sm:$0xff]
    %v4413 = vld [vmem:[#allocation17 + $0x7c0] sm:$0xff]
    %v4414 = vld [vmem:[#allocation17 + $0x7c8] sm:$0xff]
    %v4415 = vld [vmem:[#allocation17 + $0x7d0] sm:$0xff]
    %v4416 = vld [vmem:[#allocation17 + $0x7d8] sm:$0xff]
    %v4417 = vld [vmem:[#allocation17 + $0x7e0] sm:$0xff]
    %v4418 = vld [vmem:[#allocation17 + $0x7e8] sm:$0xff]
    %v4419 = vld [vmem:[#allocation17 + $0x7f0] sm:$0xff]
    %v4420 = vld [vmem:[#allocation17 + $0x7f8] sm:$0xff]
    %v4421 = vld [vmem:[#allocation17 + $0x800] sm:$0xff]
    %v4422 = vld [vmem:[#allocation17 + $0x808] sm:$0xff]
    %v4423 = vld [vmem:[#allocation17 + $0x810] sm:$0xff]
    %v4424 = vld [vmem:[#allocation17 + $0x818] sm:$0xff]
    %v4425 = vld [vmem:[#allocation17 + $0x820] sm:$0xff]
    %v4426 = vld [vmem:[#allocation17 + $0x828] sm:$0xff]
    %v4427 = vld [vmem:[#allocation17 + $0x830] sm:$0xff]
    %v4428 = vld [vmem:[#allocation17 + $0x838] sm:$0xff]
    %v4429 = vld [vmem:[#allocation17 + $0x840] sm:$0xff]
    %v4430 = vld [vmem:[#allocation17 + $0x848] sm:$0xff]
    %v4431 = vld [vmem:[#allocation17 + $0x850] sm:$0xff]
    %v4432 = vld [vmem:[#allocation17 + $0x858] sm:$0xff]
    %v4433 = vld [vmem:[#allocation17 + $0x860] sm:$0xff]
    %v4434 = vld [vmem:[#allocation17 + $0x868] sm:$0xff]
    %v4435 = vld [vmem:[#allocation17 + $0x870] sm:$0xff]
    %v4436 = vld [vmem:[#allocation17 + $0x878] sm:$0xff]
    %v4437 = vld [vmem:[#allocation17 + $0x880] sm:$0xff]
    %v4438 = vld [vmem:[#allocation17 + $0x888] sm:$0xff]
    %v4439 = vld [vmem:[#allocation17 + $0x890] sm:$0xff]
    %v4440 = vld [vmem:[#allocation17 + $0x898] sm:$0xff]
    %v4441 = vld [vmem:[#allocation17 + $0x8a0] sm:$0xff]
    %v4442 = vld [vmem:[#allocation17 + $0x8a8] sm:$0xff]
    %v4443 = vld [vmem:[#allocation17 + $0x8b0] sm:$0xff]
    %v4444 = vld [vmem:[#allocation17 + $0x8b8] sm:$0xff]
    %v4445 = vld [vmem:[#allocation17 + $0x8c0] sm:$0xff]
    %v4446 = vld [vmem:[#allocation17 + $0x8c8] sm:$0xff]
    %v4447 = vld [vmem:[#allocation17 + $0x8d0] sm:$0xff]
    %v4448 = vld [vmem:[#allocation17 + $0x8d8] sm:$0xff]
    %v4449 = vld [vmem:[#allocation17 + $0x8e0] sm:$0xff]
    %v4450 = vld [vmem:[#allocation17 + $0x8e8] sm:$0xff]
    %v4451 = vld [vmem:[#allocation17 + $0x8f0] sm:$0xff]
    %v4452 = vld [vmem:[#allocation17 + $0x8f8] sm:$0xff]
    %v4453 = vld [vmem:[#allocation19] sm:$0x3f]
    %v4455 = vlaneseq
    %v4456 = vshrl.u32 %v4455, 7
    %v4457 = vsub.s32 0, %v4456
    %v4458 = vrot.slane %v4453, %v4457
    %v4459 = vlaneseq
    %v4460 = vshrl.u32 %v4459, 7
    %v4461 = vsub.s32 1, %v4460
    %v4462 = vrot.slane %v4453, %v4461
    %v4463 = vlaneseq
    %v4464 = vshrl.u32 %v4463, 7
    %v4465 = vsub.s32 2, %v4464
    %v4466 = vrot.slane %v4453, %v4465
    %v4467 = vlaneseq
    %v4468 = vshrl.u32 %v4467, 7
    %v4469 = vsub.s32 3, %v4468
    %v4470 = vrot.slane %v4453, %v4469
    %v4471 = vlaneseq
    %v4472 = vshrl.u32 %v4471, 7
    %v4473 = vsub.s32 4, %v4472
    %v4474 = vrot.slane %v4453, %v4473
    %v4475 = vlaneseq
    %v4476 = vshrl.u32 %v4475, 7
    %v4477 = vsub.s32 5, %v4476
    %v4478 = vrot.slane %v4453, %v4477
    %v4773 = vunpack.c.l.b16 %v4165
    %v4774 = vunpack.c.h.b16 %v4165
    %v4775 = vunpack.c.l.b16 %v4166
    %v4776 = vunpack.c.h.b16 %v4166
    %v4777 = vunpack.c.l.b16 %v4167
    %v4778 = vunpack.c.h.b16 %v4167
    %v4779 = vunpack.c.l.b16 %v4168
    %v4780 = vunpack.c.h.b16 %v4168
    %v4781 = vunpack.c.l.b16 %v4169
    %v4782 = vunpack.c.h.b16 %v4169
    %v4783 = vunpack.c.l.b16 %v4170
    %v4784 = vunpack.c.h.b16 %v4170
    %v4785 = vunpack.c.l.b16 %v4171
    %v4786 = vunpack.c.h.b16 %v4171
    %v4787 = vunpack.c.l.b16 %v4172
    %v4788 = vunpack.c.h.b16 %v4172
    %v4789 = vunpack.c.l.b16 %v4173
    %v4790 = vunpack.c.h.b16 %v4173
    %v4791 = vunpack.c.l.b16 %v4174
    %v4792 = vunpack.c.h.b16 %v4174
    %v4793 = vunpack.c.l.b16 %v4175
    %v4794 = vunpack.c.h.b16 %v4175
    %v4795 = vunpack.c.l.b16 %v4176
    %v4796 = vunpack.c.h.b16 %v4176
    %v4797 = vunpack.c.l.b16 %v4177
    %v4798 = vunpack.c.h.b16 %v4177
    %v4799 = vunpack.c.l.b16 %v4178
    %v4800 = vunpack.c.h.b16 %v4178
    %v4801 = vunpack.c.l.b16 %v4179
    %v4802 = vunpack.c.h.b16 %v4179
    %v4803 = vunpack.c.l.b16 %v4180
    %v4804 = vunpack.c.h.b16 %v4180
    %v4805 = vunpack.c.l.b16 %v4181
    %v4806 = vunpack.c.h.b16 %v4181
    %v4807 = vunpack.c.l.b16 %v4182
    %v4808 = vunpack.c.h.b16 %v4182
    %v4809 = vunpack.c.l.b16 %v4183
    %v4810 = vunpack.c.h.b16 %v4183
    %v4811 = vunpack.c.l.b16 %v4184
    %v4812 = vunpack.c.h.b16 %v4184
    %v4813 = vunpack.c.l.b16 %v4185
    %v4814 = vunpack.c.h.b16 %v4185
    %v4815 = vunpack.c.l.b16 %v4186
    %v4816 = vunpack.c.h.b16 %v4186
    %v4817 = vunpack.c.l.b16 %v4187
    %v4818 = vunpack.c.h.b16 %v4187
    %v4819 = vunpack.c.l.b16 %v4188
    %v4820 = vunpack.c.h.b16 %v4188
    %v4821 = vunpack.c.l.b16 %v4189
    %v4822 = vunpack.c.h.b16 %v4189
    %v4823 = vunpack.c.l.b16 %v4190
    %v4824 = vunpack.c.h.b16 %v4190
    %v4825 = vunpack.c.l.b16 %v4191
    %v4826 = vunpack.c.h.b16 %v4191
    %v4827 = vunpack.c.l.b16 %v4192
    %v4828 = vunpack.c.h.b16 %v4192
    %v4829 = vunpack.c.l.b16 %v4193
    %v4830 = vunpack.c.h.b16 %v4193
    %v4831 = vunpack.c.l.b16 %v4194
    %v4832 = vunpack.c.h.b16 %v4194
    %v4833 = vunpack.c.l.b16 %v4195
    %v4834 = vunpack.c.h.b16 %v4195
    %v4835 = vunpack.c.l.b16 %v4196
    %v4836 = vunpack.c.h.b16 %v4196
    %v4837 = vunpack.c.l.b16 %v4197
    %v4838 = vunpack.c.h.b16 %v4197
    %v4839 = vunpack.c.l.b16 %v4198
    %v4840 = vunpack.c.h.b16 %v4198
    %v4841 = vunpack.c.l.b16 %v4199
    %v4842 = vunpack.c.h.b16 %v4199
    %v4843 = vunpack.c.l.b16 %v4200
    %v4844 = vunpack.c.h.b16 %v4200
    %v4845 = vunpack.c.l.b16 %v4201
    %v4846 = vunpack.c.h.b16 %v4201
    %v4847 = vunpack.c.l.b16 %v4202
    %v4848 = vunpack.c.h.b16 %v4202
    %v4849 = vunpack.c.l.b16 %v4203
    %v4850 = vunpack.c.h.b16 %v4203
    %v4851 = vunpack.c.l.b16 %v4204
    %v4852 = vunpack.c.h.b16 %v4204
    %v4853 = vunpack.c.l.b16 %v4205
    %v4854 = vunpack.c.h.b16 %v4205
    %v4855 = vunpack.c.l.b16 %v4206
    %v4856 = vunpack.c.h.b16 %v4206
    %v4857 = vunpack.c.l.b16 %v4207
    %v4858 = vunpack.c.h.b16 %v4207
    %v4859 = vunpack.c.l.b16 %v4208
    %v4860 = vunpack.c.h.b16 %v4208
    %v4861 = vunpack.c.l.b16 %v4209
    %v4862 = vunpack.c.h.b16 %v4209
    %v4863 = vunpack.c.l.b16 %v4210
    %v4864 = vunpack.c.h.b16 %v4210
    %v4865 = vunpack.c.l.b16 %v4211
    %v4866 = vunpack.c.h.b16 %v4211
    %v4867 = vunpack.c.l.b16 %v4212
    %v4868 = vunpack.c.h.b16 %v4212
    %v4869 = vunpack.c.l.b16 %v4213
    %v4870 = vunpack.c.h.b16 %v4213
    %v4871 = vunpack.c.l.b16 %v4214
    %v4872 = vunpack.c.h.b16 %v4214
    %v4873 = vunpack.c.l.b16 %v4215
    %v4874 = vunpack.c.h.b16 %v4215
    %v4875 = vunpack.c.l.b16 %v4216
    %v4876 = vunpack.c.h.b16 %v4216
    %v4877 = vunpack.c.l.b16 %v4217
    %v4878 = vunpack.c.h.b16 %v4217
    %v4879 = vunpack.c.l.b16 %v4218
    %v4880 = vunpack.c.h.b16 %v4218
    %v4881 = vunpack.c.l.b16 %v4219
    %v4882 = vunpack.c.h.b16 %v4219
    %v4883 = vunpack.c.l.b16 %v4220
    %v4884 = vunpack.c.h.b16 %v4220
    %v4885 = vunpack.c.l.b16 %v4221
    %v4886 = vunpack.c.h.b16 %v4221
    %v4887 = vunpack.c.l.b16 %v4222
    %v4888 = vunpack.c.h.b16 %v4222
    %v4889 = vunpack.c.l.b16 %v4223
    %v4890 = vunpack.c.h.b16 %v4223
    %v4891 = vunpack.c.l.b16 %v4224
    %v4892 = vunpack.c.h.b16 %v4224
    %v4893 = vunpack.c.l.b16 %v4225
    %v4894 = vunpack.c.h.b16 %v4225
    %v4895 = vunpack.c.l.b16 %v4226
    %v4896 = vunpack.c.h.b16 %v4226
    %v4897 = vunpack.c.l.b16 %v4227
    %v4898 = vunpack.c.h.b16 %v4227
    %v4899 = vunpack.c.l.b16 %v4228
    %v4900 = vunpack.c.h.b16 %v4228
    %v4901 = vunpack.c.l.b16 %v4229
    %v4902 = vunpack.c.h.b16 %v4229
    %v4903 = vunpack.c.l.b16 %v4230
    %v4904 = vunpack.c.h.b16 %v4230
    %v4905 = vunpack.c.l.b16 %v4231
    %v4906 = vunpack.c.h.b16 %v4231
    %v4907 = vunpack.c.l.b16 %v4232
    %v4908 = vunpack.c.h.b16 %v4232
    %v4909 = vunpack.c.l.b16 %v4233
    %v4910 = vunpack.c.h.b16 %v4233
    %v4911 = vunpack.c.l.b16 %v4234
    %v4912 = vunpack.c.h.b16 %v4234
    %v4913 = vunpack.c.l.b16 %v4235
    %v4914 = vunpack.c.h.b16 %v4235
    %v4915 = vunpack.c.l.b16 %v4236
    %v4916 = vunpack.c.h.b16 %v4236
    %v4917 = vunpack.c.l.b16 %v4237
    %v4918 = vunpack.c.h.b16 %v4237
    %v4919 = vunpack.c.l.b16 %v4238
    %v4920 = vunpack.c.h.b16 %v4238
    %v4921 = vunpack.c.l.b16 %v4239
    %v4922 = vunpack.c.h.b16 %v4239
    %v4923 = vunpack.c.l.b16 %v4240
    %v4924 = vunpack.c.h.b16 %v4240
    %v4925 = vunpack.c.l.b16 %v4241
    %v4926 = vunpack.c.h.b16 %v4241
    %v4927 = vunpack.c.l.b16 %v4242
    %v4928 = vunpack.c.h.b16 %v4242
    %v4929 = vunpack.c.l.b16 %v4243
    %v4930 = vunpack.c.h.b16 %v4243
    %v4931 = vunpack.c.l.b16 %v4244
    %v4932 = vunpack.c.h.b16 %v4244
    %v4933 = vunpack.c.l.b16 %v4245
    %v4934 = vunpack.c.h.b16 %v4245
    %v4935 = vunpack.c.l.b16 %v4246
    %v4936 = vunpack.c.h.b16 %v4246
    %v4937 = vunpack.c.l.b16 %v4247
    %v4938 = vunpack.c.h.b16 %v4247
    %v4939 = vunpack.c.l.b16 %v4248
    %v4940 = vunpack.c.h.b16 %v4248
    %v4941 = vunpack.c.l.b16 %v4249
    %v4942 = vunpack.c.h.b16 %v4249
    %v4943 = vunpack.c.l.b16 %v4250
    %v4944 = vunpack.c.h.b16 %v4250
    %v4945 = vunpack.c.l.b16 %v4251
    %v4946 = vunpack.c.h.b16 %v4251
    %v4947 = vunpack.c.l.b16 %v4252
    %v4948 = vunpack.c.h.b16 %v4252
    %v4949 = vunpack.c.l.b16 %v4253
    %v4950 = vunpack.c.h.b16 %v4253
    %v4951 = vunpack.c.l.b16 %v4254
    %v4952 = vunpack.c.h.b16 %v4254
    %v4953 = vunpack.c.l.b16 %v4255
    %v4954 = vunpack.c.h.b16 %v4255
    %v4955 = vunpack.c.l.b16 %v4256
    %v4956 = vunpack.c.h.b16 %v4256
    %v4957 = vunpack.c.l.b16 %v4257
    %v4958 = vunpack.c.h.b16 %v4257
    %v4959 = vunpack.c.l.b16 %v4258
    %v4960 = vunpack.c.h.b16 %v4258
    %v4961 = vunpack.c.l.b16 %v4259
    %v4962 = vunpack.c.h.b16 %v4259
    %v4963 = vunpack.c.l.b16 %v4260
    %v4964 = vunpack.c.h.b16 %v4260
    %v4965 = vunpack.c.l.b16 %v4261
    %v4966 = vunpack.c.h.b16 %v4261
    %v4967 = vunpack.c.l.b16 %v4262
    %v4968 = vunpack.c.h.b16 %v4262
    %v4969 = vunpack.c.l.b16 %v4263
    %v4970 = vunpack.c.h.b16 %v4263
    %v4971 = vunpack.c.l.b16 %v4264
    %v4972 = vunpack.c.h.b16 %v4264
    %v4973 = vunpack.c.l.b16 %v4265
    %v4974 = vunpack.c.h.b16 %v4265
    %v4975 = vunpack.c.l.b16 %v4266
    %v4976 = vunpack.c.h.b16 %v4266
    %v4977 = vunpack.c.l.b16 %v4267
    %v4978 = vunpack.c.h.b16 %v4267
    %v4979 = vunpack.c.l.b16 %v4268
    %v4980 = vunpack.c.h.b16 %v4268
    %v4981 = vunpack.c.l.b16 %v4269
    %v4982 = vunpack.c.h.b16 %v4269
    %v4983 = vunpack.c.l.b16 %v4270
    %v4984 = vunpack.c.h.b16 %v4270
    %v4985 = vunpack.c.l.b16 %v4271
    %v4986 = vunpack.c.h.b16 %v4271
    %v4987 = vunpack.c.l.b16 %v4272
    %v4988 = vunpack.c.h.b16 %v4272
    %v4989 = vunpack.c.l.b16 %v4273
    %v4990 = vunpack.c.h.b16 %v4273
    %v4991 = vunpack.c.l.b16 %v4274
    %v4992 = vunpack.c.h.b16 %v4274
    %v4993 = vunpack.c.l.b16 %v4275
    %v4994 = vunpack.c.h.b16 %v4275
    %v4995 = vunpack.c.l.b16 %v4276
    %v4996 = vunpack.c.h.b16 %v4276
    %v4997 = vunpack.c.l.b16 %v4277
    %v4998 = vunpack.c.h.b16 %v4277
    %v4999 = vunpack.c.l.b16 %v4278
    %v5000 = vunpack.c.h.b16 %v4278
    %v5001 = vunpack.c.l.b16 %v4279
    %v5002 = vunpack.c.h.b16 %v4279
    %v5003 = vunpack.c.l.b16 %v4280
    %v5004 = vunpack.c.h.b16 %v4280
    %v5005 = vunpack.c.l.b16 %v4281
    %v5006 = vunpack.c.h.b16 %v4281
    %v5007 = vunpack.c.l.b16 %v4282
    %v5008 = vunpack.c.h.b16 %v4282
    %v5009 = vunpack.c.l.b16 %v4283
    %v5010 = vunpack.c.h.b16 %v4283
    %v5011 = vunpack.c.l.b16 %v4284
    %v5012 = vunpack.c.h.b16 %v4284
    %v5013 = vunpack.c.l.b16 %v4285
    %v5014 = vunpack.c.h.b16 %v4285
    %v5015 = vunpack.c.l.b16 %v4286
    %v5016 = vunpack.c.h.b16 %v4286
    %v5017 = vunpack.c.l.b16 %v4287
    %v5018 = vunpack.c.h.b16 %v4287
    %v5019 = vunpack.c.l.b16 %v4288
    %v5020 = vunpack.c.h.b16 %v4288
    %v5021 = vunpack.c.l.b16 %v4289
    %v5022 = vunpack.c.h.b16 %v4289
    %v5023 = vunpack.c.l.b16 %v4290
    %v5024 = vunpack.c.h.b16 %v4290
    %v5025 = vunpack.c.l.b16 %v4291
    %v5026 = vunpack.c.h.b16 %v4291
    %v5027 = vunpack.c.l.b16 %v4292
    %v5028 = vunpack.c.h.b16 %v4292
    %v5029 = vunpack.c.l.b16 %v4293
    %v5030 = vunpack.c.h.b16 %v4293
    %v5031 = vunpack.c.l.b16 %v4294
    %v5032 = vunpack.c.h.b16 %v4294
    %v5033 = vunpack.c.l.b16 %v4295
    %v5034 = vunpack.c.h.b16 %v4295
    %v5035 = vunpack.c.l.b16 %v4296
    %v5036 = vunpack.c.h.b16 %v4296
    %v5037 = vunpack.c.l.b16 %v4297
    %v5038 = vunpack.c.h.b16 %v4297
    %v5039 = vunpack.c.l.b16 %v4298
    %v5040 = vunpack.c.h.b16 %v4298
    %v5041 = vunpack.c.l.b16 %v4299
    %v5042 = vunpack.c.h.b16 %v4299
    %v5043 = vunpack.c.l.b16 %v4300
    %v5044 = vunpack.c.h.b16 %v4300
    %v5045 = vunpack.c.l.b16 %v4301
    %v5046 = vunpack.c.h.b16 %v4301
    %v5047 = vunpack.c.l.b16 %v4302
    %v5048 = vunpack.c.h.b16 %v4302
    %v5049 = vunpack.c.l.b16 %v4303
    %v5050 = vunpack.c.h.b16 %v4303
    %v5051 = vunpack.c.l.b16 %v4304
    %v5052 = vunpack.c.h.b16 %v4304
    %v5053 = vunpack.c.l.b16 %v4305
    %v5054 = vunpack.c.h.b16 %v4305
    %v5055 = vunpack.c.l.b16 %v4306
    %v5056 = vunpack.c.h.b16 %v4306
    %v5057 = vunpack.c.l.b16 %v4307
    %v5058 = vunpack.c.h.b16 %v4307
    %v5059 = vunpack.c.l.b16 %v4308
    %v5060 = vunpack.c.h.b16 %v4308
    %v5061 = vunpack.c.l.b16 %v4309
    %v5062 = vunpack.c.h.b16 %v4309
    %v5063 = vunpack.c.l.b16 %v4310
    %v5064 = vunpack.c.h.b16 %v4310
    %v5065 = vunpack.c.l.b16 %v4311
    %v5066 = vunpack.c.h.b16 %v4311
    %v5067 = vunpack.c.l.b16 %v4312
    %v5068 = vunpack.c.h.b16 %v4312
    %v5069 = vunpack.c.l.b16 %v4313
    %v5070 = vunpack.c.h.b16 %v4313
    %v5071 = vunpack.c.l.b16 %v4314
    %v5072 = vunpack.c.h.b16 %v4314
    %v5073 = vunpack.c.l.b16 %v4315
    %v5074 = vunpack.c.h.b16 %v4315
    %v5075 = vunpack.c.l.b16 %v4316
    %v5076 = vunpack.c.h.b16 %v4316
    %v5077 = vunpack.c.l.b16 %v4317
    %v5078 = vunpack.c.h.b16 %v4317
    %v5079 = vunpack.c.l.b16 %v4318
    %v5080 = vunpack.c.h.b16 %v4318
    %v5081 = vunpack.c.l.b16 %v4319
    %v5082 = vunpack.c.h.b16 %v4319
    %v5083 = vunpack.c.l.b16 %v4320
    %v5084 = vunpack.c.h.b16 %v4320
    %v5085 = vunpack.c.l.b16 %v4321
    %v5086 = vunpack.c.h.b16 %v4321
    %v5087 = vunpack.c.l.b16 %v4322
    %v5088 = vunpack.c.h.b16 %v4322
    %v5089 = vunpack.c.l.b16 %v4323
    %v5090 = vunpack.c.h.b16 %v4323
    %v5091 = vunpack.c.l.b16 %v4324
    %v5092 = vunpack.c.h.b16 %v4324
    %v5093 = vunpack.c.l.b16 %v4325
    %v5094 = vunpack.c.h.b16 %v4325
    %v5095 = vunpack.c.l.b16 %v4326
    %v5096 = vunpack.c.h.b16 %v4326
    %v5097 = vunpack.c.l.b16 %v4327
    %v5098 = vunpack.c.h.b16 %v4327
    %v5099 = vunpack.c.l.b16 %v4328
    %v5100 = vunpack.c.h.b16 %v4328
    %v5101 = vunpack.c.l.b16 %v4329
    %v5102 = vunpack.c.h.b16 %v4329
    %v5103 = vunpack.c.l.b16 %v4330
    %v5104 = vunpack.c.h.b16 %v4330
    %v5105 = vunpack.c.l.b16 %v4331
    %v5106 = vunpack.c.h.b16 %v4331
    %v5107 = vunpack.c.l.b16 %v4332
    %v5108 = vunpack.c.h.b16 %v4332
    %v5109 = vunpack.c.l.b16 %v4333
    %v5110 = vunpack.c.h.b16 %v4333
    %v5111 = vunpack.c.l.b16 %v4334
    %v5112 = vunpack.c.h.b16 %v4334
    %v5113 = vunpack.c.l.b16 %v4335
    %v5114 = vunpack.c.h.b16 %v4335
    %v5115 = vunpack.c.l.b16 %v4336
    %v5116 = vunpack.c.h.b16 %v4336
    %v5117 = vunpack.c.l.b16 %v4337
    %v5118 = vunpack.c.h.b16 %v4337
    %v5119 = vunpack.c.l.b16 %v4338
    %v5120 = vunpack.c.h.b16 %v4338
    %v5121 = vunpack.c.l.b16 %v4339
    %v5122 = vunpack.c.h.b16 %v4339
    %v5123 = vunpack.c.l.b16 %v4340
    %v5124 = vunpack.c.h.b16 %v4340
    %v5125 = vunpack.c.l.b16 %v4341
    %v5126 = vunpack.c.h.b16 %v4341
    %v5127 = vunpack.c.l.b16 %v4342
    %v5128 = vunpack.c.h.b16 %v4342
    %v5129 = vunpack.c.l.b16 %v4343
    %v5130 = vunpack.c.h.b16 %v4343
    %v5131 = vunpack.c.l.b16 %v4344
    %v5132 = vunpack.c.h.b16 %v4344
    %v5133 = vunpack.c.l.b16 %v4345
    %v5134 = vunpack.c.h.b16 %v4345
    %v5135 = vunpack.c.l.b16 %v4346
    %v5136 = vunpack.c.h.b16 %v4346
    %v5137 = vunpack.c.l.b16 %v4347
    %v5138 = vunpack.c.h.b16 %v4347
    %v5139 = vunpack.c.l.b16 %v4348
    %v5140 = vunpack.c.h.b16 %v4348
    %v5141 = vunpack.c.l.b16 %v4349
    %v5142 = vunpack.c.h.b16 %v4349
    %v5143 = vunpack.c.l.b16 %v4350
    %v5144 = vunpack.c.h.b16 %v4350
    %v5145 = vunpack.c.l.b16 %v4351
    %v5146 = vunpack.c.h.b16 %v4351
    %v5147 = vunpack.c.l.b16 %v4352
    %v5148 = vunpack.c.h.b16 %v4352
    %v5149 = vunpack.c.l.b16 %v4353
    %v5150 = vunpack.c.h.b16 %v4353
    %v5151 = vunpack.c.l.b16 %v4354
    %v5152 = vunpack.c.h.b16 %v4354
    %v5153 = vunpack.c.l.b16 %v4355
    %v5154 = vunpack.c.h.b16 %v4355
    %v5155 = vunpack.c.l.b16 %v4356
    %v5156 = vunpack.c.h.b16 %v4356
    %v5157 = vunpack.c.l.b16 %v4357
    %v5158 = vunpack.c.h.b16 %v4357
    %v5159 = vunpack.c.l.b16 %v4358
    %v5160 = vunpack.c.h.b16 %v4358
    %v5161 = vunpack.c.l.b16 %v4359
    %v5162 = vunpack.c.h.b16 %v4359
    %v5163 = vunpack.c.l.b16 %v4360
    %v5164 = vunpack.c.h.b16 %v4360
    %v5165 = vunpack.c.l.b16 %v4361
    %v5166 = vunpack.c.h.b16 %v4361
    %v5167 = vunpack.c.l.b16 %v4362
    %v5168 = vunpack.c.h.b16 %v4362
    %v5169 = vunpack.c.l.b16 %v4363
    %v5170 = vunpack.c.h.b16 %v4363
    %v5171 = vunpack.c.l.b16 %v4364
    %v5172 = vunpack.c.h.b16 %v4364
    %v5173 = vunpack.c.l.b16 %v4365
    %v5174 = vunpack.c.h.b16 %v4365
    %v5175 = vunpack.c.l.b16 %v4366
    %v5176 = vunpack.c.h.b16 %v4366
    %v5177 = vunpack.c.l.b16 %v4367
    %v5178 = vunpack.c.h.b16 %v4367
    %v5179 = vunpack.c.l.b16 %v4368
    %v5180 = vunpack.c.h.b16 %v4368
    %v5181 = vunpack.c.l.b16 %v4369
    %v5182 = vunpack.c.h.b16 %v4369
    %v5183 = vunpack.c.l.b16 %v4370
    %v5184 = vunpack.c.h.b16 %v4370
    %v5185 = vunpack.c.l.b16 %v4371
    %v5186 = vunpack.c.h.b16 %v4371
    %v5187 = vunpack.c.l.b16 %v4372
    %v5188 = vunpack.c.h.b16 %v4372
    %v5189 = vunpack.c.l.b16 %v4373
    %v5190 = vunpack.c.h.b16 %v4373
    %v5191 = vunpack.c.l.b16 %v4374
    %v5192 = vunpack.c.h.b16 %v4374
    %v5193 = vunpack.c.l.b16 %v4375
    %v5194 = vunpack.c.h.b16 %v4375
    %v5195 = vunpack.c.l.b16 %v4376
    %v5196 = vunpack.c.h.b16 %v4376
    %v5197 = vunpack.c.l.b16 %v4377
    %v5198 = vunpack.c.h.b16 %v4377
    %v5199 = vunpack.c.l.b16 %v4378
    %v5200 = vunpack.c.h.b16 %v4378
    %v5201 = vunpack.c.l.b16 %v4379
    %v5202 = vunpack.c.h.b16 %v4379
    %v5203 = vunpack.c.l.b16 %v4380
    %v5204 = vunpack.c.h.b16 %v4380
    %v5205 = vunpack.c.l.b16 %v4381
    %v5206 = vunpack.c.h.b16 %v4381
    %v5207 = vunpack.c.l.b16 %v4382
    %v5208 = vunpack.c.h.b16 %v4382
    %v5209 = vunpack.c.l.b16 %v4383
    %v5210 = vunpack.c.h.b16 %v4383
    %v5211 = vunpack.c.l.b16 %v4384
    %v5212 = vunpack.c.h.b16 %v4384
    %v5213 = vunpack.c.l.b16 %v4385
    %v5214 = vunpack.c.h.b16 %v4385
    %v5215 = vunpack.c.l.b16 %v4386
    %v5216 = vunpack.c.h.b16 %v4386
    %v5217 = vunpack.c.l.b16 %v4387
    %v5218 = vunpack.c.h.b16 %v4387
    %v5219 = vunpack.c.l.b16 %v4388
    %v5220 = vunpack.c.h.b16 %v4388
    %v5221 = vunpack.c.l.b16 %v4389
    %v5222 = vunpack.c.h.b16 %v4389
    %v5223 = vunpack.c.l.b16 %v4390
    %v5224 = vunpack.c.h.b16 %v4390
    %v5225 = vunpack.c.l.b16 %v4391
    %v5226 = vunpack.c.h.b16 %v4391
    %v5227 = vunpack.c.l.b16 %v4392
    %v5228 = vunpack.c.h.b16 %v4392
    %v5229 = vunpack.c.l.b16 %v4393
    %v5230 = vunpack.c.h.b16 %v4393
    %v5231 = vunpack.c.l.b16 %v4394
    %v5232 = vunpack.c.h.b16 %v4394
    %v5233 = vunpack.c.l.b16 %v4395
    %v5234 = vunpack.c.h.b16 %v4395
    %v5235 = vunpack.c.l.b16 %v4396
    %v5236 = vunpack.c.h.b16 %v4396
    %v5237 = vunpack.c.l.b16 %v4397
    %v5238 = vunpack.c.h.b16 %v4397
    %v5239 = vunpack.c.l.b16 %v4398
    %v5240 = vunpack.c.h.b16 %v4398
    %v5241 = vunpack.c.l.b16 %v4399
    %v5242 = vunpack.c.h.b16 %v4399
    %v5243 = vunpack.c.l.b16 %v4400
    %v5244 = vunpack.c.h.b16 %v4400
    %v5245 = vunpack.c.l.b16 %v4401
    %v5246 = vunpack.c.h.b16 %v4401
    %v5247 = vunpack.c.l.b16 %v4402
    %v5248 = vunpack.c.h.b16 %v4402
    %v5249 = vunpack.c.l.b16 %v4403
    %v5250 = vunpack.c.h.b16 %v4403
    %v5251 = vunpack.c.l.b16 %v4404
    %v5252 = vunpack.c.h.b16 %v4404
    %v5253 = vunpack.c.l.b16 %v4405
    %v5254 = vunpack.c.h.b16 %v4405
    %v5255 = vunpack.c.l.b16 %v4406
    %v5256 = vunpack.c.h.b16 %v4406
    %v5257 = vunpack.c.l.b16 %v4407
    %v5258 = vunpack.c.h.b16 %v4407
    %v5259 = vunpack.c.l.b16 %v4408
    %v5260 = vunpack.c.h.b16 %v4408
    %v5261 = vunpack.c.l.b16 %v4409
    %v5262 = vunpack.c.h.b16 %v4409
    %v5263 = vunpack.c.l.b16 %v4410
    %v5264 = vunpack.c.h.b16 %v4410
    %v5265 = vunpack.c.l.b16 %v4411
    %v5266 = vunpack.c.h.b16 %v4411
    %v5267 = vunpack.c.l.b16 %v4412
    %v5268 = vunpack.c.h.b16 %v4412
    %v5269 = vunpack.c.l.b16 %v4413
    %v5270 = vunpack.c.h.b16 %v4413
    %v5271 = vunpack.c.l.b16 %v4414
    %v5272 = vunpack.c.h.b16 %v4414
    %v5273 = vunpack.c.l.b16 %v4415
    %v5274 = vunpack.c.h.b16 %v4415
    %v5275 = vunpack.c.l.b16 %v4416
    %v5276 = vunpack.c.h.b16 %v4416
    %v5277 = vunpack.c.l.b16 %v4417
    %v5278 = vunpack.c.h.b16 %v4417
    %v5279 = vunpack.c.l.b16 %v4418
    %v5280 = vunpack.c.h.b16 %v4418
    %v5281 = vunpack.c.l.b16 %v4419
    %v5282 = vunpack.c.h.b16 %v4419
    %v5283 = vunpack.c.l.b16 %v4420
    %v5284 = vunpack.c.h.b16 %v4420
    %v5285 = vunpack.c.l.b16 %v4421
    %v5286 = vunpack.c.h.b16 %v4421
    %v5287 = vunpack.c.l.b16 %v4422
    %v5288 = vunpack.c.h.b16 %v4422
    %v5289 = vunpack.c.l.b16 %v4423
    %v5290 = vunpack.c.h.b16 %v4423
    %v5291 = vunpack.c.l.b16 %v4424
    %v5292 = vunpack.c.h.b16 %v4424
    %v5293 = vunpack.c.l.b16 %v4425
    %v5294 = vunpack.c.h.b16 %v4425
    %v5295 = vunpack.c.l.b16 %v4426
    %v5296 = vunpack.c.h.b16 %v4426
    %v5297 = vunpack.c.l.b16 %v4427
    %v5298 = vunpack.c.h.b16 %v4427
    %v5299 = vunpack.c.l.b16 %v4428
    %v5300 = vunpack.c.h.b16 %v4428
    %v5301 = vunpack.c.l.b16 %v4429
    %v5302 = vunpack.c.h.b16 %v4429
    %v5303 = vunpack.c.l.b16 %v4430
    %v5304 = vunpack.c.h.b16 %v4430
    %v5305 = vunpack.c.l.b16 %v4431
    %v5306 = vunpack.c.h.b16 %v4431
    %v5307 = vunpack.c.l.b16 %v4432
    %v5308 = vunpack.c.h.b16 %v4432
    %v5309 = vunpack.c.l.b16 %v4433
    %v5310 = vunpack.c.h.b16 %v4433
    %v5311 = vunpack.c.l.b16 %v4434
    %v5312 = vunpack.c.h.b16 %v4434
    %v5313 = vunpack.c.l.b16 %v4435
    %v5314 = vunpack.c.h.b16 %v4435
    %v5315 = vunpack.c.l.b16 %v4436
    %v5316 = vunpack.c.h.b16 %v4436
    %v5317 = vunpack.c.l.b16 %v4437
    %v5318 = vunpack.c.h.b16 %v4437
    %v5319 = vunpack.c.l.b16 %v4438
    %v5320 = vunpack.c.h.b16 %v4438
    %v5321 = vunpack.c.l.b16 %v4439
    %v5322 = vunpack.c.h.b16 %v4439
    %v5323 = vunpack.c.l.b16 %v4440
    %v5324 = vunpack.c.h.b16 %v4440
    %v5325 = vunpack.c.l.b16 %v4441
    %v5326 = vunpack.c.h.b16 %v4441
    %v5327 = vunpack.c.l.b16 %v4442
    %v5328 = vunpack.c.h.b16 %v4442
    %v5329 = vunpack.c.l.b16 %v4443
    %v5330 = vunpack.c.h.b16 %v4443
    %v5331 = vunpack.c.l.b16 %v4444
    %v5332 = vunpack.c.h.b16 %v4444
    %v5333 = vunpack.c.l.b16 %v4445
    %v5334 = vunpack.c.h.b16 %v4445
    %v5335 = vunpack.c.l.b16 %v4446
    %v5336 = vunpack.c.h.b16 %v4446
    %v5337 = vunpack.c.l.b16 %v4447
    %v5338 = vunpack.c.h.b16 %v4447
    %v5339 = vunpack.c.l.b16 %v4448
    %v5340 = vunpack.c.h.b16 %v4448
    %v5341 = vunpack.c.l.b16 %v4449
    %v5342 = vunpack.c.h.b16 %v4449
    %v5343 = vunpack.c.l.b16 %v4450
    %v5344 = vunpack.c.h.b16 %v4450
    %v5345 = vunpack.c.l.b16 %v4451
    %v5346 = vunpack.c.h.b16 %v4451
    %v5347 = vunpack.c.l.b16 %v4452
    %v5348 = vunpack.c.h.b16 %v4452
    %v5349 = vpack.c.b16 %v4779, %v4773
    %v5350 = vpack.c.b16 %v4780, %v4774
    %v5351 = vpack.c.b16 %v4781, %v4775
    %v5352 = vpack.c.b16 %v4782, %v4776
    %v5353 = vpack.c.b16 %v4783, %v4777
    %v5354 = vpack.c.b16 %v4784, %v4778
    %v5355 = vpack.c.b16 %v4791, %v4785
    %v5356 = vpack.c.b16 %v4792, %v4786
    %v5357 = vpack.c.b16 %v4793, %v4787
    %v5358 = vpack.c.b16 %v4794, %v4788
    %v5359 = vpack.c.b16 %v4795, %v4789
    %v5360 = vpack.c.b16 %v4796, %v4790
    %v5361 = vpack.c.b16 %v4803, %v4797
    %v5362 = vpack.c.b16 %v4804, %v4798
    %v5363 = vpack.c.b16 %v4805, %v4799
    %v5364 = vpack.c.b16 %v4806, %v4800
    %v5365 = vpack.c.b16 %v4807, %v4801
    %v5366 = vpack.c.b16 %v4808, %v4802
    %v5367 = vpack.c.b16 %v4815, %v4809
    %v5368 = vpack.c.b16 %v4816, %v4810
    %v5369 = vpack.c.b16 %v4817, %v4811
    %v5370 = vpack.c.b16 %v4818, %v4812
    %v5371 = vpack.c.b16 %v4819, %v4813
    %v5372 = vpack.c.b16 %v4820, %v4814
    %v5373 = vpack.c.b16 %v4827, %v4821
    %v5374 = vpack.c.b16 %v4828, %v4822
    %v5375 = vpack.c.b16 %v4829, %v4823
    %v5376 = vpack.c.b16 %v4830, %v4824
    %v5377 = vpack.c.b16 %v4831, %v4825
    %v5378 = vpack.c.b16 %v4832, %v4826
    %v5379 = vpack.c.b16 %v4839, %v4833
    %v5380 = vpack.c.b16 %v4840, %v4834
    %v5381 = vpack.c.b16 %v4841, %v4835
    %v5382 = vpack.c.b16 %v4842, %v4836
    %v5383 = vpack.c.b16 %v4843, %v4837
    %v5384 = vpack.c.b16 %v4844, %v4838
    %v5385 = vpack.c.b16 %v4851, %v4845
    %v5386 = vpack.c.b16 %v4852, %v4846
    %v5387 = vpack.c.b16 %v4853, %v4847
    %v5388 = vpack.c.b16 %v4854, %v4848
    %v5389 = vpack.c.b16 %v4855, %v4849
    %v5390 = vpack.c.b16 %v4856, %v4850
    %v5391 = vpack.c.b16 %v4863, %v4857
    %v5392 = vpack.c.b16 %v4864, %v4858
    %v5393 = vpack.c.b16 %v4865, %v4859
    %v5394 = vpack.c.b16 %v4866, %v4860
    %v5395 = vpack.c.b16 %v4867, %v4861
    %v5396 = vpack.c.b16 %v4868, %v4862
    %v5397 = vpack.c.b16 %v4875, %v4869
    %v5398 = vpack.c.b16 %v4876, %v4870
    %v5399 = vpack.c.b16 %v4877, %v4871
    %v5400 = vpack.c.b16 %v4878, %v4872
    %v5401 = vpack.c.b16 %v4879, %v4873
    %v5402 = vpack.c.b16 %v4880, %v4874
    %v5403 = vpack.c.b16 %v4887, %v4881
    %v5404 = vpack.c.b16 %v4888, %v4882
    %v5405 = vpack.c.b16 %v4889, %v4883
    %v5406 = vpack.c.b16 %v4890, %v4884
    %v5407 = vpack.c.b16 %v4891, %v4885
    %v5408 = vpack.c.b16 %v4892, %v4886
    %v5409 = vpack.c.b16 %v4899, %v4893
    %v5410 = vpack.c.b16 %v4900, %v4894
    %v5411 = vpack.c.b16 %v4901, %v4895
    %v5412 = vpack.c.b16 %v4902, %v4896
    %v5413 = vpack.c.b16 %v4903, %v4897
    %v5414 = vpack.c.b16 %v4904, %v4898
    %v5415 = vpack.c.b16 %v4911, %v4905
    %v5416 = vpack.c.b16 %v4912, %v4906
    %v5417 = vpack.c.b16 %v4913, %v4907
    %v5418 = vpack.c.b16 %v4914, %v4908
    %v5419 = vpack.c.b16 %v4915, %v4909
    %v5420 = vpack.c.b16 %v4916, %v4910
    %v5421 = vpack.c.b16 %v4923, %v4917
    %v5422 = vpack.c.b16 %v4924, %v4918
    %v5423 = vpack.c.b16 %v4925, %v4919
    %v5424 = vpack.c.b16 %v4926, %v4920
    %v5425 = vpack.c.b16 %v4927, %v4921
    %v5426 = vpack.c.b16 %v4928, %v4922
    %v5427 = vpack.c.b16 %v4935, %v4929
    %v5428 = vpack.c.b16 %v4936, %v4930
    %v5429 = vpack.c.b16 %v4937, %v4931
    %v5430 = vpack.c.b16 %v4938, %v4932
    %v5431 = vpack.c.b16 %v4939, %v4933
    %v5432 = vpack.c.b16 %v4940, %v4934
    %v5433 = vpack.c.b16 %v4947, %v4941
    %v5434 = vpack.c.b16 %v4948, %v4942
    %v5435 = vpack.c.b16 %v4949, %v4943
    %v5436 = vpack.c.b16 %v4950, %v4944
    %v5437 = vpack.c.b16 %v4951, %v4945
    %v5438 = vpack.c.b16 %v4952, %v4946
    %v5439 = vpack.c.b16 %v4959, %v4953
    %v5440 = vpack.c.b16 %v4960, %v4954
    %v5441 = vpack.c.b16 %v4961, %v4955
    %v5442 = vpack.c.b16 %v4962, %v4956
    %v5443 = vpack.c.b16 %v4963, %v4957
    %v5444 = vpack.c.b16 %v4964, %v4958
    %v5445 = vpack.c.b16 %v4971, %v4965
    %v5446 = vpack.c.b16 %v4972, %v4966
    %v5447 = vpack.c.b16 %v4973, %v4967
    %v5448 = vpack.c.b16 %v4974, %v4968
    %v5449 = vpack.c.b16 %v4975, %v4969
    %v5450 = vpack.c.b16 %v4976, %v4970
    %v5451 = vpack.c.b16 %v4983, %v4977
    %v5452 = vpack.c.b16 %v4984, %v4978
    %v5453 = vpack.c.b16 %v4985, %v4979
    %v5454 = vpack.c.b16 %v4986, %v4980
    %v5455 = vpack.c.b16 %v4987, %v4981
    %v5456 = vpack.c.b16 %v4988, %v4982
    %v5457 = vpack.c.b16 %v4995, %v4989
    %v5458 = vpack.c.b16 %v4996, %v4990
    %v5459 = vpack.c.b16 %v4997, %v4991
    %v5460 = vpack.c.b16 %v4998, %v4992
    %v5461 = vpack.c.b16 %v4999, %v4993
    %v5462 = vpack.c.b16 %v5000, %v4994
    %v5463 = vpack.c.b16 %v5007, %v5001
    %v5464 = vpack.c.b16 %v5008, %v5002
    %v5465 = vpack.c.b16 %v5009, %v5003
    %v5466 = vpack.c.b16 %v5010, %v5004
    %v5467 = vpack.c.b16 %v5011, %v5005
    %v5468 = vpack.c.b16 %v5012, %v5006
    %v5469 = vpack.c.b16 %v5019, %v5013
    %v5470 = vpack.c.b16 %v5020, %v5014
    %v5471 = vpack.c.b16 %v5021, %v5015
    %v5472 = vpack.c.b16 %v5022, %v5016
    %v5473 = vpack.c.b16 %v5023, %v5017
    %v5474 = vpack.c.b16 %v5024, %v5018
    %v5475 = vpack.c.b16 %v5031, %v5025
    %v5476 = vpack.c.b16 %v5032, %v5026
    %v5477 = vpack.c.b16 %v5033, %v5027
    %v5478 = vpack.c.b16 %v5034, %v5028
    %v5479 = vpack.c.b16 %v5035, %v5029
    %v5480 = vpack.c.b16 %v5036, %v5030
    %v5481 = vpack.c.b16 %v5043, %v5037
    %v5482 = vpack.c.b16 %v5044, %v5038
    %v5483 = vpack.c.b16 %v5045, %v5039
    %v5484 = vpack.c.b16 %v5046, %v5040
    %v5485 = vpack.c.b16 %v5047, %v5041
    %v5486 = vpack.c.b16 %v5048, %v5042
    %v5487 = vpack.c.b16 %v5055, %v5049
    %v5488 = vpack.c.b16 %v5056, %v5050
    %v5489 = vpack.c.b16 %v5057, %v5051
    %v5490 = vpack.c.b16 %v5058, %v5052
    %v5491 = vpack.c.b16 %v5059, %v5053
    %v5492 = vpack.c.b16 %v5060, %v5054
    %v5493 = vpack.c.b16 %v5067, %v5061
    %v5494 = vpack.c.b16 %v5068, %v5062
    %v5495 = vpack.c.b16 %v5069, %v5063
    %v5496 = vpack.c.b16 %v5070, %v5064
    %v5497 = vpack.c.b16 %v5071, %v5065
    %v5498 = vpack.c.b16 %v5072, %v5066
    %v5499 = vpack.c.b16 %v5079, %v5073
    %v5500 = vpack.c.b16 %v5080, %v5074
    %v5501 = vpack.c.b16 %v5081, %v5075
    %v5502 = vpack.c.b16 %v5082, %v5076
    %v5503 = vpack.c.b16 %v5083, %v5077
    %v5504 = vpack.c.b16 %v5084, %v5078
    %v5505 = vpack.c.b16 %v5091, %v5085
    %v5506 = vpack.c.b16 %v5092, %v5086
    %v5507 = vpack.c.b16 %v5093, %v5087
    %v5508 = vpack.c.b16 %v5094, %v5088
    %v5509 = vpack.c.b16 %v5095, %v5089
    %v5510 = vpack.c.b16 %v5096, %v5090
    %v5511 = vpack.c.b16 %v5103, %v5097
    %v5512 = vpack.c.b16 %v5104, %v5098
    %v5513 = vpack.c.b16 %v5105, %v5099
    %v5514 = vpack.c.b16 %v5106, %v5100
    %v5515 = vpack.c.b16 %v5107, %v5101
    %v5516 = vpack.c.b16 %v5108, %v5102
    %v5517 = vpack.c.b16 %v5115, %v5109
    %v5518 = vpack.c.b16 %v5116, %v5110
    %v5519 = vpack.c.b16 %v5117, %v5111
    %v5520 = vpack.c.b16 %v5118, %v5112
    %v5521 = vpack.c.b16 %v5119, %v5113
    %v5522 = vpack.c.b16 %v5120, %v5114
    %v5523 = vpack.c.b16 %v5127, %v5121
    %v5524 = vpack.c.b16 %v5128, %v5122
    %v5525 = vpack.c.b16 %v5129, %v5123
    %v5526 = vpack.c.b16 %v5130, %v5124
    %v5527 = vpack.c.b16 %v5131, %v5125
    %v5528 = vpack.c.b16 %v5132, %v5126
    %v5529 = vpack.c.b16 %v5139, %v5133
    %v5530 = vpack.c.b16 %v5140, %v5134
    %v5531 = vpack.c.b16 %v5141, %v5135
    %v5532 = vpack.c.b16 %v5142, %v5136
    %v5533 = vpack.c.b16 %v5143, %v5137
    %v5534 = vpack.c.b16 %v5144, %v5138
    %v5535 = vpack.c.b16 %v5151, %v5145
    %v5536 = vpack.c.b16 %v5152, %v5146
    %v5537 = vpack.c.b16 %v5153, %v5147
    %v5538 = vpack.c.b16 %v5154, %v5148
    %v5539 = vpack.c.b16 %v5155, %v5149
    %v5540 = vpack.c.b16 %v5156, %v5150
    %v5541 = vpack.c.b16 %v5163, %v5157
    %v5542 = vpack.c.b16 %v5164, %v5158
    %v5543 = vpack.c.b16 %v5165, %v5159
    %v5544 = vpack.c.b16 %v5166, %v5160
    %v5545 = vpack.c.b16 %v5167, %v5161
    %v5546 = vpack.c.b16 %v5168, %v5162
    %v5547 = vpack.c.b16 %v5175, %v5169
    %v5548 = vpack.c.b16 %v5176, %v5170
    %v5549 = vpack.c.b16 %v5177, %v5171
    %v5550 = vpack.c.b16 %v5178, %v5172
    %v5551 = vpack.c.b16 %v5179, %v5173
    %v5552 = vpack.c.b16 %v5180, %v5174
    %v5553 = vpack.c.b16 %v5187, %v5181
    %v5554 = vpack.c.b16 %v5188, %v5182
    %v5555 = vpack.c.b16 %v5189, %v5183
    %v5556 = vpack.c.b16 %v5190, %v5184
    %v5557 = vpack.c.b16 %v5191, %v5185
    %v5558 = vpack.c.b16 %v5192, %v5186
    %v5559 = vpack.c.b16 %v5199, %v5193
    %v5560 = vpack.c.b16 %v5200, %v5194
    %v5561 = vpack.c.b16 %v5201, %v5195
    %v5562 = vpack.c.b16 %v5202, %v5196
    %v5563 = vpack.c.b16 %v5203, %v5197
    %v5564 = vpack.c.b16 %v5204, %v5198
    %v5565 = vpack.c.b16 %v5211, %v5205
    %v5566 = vpack.c.b16 %v5212, %v5206
    %v5567 = vpack.c.b16 %v5213, %v5207
    %v5568 = vpack.c.b16 %v5214, %v5208
    %v5569 = vpack.c.b16 %v5215, %v5209
    %v5570 = vpack.c.b16 %v5216, %v5210
    %v5571 = vpack.c.b16 %v5223, %v5217
    %v5572 = vpack.c.b16 %v5224, %v5218
    %v5573 = vpack.c.b16 %v5225, %v5219
    %v5574 = vpack.c.b16 %v5226, %v5220
    %v5575 = vpack.c.b16 %v5227, %v5221
    %v5576 = vpack.c.b16 %v5228, %v5222
    %v5577 = vpack.c.b16 %v5235, %v5229
    %v5578 = vpack.c.b16 %v5236, %v5230
    %v5579 = vpack.c.b16 %v5237, %v5231
    %v5580 = vpack.c.b16 %v5238, %v5232
    %v5581 = vpack.c.b16 %v5239, %v5233
    %v5582 = vpack.c.b16 %v5240, %v5234
    %v5583 = vpack.c.b16 %v5247, %v5241
    %v5584 = vpack.c.b16 %v5248, %v5242
    %v5585 = vpack.c.b16 %v5249, %v5243
    %v5586 = vpack.c.b16 %v5250, %v5244
    %v5587 = vpack.c.b16 %v5251, %v5245
    %v5588 = vpack.c.b16 %v5252, %v5246
    %v5589 = vpack.c.b16 %v5259, %v5253
    %v5590 = vpack.c.b16 %v5260, %v5254
    %v5591 = vpack.c.b16 %v5261, %v5255
    %v5592 = vpack.c.b16 %v5262, %v5256
    %v5593 = vpack.c.b16 %v5263, %v5257
    %v5594 = vpack.c.b16 %v5264, %v5258
    %v5595 = vpack.c.b16 %v5271, %v5265
    %v5596 = vpack.c.b16 %v5272, %v5266
    %v5597 = vpack.c.b16 %v5273, %v5267
    %v5598 = vpack.c.b16 %v5274, %v5268
    %v5599 = vpack.c.b16 %v5275, %v5269
    %v5600 = vpack.c.b16 %v5276, %v5270
    %v5601 = vpack.c.b16 %v5283, %v5277
    %v5602 = vpack.c.b16 %v5284, %v5278
    %v5603 = vpack.c.b16 %v5285, %v5279
    %v5604 = vpack.c.b16 %v5286, %v5280
    %v5605 = vpack.c.b16 %v5287, %v5281
    %v5606 = vpack.c.b16 %v5288, %v5282
    %v5607 = vpack.c.b16 %v5295, %v5289
    %v5608 = vpack.c.b16 %v5296, %v5290
    %v5609 = vpack.c.b16 %v5297, %v5291
    %v5610 = vpack.c.b16 %v5298, %v5292
    %v5611 = vpack.c.b16 %v5299, %v5293
    %v5612 = vpack.c.b16 %v5300, %v5294
    %v5613 = vpack.c.b16 %v5307, %v5301
    %v5614 = vpack.c.b16 %v5308, %v5302
    %v5615 = vpack.c.b16 %v5309, %v5303
    %v5616 = vpack.c.b16 %v5310, %v5304
    %v5617 = vpack.c.b16 %v5311, %v5305
    %v5618 = vpack.c.b16 %v5312, %v5306
    %v5619 = vpack.c.b16 %v5319, %v5313
    %v5620 = vpack.c.b16 %v5320, %v5314
    %v5621 = vpack.c.b16 %v5321, %v5315
    %v5622 = vpack.c.b16 %v5322, %v5316
    %v5623 = vpack.c.b16 %v5323, %v5317
    %v5624 = vpack.c.b16 %v5324, %v5318
    %v5625 = vpack.c.b16 %v5331, %v5325
    %v5626 = vpack.c.b16 %v5332, %v5326
    %v5627 = vpack.c.b16 %v5333, %v5327
    %v5628 = vpack.c.b16 %v5334, %v5328
    %v5629 = vpack.c.b16 %v5335, %v5329
    %v5630 = vpack.c.b16 %v5336, %v5330
    %v5631 = vpack.c.b16 %v5343, %v5337
    %v5632 = vpack.c.b16 %v5344, %v5338
    %v5633 = vpack.c.b16 %v5345, %v5339
    %v5634 = vpack.c.b16 %v5346, %v5340
    %v5635 = vpack.c.b16 %v5347, %v5341
    %v5636 = vpack.c.b16 %v5348, %v5342
    %5925 = vmatprep.subr.bf16.mxu0 %v5350
    %5926 = vmatpush1.bf16.msra.mxu0 %v5349
    %5927 = vmatprep.subr.bf16.mxu0 %v5356
    %5928 = vmatpush1.bf16.msra.mxu0 %v5355
    %5929 = vmatprep.subr.bf16.mxu0 %v5362
    %5930 = vmatpush1.bf16.msra.mxu0 %v5361
    %5931 = vmatprep.subr.bf16.mxu0 %v5368
    %5932 = vmatpush1.bf16.msra.mxu0 %v5367
    %5933 = vmatprep.subr.bf16.mxu0 %v5374
    %5934 = vmatpush1.bf16.msra.mxu0 %v5373
    %5935 = vmatprep.subr.bf16.mxu0 %v5380
    %5936 = vmatpush1.bf16.msra.mxu0 %v5379
    %5937 = vmatprep.subr.bf16.mxu0 %v5386
    %5938 = vmatpush1.bf16.msra.mxu0 %v5385
    %5939 = vmatprep.subr.bf16.mxu0 %v5392
    %5940 = vmatpush1.bf16.msra.mxu0 %v5391
    %5941 = vmatprep.subr.bf16.mxu0 %v5398
    %5942 = vmatpush1.bf16.msra.mxu0 %v5397
    %5943 = vmatprep.subr.bf16.mxu0 %v5404
    %5944 = vmatpush1.bf16.msra.mxu0 %v5403
    %5945 = vmatprep.subr.bf16.mxu0 %v5410
    %5946 = vmatpush1.bf16.msra.mxu0 %v5409
    %5947 = vmatprep.subr.bf16.mxu0 %v5416
    %5948 = vmatpush1.bf16.msra.mxu0 %v5415
    %5949 = vmatprep.subr.bf16.mxu0 %v5422
    %5950 = vmatpush1.bf16.msra.mxu0 %v5421
    %5951 = vmatprep.subr.bf16.mxu0 %v5428
    %5952 = vmatpush1.bf16.msra.mxu0 %v5427
    %5953 = vmatprep.subr.bf16.mxu0 %v5434
    %5954 = vmatpush1.bf16.msra.mxu0 %v5433
    %5955 = vmatprep.subr.bf16.mxu0 %v5440
    %5956 = vmatpush1.bf16.msra.mxu0 %v5439
    %5957 = vmatprep.mubr.bf16.mxu0 %v4160
    %5958 = vmatmul.mubr.bf16.gmra.mrb[0].mxu0 %v4159
    %v5959 = vpop.f32.mrb[0].mxu0
    %v5960 = vadd.f32 %v4458, %v5959
    %v5961 = vpop.f32.mrb[0].mxu0
    %v5962 = vadd.f32 %v4462, %v5961
    %v5963 = vpop.f32.mrb[0].mxu0
    %v5964 = vpop.f32.mrb[0].mxu0
    %5965 = vdwg.mxu0
    %5966 = vmatprep.subr.bf16.mxu0 %v5446
    %5967 = vmatpush1.bf16.msra.mxu0 %v5445
    %5968 = vmatprep.subr.bf16.mxu0 %v5452
    %5969 = vmatpush1.bf16.msra.mxu0 %v5451
    %5970 = vmatprep.subr.bf16.mxu0 %v5458
    %5971 = vmatpush1.bf16.msra.mxu0 %v5457
    %5972 = vmatprep.subr.bf16.mxu0 %v5464
    %5973 = vmatpush1.bf16.msra.mxu0 %v5463
    %5974 = vmatprep.subr.bf16.mxu0 %v5470
    %5975 = vmatpush1.bf16.msra.mxu0 %v5469
    %5976 = vmatprep.subr.bf16.mxu0 %v5476
    %5977 = vmatpush1.bf16.msra.mxu0 %v5475
    %5978 = vmatprep.subr.bf16.mxu0 %v5482
    %5979 = vmatpush1.bf16.msra.mxu0 %v5481
    %5980 = vmatprep.subr.bf16.mxu0 %v5488
    %5981 = vmatpush1.bf16.msra.mxu0 %v5487
    %5982 = vmatprep.subr.bf16.mxu0 %v5494
    %5983 = vmatpush1.bf16.msra.mxu0 %v5493
    %5984 = vmatprep.subr.bf16.mxu0 %v5500
    %5985 = vmatpush1.bf16.msra.mxu0 %v5499
    %5986 = vmatprep.subr.bf16.mxu0 %v5506
    %5987 = vmatpush1.bf16.msra.mxu0 %v5505
    %5988 = vmatprep.subr.bf16.mxu0 %v5512
    %5989 = vmatpush1.bf16.msra.mxu0 %v5511
    %5990 = vmatprep.subr.bf16.mxu0 %v5518
    %5991 = vmatpush1.bf16.msra.mxu0 %v5517
    %5992 = vmatprep.subr.bf16.mxu0 %v5524
    %5993 = vmatpush1.bf16.msra.mxu0 %v5523
    %5994 = vmatprep.subr.bf16.mxu0 %v5530
    %5995 = vmatpush1.bf16.msra.mxu0 %v5529
    %5996 = vmatprep.subr.bf16.mxu0 %v5536
    %5997 = vmatpush1.bf16.msra.mxu0 %v5535
    %5998 = vmatprep.mubr.bf16.mxu0 %v4162
    %5999 = vmatmul.mubr.bf16.gmra.mrb[0].mxu0 %v4161
    %v6000 = vpop.f32.mrb[0].mxu0
    %v6001 = vadd.f32 %v5960, %v6000
    %v6002 = vpop.f32.mrb[0].mxu0
    %v6003 = vadd.f32 %v5962, %v6002
    %v6004 = vpop.f32.mrb[0].mxu0
    %v6005 = vpop.f32.mrb[0].mxu0
    %6006 = vdwg.mxu0
    %6007 = vmatprep.subr.bf16.mxu0 %v5542
    %6008 = vmatpush1.bf16.msra.mxu0 %v5541
    %6009 = vmatprep.subr.bf16.mxu0 %v5548
    %6010 = vmatpush1.bf16.msra.mxu0 %v5547
    %6011 = vmatprep.subr.bf16.mxu0 %v5554
    %6012 = vmatpush1.bf16.msra.mxu0 %v5553
    %6013 = vmatprep.subr.bf16.mxu0 %v5560
    %6014 = vmatpush1.bf16.msra.mxu0 %v5559
    %6015 = vmatprep.subr.bf16.mxu0 %v5566
    %6016 = vmatpush1.bf16.msra.mxu0 %v5565
    %6017 = vmatprep.subr.bf16.mxu0 %v5572
    %6018 = vmatpush1.bf16.msra.mxu0 %v5571
    %6019 = vmatprep.subr.bf16.mxu0 %v5578
    %6020 = vmatpush1.bf16.msra.mxu0 %v5577
    %6021 = vmatprep.subr.bf16.mxu0 %v5584
    %6022 = vmatpush1.bf16.msra.mxu0 %v5583
    %6023 = vmatprep.subr.bf16.mxu0 %v5590
    %6024 = vmatpush1.bf16.msra.mxu0 %v5589
    %6025 = vmatprep.subr.bf16.mxu0 %v5596
    %6026 = vmatpush1.bf16.msra.mxu0 %v5595
    %6027 = vmatprep.subr.bf16.mxu0 %v5602
    %6028 = vmatpush1.bf16.msra.mxu0 %v5601
    %6029 = vmatprep.subr.bf16.mxu0 %v5608
    %6030 = vmatpush1.bf16.msra.mxu0 %v5607
    %6031 = vmatprep.subr.bf16.mxu0 %v5614
    %6032 = vmatpush1.bf16.msra.mxu0 %v5613
    %6033 = vmatprep.subr.bf16.mxu0 %v5620
    %6034 = vmatpush1.bf16.msra.mxu0 %v5619
    %6035 = vmatprep.subr.bf16.mxu0 %v5626
    %6036 = vmatpush1.bf16.msra.mxu0 %v5625
    %6037 = vmatprep.subr.bf16.mxu0 %v5632
    %6038 = vmatpush1.bf16.msra.mxu0 %v5631
    %6039 = vmatprep.mubr.bf16.mxu0 %v4164
    %6040 = vmatmul.mubr.bf16.gmra.mrb[0].mxu0 %v4163
    %v6041 = vpop.f32.mrb[0].mxu0
    %v6042 = vadd.f32 %v6001, %v6041
    %v6043 = vpop.f32.mrb[0].mxu0
    %v6044 = vadd.f32 %v6003, %v6043
    %v6045 = vpop.f32.mrb[0].mxu0
    %v6046 = vpop.f32.mrb[0].mxu0
    %6047 = vdwg.mxu0
    %6048 = vmatprep.subr.bf16.mxu0 %v5352
    %6049 = vmatpush1.bf16.msra.mxu0 %v5351
    %6050 = vmatprep.subr.bf16.mxu0 %v5358
    %6051 = vmatpush1.bf16.msra.mxu0 %v5357
    %6052 = vmatprep.subr.bf16.mxu0 %v5364
    %6053 = vmatpush1.bf16.msra.mxu0 %v5363
    %6054 = vmatprep.subr.bf16.mxu0 %v5370
    %6055 = vmatpush1.bf16.msra.mxu0 %v5369
    %6056 = vmatprep.subr.bf16.mxu0 %v5376
    %6057 = vmatpush1.bf16.msra.mxu0 %v5375
    %6058 = vmatprep.subr.bf16.mxu0 %v5382
    %6059 = vmatpush1.bf16.msra.mxu0 %v5381
    %6060 = vmatprep.subr.bf16.mxu0 %v5388
    %6061 = vmatpush1.bf16.msra.mxu0 %v5387
    %6062 = vmatprep.subr.bf16.mxu0 %v5394
    %6063 = vmatpush1.bf16.msra.mxu0 %v5393
    %6064 = vmatprep.subr.bf16.mxu0 %v5400
    %6065 = vmatpush1.bf16.msra.mxu0 %v5399
    %6066 = vmatprep.subr.bf16.mxu0 %v5406
    %6067 = vmatpush1.bf16.msra.mxu0 %v5405
    %6068 = vmatprep.subr.bf16.mxu0 %v5412
    %6069 = vmatpush1.bf16.msra.mxu0 %v5411
    %6070 = vmatprep.subr.bf16.mxu0 %v5418
    %6071 = vmatpush1.bf16.msra.mxu0 %v5417
    %6072 = vmatprep.subr.bf16.mxu0 %v5424
    %6073 = vmatpush1.bf16.msra.mxu0 %v5423
    %6074 = vmatprep.subr.bf16.mxu0 %v5430
    %6075 = vmatpush1.bf16.msra.mxu0 %v5429
    %6076 = vmatprep.subr.bf16.mxu0 %v5436
    %6077 = vmatpush1.bf16.msra.mxu0 %v5435
    %6078 = vmatprep.subr.bf16.mxu0 %v5442
    %6079 = vmatpush1.bf16.msra.mxu0 %v5441
    %6080 = vmatprep.mubr.bf16.mxu0 %v4160
    %6081 = vmatmul.mubr.bf16.gmra.mrb[0].mxu0 %v4159
    %v6082 = vpop.f32.mrb[0].mxu0
    %v6083 = vadd.f32 %v4466, %v6082
    %v6084 = vpop.f32.mrb[0].mxu0
    %v6085 = vadd.f32 %v4470, %v6084
    %v6086 = vpop.f32.mrb[0].mxu0
    %v6087 = vpop.f32.mrb[0].mxu0
    %6088 = vdwg.mxu0
    %6089 = vmatprep.subr.bf16.mxu0 %v5448
    %6090 = vmatpush1.bf16.msra.mxu0 %v5447
    %6091 = vmatprep.subr.bf16.mxu0 %v5454
    %6092 = vmatpush1.bf16.msra.mxu0 %v5453
    %6093 = vmatprep.subr.bf16.mxu0 %v5460
    %6094 = vmatpush1.bf16.msra.mxu0 %v5459
    %6095 = vmatprep.subr.bf16.mxu0 %v5466
    %6096 = vmatpush1.bf16.msra.mxu0 %v5465
    %6097 = vmatprep.subr.bf16.mxu0 %v5472
    %6098 = vmatpush1.bf16.msra.mxu0 %v5471
    %6099 = vmatprep.subr.bf16.mxu0 %v5478
    %6100 = vmatpush1.bf16.msra.mxu0 %v5477
    %6101 = vmatprep.subr.bf16.mxu0 %v5484
    %6102 = vmatpush1.bf16.msra.mxu0 %v5483
    %6103 = vmatprep.subr.bf16.mxu0 %v5490
    %6104 = vmatpush1.bf16.msra.mxu0 %v5489
    %6105 = vmatprep.subr.bf16.mxu0 %v5496
    %6106 = vmatpush1.bf16.msra.mxu0 %v5495
    %6107 = vmatprep.subr.bf16.mxu0 %v5502
    %6108 = vmatpush1.bf16.msra.mxu0 %v5501
    %6109 = vmatprep.subr.bf16.mxu0 %v5508
    %6110 = vmatpush1.bf16.msra.mxu0 %v5507
    %6111 = vmatprep.subr.bf16.mxu0 %v5514
    %6112 = vmatpush1.bf16.msra.mxu0 %v5513
    %6113 = vmatprep.subr.bf16.mxu0 %v5520
    %6114 = vmatpush1.bf16.msra.mxu0 %v5519
    %6115 = vmatprep.subr.bf16.mxu0 %v5526
    %6116 = vmatpush1.bf16.msra.mxu0 %v5525
    %6117 = vmatprep.subr.bf16.mxu0 %v5532
    %6118 = vmatpush1.bf16.msra.mxu0 %v5531
    %6119 = vmatprep.subr.bf16.mxu0 %v5538
    %6120 = vmatpush1.bf16.msra.mxu0 %v5537
    %6121 = vmatprep.mubr.bf16.mxu0 %v4162
    %6122 = vmatmul.mubr.bf16.gmra.mrb[0].mxu0 %v4161
    %v6123 = vpop.f32.mrb[0].mxu0
    %v6124 = vadd.f32 %v6083, %v6123
    %v6125 = vpop.f32.mrb[0].mxu0
    %v6126 = vadd.f32 %v6085, %v6125
    %v6127 = vpop.f32.mrb[0].mxu0
    %v6128 = vpop.f32.mrb[0].mxu0
    %6129 = vdwg.mxu0
    %6130 = vmatprep.subr.bf16.mxu0 %v5544
    %6131 = vmatpush1.bf16.msra.mxu0 %v5543
    %6132 = vmatprep.subr.bf16.mxu0 %v5550
    %6133 = vmatpush1.bf16.msra.mxu0 %v5549
    %6134 = vmatprep.subr.bf16.mxu0 %v5556
    %6135 = vmatpush1.bf16.msra.mxu0 %v5555
    %6136 = vmatprep.subr.bf16.mxu0 %v5562
    %6137 = vmatpush1.bf16.msra.mxu0 %v5561
    %6138 = vmatprep.subr.bf16.mxu0 %v5568
    %6139 = vmatpush1.bf16.msra.mxu0 %v5567
    %6140 = vmatprep.subr.bf16.mxu0 %v5574
    %6141 = vmatpush1.bf16.msra.mxu0 %v5573
    %6142 = vmatprep.subr.bf16.mxu0 %v5580
    %6143 = vmatpush1.bf16.msra.mxu0 %v5579
    %6144 = vmatprep.subr.bf16.mxu0 %v5586
    %6145 = vmatpush1.bf16.msra.mxu0 %v5585
    %6146 = vmatprep.subr.bf16.mxu0 %v5592
    %6147 = vmatpush1.bf16.msra.mxu0 %v5591
    %6148 = vmatprep.subr.bf16.mxu0 %v5598
    %6149 = vmatpush1.bf16.msra.mxu0 %v5597
    %6150 = vmatprep.subr.bf16.mxu0 %v5604
    %6151 = vmatpush1.bf16.msra.mxu0 %v5603
    %6152 = vmatprep.subr.bf16.mxu0 %v5610
    %6153 = vmatpush1.bf16.msra.mxu0 %v5609
    %6154 = vmatprep.subr.bf16.mxu0 %v5616
    %6155 = vmatpush1.bf16.msra.mxu0 %v5615
    %6156 = vmatprep.subr.bf16.mxu0 %v5622
    %6157 = vmatpush1.bf16.msra.mxu0 %v5621
    %6158 = vmatprep.subr.bf16.mxu0 %v5628
    %6159 = vmatpush1.bf16.msra.mxu0 %v5627
    %6160 = vmatprep.subr.bf16.mxu0 %v5634
    %6161 = vmatpush1.bf16.msra.mxu0 %v5633
    %6162 = vmatprep.mubr.bf16.mxu0 %v4164
    %6163 = vmatmul.mubr.bf16.gmra.mrb[0].mxu0 %v4163
    %v6164 = vpop.f32.mrb[0].mxu0
    %v6165 = vadd.f32 %v6124, %v6164
    %v6166 = vpop.f32.mrb[0].mxu0
    %v6167 = vadd.f32 %v6126, %v6166
    %v6168 = vpop.f32.mrb[0].mxu0
    %v6169 = vpop.f32.mrb[0].mxu0
    %6170 = vdwg.mxu0
    %6171 = vmatprep.subr.bf16.mxu0 %v5354
    %6172 = vmatpush1.bf16.msra.mxu0 %v5353
    %6173 = vmatprep.subr.bf16.mxu0 %v5360
    %6174 = vmatpush1.bf16.msra.mxu0 %v5359
    %6175 = vmatprep.subr.bf16.mxu0 %v5366
    %6176 = vmatpush1.bf16.msra.mxu0 %v5365
    %6177 = vmatprep.subr.bf16.mxu0 %v5372
    %6178 = vmatpush1.bf16.msra.mxu0 %v5371
    %6179 = vmatprep.subr.bf16.mxu0 %v5378
    %6180 = vmatpush1.bf16.msra.mxu0 %v5377
    %6181 = vmatprep.subr.bf16.mxu0 %v5384
    %6182 = vmatpush1.bf16.msra.mxu0 %v5383
    %6183 = vmatprep.subr.bf16.mxu0 %v5390
    %6184 = vmatpush1.bf16.msra.mxu0 %v5389
    %6185 = vmatprep.subr.bf16.mxu0 %v5396
    %6186 = vmatpush1.bf16.msra.mxu0 %v5395
    %6187 = vmatprep.subr.bf16.mxu0 %v5402
    %6188 = vmatpush1.bf16.msra.mxu0 %v5401
    %6189 = vmatprep.subr.bf16.mxu0 %v5408
    %6190 = vmatpush1.bf16.msra.mxu0 %v5407
    %6191 = vmatprep.subr.bf16.mxu0 %v5414
    %6192 = vmatpush1.bf16.msra.mxu0 %v5413
    %6193 = vmatprep.subr.bf16.mxu0 %v5420
    %6194 = vmatpush1.bf16.msra.mxu0 %v5419
    %6195 = vmatprep.subr.bf16.mxu0 %v5426
    %6196 = vmatpush1.bf16.msra.mxu0 %v5425
    %6197 = vmatprep.subr.bf16.mxu0 %v5432
    %6198 = vmatpush1.bf16.msra.mxu0 %v5431
    %6199 = vmatprep.subr.bf16.mxu0 %v5438
    %6200 = vmatpush1.bf16.msra.mxu0 %v5437
    %6201 = vmatprep.subr.bf16.mxu0 %v5444
    %6202 = vmatpush1.bf16.msra.mxu0 %v5443
    %6203 = vmatprep.mubr.bf16.mxu0 %v4160
    %6204 = vmatmul.mubr.bf16.gmra.mrb[0].mxu0 %v4159
    %v6205 = vpop.f32.mrb[0].mxu0
    %v6206 = vadd.f32 %v4474, %v6205
    %v6207 = vpop.f32.mrb[0].mxu0
    %v6208 = vadd.f32 %v4478, %v6207
    %v6209 = vpop.f32.mrb[0].mxu0
    %v6210 = vpop.f32.mrb[0].mxu0
    %6211 = vdwg.mxu0
    %6212 = vmatprep.subr.bf16.mxu0 %v5450
    %6213 = vmatpush1.bf16.msra.mxu0 %v5449
    %6214 = vmatprep.subr.bf16.mxu0 %v5456
    %6215 = vmatpush1.bf16.msra.mxu0 %v5455
    %6216 = vmatprep.subr.bf16.mxu0 %v5462
    %6217 = vmatpush1.bf16.msra.mxu0 %v5461
    %6218 = vmatprep.subr.bf16.mxu0 %v5468
    %6219 = vmatpush1.bf16.msra.mxu0 %v5467
    %6220 = vmatprep.subr.bf16.mxu0 %v5474
    %6221 = vmatpush1.bf16.msra.mxu0 %v5473
    %6222 = vmatprep.subr.bf16.mxu0 %v5480
    %6223 = vmatpush1.bf16.msra.mxu0 %v5479
    %6224 = vmatprep.subr.bf16.mxu0 %v5486
    %6225 = vmatpush1.bf16.msra.mxu0 %v5485
    %6226 = vmatprep.subr.bf16.mxu0 %v5492
    %6227 = vmatpush1.bf16.msra.mxu0 %v5491
    %6228 = vmatprep.subr.bf16.mxu0 %v5498
    %6229 = vmatpush1.bf16.msra.mxu0 %v5497
    %6230 = vmatprep.subr.bf16.mxu0 %v5504
    %6231 = vmatpush1.bf16.msra.mxu0 %v5503
    %6232 = vmatprep.subr.bf16.mxu0 %v5510
    %6233 = vmatpush1.bf16.msra.mxu0 %v5509
    %6234 = vmatprep.subr.bf16.mxu0 %v5516
    %6235 = vmatpush1.bf16.msra.mxu0 %v5515
    %6236 = vmatprep.subr.bf16.mxu0 %v5522
    %6237 = vmatpush1.bf16.msra.mxu0 %v5521
    %6238 = vmatprep.subr.bf16.mxu0 %v5528
    %6239 = vmatpush1.bf16.msra.mxu0 %v5527
    %6240 = vmatprep.subr.bf16.mxu0 %v5534
    %6241 = vmatpush1.bf16.msra.mxu0 %v5533
    %6242 = vmatprep.subr.bf16.mxu0 %v5540
    %6243 = vmatpush1.bf16.msra.mxu0 %v5539
    %6244 = vmatprep.mubr.bf16.mxu0 %v4162
    %6245 = vmatmul.mubr.bf16.gmra.mrb[0].mxu0 %v4161
    %v6246 = vpop.f32.mrb[0].mxu0
    %v6247 = vadd.f32 %v6206, %v6246
    %v6248 = vpop.f32.mrb[0].mxu0
    %v6249 = vadd.f32 %v6208, %v6248
    %v6250 = vpop.f32.mrb[0].mxu0
    %v6251 = vpop.f32.mrb[0].mxu0
    %6252 = vdwg.mxu0
    %6253 = vmatprep.subr.bf16.mxu0 %v5546
    %6254 = vmatpush1.bf16.msra.mxu0 %v5545
    %6255 = vmatprep.subr.bf16.mxu0 %v5552
    %6256 = vmatpush1.bf16.msra.mxu0 %v5551
    %6257 = vmatprep.subr.bf16.mxu0 %v5558
    %6258 = vmatpush1.bf16.msra.mxu0 %v5557
    %6259 = vmatprep.subr.bf16.mxu0 %v5564
    %6260 = vmatpush1.bf16.msra.mxu0 %v5563
    %6261 = vmatprep.subr.bf16.mxu0 %v5570
    %6262 = vmatpush1.bf16.msra.mxu0 %v5569
    %6263 = vmatprep.subr.bf16.mxu0 %v5576
    %6264 = vmatpush1.bf16.msra.mxu0 %v5575
    %6265 = vmatprep.subr.bf16.mxu0 %v5582
    %6266 = vmatpush1.bf16.msra.mxu0 %v5581
    %6267 = vmatprep.subr.bf16.mxu0 %v5588
    %6268 = vmatpush1.bf16.msra.mxu0 %v5587
    %6269 = vmatprep.subr.bf16.mxu0 %v5594
    %6270 = vmatpush1.bf16.msra.mxu0 %v5593
    %6271 = vmatprep.subr.bf16.mxu0 %v5600
    %6272 = vmatpush1.bf16.msra.mxu0 %v5599
    %6273 = vmatprep.subr.bf16.mxu0 %v5606
    %6274 = vmatpush1.bf16.msra.mxu0 %v5605
    %6275 = vmatprep.subr.bf16.mxu0 %v5612
    %6276 = vmatpush1.bf16.msra.mxu0 %v5611
    %6277 = vmatprep.subr.bf16.mxu0 %v5618
    %6278 = vmatpush1.bf16.msra.mxu0 %v5617
    %6279 = vmatprep.subr.bf16.mxu0 %v5624
    %6280 = vmatpush1.bf16.msra.mxu0 %v5623
    %6281 = vmatprep.subr.bf16.mxu0 %v5630
    %6282 = vmatpush1.bf16.msra.mxu0 %v5629
    %6283 = vmatprep.subr.bf16.mxu0 %v5636
    %6284 = vmatpush1.bf16.msra.mxu0 %v5635
    %6285 = vmatprep.mubr.bf16.mxu0 %v4164
    %6286 = vmatmul.mubr.bf16.gmra.mrb[0].mxu0 %v4163
    %v6287 = vpop.f32.mrb[0].mxu0
    %v6288 = vadd.f32 %v6247, %v6287
    %v6289 = vpop.f32.mrb[0].mxu0
    %v6290 = vadd.f32 %v6249, %v6289
    %v6291 = vpop.f32.mrb[0].mxu0
    %v6292 = vpop.f32.mrb[0].mxu0
    %6293 = vdwg.mxu0
    %v6294 = vld [vmem:[#allocation20] sm:$0x3f]
    %v6295 = vld [vmem:[#allocation22] sm:$0x3f]
    %v6296 = vadd.f32 %v6042, %v6044
    %v6297 = vadd.f32 %v6296, %v6165
    %v6298 = vadd.f32 %v6297, %v6167
    %v6299 = vadd.f32 %v6298, %v6288
    %v6300 = vadd.f32 %v6299, %v6290
    %6301 = vadd.xlane.f32.xlu0 %v6300
    %v6302 = vpop.xlane.xlu0 %6301
    %v6303 = vmul.f32 %v6042, %v6042
    %v6304 = vmul.f32 %v6044, %v6044
    %v6305 = vmul.f32 %v6165, %v6165
    %v6306 = vmul.f32 %v6167, %v6167
    %v6307 = vmul.f32 %v6288, %v6288
    %v6308 = vmul.f32 %v6290, %v6290
    %v6309 = vadd.f32 %v6303, %v6304
    %v6310 = vadd.f32 %v6309, %v6305
    %v6311 = vadd.f32 %v6310, %v6306
    %v6312 = vadd.f32 %v6311, %v6307
    %v6313 = vadd.f32 %v6312, %v6308
    %6314 = vadd.xlane.f32.xlu0 %v6313
    %v6315 = vpop.xlane.xlu0 %6314
    %v6316 = vmul.f32 %v6302, 0.0014285714
    %v6317 = vmul.f32 %v6315, 0.0014285714
    %v6318 = vmul.f32 %v6316, %v6316
    %v6319 = vsub.f32 %v6317, %v6318
    %v6320 = vmax.f32 %v6319, 0.0
    %v6321 = vsub.f32 %v6042, %v6316
    %v6322 = vsub.f32 %v6044, %v6316
    %v6323 = vsub.f32 %v6165, %v6316
    %v6324 = vsub.f32 %v6167, %v6316
    %v6325 = vsub.f32 %v6288, %v6316
    %v6326 = vsub.f32 %v6290, %v6316
    %v6327 = vadd.f32 %v6320, 1e-05
    %v6328 = vrsqrt.pop %v6327
    %v6329 = vmul.f32 %v6321, %v6328
    %v6330 = vmul.f32 %v6322, %v6328
    %v6331 = vmul.f32 %v6323, %v6328
    %v6332 = vmul.f32 %v6324, %v6328
    %v6333 = vmul.f32 %v6325, %v6328
    %v6334 = vmul.f32 %v6326, %v6328
    %v6336 = vlaneseq
    %v6337 = vshrl.u32 %v6336, 7
    %v6338 = vsub.s32 0, %v6337
    %v6339 = vrot.slane %v6294, %v6338
    %v6340 = vlaneseq
    %v6341 = vshrl.u32 %v6340, 7
    %v6342 = vsub.s32 1, %v6341
    %v6343 = vrot.slane %v6294, %v6342
    %v6344 = vlaneseq
    %v6345 = vshrl.u32 %v6344, 7
    %v6346 = vsub.s32 2, %v6345
    %v6347 = vrot.slane %v6294, %v6346
    %v6348 = vlaneseq
    %v6349 = vshrl.u32 %v6348, 7
    %v6350 = vsub.s32 3, %v6349
    %v6351 = vrot.slane %v6294, %v6350
    %v6352 = vlaneseq
    %v6353 = vshrl.u32 %v6352, 7
    %v6354 = vsub.s32 4, %v6353
    %v6355 = vrot.slane %v6294, %v6354
    %v6356 = vlaneseq
    %v6357 = vshrl.u32 %v6356, 7
    %v6358 = vsub.s32 5, %v6357
    %v6359 = vrot.slane %v6294, %v6358
    %v6366 = vmul.f32 %v6329, %v6339
    %v6367 = vmul.f32 %v6330, %v6343
    %v6368 = vmul.f32 %v6331, %v6347
    %v6369 = vmul.f32 %v6332, %v6351
    %v6370 = vmul.f32 %v6333, %v6355
    %v6371 = vmul.f32 %v6334, %v6359
    %v6373 = vlaneseq
    %v6374 = vshrl.u32 %v6373, 7
    %v6375 = vsub.s32 0, %v6374
    %v6376 = vrot.slane %v6295, %v6375
    %v6377 = vlaneseq
    %v6378 = vshrl.u32 %v6377, 7
    %v6379 = vsub.s32 1, %v6378
    %v6380 = vrot.slane %v6295, %v6379
    %v6381 = vlaneseq
    %v6382 = vshrl.u32 %v6381, 7
    %v6383 = vsub.s32 2, %v6382
    %v6384 = vrot.slane %v6295, %v6383
    %v6385 = vlaneseq
    %v6386 = vshrl.u32 %v6385, 7
    %v6387 = vsub.s32 3, %v6386
    %v6388 = vrot.slane %v6295, %v6387
    %v6389 = vlaneseq
    %v6390 = vshrl.u32 %v6389, 7
    %v6391 = vsub.s32 4, %v6390
    %v6392 = vrot.slane %v6295, %v6391
    %v6393 = vlaneseq
    %v6394 = vshrl.u32 %v6393, 7
    %v6395 = vsub.s32 5, %v6394
    %v6396 = vrot.slane %v6295, %v6395
    %v6403 = vadd.f32 %v6366, %v6376
    %v6404 = vadd.f32 %v6367, %v6380
    %v6405 = vadd.f32 %v6368, %v6384
    %v6406 = vadd.f32 %v6369, %v6388
    %v6407 = vadd.f32 %v6370, %v6392
    %v6408 = vadd.f32 %v6371, %v6396
    %v6409 = vmax.f32 %v6403, 0.0
    %v6410 = vmax.f32 %v6404, 0.0
    %v6411 = vmax.f32 %v6405, 0.0
    %v6412 = vmax.f32 %v6406, 0.0
    %v6413 = vmax.f32 %v6407, 0.0
    %v6414 = vmax.f32 %v6408, 0.0
    %v6415 = vpack.c.bf16 %v6409, %v6409
    %v6416 = vpack.c.bf16 %v6410, %v6410
    %v6417 = vpack.c.bf16 %v6411, %v6411
    %v6418 = vpack.c.bf16 %v6412, %v6412
    %v6419 = vpack.c.bf16 %v6413, %v6413
    %v6420 = vpack.c.bf16 %v6414, %v6414
    %v6421 = vld [vmem:[#allocation23] sm:$0xff]
    %v6422 = vld [vmem:[#allocation23 + $0x8] sm:$0xff]
    %v6423 = vld [vmem:[#allocation23 + $0x10] sm:$0xff]
    %v6424 = vld [vmem:[#allocation23 + $0x18] sm:$0xff]
    %v6425 = vld [vmem:[#allocation23 + $0x20] sm:$0xff]
    %v6426 = vld [vmem:[#allocation23 + $0x28] sm:$0xff]
    %v6427 = vld [vmem:[#allocation23 + $0x30] sm:$0xff]
    %v6428 = vld [vmem:[#allocation23 + $0x38] sm:$0xff]
    %v6429 = vld [vmem:[#allocation23 + $0x40] sm:$0xff]
    %v6430 = vld [vmem:[#allocation23 + $0x48] sm:$0xff]
    %v6431 = vld [vmem:[#allocation23 + $0x50] sm:$0xff]
    %v6432 = vld [vmem:[#allocation23 + $0x58] sm:$0xff]
    %v6433 = vld [vmem:[#allocation23 + $0x60] sm:$0xff]
    %v6434 = vld [vmem:[#allocation23 + $0x68] sm:$0xff]
    %v6435 = vld [vmem:[#allocation23 + $0x70] sm:$0xff]
    %v6436 = vld [vmem:[#allocation23 + $0x78] sm:$0xff]
    %v6437 = vld [vmem:[#allocation23 + $0x80] sm:$0xff]
    %v6438 = vld [vmem:[#allocation23 + $0x88] sm:$0xff]
    %v6439 = vld [vmem:[#allocation23 + $0x90] sm:$0xff]
    %v6440 = vld [vmem:[#allocation23 + $0x98] sm:$0xff]
    %v6441 = vld [vmem:[#allocation23 + $0xa0] sm:$0xff]
    %v6442 = vld [vmem:[#allocation23 + $0xa8] sm:$0xff]
    %v6443 = vld [vmem:[#allocation23 + $0xb0] sm:$0xff]
    %v6444 = vld [vmem:[#allocation23 + $0xb8] sm:$0xff]
    %v6445 = vld [vmem:[#allocation23 + $0xc0] sm:$0xff]
    %v6446 = vld [vmem:[#allocation23 + $0xc8] sm:$0xff]
    %v6447 = vld [vmem:[#allocation23 + $0xd0] sm:$0xff]
    %v6448 = vld [vmem:[#allocation23 + $0xd8] sm:$0xff]
    %v6449 = vld [vmem:[#allocation23 + $0xe0] sm:$0xff]
    %v6450 = vld [vmem:[#allocation23 + $0xe8] sm:$0xff]
    %v6451 = vld [vmem:[#allocation23 + $0xf0] sm:$0xff]
    %v6452 = vld [vmem:[#allocation23 + $0xf8] sm:$0xff]
    %v6453 = vld [vmem:[#allocation23 + $0x100] sm:$0xff]
    %v6454 = vld [vmem:[#allocation23 + $0x108] sm:$0xff]
    %v6455 = vld [vmem:[#allocation23 + $0x110] sm:$0xff]
    %v6456 = vld [vmem:[#allocation23 + $0x118] sm:$0xff]
    %v6457 = vld [vmem:[#allocation23 + $0x120] sm:$0xff]
    %v6458 = vld [vmem:[#allocation23 + $0x128] sm:$0xff]
    %v6459 = vld [vmem:[#allocation23 + $0x130] sm:$0xff]
    %v6460 = vld [vmem:[#allocation23 + $0x138] sm:$0xff]
    %v6461 = vld [vmem:[#allocation23 + $0x140] sm:$0xff]
    %v6462 = vld [vmem:[#allocation23 + $0x148] sm:$0xff]
    %v6463 = vld [vmem:[#allocation23 + $0x150] sm:$0xff]
    %v6464 = vld [vmem:[#allocation23 + $0x158] sm:$0xff]
    %v6465 = vld [vmem:[#allocation23 + $0x160] sm:$0xff]
    %v6466 = vld [vmem:[#allocation23 + $0x168] sm:$0xff]
    %v6467 = vld [vmem:[#allocation23 + $0x170] sm:$0xff]
    %v6468 = vld [vmem:[#allocation23 + $0x178] sm:$0xff]
    %v6469 = vld [vmem:[#allocation23 + $0x180] sm:$0xff]
    %v6470 = vld [vmem:[#allocation23 + $0x188] sm:$0xff]
    %v6471 = vld [vmem:[#allocation23 + $0x190] sm:$0xff]
    %v6472 = vld [vmem:[#allocation23 + $0x198] sm:$0xff]
    %v6473 = vld [vmem:[#allocation23 + $0x1a0] sm:$0xff]
    %v6474 = vld [vmem:[#allocation23 + $0x1a8] sm:$0xff]
    %v6475 = vld [vmem:[#allocation23 + $0x1b0] sm:$0xff]
    %v6476 = vld [vmem:[#allocation23 + $0x1b8] sm:$0xff]
    %v6477 = vld [vmem:[#allocation23 + $0x1c0] sm:$0xff]
    %v6478 = vld [vmem:[#allocation23 + $0x1c8] sm:$0xff]
    %v6479 = vld [vmem:[#allocation23 + $0x1d0] sm:$0xff]
    %v6480 = vld [vmem:[#allocation23 + $0x1d8] sm:$0xff]
    %v6481 = vld [vmem:[#allocation23 + $0x1e0] sm:$0xff]
    %v6482 = vld [vmem:[#allocation23 + $0x1e8] sm:$0xff]
    %v6483 = vld [vmem:[#allocation23 + $0x1f0] sm:$0xff]
    %v6484 = vld [vmem:[#allocation23 + $0x1f8] sm:$0xff]
    %v6485 = vld [vmem:[#allocation23 + $0x200] sm:$0xff]
    %v6486 = vld [vmem:[#allocation23 + $0x208] sm:$0xff]
    %v6487 = vld [vmem:[#allocation23 + $0x210] sm:$0xff]
    %v6488 = vld [vmem:[#allocation23 + $0x218] sm:$0xff]
    %v6489 = vld [vmem:[#allocation23 + $0x220] sm:$0xff]
    %v6490 = vld [vmem:[#allocation23 + $0x228] sm:$0xff]
    %v6491 = vld [vmem:[#allocation23 + $0x230] sm:$0xff]
    %v6492 = vld [vmem:[#allocation23 + $0x238] sm:$0xff]
    %v6493 = vld [vmem:[#allocation23 + $0x240] sm:$0xff]
    %v6494 = vld [vmem:[#allocation23 + $0x248] sm:$0xff]
    %v6495 = vld [vmem:[#allocation23 + $0x250] sm:$0xff]
    %v6496 = vld [vmem:[#allocation23 + $0x258] sm:$0xff]
    %v6497 = vld [vmem:[#allocation23 + $0x260] sm:$0xff]
    %v6498 = vld [vmem:[#allocation23 + $0x268] sm:$0xff]
    %v6499 = vld [vmem:[#allocation23 + $0x270] sm:$0xff]
    %v6500 = vld [vmem:[#allocation23 + $0x278] sm:$0xff]
    %v6501 = vld [vmem:[#allocation23 + $0x280] sm:$0xff]
    %v6502 = vld [vmem:[#allocation23 + $0x288] sm:$0xff]
    %v6503 = vld [vmem:[#allocation23 + $0x290] sm:$0xff]
    %v6504 = vld [vmem:[#allocation23 + $0x298] sm:$0xff]
    %v6505 = vld [vmem:[#allocation23 + $0x2a0] sm:$0xff]
    %v6506 = vld [vmem:[#allocation23 + $0x2a8] sm:$0xff]
    %v6507 = vld [vmem:[#allocation23 + $0x2b0] sm:$0xff]
    %v6508 = vld [vmem:[#allocation23 + $0x2b8] sm:$0xff]
    %v6509 = vld [vmem:[#allocation23 + $0x2c0] sm:$0xff]
    %v6510 = vld [vmem:[#allocation23 + $0x2c8] sm:$0xff]
    %v6511 = vld [vmem:[#allocation23 + $0x2d0] sm:$0xff]
    %v6512 = vld [vmem:[#allocation23 + $0x2d8] sm:$0xff]
    %v6513 = vld [vmem:[#allocation23 + $0x2e0] sm:$0xff]
    %v6514 = vld [vmem:[#allocation23 + $0x2e8] sm:$0xff]
    %v6515 = vld [vmem:[#allocation23 + $0x2f0] sm:$0xff]
    %v6516 = vld [vmem:[#allocation23 + $0x2f8] sm:$0xff]
    %v6517 = vld [vmem:[#allocation23 + $0x300] sm:$0xff]
    %v6518 = vld [vmem:[#allocation23 + $0x308] sm:$0xff]
    %v6519 = vld [vmem:[#allocation23 + $0x310] sm:$0xff]
    %v6520 = vld [vmem:[#allocation23 + $0x318] sm:$0xff]
    %v6521 = vld [vmem:[#allocation23 + $0x320] sm:$0xff]
    %v6522 = vld [vmem:[#allocation23 + $0x328] sm:$0xff]
    %v6523 = vld [vmem:[#allocation23 + $0x330] sm:$0xff]
    %v6524 = vld [vmem:[#allocation23 + $0x338] sm:$0xff]
    %v6525 = vld [vmem:[#allocation23 + $0x340] sm:$0xff]
    %v6526 = vld [vmem:[#allocation23 + $0x348] sm:$0xff]
    %v6527 = vld [vmem:[#allocation23 + $0x350] sm:$0xff]
    %v6528 = vld [vmem:[#allocation23 + $0x358] sm:$0xff]
    %v6529 = vld [vmem:[#allocation23 + $0x360] sm:$0xff]
    %v6530 = vld [vmem:[#allocation23 + $0x368] sm:$0xff]
    %v6531 = vld [vmem:[#allocation23 + $0x370] sm:$0xff]
    %v6532 = vld [vmem:[#allocation23 + $0x378] sm:$0xff]
    %v6533 = vld [vmem:[#allocation23 + $0x380] sm:$0xff]
    %v6534 = vld [vmem:[#allocation23 + $0x388] sm:$0xff]
    %v6535 = vld [vmem:[#allocation23 + $0x390] sm:$0xff]
    %v6536 = vld [vmem:[#allocation23 + $0x398] sm:$0xff]
    %v6537 = vld [vmem:[#allocation23 + $0x3a0] sm:$0xff]
    %v6538 = vld [vmem:[#allocation23 + $0x3a8] sm:$0xff]
    %v6539 = vld [vmem:[#allocation23 + $0x3b0] sm:$0xff]
    %v6540 = vld [vmem:[#allocation23 + $0x3b8] sm:$0xff]
    %v6541 = vld [vmem:[#allocation23 + $0x3c0] sm:$0xff]
    %v6542 = vld [vmem:[#allocation23 + $0x3c8] sm:$0xff]
    %v6543 = vld [vmem:[#allocation23 + $0x3d0] sm:$0xff]
    %v6544 = vld [vmem:[#allocation23 + $0x3d8] sm:$0xff]
    %v6545 = vld [vmem:[#allocation23 + $0x3e0] sm:$0xff]
    %v6546 = vld [vmem:[#allocation23 + $0x3e8] sm:$0xff]
    %v6547 = vld [vmem:[#allocation23 + $0x3f0] sm:$0xff]
    %v6548 = vld [vmem:[#allocation23 + $0x3f8] sm:$0xff]
    %v6549 = vld [vmem:[#allocation23 + $0x400] sm:$0xff]
    %v6550 = vld [vmem:[#allocation23 + $0x408] sm:$0xff]
    %v6551 = vld [vmem:[#allocation23 + $0x410] sm:$0xff]
    %v6552 = vld [vmem:[#allocation23 + $0x418] sm:$0xff]
    %v6553 = vld [vmem:[#allocation23 + $0x420] sm:$0xff]
    %v6554 = vld [vmem:[#allocation23 + $0x428] sm:$0xff]
    %v6555 = vld [vmem:[#allocation23 + $0x430] sm:$0xff]
    %v6556 = vld [vmem:[#allocation23 + $0x438] sm:$0xff]
    %v6557 = vld [vmem:[#allocation23 + $0x440] sm:$0xff]
    %v6558 = vld [vmem:[#allocation23 + $0x448] sm:$0xff]
    %v6559 = vld [vmem:[#allocation23 + $0x450] sm:$0xff]
    %v6560 = vld [vmem:[#allocation23 + $0x458] sm:$0xff]
    %v6561 = vld [vmem:[#allocation23 + $0x460] sm:$0xff]
    %v6562 = vld [vmem:[#allocation23 + $0x468] sm:$0xff]
    %v6563 = vld [vmem:[#allocation23 + $0x470] sm:$0xff]
    %v6564 = vld [vmem:[#allocation23 + $0x478] sm:$0xff]
    %v6565 = vld [vmem:[#allocation23 + $0x480] sm:$0xff]
    %v6566 = vld [vmem:[#allocation23 + $0x488] sm:$0xff]
    %v6567 = vld [vmem:[#allocation23 + $0x490] sm:$0xff]
    %v6568 = vld [vmem:[#allocation23 + $0x498] sm:$0xff]
    %v6569 = vld [vmem:[#allocation23 + $0x4a0] sm:$0xff]
    %v6570 = vld [vmem:[#allocation23 + $0x4a8] sm:$0xff]
    %v6571 = vld [vmem:[#allocation23 + $0x4b0] sm:$0xff]
    %v6572 = vld [vmem:[#allocation23 + $0x4b8] sm:$0xff]
    %v6573 = vld [vmem:[#allocation23 + $0x4c0] sm:$0xff]
    %v6574 = vld [vmem:[#allocation23 + $0x4c8] sm:$0xff]
    %v6575 = vld [vmem:[#allocation23 + $0x4d0] sm:$0xff]
    %v6576 = vld [vmem:[#allocation23 + $0x4d8] sm:$0xff]
    %v6577 = vld [vmem:[#allocation23 + $0x4e0] sm:$0xff]
    %v6578 = vld [vmem:[#allocation23 + $0x4e8] sm:$0xff]
    %v6579 = vld [vmem:[#allocation23 + $0x4f0] sm:$0xff]
    %v6580 = vld [vmem:[#allocation23 + $0x4f8] sm:$0xff]
    %v6581 = vld [vmem:[#allocation23 + $0x500] sm:$0xff]
    %v6582 = vld [vmem:[#allocation23 + $0x508] sm:$0xff]
    %v6583 = vld [vmem:[#allocation23 + $0x510] sm:$0xff]
    %v6584 = vld [vmem:[#allocation23 + $0x518] sm:$0xff]
    %v6585 = vld [vmem:[#allocation23 + $0x520] sm:$0xff]
    %v6586 = vld [vmem:[#allocation23 + $0x528] sm:$0xff]
    %v6587 = vld [vmem:[#allocation23 + $0x530] sm:$0xff]
    %v6588 = vld [vmem:[#allocation23 + $0x538] sm:$0xff]
    %v6589 = vld [vmem:[#allocation23 + $0x540] sm:$0xff]
    %v6590 = vld [vmem:[#allocation23 + $0x548] sm:$0xff]
    %v6591 = vld [vmem:[#allocation23 + $0x550] sm:$0xff]
    %v6592 = vld [vmem:[#allocation23 + $0x558] sm:$0xff]
    %v6593 = vld [vmem:[#allocation23 + $0x560] sm:$0xff]
    %v6594 = vld [vmem:[#allocation23 + $0x568] sm:$0xff]
    %v6595 = vld [vmem:[#allocation23 + $0x570] sm:$0xff]
    %v6596 = vld [vmem:[#allocation23 + $0x578] sm:$0xff]
    %v6597 = vld [vmem:[#allocation23 + $0x580] sm:$0xff]
    %v6598 = vld [vmem:[#allocation23 + $0x588] sm:$0xff]
    %v6599 = vld [vmem:[#allocation23 + $0x590] sm:$0xff]
    %v6600 = vld [vmem:[#allocation23 + $0x598] sm:$0xff]
    %v6601 = vld [vmem:[#allocation23 + $0x5a0] sm:$0xff]
    %v6602 = vld [vmem:[#allocation23 + $0x5a8] sm:$0xff]
    %v6603 = vld [vmem:[#allocation23 + $0x5b0] sm:$0xff]
    %v6604 = vld [vmem:[#allocation23 + $0x5b8] sm:$0xff]
    %v6605 = vld [vmem:[#allocation23 + $0x5c0] sm:$0xff]
    %v6606 = vld [vmem:[#allocation23 + $0x5c8] sm:$0xff]
    %v6607 = vld [vmem:[#allocation23 + $0x5d0] sm:$0xff]
    %v6608 = vld [vmem:[#allocation23 + $0x5d8] sm:$0xff]
    %v6609 = vld [vmem:[#allocation23 + $0x5e0] sm:$0xff]
    %v6610 = vld [vmem:[#allocation23 + $0x5e8] sm:$0xff]
    %v6611 = vld [vmem:[#allocation23 + $0x5f0] sm:$0xff]
    %v6612 = vld [vmem:[#allocation23 + $0x5f8] sm:$0xff]
    %v6613 = vld [vmem:[#allocation25] sm:$0xf]
    %v6615 = vlaneseq
    %v6616 = vshrl.u32 %v6615, 7
    %v6617 = vsub.s32 0, %v6616
    %v6618 = vrot.slane %v6613, %v6617
    %v6619 = vlaneseq
    %v6620 = vshrl.u32 %v6619, 7
    %v6621 = vsub.s32 1, %v6620
    %v6622 = vrot.slane %v6613, %v6621
    %v6623 = vlaneseq
    %v6624 = vshrl.u32 %v6623, 7
    %v6625 = vsub.s32 2, %v6624
    %v6626 = vrot.slane %v6613, %v6625
    %v6627 = vlaneseq
    %v6628 = vshrl.u32 %v6627, 7
    %v6629 = vsub.s32 3, %v6628
    %v6630 = vrot.slane %v6613, %v6629
    %v6827 = vunpack.c.l.b16 %v6421
    %v6828 = vunpack.c.h.b16 %v6421
    %v6829 = vunpack.c.l.b16 %v6422
    %v6830 = vunpack.c.h.b16 %v6422
    %v6831 = vunpack.c.l.b16 %v6423
    %v6832 = vunpack.c.h.b16 %v6423
    %v6833 = vunpack.c.l.b16 %v6424
    %v6834 = vunpack.c.h.b16 %v6424
    %v6835 = vunpack.c.l.b16 %v6425
    %v6836 = vunpack.c.h.b16 %v6425
    %v6837 = vunpack.c.l.b16 %v6426
    %v6838 = vunpack.c.h.b16 %v6426
    %v6839 = vunpack.c.l.b16 %v6427
    %v6840 = vunpack.c.h.b16 %v6427
    %v6841 = vunpack.c.l.b16 %v6428
    %v6842 = vunpack.c.h.b16 %v6428
    %v6843 = vunpack.c.l.b16 %v6429
    %v6844 = vunpack.c.h.b16 %v6429
    %v6845 = vunpack.c.l.b16 %v6430
    %v6846 = vunpack.c.h.b16 %v6430
    %v6847 = vunpack.c.l.b16 %v6431
    %v6848 = vunpack.c.h.b16 %v6431
    %v6849 = vunpack.c.l.b16 %v6432
    %v6850 = vunpack.c.h.b16 %v6432
    %v6851 = vunpack.c.l.b16 %v6433
    %v6852 = vunpack.c.h.b16 %v6433
    %v6853 = vunpack.c.l.b16 %v6434
    %v6854 = vunpack.c.h.b16 %v6434
    %v6855 = vunpack.c.l.b16 %v6435
    %v6856 = vunpack.c.h.b16 %v6435
    %v6857 = vunpack.c.l.b16 %v6436
    %v6858 = vunpack.c.h.b16 %v6436
    %v6859 = vunpack.c.l.b16 %v6437
    %v6860 = vunpack.c.h.b16 %v6437
    %v6861 = vunpack.c.l.b16 %v6438
    %v6862 = vunpack.c.h.b16 %v6438
    %v6863 = vunpack.c.l.b16 %v6439
    %v6864 = vunpack.c.h.b16 %v6439
    %v6865 = vunpack.c.l.b16 %v6440
    %v6866 = vunpack.c.h.b16 %v6440
    %v6867 = vunpack.c.l.b16 %v6441
    %v6868 = vunpack.c.h.b16 %v6441
    %v6869 = vunpack.c.l.b16 %v6442
    %v6870 = vunpack.c.h.b16 %v6442
    %v6871 = vunpack.c.l.b16 %v6443
    %v6872 = vunpack.c.h.b16 %v6443
    %v6873 = vunpack.c.l.b16 %v6444
    %v6874 = vunpack.c.h.b16 %v6444
    %v6875 = vunpack.c.l.b16 %v6445
    %v6876 = vunpack.c.h.b16 %v6445
    %v6877 = vunpack.c.l.b16 %v6446
    %v6878 = vunpack.c.h.b16 %v6446
    %v6879 = vunpack.c.l.b16 %v6447
    %v6880 = vunpack.c.h.b16 %v6447
    %v6881 = vunpack.c.l.b16 %v6448
    %v6882 = vunpack.c.h.b16 %v6448
    %v6883 = vunpack.c.l.b16 %v6449
    %v6884 = vunpack.c.h.b16 %v6449
    %v6885 = vunpack.c.l.b16 %v6450
    %v6886 = vunpack.c.h.b16 %v6450
    %v6887 = vunpack.c.l.b16 %v6451
    %v6888 = vunpack.c.h.b16 %v6451
    %v6889 = vunpack.c.l.b16 %v6452
    %v6890 = vunpack.c.h.b16 %v6452
    %v6891 = vunpack.c.l.b16 %v6453
    %v6892 = vunpack.c.h.b16 %v6453
    %v6893 = vunpack.c.l.b16 %v6454
    %v6894 = vunpack.c.h.b16 %v6454
    %v6895 = vunpack.c.l.b16 %v6455
    %v6896 = vunpack.c.h.b16 %v6455
    %v6897 = vunpack.c.l.b16 %v6456
    %v6898 = vunpack.c.h.b16 %v6456
    %v6899 = vunpack.c.l.b16 %v6457
    %v6900 = vunpack.c.h.b16 %v6457
    %v6901 = vunpack.c.l.b16 %v6458
    %v6902 = vunpack.c.h.b16 %v6458
    %v6903 = vunpack.c.l.b16 %v6459
    %v6904 = vunpack.c.h.b16 %v6459
    %v6905 = vunpack.c.l.b16 %v6460
    %v6906 = vunpack.c.h.b16 %v6460
    %v6907 = vunpack.c.l.b16 %v6461
    %v6908 = vunpack.c.h.b16 %v6461
    %v6909 = vunpack.c.l.b16 %v6462
    %v6910 = vunpack.c.h.b16 %v6462
    %v6911 = vunpack.c.l.b16 %v6463
    %v6912 = vunpack.c.h.b16 %v6463
    %v6913 = vunpack.c.l.b16 %v6464
    %v6914 = vunpack.c.h.b16 %v6464
    %v6915 = vunpack.c.l.b16 %v6465
    %v6916 = vunpack.c.h.b16 %v6465
    %v6917 = vunpack.c.l.b16 %v6466
    %v6918 = vunpack.c.h.b16 %v6466
    %v6919 = vunpack.c.l.b16 %v6467
    %v6920 = vunpack.c.h.b16 %v6467
    %v6921 = vunpack.c.l.b16 %v6468
    %v6922 = vunpack.c.h.b16 %v6468
    %v6923 = vunpack.c.l.b16 %v6469
    %v6924 = vunpack.c.h.b16 %v6469
    %v6925 = vunpack.c.l.b16 %v6470
    %v6926 = vunpack.c.h.b16 %v6470
    %v6927 = vunpack.c.l.b16 %v6471
    %v6928 = vunpack.c.h.b16 %v6471
    %v6929 = vunpack.c.l.b16 %v6472
    %v6930 = vunpack.c.h.b16 %v6472
    %v6931 = vunpack.c.l.b16 %v6473
    %v6932 = vunpack.c.h.b16 %v6473
    %v6933 = vunpack.c.l.b16 %v6474
    %v6934 = vunpack.c.h.b16 %v6474
    %v6935 = vunpack.c.l.b16 %v6475
    %v6936 = vunpack.c.h.b16 %v6475
    %v6937 = vunpack.c.l.b16 %v6476
    %v6938 = vunpack.c.h.b16 %v6476
    %v6939 = vunpack.c.l.b16 %v6477
    %v6940 = vunpack.c.h.b16 %v6477
    %v6941 = vunpack.c.l.b16 %v6478
    %v6942 = vunpack.c.h.b16 %v6478
    %v6943 = vunpack.c.l.b16 %v6479
    %v6944 = vunpack.c.h.b16 %v6479
    %v6945 = vunpack.c.l.b16 %v6480
    %v6946 = vunpack.c.h.b16 %v6480
    %v6947 = vunpack.c.l.b16 %v6481
    %v6948 = vunpack.c.h.b16 %v6481
    %v6949 = vunpack.c.l.b16 %v6482
    %v6950 = vunpack.c.h.b16 %v6482
    %v6951 = vunpack.c.l.b16 %v6483
    %v6952 = vunpack.c.h.b16 %v6483
    %v6953 = vunpack.c.l.b16 %v6484
    %v6954 = vunpack.c.h.b16 %v6484
    %v6955 = vunpack.c.l.b16 %v6485
    %v6956 = vunpack.c.h.b16 %v6485
    %v6957 = vunpack.c.l.b16 %v6486
    %v6958 = vunpack.c.h.b16 %v6486
    %v6959 = vunpack.c.l.b16 %v6487
    %v6960 = vunpack.c.h.b16 %v6487
    %v6961 = vunpack.c.l.b16 %v6488
    %v6962 = vunpack.c.h.b16 %v6488
    %v6963 = vunpack.c.l.b16 %v6489
    %v6964 = vunpack.c.h.b16 %v6489
    %v6965 = vunpack.c.l.b16 %v6490
    %v6966 = vunpack.c.h.b16 %v6490
    %v6967 = vunpack.c.l.b16 %v6491
    %v6968 = vunpack.c.h.b16 %v6491
    %v6969 = vunpack.c.l.b16 %v6492
    %v6970 = vunpack.c.h.b16 %v6492
    %v6971 = vunpack.c.l.b16 %v6493
    %v6972 = vunpack.c.h.b16 %v6493
    %v6973 = vunpack.c.l.b16 %v6494
    %v6974 = vunpack.c.h.b16 %v6494
    %v6975 = vunpack.c.l.b16 %v6495
    %v6976 = vunpack.c.h.b16 %v6495
    %v6977 = vunpack.c.l.b16 %v6496
    %v6978 = vunpack.c.h.b16 %v6496
    %v6979 = vunpack.c.l.b16 %v6497
    %v6980 = vunpack.c.h.b16 %v6497
    %v6981 = vunpack.c.l.b16 %v6498
    %v6982 = vunpack.c.h.b16 %v6498
    %v6983 = vunpack.c.l.b16 %v6499
    %v6984 = vunpack.c.h.b16 %v6499
    %v6985 = vunpack.c.l.b16 %v6500
    %v6986 = vunpack.c.h.b16 %v6500
    %v6987 = vunpack.c.l.b16 %v6501
    %v6988 = vunpack.c.h.b16 %v6501
    %v6989 = vunpack.c.l.b16 %v6502
    %v6990 = vunpack.c.h.b16 %v6502
    %v6991 = vunpack.c.l.b16 %v6503
    %v6992 = vunpack.c.h.b16 %v6503
    %v6993 = vunpack.c.l.b16 %v6504
    %v6994 = vunpack.c.h.b16 %v6504
    %v6995 = vunpack.c.l.b16 %v6505
    %v6996 = vunpack.c.h.b16 %v6505
    %v6997 = vunpack.c.l.b16 %v6506
    %v6998 = vunpack.c.h.b16 %v6506
    %v6999 = vunpack.c.l.b16 %v6507
    %v7000 = vunpack.c.h.b16 %v6507
    %v7001 = vunpack.c.l.b16 %v6508
    %v7002 = vunpack.c.h.b16 %v6508
    %v7003 = vunpack.c.l.b16 %v6509
    %v7004 = vunpack.c.h.b16 %v6509
    %v7005 = vunpack.c.l.b16 %v6510
    %v7006 = vunpack.c.h.b16 %v6510
    %v7007 = vunpack.c.l.b16 %v6511
    %v7008 = vunpack.c.h.b16 %v6511
    %v7009 = vunpack.c.l.b16 %v6512
    %v7010 = vunpack.c.h.b16 %v6512
    %v7011 = vunpack.c.l.b16 %v6513
    %v7012 = vunpack.c.h.b16 %v6513
    %v7013 = vunpack.c.l.b16 %v6514
    %v7014 = vunpack.c.h.b16 %v6514
    %v7015 = vunpack.c.l.b16 %v6515
    %v7016 = vunpack.c.h.b16 %v6515
    %v7017 = vunpack.c.l.b16 %v6516
    %v7018 = vunpack.c.h.b16 %v6516
    %v7019 = vunpack.c.l.b16 %v6517
    %v7020 = vunpack.c.h.b16 %v6517
    %v7021 = vunpack.c.l.b16 %v6518
    %v7022 = vunpack.c.h.b16 %v6518
    %v7023 = vunpack.c.l.b16 %v6519
    %v7024 = vunpack.c.h.b16 %v6519
    %v7025 = vunpack.c.l.b16 %v6520
    %v7026 = vunpack.c.h.b16 %v6520
    %v7027 = vunpack.c.l.b16 %v6521
    %v7028 = vunpack.c.h.b16 %v6521
    %v7029 = vunpack.c.l.b16 %v6522
    %v7030 = vunpack.c.h.b16 %v6522
    %v7031 = vunpack.c.l.b16 %v6523
    %v7032 = vunpack.c.h.b16 %v6523
    %v7033 = vunpack.c.l.b16 %v6524
    %v7034 = vunpack.c.h.b16 %v6524
    %v7035 = vunpack.c.l.b16 %v6525
    %v7036 = vunpack.c.h.b16 %v6525
    %v7037 = vunpack.c.l.b16 %v6526
    %v7038 = vunpack.c.h.b16 %v6526
    %v7039 = vunpack.c.l.b16 %v6527
    %v7040 = vunpack.c.h.b16 %v6527
    %v7041 = vunpack.c.l.b16 %v6528
    %v7042 = vunpack.c.h.b16 %v6528
    %v7043 = vunpack.c.l.b16 %v6529
    %v7044 = vunpack.c.h.b16 %v6529
    %v7045 = vunpack.c.l.b16 %v6530
    %v7046 = vunpack.c.h.b16 %v6530
    %v7047 = vunpack.c.l.b16 %v6531
    %v7048 = vunpack.c.h.b16 %v6531
    %v7049 = vunpack.c.l.b16 %v6532
    %v7050 = vunpack.c.h.b16 %v6532
    %v7051 = vunpack.c.l.b16 %v6533
    %v7052 = vunpack.c.h.b16 %v6533
    %v7053 = vunpack.c.l.b16 %v6534
    %v7054 = vunpack.c.h.b16 %v6534
    %v7055 = vunpack.c.l.b16 %v6535
    %v7056 = vunpack.c.h.b16 %v6535
    %v7057 = vunpack.c.l.b16 %v6536
    %v7058 = vunpack.c.h.b16 %v6536
    %v7059 = vunpack.c.l.b16 %v6537
    %v7060 = vunpack.c.h.b16 %v6537
    %v7061 = vunpack.c.l.b16 %v6538
    %v7062 = vunpack.c.h.b16 %v6538
    %v7063 = vunpack.c.l.b16 %v6539
    %v7064 = vunpack.c.h.b16 %v6539
    %v7065 = vunpack.c.l.b16 %v6540
    %v7066 = vunpack.c.h.b16 %v6540
    %v7067 = vunpack.c.l.b16 %v6541
    %v7068 = vunpack.c.h.b16 %v6541
    %v7069 = vunpack.c.l.b16 %v6542
    %v7070 = vunpack.c.h.b16 %v6542
    %v7071 = vunpack.c.l.b16 %v6543
    %v7072 = vunpack.c.h.b16 %v6543
    %v7073 = vunpack.c.l.b16 %v6544
    %v7074 = vunpack.c.h.b16 %v6544
    %v7075 = vunpack.c.l.b16 %v6545
    %v7076 = vunpack.c.h.b16 %v6545
    %v7077 = vunpack.c.l.b16 %v6546
    %v7078 = vunpack.c.h.b16 %v6546
    %v7079 = vunpack.c.l.b16 %v6547
    %v7080 = vunpack.c.h.b16 %v6547
    %v7081 = vunpack.c.l.b16 %v6548
    %v7082 = vunpack.c.h.b16 %v6548
    %v7083 = vunpack.c.l.b16 %v6549
    %v7084 = vunpack.c.h.b16 %v6549
    %v7085 = vunpack.c.l.b16 %v6550
    %v7086 = vunpack.c.h.b16 %v6550
    %v7087 = vunpack.c.l.b16 %v6551
    %v7088 = vunpack.c.h.b16 %v6551
    %v7089 = vunpack.c.l.b16 %v6552
    %v7090 = vunpack.c.h.b16 %v6552
    %v7091 = vunpack.c.l.b16 %v6553
    %v7092 = vunpack.c.h.b16 %v6553
    %v7093 = vunpack.c.l.b16 %v6554
    %v7094 = vunpack.c.h.b16 %v6554
    %v7095 = vunpack.c.l.b16 %v6555
    %v7096 = vunpack.c.h.b16 %v6555
    %v7097 = vunpack.c.l.b16 %v6556
    %v7098 = vunpack.c.h.b16 %v6556
    %v7099 = vunpack.c.l.b16 %v6557
    %v7100 = vunpack.c.h.b16 %v6557
    %v7101 = vunpack.c.l.b16 %v6558
    %v7102 = vunpack.c.h.b16 %v6558
    %v7103 = vunpack.c.l.b16 %v6559
    %v7104 = vunpack.c.h.b16 %v6559
    %v7105 = vunpack.c.l.b16 %v6560
    %v7106 = vunpack.c.h.b16 %v6560
    %v7107 = vunpack.c.l.b16 %v6561
    %v7108 = vunpack.c.h.b16 %v6561
    %v7109 = vunpack.c.l.b16 %v6562
    %v7110 = vunpack.c.h.b16 %v6562
    %v7111 = vunpack.c.l.b16 %v6563
    %v7112 = vunpack.c.h.b16 %v6563
    %v7113 = vunpack.c.l.b16 %v6564
    %v7114 = vunpack.c.h.b16 %v6564
    %v7115 = vunpack.c.l.b16 %v6565
    %v7116 = vunpack.c.h.b16 %v6565
    %v7117 = vunpack.c.l.b16 %v6566
    %v7118 = vunpack.c.h.b16 %v6566
    %v7119 = vunpack.c.l.b16 %v6567
    %v7120 = vunpack.c.h.b16 %v6567
    %v7121 = vunpack.c.l.b16 %v6568
    %v7122 = vunpack.c.h.b16 %v6568
    %v7123 = vunpack.c.l.b16 %v6569
    %v7124 = vunpack.c.h.b16 %v6569
    %v7125 = vunpack.c.l.b16 %v6570
    %v7126 = vunpack.c.h.b16 %v6570
    %v7127 = vunpack.c.l.b16 %v6571
    %v7128 = vunpack.c.h.b16 %v6571
    %v7129 = vunpack.c.l.b16 %v6572
    %v7130 = vunpack.c.h.b16 %v6572
    %v7131 = vunpack.c.l.b16 %v6573
    %v7132 = vunpack.c.h.b16 %v6573
    %v7133 = vunpack.c.l.b16 %v6574
    %v7134 = vunpack.c.h.b16 %v6574
    %v7135 = vunpack.c.l.b16 %v6575
    %v7136 = vunpack.c.h.b16 %v6575
    %v7137 = vunpack.c.l.b16 %v6576
    %v7138 = vunpack.c.h.b16 %v6576
    %v7139 = vunpack.c.l.b16 %v6577
    %v7140 = vunpack.c.h.b16 %v6577
    %v7141 = vunpack.c.l.b16 %v6578
    %v7142 = vunpack.c.h.b16 %v6578
    %v7143 = vunpack.c.l.b16 %v6579
    %v7144 = vunpack.c.h.b16 %v6579
    %v7145 = vunpack.c.l.b16 %v6580
    %v7146 = vunpack.c.h.b16 %v6580
    %v7147 = vunpack.c.l.b16 %v6581
    %v7148 = vunpack.c.h.b16 %v6581
    %v7149 = vunpack.c.l.b16 %v6582
    %v7150 = vunpack.c.h.b16 %v6582
    %v7151 = vunpack.c.l.b16 %v6583
    %v7152 = vunpack.c.h.b16 %v6583
    %v7153 = vunpack.c.l.b16 %v6584
    %v7154 = vunpack.c.h.b16 %v6584
    %v7155 = vunpack.c.l.b16 %v6585
    %v7156 = vunpack.c.h.b16 %v6585
    %v7157 = vunpack.c.l.b16 %v6586
    %v7158 = vunpack.c.h.b16 %v6586
    %v7159 = vunpack.c.l.b16 %v6587
    %v7160 = vunpack.c.h.b16 %v6587
    %v7161 = vunpack.c.l.b16 %v6588
    %v7162 = vunpack.c.h.b16 %v6588
    %v7163 = vunpack.c.l.b16 %v6589
    %v7164 = vunpack.c.h.b16 %v6589
    %v7165 = vunpack.c.l.b16 %v6590
    %v7166 = vunpack.c.h.b16 %v6590
    %v7167 = vunpack.c.l.b16 %v6591
    %v7168 = vunpack.c.h.b16 %v6591
    %v7169 = vunpack.c.l.b16 %v6592
    %v7170 = vunpack.c.h.b16 %v6592
    %v7171 = vunpack.c.l.b16 %v6593
    %v7172 = vunpack.c.h.b16 %v6593
    %v7173 = vunpack.c.l.b16 %v6594
    %v7174 = vunpack.c.h.b16 %v6594
    %v7175 = vunpack.c.l.b16 %v6595
    %v7176 = vunpack.c.h.b16 %v6595
    %v7177 = vunpack.c.l.b16 %v6596
    %v7178 = vunpack.c.h.b16 %v6596
    %v7179 = vunpack.c.l.b16 %v6597
    %v7180 = vunpack.c.h.b16 %v6597
    %v7181 = vunpack.c.l.b16 %v6598
    %v7182 = vunpack.c.h.b16 %v6598
    %v7183 = vunpack.c.l.b16 %v6599
    %v7184 = vunpack.c.h.b16 %v6599
    %v7185 = vunpack.c.l.b16 %v6600
    %v7186 = vunpack.c.h.b16 %v6600
    %v7187 = vunpack.c.l.b16 %v6601
    %v7188 = vunpack.c.h.b16 %v6601
    %v7189 = vunpack.c.l.b16 %v6602
    %v7190 = vunpack.c.h.b16 %v6602
    %v7191 = vunpack.c.l.b16 %v6603
    %v7192 = vunpack.c.h.b16 %v6603
    %v7193 = vunpack.c.l.b16 %v6604
    %v7194 = vunpack.c.h.b16 %v6604
    %v7195 = vunpack.c.l.b16 %v6605
    %v7196 = vunpack.c.h.b16 %v6605
    %v7197 = vunpack.c.l.b16 %v6606
    %v7198 = vunpack.c.h.b16 %v6606
    %v7199 = vunpack.c.l.b16 %v6607
    %v7200 = vunpack.c.h.b16 %v6607
    %v7201 = vunpack.c.l.b16 %v6608
    %v7202 = vunpack.c.h.b16 %v6608
    %v7203 = vunpack.c.l.b16 %v6609
    %v7204 = vunpack.c.h.b16 %v6609
    %v7205 = vunpack.c.l.b16 %v6610
    %v7206 = vunpack.c.h.b16 %v6610
    %v7207 = vunpack.c.l.b16 %v6611
    %v7208 = vunpack.c.h.b16 %v6611
    %v7209 = vunpack.c.l.b16 %v6612
    %v7210 = vunpack.c.h.b16 %v6612
    %v7211 = vpack.c.b16 %v6831, %v6827
    %v7212 = vpack.c.b16 %v6832, %v6828
    %v7213 = vpack.c.b16 %v6833, %v6829
    %v7214 = vpack.c.b16 %v6834, %v6830
    %v7215 = vpack.c.b16 %v6839, %v6835
    %v7216 = vpack.c.b16 %v6840, %v6836
    %v7217 = vpack.c.b16 %v6841, %v6837
    %v7218 = vpack.c.b16 %v6842, %v6838
    %v7219 = vpack.c.b16 %v6847, %v6843
    %v7220 = vpack.c.b16 %v6848, %v6844
    %v7221 = vpack.c.b16 %v6849, %v6845
    %v7222 = vpack.c.b16 %v6850, %v6846
    %v7223 = vpack.c.b16 %v6855, %v6851
    %v7224 = vpack.c.b16 %v6856, %v6852
    %v7225 = vpack.c.b16 %v6857, %v6853
    %v7226 = vpack.c.b16 %v6858, %v6854
    %v7227 = vpack.c.b16 %v6863, %v6859
    %v7228 = vpack.c.b16 %v6864, %v6860
    %v7229 = vpack.c.b16 %v6865, %v6861
    %v7230 = vpack.c.b16 %v6866, %v6862
    %v7231 = vpack.c.b16 %v6871, %v6867
    %v7232 = vpack.c.b16 %v6872, %v6868
    %v7233 = vpack.c.b16 %v6873, %v6869
    %v7234 = vpack.c.b16 %v6874, %v6870
    %v7235 = vpack.c.b16 %v6879, %v6875
    %v7236 = vpack.c.b16 %v6880, %v6876
    %v7237 = vpack.c.b16 %v6881, %v6877
    %v7238 = vpack.c.b16 %v6882, %v6878
    %v7239 = vpack.c.b16 %v6887, %v6883
    %v7240 = vpack.c.b16 %v6888, %v6884
    %v7241 = vpack.c.b16 %v6889, %v6885
    %v7242 = vpack.c.b16 %v6890, %v6886
    %v7243 = vpack.c.b16 %v6895, %v6891
    %v7244 = vpack.c.b16 %v6896, %v6892
    %v7245 = vpack.c.b16 %v6897, %v6893
    %v7246 = vpack.c.b16 %v6898, %v6894
    %v7247 = vpack.c.b16 %v6903, %v6899
    %v7248 = vpack.c.b16 %v6904, %v6900
    %v7249 = vpack.c.b16 %v6905, %v6901
    %v7250 = vpack.c.b16 %v6906, %v6902
    %v7251 = vpack.c.b16 %v6911, %v6907
    %v7252 = vpack.c.b16 %v6912, %v6908
    %v7253 = vpack.c.b16 %v6913, %v6909
    %v7254 = vpack.c.b16 %v6914, %v6910
    %v7255 = vpack.c.b16 %v6919, %v6915
    %v7256 = vpack.c.b16 %v6920, %v6916
    %v7257 = vpack.c.b16 %v6921, %v6917
    %v7258 = vpack.c.b16 %v6922, %v6918
    %v7259 = vpack.c.b16 %v6927, %v6923
    %v7260 = vpack.c.b16 %v6928, %v6924
    %v7261 = vpack.c.b16 %v6929, %v6925
    %v7262 = vpack.c.b16 %v6930, %v6926
    %v7263 = vpack.c.b16 %v6935, %v6931
    %v7264 = vpack.c.b16 %v6936, %v6932
    %v7265 = vpack.c.b16 %v6937, %v6933
    %v7266 = vpack.c.b16 %v6938, %v6934
    %v7267 = vpack.c.b16 %v6943, %v6939
    %v7268 = vpack.c.b16 %v6944, %v6940
    %v7269 = vpack.c.b16 %v6945, %v6941
    %v7270 = vpack.c.b16 %v6946, %v6942
    %v7271 = vpack.c.b16 %v6951, %v6947
    %v7272 = vpack.c.b16 %v6952, %v6948
    %v7273 = vpack.c.b16 %v6953, %v6949
    %v7274 = vpack.c.b16 %v6954, %v6950
    %v7275 = vpack.c.b16 %v6959, %v6955
    %v7276 = vpack.c.b16 %v6960, %v6956
    %v7277 = vpack.c.b16 %v6961, %v6957
    %v7278 = vpack.c.b16 %v6962, %v6958
    %v7279 = vpack.c.b16 %v6967, %v6963
    %v7280 = vpack.c.b16 %v6968, %v6964
    %v7281 = vpack.c.b16 %v6969, %v6965
    %v7282 = vpack.c.b16 %v6970, %v6966
    %v7283 = vpack.c.b16 %v6975, %v6971
    %v7284 = vpack.c.b16 %v6976, %v6972
    %v7285 = vpack.c.b16 %v6977, %v6973
    %v7286 = vpack.c.b16 %v6978, %v6974
    %v7287 = vpack.c.b16 %v6983, %v6979
    %v7288 = vpack.c.b16 %v6984, %v6980
    %v7289 = vpack.c.b16 %v6985, %v6981
    %v7290 = vpack.c.b16 %v6986, %v6982
    %v7291 = vpack.c.b16 %v6991, %v6987
    %v7292 = vpack.c.b16 %v6992, %v6988
    %v7293 = vpack.c.b16 %v6993, %v6989
    %v7294 = vpack.c.b16 %v6994, %v6990
    %v7295 = vpack.c.b16 %v6999, %v6995
    %v7296 = vpack.c.b16 %v7000, %v6996
    %v7297 = vpack.c.b16 %v7001, %v6997
    %v7298 = vpack.c.b16 %v7002, %v6998
    %v7299 = vpack.c.b16 %v7007, %v7003
    %v7300 = vpack.c.b16 %v7008, %v7004
    %v7301 = vpack.c.b16 %v7009, %v7005
    %v7302 = vpack.c.b16 %v7010, %v7006
    %v7303 = vpack.c.b16 %v7015, %v7011
    %v7304 = vpack.c.b16 %v7016, %v7012
    %v7305 = vpack.c.b16 %v7017, %v7013
    %v7306 = vpack.c.b16 %v7018, %v7014
    %v7307 = vpack.c.b16 %v7023, %v7019
    %v7308 = vpack.c.b16 %v7024, %v7020
    %v7309 = vpack.c.b16 %v7025, %v7021
    %v7310 = vpack.c.b16 %v7026, %v7022
    %v7311 = vpack.c.b16 %v7031, %v7027
    %v7312 = vpack.c.b16 %v7032, %v7028
    %v7313 = vpack.c.b16 %v7033, %v7029
    %v7314 = vpack.c.b16 %v7034, %v7030
    %v7315 = vpack.c.b16 %v7039, %v7035
    %v7316 = vpack.c.b16 %v7040, %v7036
    %v7317 = vpack.c.b16 %v7041, %v7037
    %v7318 = vpack.c.b16 %v7042, %v7038
    %v7319 = vpack.c.b16 %v7047, %v7043
    %v7320 = vpack.c.b16 %v7048, %v7044
    %v7321 = vpack.c.b16 %v7049, %v7045
    %v7322 = vpack.c.b16 %v7050, %v7046
    %v7323 = vpack.c.b16 %v7055, %v7051
    %v7324 = vpack.c.b16 %v7056, %v7052
    %v7325 = vpack.c.b16 %v7057, %v7053
    %v7326 = vpack.c.b16 %v7058, %v7054
    %v7327 = vpack.c.b16 %v7063, %v7059
    %v7328 = vpack.c.b16 %v7064, %v7060
    %v7329 = vpack.c.b16 %v7065, %v7061
    %v7330 = vpack.c.b16 %v7066, %v7062
    %v7331 = vpack.c.b16 %v7071, %v7067
    %v7332 = vpack.c.b16 %v7072, %v7068
    %v7333 = vpack.c.b16 %v7073, %v7069
    %v7334 = vpack.c.b16 %v7074, %v7070
    %v7335 = vpack.c.b16 %v7079, %v7075
    %v7336 = vpack.c.b16 %v7080, %v7076
    %v7337 = vpack.c.b16 %v7081, %v7077
    %v7338 = vpack.c.b16 %v7082, %v7078
    %v7339 = vpack.c.b16 %v7087, %v7083
    %v7340 = vpack.c.b16 %v7088, %v7084
    %v7341 = vpack.c.b16 %v7089, %v7085
    %v7342 = vpack.c.b16 %v7090, %v7086
    %v7343 = vpack.c.b16 %v7095, %v7091
    %v7344 = vpack.c.b16 %v7096, %v7092
    %v7345 = vpack.c.b16 %v7097, %v7093
    %v7346 = vpack.c.b16 %v7098, %v7094
    %v7347 = vpack.c.b16 %v7103, %v7099
    %v7348 = vpack.c.b16 %v7104, %v7100
    %v7349 = vpack.c.b16 %v7105, %v7101
    %v7350 = vpack.c.b16 %v7106, %v7102
    %v7351 = vpack.c.b16 %v7111, %v7107
    %v7352 = vpack.c.b16 %v7112, %v7108
    %v7353 = vpack.c.b16 %v7113, %v7109
    %v7354 = vpack.c.b16 %v7114, %v7110
    %v7355 = vpack.c.b16 %v7119, %v7115
    %v7356 = vpack.c.b16 %v7120, %v7116
    %v7357 = vpack.c.b16 %v7121, %v7117
    %v7358 = vpack.c.b16 %v7122, %v7118
    %v7359 = vpack.c.b16 %v7127, %v7123
    %v7360 = vpack.c.b16 %v7128, %v7124
    %v7361 = vpack.c.b16 %v7129, %v7125
    %v7362 = vpack.c.b16 %v7130, %v7126
    %v7363 = vpack.c.b16 %v7135, %v7131
    %v7364 = vpack.c.b16 %v7136, %v7132
    %v7365 = vpack.c.b16 %v7137, %v7133
    %v7366 = vpack.c.b16 %v7138, %v7134
    %v7367 = vpack.c.b16 %v7143, %v7139
    %v7368 = vpack.c.b16 %v7144, %v7140
    %v7369 = vpack.c.b16 %v7145, %v7141
    %v7370 = vpack.c.b16 %v7146, %v7142
    %v7371 = vpack.c.b16 %v7151, %v7147
    %v7372 = vpack.c.b16 %v7152, %v7148
    %v7373 = vpack.c.b16 %v7153, %v7149
    %v7374 = vpack.c.b16 %v7154, %v7150
    %v7375 = vpack.c.b16 %v7159, %v7155
    %v7376 = vpack.c.b16 %v7160, %v7156
    %v7377 = vpack.c.b16 %v7161, %v7157
    %v7378 = vpack.c.b16 %v7162, %v7158
    %v7379 = vpack.c.b16 %v7167, %v7163
    %v7380 = vpack.c.b16 %v7168, %v7164
    %v7381 = vpack.c.b16 %v7169, %v7165
    %v7382 = vpack.c.b16 %v7170, %v7166
    %v7383 = vpack.c.b16 %v7175, %v7171
    %v7384 = vpack.c.b16 %v7176, %v7172
    %v7385 = vpack.c.b16 %v7177, %v7173
    %v7386 = vpack.c.b16 %v7178, %v7174
    %v7387 = vpack.c.b16 %v7183, %v7179
    %v7388 = vpack.c.b16 %v7184, %v7180
    %v7389 = vpack.c.b16 %v7185, %v7181
    %v7390 = vpack.c.b16 %v7186, %v7182
    %v7391 = vpack.c.b16 %v7191, %v7187
    %v7392 = vpack.c.b16 %v7192, %v7188
    %v7393 = vpack.c.b16 %v7193, %v7189
    %v7394 = vpack.c.b16 %v7194, %v7190
    %v7395 = vpack.c.b16 %v7199, %v7195
    %v7396 = vpack.c.b16 %v7200, %v7196
    %v7397 = vpack.c.b16 %v7201, %v7197
    %v7398 = vpack.c.b16 %v7202, %v7198
    %v7399 = vpack.c.b16 %v7207, %v7203
    %v7400 = vpack.c.b16 %v7208, %v7204
    %v7401 = vpack.c.b16 %v7209, %v7205
    %v7402 = vpack.c.b16 %v7210, %v7206
    %7595 = vmatprep.subr.bf16.mxu0 %v7212
    %7596 = vmatpush1.bf16.msra.mxu0 %v7211
    %7597 = vmatprep.subr.bf16.mxu0 %v7216
    %7598 = vmatpush1.bf16.msra.mxu0 %v7215
    %7599 = vmatprep.subr.bf16.mxu0 %v7220
    %7600 = vmatpush1.bf16.msra.mxu0 %v7219
    %7601 = vmatprep.subr.bf16.mxu0 %v7224
    %7602 = vmatpush1.bf16.msra.mxu0 %v7223
    %7603 = vmatprep.subr.bf16.mxu0 %v7228
    %7604 = vmatpush1.bf16.msra.mxu0 %v7227
    %7605 = vmatprep.subr.bf16.mxu0 %v7232
    %7606 = vmatpush1.bf16.msra.mxu0 %v7231
    %7607 = vmatprep.subr.bf16.mxu0 %v7236
    %7608 = vmatpush1.bf16.msra.mxu0 %v7235
    %7609 = vmatprep.subr.bf16.mxu0 %v7240
    %7610 = vmatpush1.bf16.msra.mxu0 %v7239
    %7611 = vmatprep.subr.bf16.mxu0 %v7244
    %7612 = vmatpush1.bf16.msra.mxu0 %v7243
    %7613 = vmatprep.subr.bf16.mxu0 %v7248
    %7614 = vmatpush1.bf16.msra.mxu0 %v7247
    %7615 = vmatprep.subr.bf16.mxu0 %v7252
    %7616 = vmatpush1.bf16.msra.mxu0 %v7251
    %7617 = vmatprep.subr.bf16.mxu0 %v7256
    %7618 = vmatpush1.bf16.msra.mxu0 %v7255
    %7619 = vmatprep.subr.bf16.mxu0 %v7260
    %7620 = vmatpush1.bf16.msra.mxu0 %v7259
    %7621 = vmatprep.subr.bf16.mxu0 %v7264
    %7622 = vmatpush1.bf16.msra.mxu0 %v7263
    %7623 = vmatprep.subr.bf16.mxu0 %v7268
    %7624 = vmatpush1.bf16.msra.mxu0 %v7267
    %7625 = vmatprep.subr.bf16.mxu0 %v7272
    %7626 = vmatpush1.bf16.msra.mxu0 %v7271
    %7627 = vmatprep.mubr.bf16.mxu0 %v6416
    %7628 = vmatmul.mubr.bf16.gmra.mrb[0].mxu0 %v6415
    %v7629 = vpop.f32.mrb[0].mxu0
    %v7630 = vadd.f32 %v6618, %v7629
    %v7631 = vpop.f32.mrb[0].mxu0
    %v7632 = vadd.f32 %v6622, %v7631
    %v7633 = vpop.f32.mrb[0].mxu0
    %v7634 = vpop.f32.mrb[0].mxu0
    %7635 = vdwg.mxu0
    %7636 = vmatprep.subr.bf16.mxu0 %v7276
    %7637 = vmatpush1.bf16.msra.mxu0 %v7275
    %7638 = vmatprep.subr.bf16.mxu0 %v7280
    %7639 = vmatpush1.bf16.msra.mxu0 %v7279
    %7640 = vmatprep.subr.bf16.mxu0 %v7284
    %7641 = vmatpush1.bf16.msra.mxu0 %v7283
    %7642 = vmatprep.subr.bf16.mxu0 %v7288
    %7643 = vmatpush1.bf16.msra.mxu0 %v7287
    %7644 = vmatprep.subr.bf16.mxu0 %v7292
    %7645 = vmatpush1.bf16.msra.mxu0 %v7291
    %7646 = vmatprep.subr.bf16.mxu0 %v7296
    %7647 = vmatpush1.bf16.msra.mxu0 %v7295
    %7648 = vmatprep.subr.bf16.mxu0 %v7300
    %7649 = vmatpush1.bf16.msra.mxu0 %v7299
    %7650 = vmatprep.subr.bf16.mxu0 %v7304
    %7651 = vmatpush1.bf16.msra.mxu0 %v7303
    %7652 = vmatprep.subr.bf16.mxu0 %v7308
    %7653 = vmatpush1.bf16.msra.mxu0 %v7307
    %7654 = vmatprep.subr.bf16.mxu0 %v7312
    %7655 = vmatpush1.bf16.msra.mxu0 %v7311
    %7656 = vmatprep.subr.bf16.mxu0 %v7316
    %7657 = vmatpush1.bf16.msra.mxu0 %v7315
    %7658 = vmatprep.subr.bf16.mxu0 %v7320
    %7659 = vmatpush1.bf16.msra.mxu0 %v7319
    %7660 = vmatprep.subr.bf16.mxu0 %v7324
    %7661 = vmatpush1.bf16.msra.mxu0 %v7323
    %7662 = vmatprep.subr.bf16.mxu0 %v7328
    %7663 = vmatpush1.bf16.msra.mxu0 %v7327
    %7664 = vmatprep.subr.bf16.mxu0 %v7332
    %7665 = vmatpush1.bf16.msra.mxu0 %v7331
    %7666 = vmatprep.subr.bf16.mxu0 %v7336
    %7667 = vmatpush1.bf16.msra.mxu0 %v7335
    %7668 = vmatprep.mubr.bf16.mxu0 %v6418
    %7669 = vmatmul.mubr.bf16.gmra.mrb[0].mxu0 %v6417
    %v7670 = vpop.f32.mrb[0].mxu0
    %v7671 = vadd.f32 %v7630, %v7670
    %v7672 = vpop.f32.mrb[0].mxu0
    %v7673 = vadd.f32 %v7632, %v7672
    %v7674 = vpop.f32.mrb[0].mxu0
    %v7675 = vpop.f32.mrb[0].mxu0
    %7676 = vdwg.mxu0
    %7677 = vmatprep.subr.bf16.mxu0 %v7340
    %7678 = vmatpush1.bf16.msra.mxu0 %v7339
    %7679 = vmatprep.subr.bf16.mxu0 %v7344
    %7680 = vmatpush1.bf16.msra.mxu0 %v7343
    %7681 = vmatprep.subr.bf16.mxu0 %v7348
    %7682 = vmatpush1.bf16.msra.mxu0 %v7347
    %7683 = vmatprep.subr.bf16.mxu0 %v7352
    %7684 = vmatpush1.bf16.msra.mxu0 %v7351
    %7685 = vmatprep.subr.bf16.mxu0 %v7356
    %7686 = vmatpush1.bf16.msra.mxu0 %v7355
    %7687 = vmatprep.subr.bf16.mxu0 %v7360
    %7688 = vmatpush1.bf16.msra.mxu0 %v7359
    %7689 = vmatprep.subr.bf16.mxu0 %v7364
    %7690 = vmatpush1.bf16.msra.mxu0 %v7363
    %7691 = vmatprep.subr.bf16.mxu0 %v7368
    %7692 = vmatpush1.bf16.msra.mxu0 %v7367
    %7693 = vmatprep.subr.bf16.mxu0 %v7372
    %7694 = vmatpush1.bf16.msra.mxu0 %v7371
    %7695 = vmatprep.subr.bf16.mxu0 %v7376
    %7696 = vmatpush1.bf16.msra.mxu0 %v7375
    %7697 = vmatprep.subr.bf16.mxu0 %v7380
    %7698 = vmatpush1.bf16.msra.mxu0 %v7379
    %7699 = vmatprep.subr.bf16.mxu0 %v7384
    %7700 = vmatpush1.bf16.msra.mxu0 %v7383
    %7701 = vmatprep.subr.bf16.mxu0 %v7388
    %7702 = vmatpush1.bf16.msra.mxu0 %v7387
    %7703 = vmatprep.subr.bf16.mxu0 %v7392
    %7704 = vmatpush1.bf16.msra.mxu0 %v7391
    %7705 = vmatprep.subr.bf16.mxu0 %v7396
    %7706 = vmatpush1.bf16.msra.mxu0 %v7395
    %7707 = vmatprep.subr.bf16.mxu0 %v7400
    %7708 = vmatpush1.bf16.msra.mxu0 %v7399
    %7709 = vmatprep.mubr.bf16.mxu0 %v6420
    %7710 = vmatmul.mubr.bf16.gmra.mrb[0].mxu0 %v6419
    %v7711 = vpop.f32.mrb[0].mxu0
    %v7712 = vadd.f32 %v7671, %v7711
    %v7713 = vpop.f32.mrb[0].mxu0
    %v7714 = vadd.f32 %v7673, %v7713
    %v7715 = vpop.f32.mrb[0].mxu0
    %v7716 = vpop.f32.mrb[0].mxu0
    %7717 = vdwg.mxu0
    %7718 = vmatprep.subr.bf16.mxu0 %v7214
    %7719 = vmatpush1.bf16.msra.mxu0 %v7213
    %7720 = vmatprep.subr.bf16.mxu0 %v7218
    %7721 = vmatpush1.bf16.msra.mxu0 %v7217
    %7722 = vmatprep.subr.bf16.mxu0 %v7222
    %7723 = vmatpush1.bf16.msra.mxu0 %v7221
    %7724 = vmatprep.subr.bf16.mxu0 %v7226
    %7725 = vmatpush1.bf16.msra.mxu0 %v7225
    %7726 = vmatprep.subr.bf16.mxu0 %v7230
    %7727 = vmatpush1.bf16.msra.mxu0 %v7229
    %7728 = vmatprep.subr.bf16.mxu0 %v7234
    %7729 = vmatpush1.bf16.msra.mxu0 %v7233
    %7730 = vmatprep.subr.bf16.mxu0 %v7238
    %7731 = vmatpush1.bf16.msra.mxu0 %v7237
    %7732 = vmatprep.subr.bf16.mxu0 %v7242
    %7733 = vmatpush1.bf16.msra.mxu0 %v7241
    %7734 = vmatprep.subr.bf16.mxu0 %v7246
    %7735 = vmatpush1.bf16.msra.mxu0 %v7245
    %7736 = vmatprep.subr.bf16.mxu0 %v7250
    %7737 = vmatpush1.bf16.msra.mxu0 %v7249
    %7738 = vmatprep.subr.bf16.mxu0 %v7254
    %7739 = vmatpush1.bf16.msra.mxu0 %v7253
    %7740 = vmatprep.subr.bf16.mxu0 %v7258
    %7741 = vmatpush1.bf16.msra.mxu0 %v7257
    %7742 = vmatprep.subr.bf16.mxu0 %v7262
    %7743 = vmatpush1.bf16.msra.mxu0 %v7261
    %7744 = vmatprep.subr.bf16.mxu0 %v7266
    %7745 = vmatpush1.bf16.msra.mxu0 %v7265
    %7746 = vmatprep.subr.bf16.mxu0 %v7270
    %7747 = vmatpush1.bf16.msra.mxu0 %v7269
    %7748 = vmatprep.subr.bf16.mxu0 %v7274
    %7749 = vmatpush1.bf16.msra.mxu0 %v7273
    %7750 = vmatprep.mubr.bf16.mxu0 %v6416
    %7751 = vmatmul.mubr.bf16.gmra.mrb[0].mxu0 %v6415
    %v7752 = vpop.f32.mrb[0].mxu0
    %v7753 = vadd.f32 %v6626, %v7752
    %v7754 = vpop.f32.mrb[0].mxu0
    %v7755 = vadd.f32 %v6630, %v7754
    %v7756 = vpop.f32.mrb[0].mxu0
    %v7757 = vpop.f32.mrb[0].mxu0
    %7758 = vdwg.mxu0
    %7759 = vmatprep.subr.bf16.mxu0 %v7278
    %7760 = vmatpush1.bf16.msra.mxu0 %v7277
    %7761 = vmatprep.subr.bf16.mxu0 %v7282
    %7762 = vmatpush1.bf16.msra.mxu0 %v7281
    %7763 = vmatprep.subr.bf16.mxu0 %v7286
    %7764 = vmatpush1.bf16.msra.mxu0 %v7285
    %7765 = vmatprep.subr.bf16.mxu0 %v7290
    %7766 = vmatpush1.bf16.msra.mxu0 %v7289
    %7767 = vmatprep.subr.bf16.mxu0 %v7294
    %7768 = vmatpush1.bf16.msra.mxu0 %v7293
    %7769 = vmatprep.subr.bf16.mxu0 %v7298
    %7770 = vmatpush1.bf16.msra.mxu0 %v7297
    %7771 = vmatprep.subr.bf16.mxu0 %v7302
    %7772 = vmatpush1.bf16.msra.mxu0 %v7301
    %7773 = vmatprep.subr.bf16.mxu0 %v7306
    %7774 = vmatpush1.bf16.msra.mxu0 %v7305
    %7775 = vmatprep.subr.bf16.mxu0 %v7310
    %7776 = vmatpush1.bf16.msra.mxu0 %v7309
    %7777 = vmatprep.subr.bf16.mxu0 %v7314
    %7778 = vmatpush1.bf16.msra.mxu0 %v7313
    %7779 = vmatprep.subr.bf16.mxu0 %v7318
    %7780 = vmatpush1.bf16.msra.mxu0 %v7317
    %7781 = vmatprep.subr.bf16.mxu0 %v7322
    %7782 = vmatpush1.bf16.msra.mxu0 %v7321
    %7783 = vmatprep.subr.bf16.mxu0 %v7326
    %7784 = vmatpush1.bf16.msra.mxu0 %v7325
    %7785 = vmatprep.subr.bf16.mxu0 %v7330
    %7786 = vmatpush1.bf16.msra.mxu0 %v7329
    %7787 = vmatprep.subr.bf16.mxu0 %v7334
    %7788 = vmatpush1.bf16.msra.mxu0 %v7333
    %7789 = vmatprep.subr.bf16.mxu0 %v7338
    %7790 = vmatpush1.bf16.msra.mxu0 %v7337
    %7791 = vmatprep.mubr.bf16.mxu0 %v6418
    %7792 = vmatmul.mubr.bf16.gmra.mrb[0].mxu0 %v6417
    %v7793 = vpop.f32.mrb[0].mxu0
    %v7794 = vadd.f32 %v7753, %v7793
    %v7795 = vpop.f32.mrb[0].mxu0
    %v7796 = vadd.f32 %v7755, %v7795
    %v7797 = vpop.f32.mrb[0].mxu0
    %v7798 = vpop.f32.mrb[0].mxu0
    %7799 = vdwg.mxu0
    %7800 = vmatprep.subr.bf16.mxu0 %v7342
    %7801 = vmatpush1.bf16.msra.mxu0 %v7341
    %7802 = vmatprep.subr.bf16.mxu0 %v7346
    %7803 = vmatpush1.bf16.msra.mxu0 %v7345
    %7804 = vmatprep.subr.bf16.mxu0 %v7350
    %7805 = vmatpush1.bf16.msra.mxu0 %v7349
    %7806 = vmatprep.subr.bf16.mxu0 %v7354
    %7807 = vmatpush1.bf16.msra.mxu0 %v7353
    %7808 = vmatprep.subr.bf16.mxu0 %v7358
    %7809 = vmatpush1.bf16.msra.mxu0 %v7357
    %7810 = vmatprep.subr.bf16.mxu0 %v7362
    %7811 = vmatpush1.bf16.msra.mxu0 %v7361
    %7812 = vmatprep.subr.bf16.mxu0 %v7366
    %7813 = vmatpush1.bf16.msra.mxu0 %v7365
    %7814 = vmatprep.subr.bf16.mxu0 %v7370
    %7815 = vmatpush1.bf16.msra.mxu0 %v7369
    %7816 = vmatprep.subr.bf16.mxu0 %v7374
    %7817 = vmatpush1.bf16.msra.mxu0 %v7373
    %7818 = vmatprep.subr.bf16.mxu0 %v7378
    %7819 = vmatpush1.bf16.msra.mxu0 %v7377
    %7820 = vmatprep.subr.bf16.mxu0 %v7382
    %7821 = vmatpush1.bf16.msra.mxu0 %v7381
    %7822 = vmatprep.subr.bf16.mxu0 %v7386
    %7823 = vmatpush1.bf16.msra.mxu0 %v7385
    %7824 = vmatprep.subr.bf16.mxu0 %v7390
    %7825 = vmatpush1.bf16.msra.mxu0 %v7389
    %7826 = vmatprep.subr.bf16.mxu0 %v7394
    %7827 = vmatpush1.bf16.msra.mxu0 %v7393
    %7828 = vmatprep.subr.bf16.mxu0 %v7398
    %7829 = vmatpush1.bf16.msra.mxu0 %v7397
    %7830 = vmatprep.subr.bf16.mxu0 %v7402
    %7831 = vmatpush1.bf16.msra.mxu0 %v7401
    %7832 = vmatprep.mubr.bf16.mxu0 %v6420
    %7833 = vmatmul.mubr.bf16.gmra.mrb[0].mxu0 %v6419
    %v7834 = vpop.f32.mrb[0].mxu0
    %v7835 = vadd.f32 %v7794, %v7834
    %v7836 = vpop.f32.mrb[0].mxu0
    %v7837 = vadd.f32 %v7796, %v7836
    %v7838 = vpop.f32.mrb[0].mxu0
    %v7839 = vpop.f32.mrb[0].mxu0
    %7840 = vdwg.mxu0
    %v7841 = vld [vmem:[#allocation26] sm:$0xf]
    %v7842 = vld [vmem:[#allocation28] sm:$0xf]
    %v7843 = vadd.f32 %v7712, %v7714
    %v7844 = vadd.f32 %v7843, %v7835
    %v7845 = vadd.f32 %v7844, %v7837
    %7846 = vadd.xlane.f32.xlu0 %v7845
    %v7847 = vpop.xlane.xlu0 %7846
    %v7848 = vmul.f32 %v7712, %v7712
    %v7849 = vmul.f32 %v7714, %v7714
    %v7850 = vmul.f32 %v7835, %v7835
    %v7851 = vmul.f32 %v7837, %v7837
    %v7852 = vadd.f32 %v7848, %v7849
    %v7853 = vadd.f32 %v7852, %v7850
    %v7854 = vadd.f32 %v7853, %v7851
    %7855 = vadd.xlane.f32.xlu0 %v7854
    %v7856 = vpop.xlane.xlu0 %7855
    %v7857 = vmul.f32 %v7847, 0.001953125
    %v7858 = vmul.f32 %v7856, 0.001953125
    %v7859 = vmul.f32 %v7857, %v7857
    %v7860 = vsub.f32 %v7858, %v7859
    %v7861 = vmax.f32 %v7860, 0.0
    %v7862 = vsub.f32 %v7712, %v7857
    %v7863 = vsub.f32 %v7714, %v7857
    %v7864 = vsub.f32 %v7835, %v7857
    %v7865 = vsub.f32 %v7837, %v7857
    %v7866 = vadd.f32 %v7861, 1e-05
    %v7867 = vrsqrt.pop %v7866
    %v7868 = vmul.f32 %v7862, %v7867
    %v7869 = vmul.f32 %v7863, %v7867
    %v7870 = vmul.f32 %v7864, %v7867
    %v7871 = vmul.f32 %v7865, %v7867
    %v7873 = vlaneseq
    %v7874 = vshrl.u32 %v7873, 7
    %v7875 = vsub.s32 0, %v7874
    %v7876 = vrot.slane %v7841, %v7875
    %v7877 = vlaneseq
    %v7878 = vshrl.u32 %v7877, 7
    %v7879 = vsub.s32 1, %v7878
    %v7880 = vrot.slane %v7841, %v7879
    %v7881 = vlaneseq
    %v7882 = vshrl.u32 %v7881, 7
    %v7883 = vsub.s32 2, %v7882
    %v7884 = vrot.slane %v7841, %v7883
    %v7885 = vlaneseq
    %v7886 = vshrl.u32 %v7885, 7
    %v7887 = vsub.s32 3, %v7886
    %v7888 = vrot.slane %v7841, %v7887
    %v7893 = vmul.f32 %v7868, %v7876
    %v7894 = vmul.f32 %v7869, %v7880
    %v7895 = vmul.f32 %v7870, %v7884
    %v7896 = vmul.f32 %v7871, %v7888
    %v7898 = vlaneseq
    %v7899 = vshrl.u32 %v7898, 7
    %v7900 = vsub.s32 0, %v7899
    %v7901 = vrot.slane %v7842, %v7900
    %v7902 = vlaneseq
    %v7903 = vshrl.u32 %v7902, 7
    %v7904 = vsub.s32 1, %v7903
    %v7905 = vrot.slane %v7842, %v7904
    %v7906 = vlaneseq
    %v7907 = vshrl.u32 %v7906, 7
    %v7908 = vsub.s32 2, %v7907
    %v7909 = vrot.slane %v7842, %v7908
    %v7910 = vlaneseq
    %v7911 = vshrl.u32 %v7910, 7
    %v7912 = vsub.s32 3, %v7911
    %v7913 = vrot.slane %v7842, %v7912
    %v7918 = vadd.f32 %v7893, %v7901
    %v7919 = vadd.f32 %v7894, %v7905
    %v7920 = vadd.f32 %v7895, %v7909
    %v7921 = vadd.f32 %v7896, %v7913
    %v7922 = vmax.f32 %v7918, 0.0
    %v7923 = vmax.f32 %v7919, 0.0
    %v7924 = vmax.f32 %v7920, 0.0
    %v7925 = vmax.f32 %v7921, 0.0
    %v7926 = vpack.c.bf16 %v7922, %v7922
    %v7927 = vpack.c.bf16 %v7923, %v7923
    %v7928 = vpack.c.bf16 %v7924, %v7924
    %v7929 = vpack.c.bf16 %v7925, %v7925
    %v7930 = vld [vmem:[#allocation29] sm:$0xf]
    %v7931 = vld [vmem:[#allocation29 + $0x4] sm:$0xf]
    %v7932 = vld [vmem:[#allocation29 + $0x8] sm:$0xf]
    %v7933 = vld [vmem:[#allocation29 + $0xc] sm:$0xf]
    %v7934 = vld [vmem:[#allocation29 + $0x10] sm:$0xf]
    %v7935 = vld [vmem:[#allocation29 + $0x14] sm:$0xf]
    %v7936 = vld [vmem:[#allocation29 + $0x18] sm:$0xf]
    %v7937 = vld [vmem:[#allocation29 + $0x1c] sm:$0xf]
    %v7938 = vld [vmem:[#allocation29 + $0x20] sm:$0xf]
    %v7939 = vld [vmem:[#allocation29 + $0x24] sm:$0xf]
    %v7940 = vld [vmem:[#allocation29 + $0x28] sm:$0xf]
    %v7941 = vld [vmem:[#allocation29 + $0x2c] sm:$0xf]
    %v7942 = vld [vmem:[#allocation29 + $0x30] sm:$0xf]
    %v7943 = vld [vmem:[#allocation29 + $0x34] sm:$0xf]
    %v7944 = vld [vmem:[#allocation29 + $0x38] sm:$0xf]
    %v7945 = vld [vmem:[#allocation29 + $0x3c] sm:$0xf]
    %v7946 = vld [vmem:[#allocation29 + $0x40] sm:$0xf]
    %v7947 = vld [vmem:[#allocation29 + $0x44] sm:$0xf]
    %v7948 = vld [vmem:[#allocation29 + $0x48] sm:$0xf]
    %v7949 = vld [vmem:[#allocation29 + $0x4c] sm:$0xf]
    %v7950 = vld [vmem:[#allocation29 + $0x50] sm:$0xf]
    %v7951 = vld [vmem:[#allocation29 + $0x54] sm:$0xf]
    %v7952 = vld [vmem:[#allocation29 + $0x58] sm:$0xf]
    %v7953 = vld [vmem:[#allocation29 + $0x5c] sm:$0xf]
    %v7954 = vld [vmem:[#allocation29 + $0x60] sm:$0xf]
    %v7955 = vld [vmem:[#allocation29 + $0x64] sm:$0xf]
    %v7956 = vld [vmem:[#allocation29 + $0x68] sm:$0xf]
    %v7957 = vld [vmem:[#allocation29 + $0x6c] sm:$0xf]
    %v7958 = vld [vmem:[#allocation29 + $0x70] sm:$0xf]
    %v7959 = vld [vmem:[#allocation29 + $0x74] sm:$0xf]
    %v7960 = vld [vmem:[#allocation29 + $0x78] sm:$0xf]
    %v7961 = vld [vmem:[#allocation29 + $0x7c] sm:$0xf]
    %v7962 = vld [vmem:[#allocation29 + $0x80] sm:$0xf]
    %v7963 = vld [vmem:[#allocation29 + $0x84] sm:$0xf]
    %v7964 = vld [vmem:[#allocation29 + $0x88] sm:$0xf]
    %v7965 = vld [vmem:[#allocation29 + $0x8c] sm:$0xf]
    %v7966 = vld [vmem:[#allocation29 + $0x90] sm:$0xf]
    %v7967 = vld [vmem:[#allocation29 + $0x94] sm:$0xf]
    %v7968 = vld [vmem:[#allocation29 + $0x98] sm:$0xf]
    %v7969 = vld [vmem:[#allocation29 + $0x9c] sm:$0xf]
    %v7970 = vld [vmem:[#allocation29 + $0xa0] sm:$0xf]
    %v7971 = vld [vmem:[#allocation29 + $0xa4] sm:$0xf]
    %v7972 = vld [vmem:[#allocation29 + $0xa8] sm:$0xf]
    %v7973 = vld [vmem:[#allocation29 + $0xac] sm:$0xf]
    %v7974 = vld [vmem:[#allocation29 + $0xb0] sm:$0xf]
    %v7975 = vld [vmem:[#allocation29 + $0xb4] sm:$0xf]
    %v7976 = vld [vmem:[#allocation29 + $0xb8] sm:$0xf]
    %v7977 = vld [vmem:[#allocation29 + $0xbc] sm:$0xf]
    %v7978 = vld [vmem:[#allocation29 + $0xc0] sm:$0xf]
    %v7979 = vld [vmem:[#allocation29 + $0xc4] sm:$0xf]
    %v7980 = vld [vmem:[#allocation29 + $0xc8] sm:$0xf]
    %v7981 = vld [vmem:[#allocation29 + $0xcc] sm:$0xf]
    %v7982 = vld [vmem:[#allocation29 + $0xd0] sm:$0xf]
    %v7983 = vld [vmem:[#allocation29 + $0xd4] sm:$0xf]
    %v7984 = vld [vmem:[#allocation29 + $0xd8] sm:$0xf]
    %v7985 = vld [vmem:[#allocation29 + $0xdc] sm:$0xf]
    %v7986 = vld [vmem:[#allocation29 + $0xe0] sm:$0xf]
    %v7987 = vld [vmem:[#allocation29 + $0xe4] sm:$0xf]
    %v7988 = vld [vmem:[#allocation29 + $0xe8] sm:$0xf]
    %v7989 = vld [vmem:[#allocation29 + $0xec] sm:$0xf]
    %v7990 = vld [vmem:[#allocation29 + $0xf0] sm:$0xf]
    %v7991 = vld [vmem:[#allocation29 + $0xf4] sm:$0xf]
    %v7992 = vld [vmem:[#allocation29 + $0xf8] sm:$0xf]
    %v7993 = vld [vmem:[#allocation29 + $0xfc] sm:$0xf]
    %v7994 = vld [vmem:[#allocation31] sm:$0x1]
    %v7996 = vlaneseq
    %v7997 = vshrl.u32 %v7996, 7
    %v7998 = vsub.s32 0, %v7997
    %v7999 = vrot.slane %v7994, %v7998
    %v8065 = vunpack.c.l.b16 %v7930
    %v8066 = vunpack.c.l.b16 %v7931
    %v8067 = vunpack.c.l.b16 %v7932
    %v8068 = vunpack.c.l.b16 %v7933
    %v8069 = vunpack.c.l.b16 %v7934
    %v8070 = vunpack.c.l.b16 %v7935
    %v8071 = vunpack.c.l.b16 %v7936
    %v8072 = vunpack.c.l.b16 %v7937
    %v8073 = vunpack.c.l.b16 %v7938
    %v8074 = vunpack.c.l.b16 %v7939
    %v8075 = vunpack.c.l.b16 %v7940
    %v8076 = vunpack.c.l.b16 %v7941
    %v8077 = vunpack.c.l.b16 %v7942
    %v8078 = vunpack.c.l.b16 %v7943
    %v8079 = vunpack.c.l.b16 %v7944
    %v8080 = vunpack.c.l.b16 %v7945
    %v8081 = vunpack.c.l.b16 %v7946
    %v8082 = vunpack.c.l.b16 %v7947
    %v8083 = vunpack.c.l.b16 %v7948
    %v8084 = vunpack.c.l.b16 %v7949
    %v8085 = vunpack.c.l.b16 %v7950
    %v8086 = vunpack.c.l.b16 %v7951
    %v8087 = vunpack.c.l.b16 %v7952
    %v8088 = vunpack.c.l.b16 %v7953
    %v8089 = vunpack.c.l.b16 %v7954
    %v8090 = vunpack.c.l.b16 %v7955
    %v8091 = vunpack.c.l.b16 %v7956
    %v8092 = vunpack.c.l.b16 %v7957
    %v8093 = vunpack.c.l.b16 %v7958
    %v8094 = vunpack.c.l.b16 %v7959
    %v8095 = vunpack.c.l.b16 %v7960
    %v8096 = vunpack.c.l.b16 %v7961
    %v8097 = vunpack.c.l.b16 %v7962
    %v8098 = vunpack.c.l.b16 %v7963
    %v8099 = vunpack.c.l.b16 %v7964
    %v8100 = vunpack.c.l.b16 %v7965
    %v8101 = vunpack.c.l.b16 %v7966
    %v8102 = vunpack.c.l.b16 %v7967
    %v8103 = vunpack.c.l.b16 %v7968
    %v8104 = vunpack.c.l.b16 %v7969
    %v8105 = vunpack.c.l.b16 %v7970
    %v8106 = vunpack.c.l.b16 %v7971
    %v8107 = vunpack.c.l.b16 %v7972
    %v8108 = vunpack.c.l.b16 %v7973
    %v8109 = vunpack.c.l.b16 %v7974
    %v8110 = vunpack.c.l.b16 %v7975
    %v8111 = vunpack.c.l.b16 %v7976
    %v8112 = vunpack.c.l.b16 %v7977
    %v8113 = vunpack.c.l.b16 %v7978
    %v8114 = vunpack.c.l.b16 %v7979
    %v8115 = vunpack.c.l.b16 %v7980
    %v8116 = vunpack.c.l.b16 %v7981
    %v8117 = vunpack.c.l.b16 %v7982
    %v8118 = vunpack.c.l.b16 %v7983
    %v8119 = vunpack.c.l.b16 %v7984
    %v8120 = vunpack.c.l.b16 %v7985
    %v8121 = vunpack.c.l.b16 %v7986
    %v8122 = vunpack.c.l.b16 %v7987
    %v8123 = vunpack.c.l.b16 %v7988
    %v8124 = vunpack.c.l.b16 %v7989
    %v8125 = vunpack.c.l.b16 %v7990
    %v8126 = vunpack.c.l.b16 %v7991
    %v8127 = vunpack.c.l.b16 %v7992
    %v8128 = vunpack.c.l.b16 %v7993
    %v8129 = vpack.c.b16 %v8066, %v8065
    %v8130 = vpack.c.b16 %v8068, %v8067
    %v8131 = vpack.c.b16 %v8070, %v8069
    %v8132 = vpack.c.b16 %v8072, %v8071
    %v8133 = vpack.c.b16 %v8074, %v8073
    %v8134 = vpack.c.b16 %v8076, %v8075
    %v8135 = vpack.c.b16 %v8078, %v8077
    %v8136 = vpack.c.b16 %v8080, %v8079
    %v8137 = vpack.c.b16 %v8082, %v8081
    %v8138 = vpack.c.b16 %v8084, %v8083
    %v8139 = vpack.c.b16 %v8086, %v8085
    %v8140 = vpack.c.b16 %v8088, %v8087
    %v8141 = vpack.c.b16 %v8090, %v8089
    %v8142 = vpack.c.b16 %v8092, %v8091
    %v8143 = vpack.c.b16 %v8094, %v8093
    %v8144 = vpack.c.b16 %v8096, %v8095
    %v8145 = vpack.c.b16 %v8098, %v8097
    %v8146 = vpack.c.b16 %v8100, %v8099
    %v8147 = vpack.c.b16 %v8102, %v8101
    %v8148 = vpack.c.b16 %v8104, %v8103
    %v8149 = vpack.c.b16 %v8106, %v8105
    %v8150 = vpack.c.b16 %v8108, %v8107
    %v8151 = vpack.c.b16 %v8110, %v8109
    %v8152 = vpack.c.b16 %v8112, %v8111
    %v8153 = vpack.c.b16 %v8114, %v8113
    %v8154 = vpack.c.b16 %v8116, %v8115
    %v8155 = vpack.c.b16 %v8118, %v8117
    %v8156 = vpack.c.b16 %v8120, %v8119
    %v8157 = vpack.c.b16 %v8122, %v8121
    %v8158 = vpack.c.b16 %v8124, %v8123
    %v8159 = vpack.c.b16 %v8126, %v8125
    %v8160 = vpack.c.b16 %v8128, %v8127
    %8193 = vmatprep.subr.bf16.mxu0 0
    %8194 = vmatpush1.bf16.msra.mxu0 %v8129
    %8195 = vmatprep.subr.bf16.mxu0 0
    %8196 = vmatpush1.bf16.msra.mxu0 %v8130
    %8197 = vmatprep.subr.bf16.mxu0 0
    %8198 = vmatpush1.bf16.msra.mxu0 %v8131
    %8199 = vmatprep.subr.bf16.mxu0 0
    %8200 = vmatpush1.bf16.msra.mxu0 %v8132
    %8201 = vmatprep.subr.bf16.mxu0 0
    %8202 = vmatpush1.bf16.msra.mxu0 %v8133
    %8203 = vmatprep.subr.bf16.mxu0 0
    %8204 = vmatpush1.bf16.msra.mxu0 %v8134
    %8205 = vmatprep.subr.bf16.mxu0 0
    %8206 = vmatpush1.bf16.msra.mxu0 %v8135
    %8207 = vmatprep.subr.bf16.mxu0 0
    %8208 = vmatpush1.bf16.msra.mxu0 %v8136
    %8209 = vmatprep.subr.bf16.mxu0 0
    %8210 = vmatpush1.bf16.msra.mxu0 %v8137
    %8211 = vmatprep.subr.bf16.mxu0 0
    %8212 = vmatpush1.bf16.msra.mxu0 %v8138
    %8213 = vmatprep.subr.bf16.mxu0 0
    %8214 = vmatpush1.bf16.msra.mxu0 %v8139
    %8215 = vmatprep.subr.bf16.mxu0 0
    %8216 = vmatpush1.bf16.msra.mxu0 %v8140
    %8217 = vmatprep.subr.bf16.mxu0 0
    %8218 = vmatpush1.bf16.msra.mxu0 %v8141
    %8219 = vmatprep.subr.bf16.mxu0 0
    %8220 = vmatpush1.bf16.msra.mxu0 %v8142
    %8221 = vmatprep.subr.bf16.mxu0 0
    %8222 = vmatpush1.bf16.msra.mxu0 %v8143
    %8223 = vmatprep.subr.bf16.mxu0 0
    %8224 = vmatpush1.bf16.msra.mxu0 %v8144
    %8225 = vmatprep.mubr.bf16.mxu0 %v7927
    %8226 = vmatmul.mubr.bf16.gmra.mrb[0].mxu0 %v7926
    %v8227 = vpop.f32.mrb[0].mxu0
    %v8228 = vadd.f32 %v7999, %v8227
    %v8229 = vpop.f32.mrb[0].mxu0
    %v8230 = vpop.f32.mrb[0].mxu0
    %v8231 = vpop.f32.mrb[0].mxu0
    %8232 = vdwg.mxu0
    %8233 = vmatprep.subr.bf16.mxu0 0
    %8234 = vmatpush1.bf16.msra.mxu0 %v8145
    %8235 = vmatprep.subr.bf16.mxu0 0
    %8236 = vmatpush1.bf16.msra.mxu0 %v8146
    %8237 = vmatprep.subr.bf16.mxu0 0
    %8238 = vmatpush1.bf16.msra.mxu0 %v8147
    %8239 = vmatprep.subr.bf16.mxu0 0
    %8240 = vmatpush1.bf16.msra.mxu0 %v8148
    %8241 = vmatprep.subr.bf16.mxu0 0
    %8242 = vmatpush1.bf16.msra.mxu0 %v8149
    %8243 = vmatprep.subr.bf16.mxu0 0
    %8244 = vmatpush1.bf16.msra.mxu0 %v8150
    %8245 = vmatprep.subr.bf16.mxu0 0
    %8246 = vmatpush1.bf16.msra.mxu0 %v8151
    %8247 = vmatprep.subr.bf16.mxu0 0
    %8248 = vmatpush1.bf16.msra.mxu0 %v8152
    %8249 = vmatprep.subr.bf16.mxu0 0
    %8250 = vmatpush1.bf16.msra.mxu0 %v8153
    %8251 = vmatprep.subr.bf16.mxu0 0
    %8252 = vmatpush1.bf16.msra.mxu0 %v8154
    %8253 = vmatprep.subr.bf16.mxu0 0
    %8254 = vmatpush1.bf16.msra.mxu0 %v8155
    %8255 = vmatprep.subr.bf16.mxu0 0
    %8256 = vmatpush1.bf16.msra.mxu0 %v8156
    %8257 = vmatprep.subr.bf16.mxu0 0
    %8258 = vmatpush1.bf16.msra.mxu0 %v8157
    %8259 = vmatprep.subr.bf16.mxu0 0
    %8260 = vmatpush1.bf16.msra.mxu0 %v8158
    %8261 = vmatprep.subr.bf16.mxu0 0
    %8262 = vmatpush1.bf16.msra.mxu0 %v8159
    %8263 = vmatprep.subr.bf16.mxu0 0
    %8264 = vmatpush1.bf16.msra.mxu0 %v8160
    %8265 = vmatprep.mubr.bf16.mxu0 %v7929
    %8266 = vmatmul.mubr.bf16.gmra.mrb[0].mxu0 %v7928
    %v8267 = vpop.f32.mrb[0].mxu0
    %v8268 = vadd.f32 %v8228, %v8267
    %v8269 = vpop.f32.mrb[0].mxu0
    %v8270 = vpop.f32.mrb[0].mxu0
    %v8271 = vpop.f32.mrb[0].mxu0
    %8272 = vdwg.mxu0
    %v8273 = vmax.f32 %v8268, 0.0
    %v8274 = vpack.c.bf16 %v8273, %v8273
    %v8275 = vld [vmem:[#allocation32] sm:$0xf]
    %v8276 = vld [vmem:[#allocation32 + $0x4] sm:$0xf]
    %v8277 = vld [vmem:[#allocation32 + $0x8] sm:$0xf]
    %v8278 = vld [vmem:[#allocation32 + $0xc] sm:$0xf]
    %v8279 = vld [vmem:[#allocation32 + $0x10] sm:$0xf]
    %v8280 = vld [vmem:[#allocation32 + $0x14] sm:$0xf]
    %v8281 = vld [vmem:[#allocation32 + $0x18] sm:$0xf]
    %v8282 = vld [vmem:[#allocation32 + $0x1c] sm:$0xf]
    %v8283 = vld [vmem:[#allocation32 + $0x20] sm:$0xf]
    %v8284 = vld [vmem:[#allocation32 + $0x24] sm:$0xf]
    %v8285 = vld [vmem:[#allocation32 + $0x28] sm:$0xf]
    %v8286 = vld [vmem:[#allocation32 + $0x2c] sm:$0xf]
    %v8287 = vld [vmem:[#allocation32 + $0x30] sm:$0xf]
    %v8288 = vld [vmem:[#allocation32 + $0x34] sm:$0xf]
    %v8289 = vld [vmem:[#allocation32 + $0x38] sm:$0xf]
    %v8290 = vld [vmem:[#allocation32 + $0x3c] sm:$0xf]
    %v8291 = vld [vmem:[#allocation34] sm:$0x1]
    %v8293 = vlaneseq
    %v8294 = vshrl.u32 %v8293, 7
    %v8295 = vsub.s32 0, %v8294
    %v8296 = vrot.slane %v8291, %v8295
    %v8314 = vunpack.c.l.b16 %v8275
    %v8315 = vunpack.c.l.b16 %v8276
    %v8316 = vunpack.c.l.b16 %v8277
    %v8317 = vunpack.c.l.b16 %v8278
    %v8318 = vunpack.c.l.b16 %v8279
    %v8319 = vunpack.c.l.b16 %v8280
    %v8320 = vunpack.c.l.b16 %v8281
    %v8321 = vunpack.c.l.b16 %v8282
    %v8322 = vunpack.c.l.b16 %v8283
    %v8323 = vunpack.c.l.b16 %v8284
    %v8324 = vunpack.c.l.b16 %v8285
    %v8325 = vunpack.c.l.b16 %v8286
    %v8326 = vunpack.c.l.b16 %v8287
    %v8327 = vunpack.c.l.b16 %v8288
    %v8328 = vunpack.c.l.b16 %v8289
    %v8329 = vunpack.c.l.b16 %v8290
    %v8330 = vpack.c.b16 %v8315, %v8314
    %v8331 = vpack.c.b16 %v8317, %v8316
    %v8332 = vpack.c.b16 %v8319, %v8318
    %v8333 = vpack.c.b16 %v8321, %v8320
    %v8334 = vpack.c.b16 %v8323, %v8322
    %v8335 = vpack.c.b16 %v8325, %v8324
    %v8336 = vpack.c.b16 %v8327, %v8326
    %v8337 = vpack.c.b16 %v8329, %v8328
    %8346 = vmatprep.subr.bf16.mxu0 0
    %8347 = vmatpush1.bf16.msra.mxu0 %v8330
    %8348 = vmatprep.subr.bf16.mxu0 0
    %8349 = vmatpush1.bf16.msra.mxu0 %v8331
    %8350 = vmatprep.subr.bf16.mxu0 0
    %8351 = vmatpush1.bf16.msra.mxu0 %v8332
    %8352 = vmatprep.subr.bf16.mxu0 0
    %8353 = vmatpush1.bf16.msra.mxu0 %v8333
    %8354 = vmatprep.subr.bf16.mxu0 0
    %8355 = vmatpush1.bf16.msra.mxu0 %v8334
    %8356 = vmatprep.subr.bf16.mxu0 0
    %8357 = vmatpush1.bf16.msra.mxu0 %v8335
    %8358 = vmatprep.subr.bf16.mxu0 0
    %8359 = vmatpush1.bf16.msra.mxu0 %v8336
    %8360 = vmatprep.subr.bf16.mxu0 0
    %8361 = vmatpush1.bf16.msra.mxu0 %v8337
    %8362 = vmatprep.subr.bf16.mxu0 0
    %8363 = vmatpush1.bf16.msra.mxu0 0
    %8364 = vmatprep.subr.bf16.mxu0 0
    %8365 = vmatpush1.bf16.msra.mxu0 0
    %8366 = vmatprep.subr.bf16.mxu0 0
    %8367 = vmatpush1.bf16.msra.mxu0 0
    %8368 = vmatprep.subr.bf16.mxu0 0
    %8369 = vmatpush1.bf16.msra.mxu0 0
    %8370 = vmatprep.subr.bf16.mxu0 0
    %8371 = vmatpush1.bf16.msra.mxu0 0
    %8372 = vmatprep.subr.bf16.mxu0 0
    %8373 = vmatpush1.bf16.msra.mxu0 0
    %8374 = vmatprep.subr.bf16.mxu0 0
    %8375 = vmatpush1.bf16.msra.mxu0 0
    %8376 = vmatprep.subr.bf16.mxu0 0
    %8377 = vmatpush1.bf16.msra.mxu0 0
    %8378 = vmatprep.mubr.bf16.mxu0 0
    %8379 = vmatmul.mubr.bf16.gmra.mrb[0].mxu0 %v8274
    %v8380 = vpop.f32.mrb[0].mxu0
    %v8381 = vadd.f32 %v8296, %v8380
    %v8382 = vpop.f32.mrb[0].mxu0
    %v8383 = vpop.f32.mrb[0].mxu0
    %v8384 = vpop.f32.mrb[0].mxu0
    %8385 = vdwg.mxu0
    %v8386 = vmax.f32 %v8381, 0.0
    %v8387 = vpack.c.bf16 %v8386, %v8386
    %v8388 = vld [vmem:[#allocation35] sm:$0xf]
    %v8389 = vld [vmem:[#allocation35 + $0x4] sm:$0xf]
    %v8390 = vld [vmem:[#allocation35 + $0x8] sm:$0xf]
    %v8391 = vld [vmem:[#allocation35 + $0xc] sm:$0xf]
    %v8392 = vld [vmem:[#allocation35 + $0x10] sm:$0xf]
    %v8393 = vld [vmem:[#allocation35 + $0x14] sm:$0xf]
    %v8394 = vld [vmem:[#allocation35 + $0x18] sm:$0xf]
    %v8395 = vld [vmem:[#allocation35 + $0x1c] sm:$0xf]
    %v8396 = vld [vmem:[#allocation35 + $0x20] sm:$0xf]
    %v8397 = vld [vmem:[#allocation35 + $0x24] sm:$0xf]
    %v8398 = vld [vmem:[#allocation35 + $0x28] sm:$0xf]
    %v8399 = vld [vmem:[#allocation35 + $0x2c] sm:$0xf]
    %v8400 = vld [vmem:[#allocation35 + $0x30] sm:$0xf]
    %v8401 = vld [vmem:[#allocation35 + $0x34] sm:$0xf]
    %v8402 = vld [vmem:[#allocation35 + $0x38] sm:$0xf]
    %v8403 = vld [vmem:[#allocation35 + $0x3c] sm:$0xf]
    %v8404 = vld [vmem:[%s22] sm:$0xff]
    %v8405 = vld [vmem:[%s22 + $0x8] sm:$0xff]
    %v8406 = vld [vmem:[%s22 + $0x10] sm:$0xff]
    %v8407 = vld [vmem:[%s22 + $0x18] sm:$0xff]
    %v8408 = vld [vmem:[%s22 + $0x20] sm:$0xff]
    %v8409 = vld [vmem:[%s22 + $0x28] sm:$0xff]
    %v8410 = vld [vmem:[%s22 + $0x30] sm:$0xff]
    %v8411 = vld [vmem:[%s22 + $0x38] sm:$0xff]
    %v8412 = vld [vmem:[%s22 + $0x40] sm:$0xff]
    %v8413 = vld [vmem:[%s22 + $0x48] sm:$0xff]
    %v8414 = vld [vmem:[%s22 + $0x50] sm:$0xff]
    %v8415 = vld [vmem:[%s22 + $0x58] sm:$0xff]
    %v8416 = vld [vmem:[%s22 + $0x60] sm:$0xff]
    %v8417 = vld [vmem:[%s22 + $0x68] sm:$0xff]
    %v8418 = vld [vmem:[%s22 + $0x70] sm:$0xff]
    %v8419 = vld [vmem:[%s22 + $0x78] sm:$0xff]
    %8421 = vset.pattern.permute.xlu0 0
    %8422 = vperm.xlu0 %8421, %v8404
    %v8423 = vpop.permute.xlu0 %8422
    %8426 = vset.pattern.permute.xlu0 0
    %8427 = vperm.xlu0 %8426, %v8405
    %v8428 = vpop.permute.xlu0 %8427
    %8430 = vset.pattern.permute.xlu0 0
    %8431 = vperm.xlu0 %8430, %v8406
    %v8432 = vpop.permute.xlu0 %8431
    %8434 = vset.pattern.permute.xlu0 0
    %8435 = vperm.xlu0 %8434, %v8407
    %v8436 = vpop.permute.xlu0 %8435
    %8438 = vset.pattern.permute.xlu0 0
    %8439 = vperm.xlu0 %8438, %v8408
    %v8440 = vpop.permute.xlu0 %8439
    %8442 = vset.pattern.permute.xlu0 0
    %8443 = vperm.xlu0 %8442, %v8409
    %v8444 = vpop.permute.xlu0 %8443
    %8446 = vset.pattern.permute.xlu0 0
    %8447 = vperm.xlu0 %8446, %v8410
    %v8448 = vpop.permute.xlu0 %8447
    %8450 = vset.pattern.permute.xlu0 0
    %8451 = vperm.xlu0 %8450, %v8411
    %v8452 = vpop.permute.xlu0 %8451
    %8454 = vset.pattern.permute.xlu0 0
    %8455 = vperm.xlu0 %8454, %v8412
    %v8456 = vpop.permute.xlu0 %8455
    %8458 = vset.pattern.permute.xlu0 0
    %8459 = vperm.xlu0 %8458, %v8413
    %v8460 = vpop.permute.xlu0 %8459
    %8462 = vset.pattern.permute.xlu0 0
    %8463 = vperm.xlu0 %8462, %v8414
    %v8464 = vpop.permute.xlu0 %8463
    %8466 = vset.pattern.permute.xlu0 0
    %8467 = vperm.xlu0 %8466, %v8415
    %v8468 = vpop.permute.xlu0 %8467
    %8470 = vset.pattern.permute.xlu0 0
    %8471 = vperm.xlu0 %8470, %v8416
    %v8472 = vpop.permute.xlu0 %8471
    %8474 = vset.pattern.permute.xlu0 0
    %8475 = vperm.xlu0 %8474, %v8417
    %v8476 = vpop.permute.xlu0 %8475
    %8478 = vset.pattern.permute.xlu0 0
    %8479 = vperm.xlu0 %8478, %v8418
    %v8480 = vpop.permute.xlu0 %8479
    %8482 = vset.pattern.permute.xlu0 0
    %8483 = vperm.xlu0 %8482, %v8419
    %v8484 = vpop.permute.xlu0 %8483
    %v8501 = vunpack.c.l.b16 %v8388
    %v8502 = vunpack.c.l.b16 %v8389
    %v8503 = vunpack.c.l.b16 %v8390
    %v8504 = vunpack.c.l.b16 %v8391
    %v8505 = vunpack.c.l.b16 %v8392
    %v8506 = vunpack.c.l.b16 %v8393
    %v8507 = vunpack.c.l.b16 %v8394
    %v8508 = vunpack.c.l.b16 %v8395
    %v8509 = vunpack.c.l.b16 %v8396
    %v8510 = vunpack.c.l.b16 %v8397
    %v8511 = vunpack.c.l.b16 %v8398
    %v8512 = vunpack.c.l.b16 %v8399
    %v8513 = vunpack.c.l.b16 %v8400
    %v8514 = vunpack.c.l.b16 %v8401
    %v8515 = vunpack.c.l.b16 %v8402
    %v8516 = vunpack.c.l.b16 %v8403
    %v8517 = vpack.c.b16 %v8502, %v8501
    %v8518 = vpack.c.b16 %v8504, %v8503
    %v8519 = vpack.c.b16 %v8506, %v8505
    %v8520 = vpack.c.b16 %v8508, %v8507
    %v8521 = vpack.c.b16 %v8510, %v8509
    %v8522 = vpack.c.b16 %v8512, %v8511
    %v8523 = vpack.c.b16 %v8514, %v8513
    %v8524 = vpack.c.b16 %v8516, %v8515
    %8533 = vmatprep.subr.bf16.mxu0 0
    %8534 = vmatpush1.bf16.xpose.msra.mxu0 %v8387
    %8535 = vmatprep.subr.bf16.mxu0 0
    %8536 = vmatpush1.bf16.xpose.msra.mxu0 0
    %8537 = vmatprep.subr.bf16.mxu0 0
    %8538 = vmatpush1.bf16.xpose.msra.mxu0 0
    %8539 = vmatprep.subr.bf16.mxu0 0
    %8540 = vmatpush1.bf16.xpose.msra.mxu0 0
    %8541 = vmatprep.subr.bf16.mxu0 0
    %8542 = vmatpush1.bf16.xpose.msra.mxu0 0
    %8543 = vmatprep.subr.bf16.mxu0 0
    %8544 = vmatpush1.bf16.xpose.msra.mxu0 0
    %8545 = vmatprep.subr.bf16.mxu0 0
    %8546 = vmatpush1.bf16.xpose.msra.mxu0 0
    %8547 = vmatprep.subr.bf16.mxu0 0
    %8548 = vmatpush1.bf16.xpose.msra.mxu0 0
    %8549 = vmatprep.subr.bf16.mxu0 0
    %8550 = vmatpush1.bf16.xpose.msra.mxu0 0
    %8551 = vmatprep.subr.bf16.mxu0 0
    %8552 = vmatpush1.bf16.xpose.msra.mxu0 0
    %8553 = vmatprep.subr.bf16.mxu0 0
    %8554 = vmatpush1.bf16.xpose.msra.mxu0 0
    %8555 = vmatprep.subr.bf16.mxu0 0
    %8556 = vmatpush1.bf16.xpose.msra.mxu0 0
    %8557 = vmatprep.subr.bf16.mxu0 0
    %8558 = vmatpush1.bf16.xpose.msra.mxu0 0
    %8559 = vmatprep.subr.bf16.mxu0 0
    %8560 = vmatpush1.bf16.xpose.msra.mxu0 0
    %8561 = vmatprep.subr.bf16.mxu0 0
    %8562 = vmatpush1.bf16.xpose.msra.mxu0 0
    %8563 = vmatprep.subr.bf16.mxu0 0
    %8564 = vmatpush1.bf16.xpose.msra.mxu0 0
    %8565 = vmatprep.mubr.bf16.mxu0 0
    %8566 = vmatmul.mubr.bf16.gmra.mrb[0].mxu0 %v8517
    %v8567 = vpop.f32.mrb[0].mxu0
    %v8568 = vadd.f32 %v8423, %v8567
    %v8569 = vpop.f32.mrb[0].mxu0
    %v8570 = vpop.f32.mrb[0].mxu0
    %v8571 = vpop.f32.mrb[0].mxu0
    %8572 = vmatprep.mubr.bf16.mxu0 0
    %8573 = vmatmul.mubr.bf16.gmra.mrb[0].mxu0 %v8518
    %v8574 = vpop.f32.mrb[0].mxu0
    %v8575 = vpop.f32.mrb[0].mxu0
    %v8576 = vpop.f32.mrb[0].mxu0
    %v8577 = vpop.f32.mrb[0].mxu0
    %8578 = vmatprep.mubr.bf16.mxu0 0
    %8579 = vmatmul.mubr.bf16.gmra.mrb[0].mxu0 %v8519
    %v8580 = vpop.f32.mrb[0].mxu0
    %v8581 = vpop.f32.mrb[0].mxu0
    %v8582 = vpop.f32.mrb[0].mxu0
    %v8583 = vpop.f32.mrb[0].mxu0
    %8584 = vmatprep.mubr.bf16.mxu0 0
    %8585 = vmatmul.mubr.bf16.gmra.mrb[0].mxu0 %v8520
    %v8586 = vpop.f32.mrb[0].mxu0
    %v8587 = vpop.f32.mrb[0].mxu0
    %v8588 = vpop.f32.mrb[0].mxu0
    %v8589 = vpop.f32.mrb[0].mxu0
    %8590 = vmatprep.mubr.bf16.mxu0 0
    %8591 = vmatmul.mubr.bf16.gmra.mrb[0].mxu0 %v8521
    %v8592 = vpop.f32.mrb[0].mxu0
    %v8593 = vpop.f32.mrb[0].mxu0
    %v8594 = vpop.f32.mrb[0].mxu0
    %v8595 = vpop.f32.mrb[0].mxu0
    %8596 = vmatprep.mubr.bf16.mxu0 0
    %8597 = vmatmul.mubr.bf16.gmra.mrb[0].mxu0 %v8522
    %v8598 = vpop.f32.mrb[0].mxu0
    %v8599 = vpop.f32.mrb[0].mxu0
    %v8600 = vpop.f32.mrb[0].mxu0
    %v8601 = vpop.f32.mrb[0].mxu0
    %8602 = vmatprep.mubr.bf16.mxu0 0
    %8603 = vmatmul.mubr.bf16.gmra.mrb[0].mxu0 %v8523
    %v8604 = vpop.f32.mrb[0].mxu0
    %v8605 = vpop.f32.mrb[0].mxu0
    %v8606 = vpop.f32.mrb[0].mxu0
    %v8607 = vpop.f32.mrb[0].mxu0
    %8608 = vmatprep.mubr.bf16.mxu0 0
    %8609 = vmatmul.mubr.bf16.gmra.mrb[0].mxu0 %v8524
    %v8610 = vpop.f32.mrb[0].mxu0
    %v8611 = vpop.f32.mrb[0].mxu0
    %v8612 = vpop.f32.mrb[0].mxu0
    %v8613 = vpop.f32.mrb[0].mxu0
    %8614 = vdwg.mxu0
    %vm8615 = vcmask 64512
    %8616 = vst.msk [vmem:[#allocation37] sm:$0xff] %vm8615, %v8568
    // Predicated region
    $region182: #{tpu_custom_call.1} parent=1 // pred_check
      _
    $region183: #{tpu_custom_call.1} parent=1 // pred_check_branch
      %8618 = sbr.rel (0) target = $region185
    $region184: #{tpu_custom_call.1} parent=1 // pred_region
      %s8620 = ssub.s32 128, 128
      %8621 = vsyncadd [#allocation4], %s8620
      %s8623 = sshll.u32 [#allocation37], 4
      %s8624 = int_to_ptr.vmem [resolvable:$true] %s8623
      %8626 = dma.vmem_to_hbm [thread:$0]  %s8624, 128, %s23, [#allocation4]
    $region185: #{tpu_custom_call.1} parent=1 // pred_fallthru
      _
    // Predicated region
    $region186: #{tpu_custom_call.1} parent=1 // pred_check
      _
    $region187: #{tpu_custom_call.1} parent=1 // pred_check_branch
      %8628 = sbr.rel (0) target = $region189
    $region188: #{tpu_custom_call.1} parent=1 // pred_region
      %8629 = dma.done [#allocation4], 128
    $region189: #{tpu_custom_call.1} parent=1 // pred_fallthru
      _
    %8630 = vsyncpa [#allocation3], 1
    %8631 = vsyncpa [#allocation6], 1
    %8632 = vsyncpa [#allocation9], 1
    %8633 = vsyncpa [#allocation12], 1
    %8634 = vsyncpa [#allocation15], 1
    %8635 = vsyncpa [#allocation18], 1
    %8636 = vsyncpa [#allocation21], 1
    %8637 = vsyncpa [#allocation24], 1
    %8638 = vsyncpa [#allocation27], 1
    %8639 = vsyncpa [#allocation30], 1
    %8640 = vsyncpa [#allocation33], 1
    %8641 = vsyncpa [#allocation36], 1
    %8642 = vsyncpa [#allocation4], 1

</llo_original>
